<compile_context>
chip_gen: v7x
topology: tpu7x:2x2x1
jax: 0.10.0
libtpu: 0.0.40
codegen_flags: <defaults>
</compile_context>

<pallas_src>
import numpy as np

import jax
import jax.numpy as jnp
from jax import lax
from jax.experimental import pallas as pl
from jax.experimental.pallas import tpu as pltpu


# ---------------------------------------------------------------------------
# Fused Pallas kernel: pad -> conv3x3 -> shuffle -> conv3x3 -> shuffle
# (one batch element per grid step)
# ---------------------------------------------------------------------------
def _upsample_block_kernel(x_ref, w1_ref, b1_ref, w2_ref, b2_ref, out_ref,
                           xp_ref, cols_ref, pp_ref):
    # x_ref    : (H, W, C)          input image (batch dim squeezed)
    # w1_ref   : (9C, 4C)           conv1 weights, rows = (kh, kw, cin), cols phase-major
    # b1_ref   : (1, 4C)            conv1 bias (phase-major)
    # w2_ref   : (9C, 4C)           conv2 weights (same layout)
    # b2_ref   : (1, 4C)            conv2 bias
    # out_ref  : (H, W, 16C)        lane = ((a*2+b)*4 + (i*2+j))*C + c   (phase-major)
    # xp_ref   : (H+2, W+2, C)      zero-padded conv1 input (VMEM scratch)
    # cols_ref : (H, W, 9C)         im2col scratch, reused by both convs
    # pp_ref   : (4, H+2, W+2, C)   zero-padded sub-pixel phase images after shuffle #1
    H, W, C = x_ref.shape
    C4 = 4 * C
    taps = [(kh, kw) for kh in range(3) for kw in range(3)]

    # ---- zero-pad the input inside VMEM (no HBM round trip) ----------------
    xp_ref[...] = jnp.zeros(xp_ref.shape, xp_ref.dtype)
    xp_ref[1:H + 1, 1:W + 1, :] = x_ref[...].astype(xp_ref.dtype)

    # ---- conv1: build im2col once, single K=9C MXU matmul ------------------
    for k, (kh, kw) in enumerate(taps):
        cols_ref[:, :, k * C:(k + 1) * C] = xp_ref[kh:kh + H, kw:kw + W, :]
    y1 = lax.dot_general(
        cols_ref[...], w1_ref[...],
        dimension_numbers=(((2,), (0,)), ((), ())),
        preferred_element_type=jnp.float32)
    y1 = y1 + b1_ref[0][None, None, :]                    # (H, W, 4C), phase-major

    # ---- pixel-shuffle #1: scatter the 4 phase images, pre-padded ----------
    # phase ph = a*2 + b holds s[2y+a, 2x+b, :] of the shuffled (2H, 2W, C) image.
    pp_ref[...] = jnp.zeros(pp_ref.shape, pp_ref.dtype)
    for ph in range(4):
        pp_ref[ph, 1:H + 1, 1:W + 1, :] = y1[:, :, ph * C:(ph + 1) * C]

    # ---- conv2 + pixel-shuffle #2: one output sub-pixel phase at a time ----
    for a in range(2):
        for b in range(2):
            for k, (kh, kw) in enumerate(taps):
                t = a + kh - 1                     # row coordinate parity / block shift
                u = b + kw - 1
                src = (t % 2) * 2 + (u % 2)        # source phase image
                dy = t // 2                        # -1 / 0 / +1 block shift
                dx = u // 2
                cols_ref[:, :, k * C:(k + 1) * C] = (
                    pp_ref[src, 1 + dy:1 + dy + H, 1 + dx:1 + dx + W, :])
            y2 = lax.dot_general(
                cols_ref[...], w2_ref[...],
                dimension_numbers=(((2,), (0,)), ((), ())),
                preferred_element_type=jnp.float32)
            y2 = y2 + b2_ref[0][None, None, :]             # (H, W, 4C), phase-major
            ph2 = a * 2 + b
            out_ref[:, :, ph2 * C4:(ph2 + 1) * C4] = y2.astype(out_ref.dtype)


# ---------------------------------------------------------------------------
# Wrapper: weight prep, pallas_call, final phase -> NCHW untangle
# ---------------------------------------------------------------------------
def _phase_permutation(C):
    # permuted channel p = (phase)*C + c  <-  original channel c*4 + phase
    return np.array([(p % C) * 4 + p // C for p in range(4 * C)], dtype=np.int32)


def upsample_block_forward(x_nchw, params):
    """x: (N, C, H, W) float32  ->  (N, C, 4H, 4W) float32 (scale=4, group=1)."""
    N, C, H, W = x_nchw.shape
    (w1, b1), (w2, b2) = params                        # HWIO (3,3,C,4C), (4C,)

    x_nhwc = jnp.transpose(x_nchw, (0, 2, 3, 1))       # only remaining input glue

    perm = _phase_permutation(C)                       # phase-major output channels
    w1p = w1.reshape(9 * C, 4 * C)[:, perm]
    w2p = w2.reshape(9 * C, 4 * C)[:, perm]
    b1p = b1[perm].reshape(1, 4 * C)
    b2p = b2[perm].reshape(1, 4 * C)

    out_k = pl.pallas_call(
        _upsample_block_kernel,
        out_shape=jax.ShapeDtypeStruct((N, H, W, 16 * C), x_nchw.dtype),
        grid=(N,),
        in_specs=[
            pl.BlockSpec((None, H, W, C), lambda n: (n, 0, 0, 0)),
            pl.BlockSpec((9 * C, 4 * C), lambda n: (0, 0)),
            pl.BlockSpec((1, 4 * C), lambda n: (0, 0)),
            pl.BlockSpec((9 * C, 4 * C), lambda n: (0, 0)),
            pl.BlockSpec((1, 4 * C), lambda n: (0, 0)),
        ],
        out_specs=pl.BlockSpec((None, H, W, 16 * C), lambda n: (n, 0, 0, 0)),
        scratch_shapes=[
            pltpu.VMEM((H + 2, W + 2, C), jnp.float32),      # padded conv1 input
            pltpu.VMEM((H, W, 9 * C), jnp.float32),          # shared im2col buffer
            pltpu.VMEM((4, H + 2, W + 2, C), jnp.float32),   # padded phase images
        ],
        compiler_params=pltpu.CompilerParams(
            dimension_semantics=("parallel",)),
    )(x_nhwc, w1p, b1p, w2p, b2p)

    # lane index of out_k = (a, b, i, j, c); O[n, c, 4y+2a+i, 4x+2b+j] = out_k[n, y, x, .]
    t = out_k.reshape(N, H, W, 2, 2, 2, 2, C)          # (n, y, x, a, b, i, j, c)
    t = jnp.transpose(t, (0, 7, 1, 3, 5, 2, 4, 6))     # (n, c, y, a, i, x, b, j)
    return t.reshape(N, C, 4 * H, 4 * W)


# ---------------------------------------------------------------------------
# Pure-JAX reference (sanity check)
# ---------------------------------------------------------------------------
def _pixel_shuffle_nhwc(x, r):
    N, H, W, Crr = x.shape
    C = Crr // (r * r)
    x = x.reshape(N, H, W, C, r, r)
    x = jnp.transpose(x, (0, 1, 4, 2, 5, 3))
    return x.reshape(N, H * r, W * r, C)


def upsample_block_reference(x_nchw, params):
    x = jnp.transpose(x_nchw, (0, 2, 3, 1))
    for (w, b) in params:
        x = lax.conv_general_dilated(
            x, w, window_strides=(1, 1), padding="SAME",
            dimension_numbers=("NHWC", "HWIO", "NHWC")) + b[None, None, None, :]
        x = _pixel_shuffle_nhwc(x, 2)
    return jnp.transpose(x, (0, 3, 1, 2))


def make_params(key, n_channels):
    """Deterministic synthetic weights for the two conv layers (scale=4)."""
    params = []
    for i in range(2):
        k_w, k_b, key = jax.random.split(jax.random.fold_in(key, i), 3)
        fan_in = n_channels * 3 * 3
        bound = 1.0 / (fan_in ** 0.5)
        w = jax.random.uniform(k_w, (3, 3, n_channels, 4 * n_channels),
                               jnp.float32, -bound, bound)
        b = jax.random.uniform(k_b, (4 * n_channels,), jnp.float32, -bound, bound)
        params.append((w, b))
    return params


if __name__ == "__main__":
    key = jax.random.PRNGKey(0)
    n_channels, N, H, W = 4, 2, 16, 16
    x = jax.random.normal(jax.random.fold_in(key, 123), (N, n_channels, H, W),
                          jnp.float32)
    params = make_params(key, n_channels)

    fwd = jax.jit(upsample_block_forward)
    out = jax.block_until_ready(fwd(x, params))

    ref = upsample_block_reference(x, params)
    assert out.shape == (N, n_channels, 4 * H, 4 * W), out.shape
    assert jnp.allclose(out, ref, atol=1e-4, rtol=1e-4), "mismatch vs reference"

    print("KERNEL_OK")
</pallas_src>

<mosaic_0001>
module attributes {stable_mosaic.version = 11 : i64} {
  func.func @_upsample_block_kernel(%arg0: i32, %arg1: memref<1x16x16x4xf32, #tpu.memory_space<vmem>>, %arg2: memref<36x16xf32, #tpu.memory_space<vmem>>, %arg3: memref<1x16xf32, #tpu.memory_space<vmem>>, %arg4: memref<36x16xf32, #tpu.memory_space<vmem>>, %arg5: memref<1x16xf32, #tpu.memory_space<vmem>>, %arg6: memref<1x16x16x64xf32, #tpu.memory_space<vmem>>, %arg7: memref<18x18x4xf32, #tpu.memory_space<vmem>>, %arg8: memref<16x16x36xf32, #tpu.memory_space<vmem>>, %arg9: memref<4x18x18x4xf32, #tpu.memory_space<vmem>>) attributes {dimension_semantics = [#tpu.dimension_semantics<parallel>], iteration_bounds = array<i64: 2>, scalar_prefetch = 0 : i64, scratch_operands = 3 : i64, tpu.core_type = #tpu.core_type<tc>, window_params = [{transform_indices = @transform_0, window_bounds = array<i64: 1, 16, 16, 4>}, {pipeline_mode = #tpu.pipeline_mode<synchronous>, transform_indices = @transform_1, window_bounds = array<i64: 36, 16>}, {pipeline_mode = #tpu.pipeline_mode<synchronous>, transform_indices = @transform_2, window_bounds = array<i64: 1, 16>}, {pipeline_mode = #tpu.pipeline_mode<synchronous>, transform_indices = @transform_3, window_bounds = array<i64: 36, 16>}, {pipeline_mode = #tpu.pipeline_mode<synchronous>, transform_indices = @transform_4, window_bounds = array<i64: 1, 16>}, {transform_indices = @transform_5, window_bounds = array<i64: 1, 16, 16, 64>}]} {
    %cst = arith.constant 0.000000e+00 : f32
    %0 = vector.broadcast %cst : f32 to vector<18x18x4xf32>
    %c0 = arith.constant 0 : index
    %c0_0 = arith.constant 0 : index
    %c0_1 = arith.constant 0 : index
    %1 = vector.load %arg7[%c0, %c0_0, %c0_1] : memref<18x18x4xf32, #tpu.memory_space<vmem>>, vector<18x18x4xf32>
    tpu.vector_store %arg7[%c0, %c0_0, %c0_1], %0 {strides = array<i32>} : memref<18x18x4xf32, #tpu.memory_space<vmem>>, vector<18x18x4xf32>,
    %c0_2 = arith.constant 0 : index
    %c0_3 = arith.constant 0 : index
    %c0_4 = arith.constant 0 : index
    %c0_5 = arith.constant 0 : index
    %2 = vector.load %arg1[%c0_2, %c0_3, %c0_4, %c0_5] : memref<1x16x16x4xf32, #tpu.memory_space<vmem>>, vector<1x16x16x4xf32>
    %3 = vector.shape_cast %2 : vector<1x16x16x4xf32> to vector<16x16x4xf32>
    %c1 = arith.constant 1 : index
    %c1_6 = arith.constant 1 : index
    %c0_7 = arith.constant 0 : index
    %4 = vector.load %arg7[%c1, %c1_6, %c0_7] : memref<18x18x4xf32, #tpu.memory_space<vmem>>, vector<16x16x4xf32>
    tpu.vector_store %arg7[%c1, %c1_6, %c0_7], %3 {strides = array<i32>} : memref<18x18x4xf32, #tpu.memory_space<vmem>>, vector<16x16x4xf32>,
    %c0_8 = arith.constant 0 : index
    %c0_9 = arith.constant 0 : index
    %c0_10 = arith.constant 0 : index
    %5 = vector.load %arg7[%c0_8, %c0_9, %c0_10] : memref<18x18x4xf32, #tpu.memory_space<vmem>>, vector<16x16x4xf32>
    %c0_11 = arith.constant 0 : index
    %c0_12 = arith.constant 0 : index
    %c0_13 = arith.constant 0 : index
    %6 = vector.load %arg8[%c0_11, %c0_12, %c0_13] : memref<16x16x36xf32, #tpu.memory_space<vmem>>, vector<16x16x4xf32>
    tpu.vector_store %arg8[%c0_11, %c0_12, %c0_13], %5 {strides = array<i32>} : memref<16x16x36xf32, #tpu.memory_space<vmem>>, vector<16x16x4xf32>,
    %c0_14 = arith.constant 0 : index
    %c1_15 = arith.constant 1 : index
    %c0_16 = arith.constant 0 : index
    %7 = vector.load %arg7[%c0_14, %c1_15, %c0_16] : memref<18x18x4xf32, #tpu.memory_space<vmem>>, vector<16x16x4xf32>
    %c0_17 = arith.constant 0 : index
    %c0_18 = arith.constant 0 : index
    %c4 = arith.constant 4 : index
    %8 = vector.load %arg8[%c0_17, %c0_18, %c4] : memref<16x16x36xf32, #tpu.memory_space<vmem>>, vector<16x16x4xf32>
    tpu.vector_store %arg8[%c0_17, %c0_18, %c4], %7 {strides = array<i32>} : memref<16x16x36xf32, #tpu.memory_space<vmem>>, vector<16x16x4xf32>,
    %c0_19 = arith.constant 0 : index
    %c2 = arith.constant 2 : index
    %c0_20 = arith.constant 0 : index
    %9 = vector.load %arg7[%c0_19, %c2, %c0_20] : memref<18x18x4xf32, #tpu.memory_space<vmem>>, vector<16x16x4xf32>
    %c0_21 = arith.constant 0 : index
    %c0_22 = arith.constant 0 : index
    %c8 = arith.constant 8 : index
    %10 = vector.load %arg8[%c0_21, %c0_22, %c8] : memref<16x16x36xf32, #tpu.memory_space<vmem>>, vector<16x16x4xf32>
    tpu.vector_store %arg8[%c0_21, %c0_22, %c8], %9 {strides = array<i32>} : memref<16x16x36xf32, #tpu.memory_space<vmem>>, vector<16x16x4xf32>,
    %c1_23 = arith.constant 1 : index
    %c0_24 = arith.constant 0 : index
    %c0_25 = arith.constant 0 : index
    %11 = vector.load %arg7[%c1_23, %c0_24, %c0_25] : memref<18x18x4xf32, #tpu.memory_space<vmem>>, vector<16x16x4xf32>
    %c0_26 = arith.constant 0 : index
    %c0_27 = arith.constant 0 : index
    %c12 = arith.constant 12 : index
    %12 = vector.load %arg8[%c0_26, %c0_27, %c12] : memref<16x16x36xf32, #tpu.memory_space<vmem>>, vector<16x16x4xf32>
    tpu.vector_store %arg8[%c0_26, %c0_27, %c12], %11 {strides = array<i32>} : memref<16x16x36xf32, #tpu.memory_space<vmem>>, vector<16x16x4xf32>,
    %c1_28 = arith.constant 1 : index
    %c1_29 = arith.constant 1 : index
    %c0_30 = arith.constant 0 : index
    %13 = vector.load %arg7[%c1_28, %c1_29, %c0_30] : memref<18x18x4xf32, #tpu.memory_space<vmem>>, vector<16x16x4xf32>
    %c0_31 = arith.constant 0 : index
    %c0_32 = arith.constant 0 : index
    %c16 = arith.constant 16 : index
    %14 = vector.load %arg8[%c0_31, %c0_32, %c16] : memref<16x16x36xf32, #tpu.memory_space<vmem>>, vector<16x16x4xf32>
    tpu.vector_store %arg8[%c0_31, %c0_32, %c16], %13 {strides = array<i32>} : memref<16x16x36xf32, #tpu.memory_space<vmem>>, vector<16x16x4xf32>,
    %c1_33 = arith.constant 1 : index
    %c2_34 = arith.constant 2 : index
    %c0_35 = arith.constant 0 : index
    %15 = vector.load %arg7[%c1_33, %c2_34, %c0_35] : memref<18x18x4xf32, #tpu.memory_space<vmem>>, vector<16x16x4xf32>
    %c0_36 = arith.constant 0 : index
    %c0_37 = arith.constant 0 : index
    %c20 = arith.constant 20 : index
    %16 = vector.load %arg8[%c0_36, %c0_37, %c20] : memref<16x16x36xf32, #tpu.memory_space<vmem>>, vector<16x16x4xf32>
    tpu.vector_store %arg8[%c0_36, %c0_37, %c20], %15 {strides = array<i32>} : memref<16x16x36xf32, #tpu.memory_space<vmem>>, vector<16x16x4xf32>,
    %c2_38 = arith.constant 2 : index
    %c0_39 = arith.constant 0 : index
    %c0_40 = arith.constant 0 : index
    %17 = vector.load %arg7[%c2_38, %c0_39, %c0_40] : memref<18x18x4xf32, #tpu.memory_space<vmem>>, vector<16x16x4xf32>
    %c0_41 = arith.constant 0 : index
    %c0_42 = arith.constant 0 : index
    %c24 = arith.constant 24 : index
    %18 = vector.load %arg8[%c0_41, %c0_42, %c24] : memref<16x16x36xf32, #tpu.memory_space<vmem>>, vector<16x16x4xf32>
    tpu.vector_store %arg8[%c0_41, %c0_42, %c24], %17 {strides = array<i32>} : memref<16x16x36xf32, #tpu.memory_space<vmem>>, vector<16x16x4xf32>,
    %c2_43 = arith.constant 2 : index
    %c1_44 = arith.constant 1 : index
    %c0_45 = arith.constant 0 : index
    %19 = vector.load %arg7[%c2_43, %c1_44, %c0_45] : memref<18x18x4xf32, #tpu.memory_space<vmem>>, vector<16x16x4xf32>
    %c0_46 = arith.constant 0 : index
    %c0_47 = arith.constant 0 : index
    %c28 = arith.constant 28 : index
    %20 = vector.load %arg8[%c0_46, %c0_47, %c28] : memref<16x16x36xf32, #tpu.memory_space<vmem>>, vector<16x16x4xf32>
    tpu.vector_store %arg8[%c0_46, %c0_47, %c28], %19 {strides = array<i32>} : memref<16x16x36xf32, #tpu.memory_space<vmem>>, vector<16x16x4xf32>,
    %c2_48 = arith.constant 2 : index
    %c2_49 = arith.constant 2 : index
    %c0_50 = arith.constant 0 : index
    %21 = vector.load %arg7[%c2_48, %c2_49, %c0_50] : memref<18x18x4xf32, #tpu.memory_space<vmem>>, vector<16x16x4xf32>
    %c0_51 = arith.constant 0 : index
    %c0_52 = arith.constant 0 : index
    %c32 = arith.constant 32 : index
    %22 = vector.load %arg8[%c0_51, %c0_52, %c32] : memref<16x16x36xf32, #tpu.memory_space<vmem>>, vector<16x16x4xf32>
    tpu.vector_store %arg8[%c0_51, %c0_52, %c32], %21 {strides = array<i32>} : memref<16x16x36xf32, #tpu.memory_space<vmem>>, vector<16x16x4xf32>,
    %c0_53 = arith.constant 0 : index
    %c0_54 = arith.constant 0 : index
    %c0_55 = arith.constant 0 : index
    %23 = vector.load %arg8[%c0_53, %c0_54, %c0_55] : memref<16x16x36xf32, #tpu.memory_space<vmem>>, vector<16x16x36xf32>
    %c0_56 = arith.constant 0 : index
    %c0_57 = arith.constant 0 : index
    %24 = vector.load %arg2[%c0_56, %c0_57] : memref<36x16xf32, #tpu.memory_space<vmem>>, vector<36x16xf32>
    %cst_58 = arith.constant dense<0.000000e+00> : vector<16x16x16xf32>
    %25 = tpu.matmul %23, %24, %cst_58 {dimension_numbers = #tpu.dot_dimension_numbers<[2], [0], [0, 1], [1], [0, 0, 0, 1, 1, 1], [], []>} : vector<16x16x36xf32>, vector<36x16xf32>, vector<16x16x16xf32> -> vector<16x16x16xf32>
    %c0_59 = arith.constant 0 : index
    %c0_60 = arith.constant 0 : index
    %26 = vector.load %arg3[%c0_59, %c0_60] : memref<1x16xf32, #tpu.memory_space<vmem>>, vector<1x16xf32>
    %27 = vector.shape_cast %26 : vector<1x16xf32> to vector<16xf32>
    %28 = vector.shape_cast %27 : vector<16xf32> to vector<1x1x16xf32>
    %29 = vector.broadcast %28 : vector<1x1x16xf32> to vector<16x16x16xf32>
    %30 = arith.addf %25, %29 : vector<16x16x16xf32>
    %cst_61 = arith.constant 0.000000e+00 : f32
    %31 = vector.broadcast %cst_61 : f32 to vector<4x18x18x4xf32>
    %c0_62 = arith.constant 0 : index
    %c0_63 = arith.constant 0 : index
    %c0_64 = arith.constant 0 : index
    %c0_65 = arith.constant 0 : index
    %32 = vector.load %arg9[%c0_62, %c0_63, %c0_64, %c0_65] : memref<4x18x18x4xf32, #tpu.memory_space<vmem>>, vector<4x18x18x4xf32>
    tpu.vector_store %arg9[%c0_62, %c0_63, %c0_64, %c0_65], %31 {strides = array<i32>} : memref<4x18x18x4xf32, #tpu.memory_space<vmem>>, vector<4x18x18x4xf32>,
    %33 = vector.extract_strided_slice %30 {offsets = [0, 0, 0], sizes = [16, 16, 4], strides = [1, 1, 1]} : vector<16x16x16xf32> to vector<16x16x4xf32>
    %c0_66 = arith.constant 0 : index
    %c1_67 = arith.constant 1 : index
    %c1_68 = arith.constant 1 : index
    %c0_69 = arith.constant 0 : index
    %34 = vector.load %arg9[%c0_66, %c1_67, %c1_68, %c0_69] : memref<4x18x18x4xf32, #tpu.memory_space<vmem>>, vector<1x16x16x4xf32>
    %35 = vector.shape_cast %34 : vector<1x16x16x4xf32> to vector<16x16x4xf32>
    %36 = vector.shape_cast %33 : vector<16x16x4xf32> to vector<1x16x16x4xf32>
    tpu.vector_store %arg9[%c0_66, %c1_67, %c1_68, %c0_69], %36 {strides = array<i32>} : memref<4x18x18x4xf32, #tpu.memory_space<vmem>>, vector<1x16x16x4xf32>,
    %37 = vector.extract_strided_slice %30 {offsets = [0, 0, 4], sizes = [16, 16, 4], strides = [1, 1, 1]} : vector<16x16x16xf32> to vector<16x16x4xf32>
    %c1_70 = arith.constant 1 : index
    %c1_71 = arith.constant 1 : index
    %c1_72 = arith.constant 1 : index
    %c0_73 = arith.constant 0 : index
    %38 = vector.load %arg9[%c1_70, %c1_71, %c1_72, %c0_73] : memref<4x18x18x4xf32, #tpu.memory_space<vmem>>, vector<1x16x16x4xf32>
    %39 = vector.shape_cast %38 : vector<1x16x16x4xf32> to vector<16x16x4xf32>
    %40 = vector.shape_cast %37 : vector<16x16x4xf32> to vector<1x16x16x4xf32>
    tpu.vector_store %arg9[%c1_70, %c1_71, %c1_72, %c0_73], %40 {strides = array<i32>} : memref<4x18x18x4xf32, #tpu.memory_space<vmem>>, vector<1x16x16x4xf32>,
    %41 = vector.extract_strided_slice %30 {offsets = [0, 0, 8], sizes = [16, 16, 4], strides = [1, 1, 1]} : vector<16x16x16xf32> to vector<16x16x4xf32>
    %c2_74 = arith.constant 2 : index
    %c1_75 = arith.constant 1 : index
    %c1_76 = arith.constant 1 : index
    %c0_77 = arith.constant 0 : index
    %42 = vector.load %arg9[%c2_74, %c1_75, %c1_76, %c0_77] : memref<4x18x18x4xf32, #tpu.memory_space<vmem>>, vector<1x16x16x4xf32>
    %43 = vector.shape_cast %42 : vector<1x16x16x4xf32> to vector<16x16x4xf32>
    %44 = vector.shape_cast %41 : vector<16x16x4xf32> to vector<1x16x16x4xf32>
    tpu.vector_store %arg9[%c2_74, %c1_75, %c1_76, %c0_77], %44 {strides = array<i32>} : memref<4x18x18x4xf32, #tpu.memory_space<vmem>>, vector<1x16x16x4xf32>,
    %45 = vector.extract_strided_slice %30 {offsets = [0, 0, 12], sizes = [16, 16, 4], strides = [1, 1, 1]} : vector<16x16x16xf32> to vector<16x16x4xf32>
    %c3 = arith.constant 3 : index
    %c1_78 = arith.constant 1 : index
    %c1_79 = arith.constant 1 : index
    %c0_80 = arith.constant 0 : index
    %46 = vector.load %arg9[%c3, %c1_78, %c1_79, %c0_80] : memref<4x18x18x4xf32, #tpu.memory_space<vmem>>, vector<1x16x16x4xf32>
    %47 = vector.shape_cast %46 : vector<1x16x16x4xf32> to vector<16x16x4xf32>
    %48 = vector.shape_cast %45 : vector<16x16x4xf32> to vector<1x16x16x4xf32>
    tpu.vector_store %arg9[%c3, %c1_78, %c1_79, %c0_80], %48 {strides = array<i32>} : memref<4x18x18x4xf32, #tpu.memory_space<vmem>>, vector<1x16x16x4xf32>,
    %c3_81 = arith.constant 3 : index
    %c0_82 = arith.constant 0 : index
    %c0_83 = arith.constant 0 : index
    %c0_84 = arith.constant 0 : index
    %49 = vector.load %arg9[%c3_81, %c0_82, %c0_83, %c0_84] : memref<4x18x18x4xf32, #tpu.memory_space<vmem>>, vector<1x16x16x4xf32>
    %50 = vector.shape_cast %49 : vector<1x16x16x4xf32> to vector<16x16x4xf32>
    %c0_85 = arith.constant 0 : index
    %c0_86 = arith.constant 0 : index
    %c0_87 = arith.constant 0 : index
    %51 = vector.load %arg8[%c0_85, %c0_86, %c0_87] : memref<16x16x36xf32, #tpu.memory_space<vmem>>, vector<16x16x4xf32>
    tpu.vector_store %arg8[%c0_85, %c0_86, %c0_87], %50 {strides = array<i32>} : memref<16x16x36xf32, #tpu.memory_space<vmem>>, vector<16x16x4xf32>,
    %c2_88 = arith.constant 2 : index
    %c0_89 = arith.constant 0 : index
    %c1_90 = arith.constant 1 : index
    %c0_91 = arith.constant 0 : index
    %52 = vector.load %arg9[%c2_88, %c0_89, %c1_90, %c0_91] : memref<4x18x18x4xf32, #tpu.memory_space<vmem>>, vector<1x16x16x4xf32>
    %53 = vector.shape_cast %52 : vector<1x16x16x4xf32> to vector<16x16x4xf32>
    %c0_92 = arith.constant 0 : index
    %c0_93 = arith.constant 0 : index
    %c4_94 = arith.constant 4 : index
    %54 = vector.load %arg8[%c0_92, %c0_93, %c4_94] : memref<16x16x36xf32, #tpu.memory_space<vmem>>, vector<16x16x4xf32>
    tpu.vector_store %arg8[%c0_92, %c0_93, %c4_94], %53 {strides = array<i32>} : memref<16x16x36xf32, #tpu.memory_space<vmem>>, vector<16x16x4xf32>,
    %c3_95 = arith.constant 3 : index
    %c0_96 = arith.constant 0 : index
    %c1_97 = arith.constant 1 : index
    %c0_98 = arith.constant 0 : index
    %55 = vector.load %arg9[%c3_95, %c0_96, %c1_97, %c0_98] : memref<4x18x18x4xf32, #tpu.memory_space<vmem>>, vector<1x16x16x4xf32>
    %56 = vector.shape_cast %55 : vector<1x16x16x4xf32> to vector<16x16x4xf32>
    %c0_99 = arith.constant 0 : index
    %c0_100 = arith.constant 0 : index
    %c8_101 = arith.constant 8 : index
    %57 = vector.load %arg8[%c0_99, %c0_100, %c8_101] : memref<16x16x36xf32, #tpu.memory_space<vmem>>, vector<16x16x4xf32>
    tpu.vector_store %arg8[%c0_99, %c0_100, %c8_101], %56 {strides = array<i32>} : memref<16x16x36xf32, #tpu.memory_space<vmem>>, vector<16x16x4xf32>,
    %c1_102 = arith.constant 1 : index
    %c1_103 = arith.constant 1 : index
    %c0_104 = arith.constant 0 : index
    %c0_105 = arith.constant 0 : index
    %58 = vector.load %arg9[%c1_102, %c1_103, %c0_104, %c0_105] : memref<4x18x18x4xf32, #tpu.memory_space<vmem>>, vector<1x16x16x4xf32>
    %59 = vector.shape_cast %58 : vector<1x16x16x4xf32> to vector<16x16x4xf32>
    %c0_106 = arith.constant 0 : index
    %c0_107 = arith.constant 0 : index
    %c12_108 = arith.constant 12 : index
    %60 = vector.load %arg8[%c0_106, %c0_107, %c12_108] : memref<16x16x36xf32, #tpu.memory_space<vmem>>, vector<16x16x4xf32>
    tpu.vector_store %arg8[%c0_106, %c0_107, %c12_108], %59 {strides = array<i32>} : memref<16x16x36xf32, #tpu.memory_space<vmem>>, vector<16x16x4xf32>,
    %c0_109 = arith.constant 0 : index
    %c1_110 = arith.constant 1 : index
    %c1_111 = arith.constant 1 : index
    %c0_112 = arith.constant 0 : index
    %61 = vector.load %arg9[%c0_109, %c1_110, %c1_111, %c0_112] : memref<4x18x18x4xf32, #tpu.memory_space<vmem>>, vector<1x16x16x4xf32>
    %62 = vector.shape_cast %61 : vector<1x16x16x4xf32> to vector<16x16x4xf32>
    %c0_113 = arith.constant 0 : index
    %c0_114 = arith.constant 0 : index
    %c16_115 = arith.constant 16 : index
    %63 = vector.load %arg8[%c0_113, %c0_114, %c16_115] : memref<16x16x36xf32, #tpu.memory_space<vmem>>, vector<16x16x4xf32>
    tpu.vector_store %arg8[%c0_113, %c0_114, %c16_115], %62 {strides = array<i32>} : memref<16x16x36xf32, #tpu.memory_space<vmem>>, vector<16x16x4xf32>,
    %c1_116 = arith.constant 1 : index
    %c1_117 = arith.constant 1 : index
    %c1_118 = arith.constant 1 : index
    %c0_119 = arith.constant 0 : index
    %64 = vector.load %arg9[%c1_116, %c1_117, %c1_118, %c0_119] : memref<4x18x18x4xf32, #tpu.memory_space<vmem>>, vector<1x16x16x4xf32>
    %65 = vector.shape_cast %64 : vector<1x16x16x4xf32> to vector<16x16x4xf32>
    %c0_120 = arith.constant 0 : index
    %c0_121 = arith.constant 0 : index
    %c20_122 = arith.constant 20 : index
    %66 = vector.load %arg8[%c0_120, %c0_121, %c20_122] : memref<16x16x36xf32, #tpu.memory_space<vmem>>, vector<16x16x4xf32>
    tpu.vector_store %arg8[%c0_120, %c0_121, %c20_122], %65 {strides = array<i32>} : memref<16x16x36xf32, #tpu.memory_space<vmem>>, vector<16x16x4xf32>,
    %c3_123 = arith.constant 3 : index
    %c1_124 = arith.constant 1 : index
    %c0_125 = arith.constant 0 : index
    %c0_126 = arith.constant 0 : index
    %67 = vector.load %arg9[%c3_123, %c1_124, %c0_125, %c0_126] : memref<4x18x18x4xf32, #tpu.memory_space<vmem>>, vector<1x16x16x4xf32>
    %68 = vector.shape_cast %67 : vector<1x16x16x4xf32> to vector<16x16x4xf32>
    %c0_127 = arith.constant 0 : index
    %c0_128 = arith.constant 0 : index
    %c24_129 = arith.constant 24 : index
    %69 = vector.load %arg8[%c0_127, %c0_128, %c24_129] : memref<16x16x36xf32, #tpu.memory_space<vmem>>, vector<16x16x4xf32>
    tpu.vector_store %arg8[%c0_127, %c0_128, %c24_129], %68 {strides = array<i32>} : memref<16x16x36xf32, #tpu.memory_space<vmem>>, vector<16x16x4xf32>,
    %c2_130 = arith.constant 2 : index
    %c1_131 = arith.constant 1 : index
    %c1_132 = arith.constant 1 : index
    %c0_133 = arith.constant 0 : index
    %70 = vector.load %arg9[%c2_130, %c1_131, %c1_132, %c0_133] : memref<4x18x18x4xf32, #tpu.memory_space<vmem>>, vector<1x16x16x4xf32>
    %71 = vector.shape_cast %70 : vector<1x16x16x4xf32> to vector<16x16x4xf32>
    %c0_134 = arith.constant 0 : index
    %c0_135 = arith.constant 0 : index
    %c28_136 = arith.constant 28 : index
    %72 = vector.load %arg8[%c0_134, %c0_135, %c28_136] : memref<16x16x36xf32, #tpu.memory_space<vmem>>, vector<16x16x4xf32>
    tpu.vector_store %arg8[%c0_134, %c0_135, %c28_136], %71 {strides = array<i32>} : memref<16x16x36xf32, #tpu.memory_space<vmem>>, vector<16x16x4xf32>,
    %c3_137 = arith.constant 3 : index
    %c1_138 = arith.constant 1 : index
    %c1_139 = arith.constant 1 : index
    %c0_140 = arith.constant 0 : index
    %73 = vector.load %arg9[%c3_137, %c1_138, %c1_139, %c0_140] : memref<4x18x18x4xf32, #tpu.memory_space<vmem>>, vector<1x16x16x4xf32>
    %74 = vector.shape_cast %73 : vector<1x16x16x4xf32> to vector<16x16x4xf32>
    %c0_141 = arith.constant 0 : index
    %c0_142 = arith.constant 0 : index
    %c32_143 = arith.constant 32 : index
    %75 = vector.load %arg8[%c0_141, %c0_142, %c32_143] : memref<16x16x36xf32, #tpu.memory_space<vmem>>, vector<16x16x4xf32>
    tpu.vector_store %arg8[%c0_141, %c0_142, %c32_143], %74 {strides = array<i32>} : memref<16x16x36xf32, #tpu.memory_space<vmem>>, vector<16x16x4xf32>,
    %c0_144 = arith.constant 0 : index
    %c0_145 = arith.constant 0 : index
    %c0_146 = arith.constant 0 : index
    %76 = vector.load %arg8[%c0_144, %c0_145, %c0_146] : memref<16x16x36xf32, #tpu.memory_space<vmem>>, vector<16x16x36xf32>
    %c0_147 = arith.constant 0 : index
    %c0_148 = arith.constant 0 : index
    %77 = vector.load %arg4[%c0_147, %c0_148] : memref<36x16xf32, #tpu.memory_space<vmem>>, vector<36x16xf32>
    %cst_149 = arith.constant dense<0.000000e+00> : vector<16x16x16xf32>
    %78 = tpu.matmul %76, %77, %cst_149 {dimension_numbers = #tpu.dot_dimension_numbers<[2], [0], [0, 1], [1], [0, 0, 0, 1, 1, 1], [], []>} : vector<16x16x36xf32>, vector<36x16xf32>, vector<16x16x16xf32> -> vector<16x16x16xf32>
    %c0_150 = arith.constant 0 : index
    %c0_151 = arith.constant 0 : index
    %79 = vector.load %arg5[%c0_150, %c0_151] : memref<1x16xf32, #tpu.memory_space<vmem>>, vector<1x16xf32>
    %80 = vector.shape_cast %79 : vector<1x16xf32> to vector<16xf32>
    %81 = vector.shape_cast %80 : vector<16xf32> to vector<1x1x16xf32>
    %82 = vector.broadcast %81 : vector<1x1x16xf32> to vector<16x16x16xf32>
    %83 = arith.addf %78, %82 : vector<16x16x16xf32>
    %c0_152 = arith.constant 0 : index
    %c0_153 = arith.constant 0 : index
    %c0_154 = arith.constant 0 : index
    %c0_155 = arith.constant 0 : index
    %84 = vector.load %arg6[%c0_152, %c0_153, %c0_154, %c0_155] : memref<1x16x16x64xf32, #tpu.memory_space<vmem>>, vector<1x16x16x16xf32>
    %85 = vector.shape_cast %84 : vector<1x16x16x16xf32> to vector<16x16x16xf32>
    %86 = vector.shape_cast %83 : vector<16x16x16xf32> to vector<1x16x16x16xf32>
    tpu.vector_store %arg6[%c0_152, %c0_153, %c0_154, %c0_155], %86 {strides = array<i32>} : memref<1x16x16x64xf32, #tpu.memory_space<vmem>>, vector<1x16x16x16xf32>,
    %c2_156 = arith.constant 2 : index
    %c0_157 = arith.constant 0 : index
    %c1_158 = arith.constant 1 : index
    %c0_159 = arith.constant 0 : index
    %87 = vector.load %arg9[%c2_156, %c0_157, %c1_158, %c0_159] : memref<4x18x18x4xf32, #tpu.memory_space<vmem>>, vector<1x16x16x4xf32>
    %88 = vector.shape_cast %87 : vector<1x16x16x4xf32> to vector<16x16x4xf32>
    %c0_160 = arith.constant 0 : index
    %c0_161 = arith.constant 0 : index
    %c0_162 = arith.constant 0 : index
    %89 = vector.load %arg8[%c0_160, %c0_161, %c0_162] : memref<16x16x36xf32, #tpu.memory_space<vmem>>, vector<16x16x4xf32>
    tpu.vector_store %arg8[%c0_160, %c0_161, %c0_162], %88 {strides = array<i32>} : memref<16x16x36xf32, #tpu.memory_space<vmem>>, vector<16x16x4xf32>,
    %c3_163 = arith.constant 3 : index
    %c0_164 = arith.constant 0 : index
    %c1_165 = arith.constant 1 : index
    %c0_166 = arith.constant 0 : index
    %90 = vector.load %arg9[%c3_163, %c0_164, %c1_165, %c0_166] : memref<4x18x18x4xf32, #tpu.memory_space<vmem>>, vector<1x16x16x4xf32>
    %91 = vector.shape_cast %90 : vector<1x16x16x4xf32> to vector<16x16x4xf32>
    %c0_167 = arith.constant 0 : index
    %c0_168 = arith.constant 0 : index
    %c4_169 = arith.constant 4 : index
    %92 = vector.load %arg8[%c0_167, %c0_168, %c4_169] : memref<16x16x36xf32, #tpu.memory_space<vmem>>, vector<16x16x4xf32>
    tpu.vector_store %arg8[%c0_167, %c0_168, %c4_169], %91 {strides = array<i32>} : memref<16x16x36xf32, #tpu.memory_space<vmem>>, vector<16x16x4xf32>,
    %c2_170 = arith.constant 2 : index
    %c0_171 = arith.constant 0 : index
    %c2_172 = arith.constant 2 : index
    %c0_173 = arith.constant 0 : index
    %93 = vector.load %arg9[%c2_170, %c0_171, %c2_172, %c0_173] : memref<4x18x18x4xf32, #tpu.memory_space<vmem>>, vector<1x16x16x4xf32>
    %94 = vector.shape_cast %93 : vector<1x16x16x4xf32> to vector<16x16x4xf32>
    %c0_174 = arith.constant 0 : index
    %c0_175 = arith.constant 0 : index
    %c8_176 = arith.constant 8 : index
    %95 = vector.load %arg8[%c0_174, %c0_175, %c8_176] : memref<16x16x36xf32, #tpu.memory_space<vmem>>, vector<16x16x4xf32>
    tpu.vector_store %arg8[%c0_174, %c0_175, %c8_176], %94 {strides = array<i32>} : memref<16x16x36xf32, #tpu.memory_space<vmem>>, vector<16x16x4xf32>,
    %c0_177 = arith.constant 0 : index
    %c1_178 = arith.constant 1 : index
    %c1_179 = arith.constant 1 : index
    %c0_180 = arith.constant 0 : index
    %96 = vector.load %arg9[%c0_177, %c1_178, %c1_179, %c0_180] : memref<4x18x18x4xf32, #tpu.memory_space<vmem>>, vector<1x16x16x4xf32>
    %97 = vector.shape_cast %96 : vector<1x16x16x4xf32> to vector<16x16x4xf32>
    %c0_181 = arith.constant 0 : index
    %c0_182 = arith.constant 0 : index
    %c12_183 = arith.constant 12 : index
    %98 = vector.load %arg8[%c0_181, %c0_182, %c12_183] : memref<16x16x36xf32, #tpu.memory_space<vmem>>, vector<16x16x4xf32>
    tpu.vector_store %arg8[%c0_181, %c0_182, %c12_183], %97 {strides = array<i32>} : memref<16x16x36xf32, #tpu.memory_space<vmem>>, vector<16x16x4xf32>,
    %c1_184 = arith.constant 1 : index
    %c1_185 = arith.constant 1 : index
    %c1_186 = arith.constant 1 : index
    %c0_187 = arith.constant 0 : index
    %99 = vector.load %arg9[%c1_184, %c1_185, %c1_186, %c0_187] : memref<4x18x18x4xf32, #tpu.memory_space<vmem>>, vector<1x16x16x4xf32>
    %100 = vector.shape_cast %99 : vector<1x16x16x4xf32> to vector<16x16x4xf32>
    %c0_188 = arith.constant 0 : index
    %c0_189 = arith.constant 0 : index
    %c16_190 = arith.constant 16 : index
    %101 = vector.load %arg8[%c0_188, %c0_189, %c16_190] : memref<16x16x36xf32, #tpu.memory_space<vmem>>, vector<16x16x4xf32>
    tpu.vector_store %arg8[%c0_188, %c0_189, %c16_190], %100 {strides = array<i32>} : memref<16x16x36xf32, #tpu.memory_space<vmem>>, vector<16x16x4xf32>,
    %c0_191 = arith.constant 0 : index
    %c1_192 = arith.constant 1 : index
    %c2_193 = arith.constant 2 : index
    %c0_194 = arith.constant 0 : index
    %102 = vector.load %arg9[%c0_191, %c1_192, %c2_193, %c0_194] : memref<4x18x18x4xf32, #tpu.memory_space<vmem>>, vector<1x16x16x4xf32>
    %103 = vector.shape_cast %102 : vector<1x16x16x4xf32> to vector<16x16x4xf32>
    %c0_195 = arith.constant 0 : index
    %c0_196 = arith.constant 0 : index
    %c20_197 = arith.constant 20 : index
    %104 = vector.load %arg8[%c0_195, %c0_196, %c20_197] : memref<16x16x36xf32, #tpu.memory_space<vmem>>, vector<16x16x4xf32>
    tpu.vector_store %arg8[%c0_195, %c0_196, %c20_197], %103 {strides = array<i32>} : memref<16x16x36xf32, #tpu.memory_space<vmem>>, vector<16x16x4xf32>,
    %c2_198 = arith.constant 2 : index
    %c1_199 = arith.constant 1 : index
    %c1_200 = arith.constant 1 : index
    %c0_201 = arith.constant 0 : index
    %105 = vector.load %arg9[%c2_198, %c1_199, %c1_200, %c0_201] : memref<4x18x18x4xf32, #tpu.memory_space<vmem>>, vector<1x16x16x4xf32>
    %106 = vector.shape_cast %105 : vector<1x16x16x4xf32> to vector<16x16x4xf32>
    %c0_202 = arith.constant 0 : index
    %c0_203 = arith.constant 0 : index
    %c24_204 = arith.constant 24 : index
    %107 = vector.load %arg8[%c0_202, %c0_203, %c24_204] : memref<16x16x36xf32, #tpu.memory_space<vmem>>, vector<16x16x4xf32>
    tpu.vector_store %arg8[%c0_202, %c0_203, %c24_204], %106 {strides = array<i32>} : memref<16x16x36xf32, #tpu.memory_space<vmem>>, vector<16x16x4xf32>,
    %c3_205 = arith.constant 3 : index
    %c1_206 = arith.constant 1 : index
    %c1_207 = arith.constant 1 : index
    %c0_208 = arith.constant 0 : index
    %108 = vector.load %arg9[%c3_205, %c1_206, %c1_207, %c0_208] : memref<4x18x18x4xf32, #tpu.memory_space<vmem>>, vector<1x16x16x4xf32>
    %109 = vector.shape_cast %108 : vector<1x16x16x4xf32> to vector<16x16x4xf32>
    %c0_209 = arith.constant 0 : index
    %c0_210 = arith.constant 0 : index
    %c28_211 = arith.constant 28 : index
    %110 = vector.load %arg8[%c0_209, %c0_210, %c28_211] : memref<16x16x36xf32, #tpu.memory_space<vmem>>, vector<16x16x4xf32>
    tpu.vector_store %arg8[%c0_209, %c0_210, %c28_211], %109 {strides = array<i32>} : memref<16x16x36xf32, #tpu.memory_space<vmem>>, vector<16x16x4xf32>,
    %c2_212 = arith.constant 2 : index
    %c1_213 = arith.constant 1 : index
    %c2_214 = arith.constant 2 : index
    %c0_215 = arith.constant 0 : index
    %111 = vector.load %arg9[%c2_212, %c1_213, %c2_214, %c0_215] : memref<4x18x18x4xf32, #tpu.memory_space<vmem>>, vector<1x16x16x4xf32>
    %112 = vector.shape_cast %111 : vector<1x16x16x4xf32> to vector<16x16x4xf32>
    %c0_216 = arith.constant 0 : index
    %c0_217 = arith.constant 0 : index
    %c32_218 = arith.constant 32 : index
    %113 = vector.load %arg8[%c0_216, %c0_217, %c32_218] : memref<16x16x36xf32, #tpu.memory_space<vmem>>, vector<16x16x4xf32>
    tpu.vector_store %arg8[%c0_216, %c0_217, %c32_218], %112 {strides = array<i32>} : memref<16x16x36xf32, #tpu.memory_space<vmem>>, vector<16x16x4xf32>,
    %c0_219 = arith.constant 0 : index
    %c0_220 = arith.constant 0 : index
    %c0_221 = arith.constant 0 : index
    %114 = vector.load %arg8[%c0_219, %c0_220, %c0_221] : memref<16x16x36xf32, #tpu.memory_space<vmem>>, vector<16x16x36xf32>
    %c0_222 = arith.constant 0 : index
    %c0_223 = arith.constant 0 : index
    %115 = vector.load %arg4[%c0_222, %c0_223] : memref<36x16xf32, #tpu.memory_space<vmem>>, vector<36x16xf32>
    %cst_224 = arith.constant dense<0.000000e+00> : vector<16x16x16xf32>
    %116 = tpu.matmul %114, %115, %cst_224 {dimension_numbers = #tpu.dot_dimension_numbers<[2], [0], [0, 1], [1], [0, 0, 0, 1, 1, 1], [], []>} : vector<16x16x36xf32>, vector<36x16xf32>, vector<16x16x16xf32> -> vector<16x16x16xf32>
    %c0_225 = arith.constant 0 : index
    %c0_226 = arith.constant 0 : index
    %117 = vector.load %arg5[%c0_225, %c0_226] : memref<1x16xf32, #tpu.memory_space<vmem>>, vector<1x16xf32>
    %118 = vector.shape_cast %117 : vector<1x16xf32> to vector<16xf32>
    %119 = vector.shape_cast %118 : vector<16xf32> to vector<1x1x16xf32>
    %120 = vector.broadcast %119 : vector<1x1x16xf32> to vector<16x16x16xf32>
    %121 = arith.addf %116, %120 : vector<16x16x16xf32>
    %c0_227 = arith.constant 0 : index
    %c0_228 = arith.constant 0 : index
    %c0_229 = arith.constant 0 : index
    %c16_230 = arith.constant 16 : index
    %122 = vector.load %arg6[%c0_227, %c0_228, %c0_229, %c16_230] : memref<1x16x16x64xf32, #tpu.memory_space<vmem>>, vector<1x16x16x16xf32>
    %123 = vector.shape_cast %122 : vector<1x16x16x16xf32> to vector<16x16x16xf32>
    %124 = vector.shape_cast %121 : vector<16x16x16xf32> to vector<1x16x16x16xf32>
    tpu.vector_store %arg6[%c0_227, %c0_228, %c0_229, %c16_230], %124 {strides = array<i32>} : memref<1x16x16x64xf32, #tpu.memory_space<vmem>>, vector<1x16x16x16xf32>,
    %c1_231 = arith.constant 1 : index
    %c1_232 = arith.constant 1 : index
    %c0_233 = arith.constant 0 : index
    %c0_234 = arith.constant 0 : index
    %125 = vector.load %arg9[%c1_231, %c1_232, %c0_233, %c0_234] : memref<4x18x18x4xf32, #tpu.memory_space<vmem>>, vector<1x16x16x4xf32>
    %126 = vector.shape_cast %125 : vector<1x16x16x4xf32> to vector<16x16x4xf32>
    %c0_235 = arith.constant 0 : index
    %c0_236 = arith.constant 0 : index
    %c0_237 = arith.constant 0 : index
    %127 = vector.load %arg8[%c0_235, %c0_236, %c0_237] : memref<16x16x36xf32, #tpu.memory_space<vmem>>, vector<16x16x4xf32>
    tpu.vector_store %arg8[%c0_235, %c0_236, %c0_237], %126 {strides = array<i32>} : memref<16x16x36xf32, #tpu.memory_space<vmem>>, vector<16x16x4xf32>,
    %c0_238 = arith.constant 0 : index
    %c1_239 = arith.constant 1 : index
    %c1_240 = arith.constant 1 : index
    %c0_241 = arith.constant 0 : index
    %128 = vector.load %arg9[%c0_238, %c1_239, %c1_240, %c0_241] : memref<4x18x18x4xf32, #tpu.memory_space<vmem>>, vector<1x16x16x4xf32>
    %129 = vector.shape_cast %128 : vector<1x16x16x4xf32> to vector<16x16x4xf32>
    %c0_242 = arith.constant 0 : index
    %c0_243 = arith.constant 0 : index
    %c4_244 = arith.constant 4 : index
    %130 = vector.load %arg8[%c0_242, %c0_243, %c4_244] : memref<16x16x36xf32, #tpu.memory_space<vmem>>, vector<16x16x4xf32>
    tpu.vector_store %arg8[%c0_242, %c0_243, %c4_244], %129 {strides = array<i32>} : memref<16x16x36xf32, #tpu.memory_space<vmem>>, vector<16x16x4xf32>,
    %c1_245 = arith.constant 1 : index
    %c1_246 = arith.constant 1 : index
    %c1_247 = arith.constant 1 : index
    %c0_248 = arith.constant 0 : index
    %131 = vector.load %arg9[%c1_245, %c1_246, %c1_247, %c0_248] : memref<4x18x18x4xf32, #tpu.memory_space<vmem>>, vector<1x16x16x4xf32>
    %132 = vector.shape_cast %131 : vector<1x16x16x4xf32> to vector<16x16x4xf32>
    %c0_249 = arith.constant 0 : index
    %c0_250 = arith.constant 0 : index
    %c8_251 = arith.constant 8 : index
    %133 = vector.load %arg8[%c0_249, %c0_250, %c8_251] : memref<16x16x36xf32, #tpu.memory_space<vmem>>, vector<16x16x4xf32>
    tpu.vector_store %arg8[%c0_249, %c0_250, %c8_251], %132 {strides = array<i32>} : memref<16x16x36xf32, #tpu.memory_space<vmem>>, vector<16x16x4xf32>,
    %c3_252 = arith.constant 3 : index
    %c1_253 = arith.constant 1 : index
    %c0_254 = arith.constant 0 : index
    %c0_255 = arith.constant 0 : index
    %134 = vector.load %arg9[%c3_252, %c1_253, %c0_254, %c0_255] : memref<4x18x18x4xf32, #tpu.memory_space<vmem>>, vector<1x16x16x4xf32>
    %135 = vector.shape_cast %134 : vector<1x16x16x4xf32> to vector<16x16x4xf32>
    %c0_256 = arith.constant 0 : index
    %c0_257 = arith.constant 0 : index
    %c12_258 = arith.constant 12 : index
    %136 = vector.load %arg8[%c0_256, %c0_257, %c12_258] : memref<16x16x36xf32, #tpu.memory_space<vmem>>, vector<16x16x4xf32>
    tpu.vector_store %arg8[%c0_256, %c0_257, %c12_258], %135 {strides = array<i32>} : memref<16x16x36xf32, #tpu.memory_space<vmem>>, vector<16x16x4xf32>,
    %c2_259 = arith.constant 2 : index
    %c1_260 = arith.constant 1 : index
    %c1_261 = arith.constant 1 : index
    %c0_262 = arith.constant 0 : index
    %137 = vector.load %arg9[%c2_259, %c1_260, %c1_261, %c0_262] : memref<4x18x18x4xf32, #tpu.memory_space<vmem>>, vector<1x16x16x4xf32>
    %138 = vector.shape_cast %137 : vector<1x16x16x4xf32> to vector<16x16x4xf32>
    %c0_263 = arith.constant 0 : index
    %c0_264 = arith.constant 0 : index
    %c16_265 = arith.constant 16 : index
    %139 = vector.load %arg8[%c0_263, %c0_264, %c16_265] : memref<16x16x36xf32, #tpu.memory_space<vmem>>, vector<16x16x4xf32>
    tpu.vector_store %arg8[%c0_263, %c0_264, %c16_265], %138 {strides = array<i32>} : memref<16x16x36xf32, #tpu.memory_space<vmem>>, vector<16x16x4xf32>,
    %c3_266 = arith.constant 3 : index
    %c1_267 = arith.constant 1 : index
    %c1_268 = arith.constant 1 : index
    %c0_269 = arith.constant 0 : index
    %140 = vector.load %arg9[%c3_266, %c1_267, %c1_268, %c0_269] : memref<4x18x18x4xf32, #tpu.memory_space<vmem>>, vector<1x16x16x4xf32>
    %141 = vector.shape_cast %140 : vector<1x16x16x4xf32> to vector<16x16x4xf32>
    %c0_270 = arith.constant 0 : index
    %c0_271 = arith.constant 0 : index
    %c20_272 = arith.constant 20 : index
    %142 = vector.load %arg8[%c0_270, %c0_271, %c20_272] : memref<16x16x36xf32, #tpu.memory_space<vmem>>, vector<16x16x4xf32>
    tpu.vector_store %arg8[%c0_270, %c0_271, %c20_272], %141 {strides = array<i32>} : memref<16x16x36xf32, #tpu.memory_space<vmem>>, vector<16x16x4xf32>,
    %c1_273 = arith.constant 1 : index
    %c2_274 = arith.constant 2 : index
    %c0_275 = arith.constant 0 : index
    %c0_276 = arith.constant 0 : index
    %143 = vector.load %arg9[%c1_273, %c2_274, %c0_275, %c0_276] : memref<4x18x18x4xf32, #tpu.memory_space<vmem>>, vector<1x16x16x4xf32>
    %144 = vector.shape_cast %143 : vector<1x16x16x4xf32> to vector<16x16x4xf32>
    %c0_277 = arith.constant 0 : index
    %c0_278 = arith.constant 0 : index
    %c24_279 = arith.constant 24 : index
    %145 = vector.load %arg8[%c0_277, %c0_278, %c24_279] : memref<16x16x36xf32, #tpu.memory_space<vmem>>, vector<16x16x4xf32>
    tpu.vector_store %arg8[%c0_277, %c0_278, %c24_279], %144 {strides = array<i32>} : memref<16x16x36xf32, #tpu.memory_space<vmem>>, vector<16x16x4xf32>,
    %c0_280 = arith.constant 0 : index
    %c2_281 = arith.constant 2 : index
    %c1_282 = arith.constant 1 : index
    %c0_283 = arith.constant 0 : index
    %146 = vector.load %arg9[%c0_280, %c2_281, %c1_282, %c0_283] : memref<4x18x18x4xf32, #tpu.memory_space<vmem>>, vector<1x16x16x4xf32>
    %147 = vector.shape_cast %146 : vector<1x16x16x4xf32> to vector<16x16x4xf32>
    %c0_284 = arith.constant 0 : index
    %c0_285 = arith.constant 0 : index
    %c28_286 = arith.constant 28 : index
    %148 = vector.load %arg8[%c0_284, %c0_285, %c28_286] : memref<16x16x36xf32, #tpu.memory_space<vmem>>, vector<16x16x4xf32>
    tpu.vector_store %arg8[%c0_284, %c0_285, %c28_286], %147 {strides = array<i32>} : memref<16x16x36xf32, #tpu.memory_space<vmem>>, vector<16x16x4xf32>,
    %c1_287 = arith.constant 1 : index
    %c2_288 = arith.constant 2 : index
    %c1_289 = arith.constant 1 : index
    %c0_290 = arith.constant 0 : index
    %149 = vector.load %arg9[%c1_287, %c2_288, %c1_289, %c0_290] : memref<4x18x18x4xf32, #tpu.memory_space<vmem>>, vector<1x16x16x4xf32>
    %150 = vector.shape_cast %149 : vector<1x16x16x4xf32> to vector<16x16x4xf32>
    %c0_291 = arith.constant 0 : index
    %c0_292 = arith.constant 0 : index
    %c32_293 = arith.constant 32 : index
    %151 = vector.load %arg8[%c0_291, %c0_292, %c32_293] : memref<16x16x36xf32, #tpu.memory_space<vmem>>, vector<16x16x4xf32>
    tpu.vector_store %arg8[%c0_291, %c0_292, %c32_293], %150 {strides = array<i32>} : memref<16x16x36xf32, #tpu.memory_space<vmem>>, vector<16x16x4xf32>,
    %c0_294 = arith.constant 0 : index
    %c0_295 = arith.constant 0 : index
    %c0_296 = arith.constant 0 : index
    %152 = vector.load %arg8[%c0_294, %c0_295, %c0_296] : memref<16x16x36xf32, #tpu.memory_space<vmem>>, vector<16x16x36xf32>
    %c0_297 = arith.constant 0 : index
    %c0_298 = arith.constant 0 : index
    %153 = vector.load %arg4[%c0_297, %c0_298] : memref<36x16xf32, #tpu.memory_space<vmem>>, vector<36x16xf32>
    %cst_299 = arith.constant dense<0.000000e+00> : vector<16x16x16xf32>
    %154 = tpu.matmul %152, %153, %cst_299 {dimension_numbers = #tpu.dot_dimension_numbers<[2], [0], [0, 1], [1], [0, 0, 0, 1, 1, 1], [], []>} : vector<16x16x36xf32>, vector<36x16xf32>, vector<16x16x16xf32> -> vector<16x16x16xf32>
    %c0_300 = arith.constant 0 : index
    %c0_301 = arith.constant 0 : index
    %155 = vector.load %arg5[%c0_300, %c0_301] : memref<1x16xf32, #tpu.memory_space<vmem>>, vector<1x16xf32>
    %156 = vector.shape_cast %155 : vector<1x16xf32> to vector<16xf32>
    %157 = vector.shape_cast %156 : vector<16xf32> to vector<1x1x16xf32>
    %158 = vector.broadcast %157 : vector<1x1x16xf32> to vector<16x16x16xf32>
    %159 = arith.addf %154, %158 : vector<16x16x16xf32>
    %c0_302 = arith.constant 0 : index
    %c0_303 = arith.constant 0 : index
    %c0_304 = arith.constant 0 : index
    %c32_305 = arith.constant 32 : index
    %160 = vector.load %arg6[%c0_302, %c0_303, %c0_304, %c32_305] : memref<1x16x16x64xf32, #tpu.memory_space<vmem>>, vector<1x16x16x16xf32>
    %161 = vector.shape_cast %160 : vector<1x16x16x16xf32> to vector<16x16x16xf32>
    %162 = vector.shape_cast %159 : vector<16x16x16xf32> to vector<1x16x16x16xf32>
    tpu.vector_store %arg6[%c0_302, %c0_303, %c0_304, %c32_305], %162 {strides = array<i32>} : memref<1x16x16x64xf32, #tpu.memory_space<vmem>>, vector<1x16x16x16xf32>,
    %c0_306 = arith.constant 0 : index
    %c1_307 = arith.constant 1 : index
    %c1_308 = arith.constant 1 : index
    %c0_309 = arith.constant 0 : index
    %163 = vector.load %arg9[%c0_306, %c1_307, %c1_308, %c0_309] : memref<4x18x18x4xf32, #tpu.memory_space<vmem>>, vector<1x16x16x4xf32>
    %164 = vector.shape_cast %163 : vector<1x16x16x4xf32> to vector<16x16x4xf32>
    %c0_310 = arith.constant 0 : index
    %c0_311 = arith.constant 0 : index
    %c0_312 = arith.constant 0 : index
    %165 = vector.load %arg8[%c0_310, %c0_311, %c0_312] : memref<16x16x36xf32, #tpu.memory_space<vmem>>, vector<16x16x4xf32>
    tpu.vector_store %arg8[%c0_310, %c0_311, %c0_312], %164 {strides = array<i32>} : memref<16x16x36xf32, #tpu.memory_space<vmem>>, vector<16x16x4xf32>,
    %c1_313 = arith.constant 1 : index
    %c1_314 = arith.constant 1 : index
    %c1_315 = arith.constant 1 : index
    %c0_316 = arith.constant 0 : index
    %166 = vector.load %arg9[%c1_313, %c1_314, %c1_315, %c0_316] : memref<4x18x18x4xf32, #tpu.memory_space<vmem>>, vector<1x16x16x4xf32>
    %167 = vector.shape_cast %166 : vector<1x16x16x4xf32> to vector<16x16x4xf32>
    %c0_317 = arith.constant 0 : index
    %c0_318 = arith.constant 0 : index
    %c4_319 = arith.constant 4 : index
    %168 = vector.load %arg8[%c0_317, %c0_318, %c4_319] : memref<16x16x36xf32, #tpu.memory_space<vmem>>, vector<16x16x4xf32>
    tpu.vector_store %arg8[%c0_317, %c0_318, %c4_319], %167 {strides = array<i32>} : memref<16x16x36xf32, #tpu.memory_space<vmem>>, vector<16x16x4xf32>,
    %c0_320 = arith.constant 0 : index
    %c1_321 = arith.constant 1 : index
    %c2_322 = arith.constant 2 : index
    %c0_323 = arith.constant 0 : index
    %169 = vector.load %arg9[%c0_320, %c1_321, %c2_322, %c0_323] : memref<4x18x18x4xf32, #tpu.memory_space<vmem>>, vector<1x16x16x4xf32>
    %170 = vector.shape_cast %169 : vector<1x16x16x4xf32> to vector<16x16x4xf32>
    %c0_324 = arith.constant 0 : index
    %c0_325 = arith.constant 0 : index
    %c8_326 = arith.constant 8 : index
    %171 = vector.load %arg8[%c0_324, %c0_325, %c8_326] : memref<16x16x36xf32, #tpu.memory_space<vmem>>, vector<16x16x4xf32>
    tpu.vector_store %arg8[%c0_324, %c0_325, %c8_326], %170 {strides = array<i32>} : memref<16x16x36xf32, #tpu.memory_space<vmem>>, vector<16x16x4xf32>,
    %c2_327 = arith.constant 2 : index
    %c1_328 = arith.constant 1 : index
    %c1_329 = arith.constant 1 : index
    %c0_330 = arith.constant 0 : index
    %172 = vector.load %arg9[%c2_327, %c1_328, %c1_329, %c0_330] : memref<4x18x18x4xf32, #tpu.memory_space<vmem>>, vector<1x16x16x4xf32>
    %173 = vector.shape_cast %172 : vector<1x16x16x4xf32> to vector<16x16x4xf32>
    %c0_331 = arith.constant 0 : index
    %c0_332 = arith.constant 0 : index
    %c12_333 = arith.constant 12 : index
    %174 = vector.load %arg8[%c0_331, %c0_332, %c12_333] : memref<16x16x36xf32, #tpu.memory_space<vmem>>, vector<16x16x4xf32>
    tpu.vector_store %arg8[%c0_331, %c0_332, %c12_333], %173 {strides = array<i32>} : memref<16x16x36xf32, #tpu.memory_space<vmem>>, vector<16x16x4xf32>,
    %c3_334 = arith.constant 3 : index
    %c1_335 = arith.constant 1 : index
    %c1_336 = arith.constant 1 : index
    %c0_337 = arith.constant 0 : index
    %175 = vector.load %arg9[%c3_334, %c1_335, %c1_336, %c0_337] : memref<4x18x18x4xf32, #tpu.memory_space<vmem>>, vector<1x16x16x4xf32>
    %176 = vector.shape_cast %175 : vector<1x16x16x4xf32> to vector<16x16x4xf32>
    %c0_338 = arith.constant 0 : index
    %c0_339 = arith.constant 0 : index
    %c16_340 = arith.constant 16 : index
    %177 = vector.load %arg8[%c0_338, %c0_339, %c16_340] : memref<16x16x36xf32, #tpu.memory_space<vmem>>, vector<16x16x4xf32>
    tpu.vector_store %arg8[%c0_338, %c0_339, %c16_340], %176 {strides = array<i32>} : memref<16x16x36xf32, #tpu.memory_space<vmem>>, vector<16x16x4xf32>,
    %c2_341 = arith.constant 2 : index
    %c1_342 = arith.constant 1 : index
    %c2_343 = arith.constant 2 : index
    %c0_344 = arith.constant 0 : index
    %178 = vector.load %arg9[%c2_341, %c1_342, %c2_343, %c0_344] : memref<4x18x18x4xf32, #tpu.memory_space<vmem>>, vector<1x16x16x4xf32>
    %179 = vector.shape_cast %178 : vector<1x16x16x4xf32> to vector<16x16x4xf32>
    %c0_345 = arith.constant 0 : index
    %c0_346 = arith.constant 0 : index
    %c20_347 = arith.constant 20 : index
    %180 = vector.load %arg8[%c0_345, %c0_346, %c20_347] : memref<16x16x36xf32, #tpu.memory_space<vmem>>, vector<16x16x4xf32>
    tpu.vector_store %arg8[%c0_345, %c0_346, %c20_347], %179 {strides = array<i32>} : memref<16x16x36xf32, #tpu.memory_space<vmem>>, vector<16x16x4xf32>,
    %c0_348 = arith.constant 0 : index
    %c2_349 = arith.constant 2 : index
    %c1_350 = arith.constant 1 : index
    %c0_351 = arith.constant 0 : index
    %181 = vector.load %arg9[%c0_348, %c2_349, %c1_350, %c0_351] : memref<4x18x18x4xf32, #tpu.memory_space<vmem>>, vector<1x16x16x4xf32>
    %182 = vector.shape_cast %181 : vector<1x16x16x4xf32> to vector<16x16x4xf32>
    %c0_352 = arith.constant 0 : index
    %c0_353 = arith.constant 0 : index
    %c24_354 = arith.constant 24 : index
    %183 = vector.load %arg8[%c0_352, %c0_353, %c24_354] : memref<16x16x36xf32, #tpu.memory_space<vmem>>, vector<16x16x4xf32>
    tpu.vector_store %arg8[%c0_352, %c0_353, %c24_354], %182 {strides = array<i32>} : memref<16x16x36xf32, #tpu.memory_space<vmem>>, vector<16x16x4xf32>,
    %c1_355 = arith.constant 1 : index
    %c2_356 = arith.constant 2 : index
    %c1_357 = arith.constant 1 : index
    %c0_358 = arith.constant 0 : index
    %184 = vector.load %arg9[%c1_355, %c2_356, %c1_357, %c0_358] : memref<4x18x18x4xf32, #tpu.memory_space<vmem>>, vector<1x16x16x4xf32>
    %185 = vector.shape_cast %184 : vector<1x16x16x4xf32> to vector<16x16x4xf32>
    %c0_359 = arith.constant 0 : index
    %c0_360 = arith.constant 0 : index
    %c28_361 = arith.constant 28 : index
    %186 = vector.load %arg8[%c0_359, %c0_360, %c28_361] : memref<16x16x36xf32, #tpu.memory_space<vmem>>, vector<16x16x4xf32>
    tpu.vector_store %arg8[%c0_359, %c0_360, %c28_361], %185 {strides = array<i32>} : memref<16x16x36xf32, #tpu.memory_space<vmem>>, vector<16x16x4xf32>,
    %c0_362 = arith.constant 0 : index
    %c2_363 = arith.constant 2 : index
    %c2_364 = arith.constant 2 : index
    %c0_365 = arith.constant 0 : index
    %187 = vector.load %arg9[%c0_362, %c2_363, %c2_364, %c0_365] : memref<4x18x18x4xf32, #tpu.memory_space<vmem>>, vector<1x16x16x4xf32>
    %188 = vector.shape_cast %187 : vector<1x16x16x4xf32> to vector<16x16x4xf32>
    %c0_366 = arith.constant 0 : index
    %c0_367 = arith.constant 0 : index
    %c32_368 = arith.constant 32 : index
    %189 = vector.load %arg8[%c0_366, %c0_367, %c32_368] : memref<16x16x36xf32, #tpu.memory_space<vmem>>, vector<16x16x4xf32>
    tpu.vector_store %arg8[%c0_366, %c0_367, %c32_368], %188 {strides = array<i32>} : memref<16x16x36xf32, #tpu.memory_space<vmem>>, vector<16x16x4xf32>,
    %c0_369 = arith.constant 0 : index
    %c0_370 = arith.constant 0 : index
    %c0_371 = arith.constant 0 : index
    %190 = vector.load %arg8[%c0_369, %c0_370, %c0_371] : memref<16x16x36xf32, #tpu.memory_space<vmem>>, vector<16x16x36xf32>
    %c0_372 = arith.constant 0 : index
    %c0_373 = arith.constant 0 : index
    %191 = vector.load %arg4[%c0_372, %c0_373] : memref<36x16xf32, #tpu.memory_space<vmem>>, vector<36x16xf32>
    %cst_374 = arith.constant dense<0.000000e+00> : vector<16x16x16xf32>
    %192 = tpu.matmul %190, %191, %cst_374 {dimension_numbers = #tpu.dot_dimension_numbers<[2], [0], [0, 1], [1], [0, 0, 0, 1, 1, 1], [], []>} : vector<16x16x36xf32>, vector<36x16xf32>, vector<16x16x16xf32> -> vector<16x16x16xf32>
    %c0_375 = arith.constant 0 : index
    %c0_376 = arith.constant 0 : index
    %193 = vector.load %arg5[%c0_375, %c0_376] : memref<1x16xf32, #tpu.memory_space<vmem>>, vector<1x16xf32>
    %194 = vector.shape_cast %193 : vector<1x16xf32> to vector<16xf32>
    %195 = vector.shape_cast %194 : vector<16xf32> to vector<1x1x16xf32>
    %196 = vector.broadcast %195 : vector<1x1x16xf32> to vector<16x16x16xf32>
    %197 = arith.addf %192, %196 : vector<16x16x16xf32>
    %c0_377 = arith.constant 0 : index
    %c0_378 = arith.constant 0 : index
    %c0_379 = arith.constant 0 : index
    %c48 = arith.constant 48 : index
    %198 = vector.load %arg6[%c0_377, %c0_378, %c0_379, %c48] : memref<1x16x16x64xf32, #tpu.memory_space<vmem>>, vector<1x16x16x16xf32>
    %199 = vector.shape_cast %198 : vector<1x16x16x16xf32> to vector<16x16x16xf32>
    %200 = vector.shape_cast %197 : vector<16x16x16xf32> to vector<1x16x16x16xf32>
    tpu.vector_store %arg6[%c0_377, %c0_378, %c0_379, %c48], %200 {strides = array<i32>} : memref<1x16x16x64xf32, #tpu.memory_space<vmem>>, vector<1x16x16x16xf32>,
    return
  }
  func.func @transform_0(%arg0: i32) -> (i32, i32, i32, i32) {
    %c0_i32 = arith.constant 0 : i32
    %c0_i32_0 = arith.constant 0 : i32
    %c0_i32_1 = arith.constant 0 : i32
    %c0_i32_2 = arith.constant 0 : i32
    return %arg0, %c0_i32, %c0_i32_0, %c0_i32_1 : i32, i32, i32, i32
  }
  func.func @transform_1(%arg0: i32) -> (i32, i32) {
    %c0_i32 = arith.constant 0 : i32
    %c0_i32_0 = arith.constant 0 : i32
    %c0_i32_1 = arith.constant 0 : i32
    return %c0_i32, %c0_i32_0 : i32, i32
  }
  func.func @transform_2(%arg0: i32) -> (i32, i32) {
    %c0_i32 = arith.constant 0 : i32
    %c0_i32_0 = arith.constant 0 : i32
    %c0_i32_1 = arith.constant 0 : i32
    return %c0_i32, %c0_i32_0 : i32, i32
  }
  func.func @transform_3(%arg0: i32) -> (i32, i32) {
    %c0_i32 = arith.constant 0 : i32
    %c0_i32_0 = arith.constant 0 : i32
    %c0_i32_1 = arith.constant 0 : i32
    return %c0_i32, %c0_i32_0 : i32, i32
  }
  func.func @transform_4(%arg0: i32) -> (i32, i32) {
    %c0_i32 = arith.constant 0 : i32
    %c0_i32_0 = arith.constant 0 : i32
    %c0_i32_1 = arith.constant 0 : i32
    return %c0_i32, %c0_i32_0 : i32, i32
  }
  func.func @transform_5(%arg0: i32) -> (i32, i32, i32, i32) {
    %c0_i32 = arith.constant 0 : i32
    %c0_i32_0 = arith.constant 0 : i32
    %c0_i32_1 = arith.constant 0 : i32
    %c0_i32_2 = arith.constant 0 : i32
    return %arg0, %c0_i32, %c0_i32_0, %c0_i32_1 : i32, i32, i32, i32
  }
}

</mosaic_0001>

<llo_original>
// kernel: upsample_block_forward.1
$region0: #{upsample_block_forward.1}
  #allocation0 [shape = 'u32[]', space=smem, size = 0x4, offset = 0x4, fixed_abs, tag = 'smem constant byte address 0x4 - core index']
  #allocation1 [shape = 'u32[144,128]{1,0:T(1,128)}', space=vmem, size = 0x12000, scoped, tag = 'internal scratch']
  #allocation2 [shape = 'f32[18,18,4]{2,1,0:T(8,128)}', space=vmem, size = 0x36000, scoped, tag = 'scratch operand']
  #allocation3 [shape = 'f32[16,16,36]{2,1,0:T(8,128)}', space=vmem, size = 0x20000, scoped, tag = 'scratch operand']
  #allocation4 [shape = 'f32[4,18,18,4]{3,2,1,0:T(8,128)}', space=vmem, size = 0xd8000, scoped, tag = 'scratch operand']
  %s0 = inlined_call_operand.vmem [shape: f32[2,16,16,4], index: 0, kind: input, shape index: {}]
  %s1 = inlined_call_operand.vmem [shape: f32[36,16], index: 1, kind: input, shape index: {}]
  %s2 = inlined_call_operand.vmem [shape: f32[1,16], index: 2, kind: input, shape index: {}]
  %s3 = inlined_call_operand.vmem [shape: f32[36,16], index: 3, kind: input, shape index: {}]
  %s4 = inlined_call_operand.vmem [shape: f32[1,16], index: 4, kind: input, shape index: {}]
  %s5 = inlined_call_operand.vmem [shape: f32[2,16,16,64], index: 5, kind: output, shape index: {}]
  %s6 = sld [smem:[#allocation0]]
  $region53: #{upsample_block_forward.1} parent=0
    _
  %s8 = ssub.s32 1, %s6
  %s9 = scalar_select 0, %s8, %s6
  loop: start=0, step=1, limit=4
  $region2: #{upsample_block_forward.1} parent=0 // loop_pre_header
    _
  $region3: #{upsample_block_forward.1} parent=0 // loop_header
    %s11 = sphi 0, %s15
    %p12 = scmp.ge.s32.totalorder %s11, 4
    %s21 = sphi 0, %s23
    %s24 = sphi 0, %s21
    %s25 = sphi 0, %s24
    %s41 = sphi 0, %s25
    %s45 = sphi 0, %s45
    %s47 = sphi 0, %s45
    %s48 = sphi 0, %s47
    %s62 = sphi 0, %s48
    %s66 = sphi 0, %s66
    %s68 = sphi 0, %s66
    %s69 = sphi 0, %s68
    %s83 = sphi 0, %s69
    %s87 = sphi 0, %s87
    %s89 = sphi 0, %s87
    %s90 = sphi 0, %s89
    %s104 = sphi 0, %s90
    %s108 = sphi 0, %s108
    %s110 = sphi 0, %s108
    %s111 = sphi 0, %s110
    %s125 = sphi 0, %s111
    %s131 = sphi 0, %s133
    %s134 = sphi 0, %s131
    %s135 = sphi 0, %s134
    %s151 = sphi 0, %s135
  $region4: #{upsample_block_forward.1} parent=0 // loop_header_branch
    %14 = sbr.rel (%p12) target = $region8
  $region5: #{upsample_block_forward.1} parent=0 // loop_body
    %s16 = ssub.s32 %s11, 1
    %s17 = ssub.s32 %s11, 2
    %s18 = sadd.s32 %s11, 1
    %s19 = ssub.s32 %s11, %s18
    %p20 = scmp.eq.s32.totalorder %s19, 0
    %s22 = sadd.s32 %s21, 1
    %s23 = scalar_select %p20, %s21, %s22
    %p26 = pneg %p20
    %p27 = scmp.eq.s32.totalorder %s11, 1
    %p28 = por %p26, %p27
    %p29 = scmp.ne.s32.totalorder %s21, %s24
    %p30 = scmp.eq.s32.totalorder %s11, 0
    %p31 = por %p29, %p30
    %p32 = scmp.ne.s32.totalorder %s21, %s24
    %p33 = scmp.eq.s32.totalorder %s16, 1
    %p34 = por %p32, %p33
    %p35 = scmp.ne.s32.totalorder %s24, %s25
    %p36 = scmp.eq.s32.totalorder %s16, 0
    %p37 = por %p35, %p36
    %p38 = scmp.ne.s32.totalorder %s24, %s25
    %p39 = scmp.eq.s32.totalorder %s17, 1
    %p40 = por %p38, %p39
    %p42 = scmp.ne.s32.totalorder %s25, %s41
    %p43 = scmp.eq.s32.totalorder %s17, 0
    %p44 = por %p42, %p43
    %s46 = sadd.s32 %s45, 1
    %p49 = scmp.eq.s32.totalorder %s11, 1
    %p50 = scmp.ne.s32.totalorder %s45, %s47
    %p51 = scmp.eq.s32.totalorder %s11, 0
    %p52 = por %p50, %p51
    %p53 = scmp.ne.s32.totalorder %s45, %s47
    %p54 = scmp.eq.s32.totalorder %s16, 1
    %p55 = por %p53, %p54
    %p56 = scmp.ne.s32.totalorder %s47, %s48
    %p57 = scmp.eq.s32.totalorder %s16, 0
    %p58 = por %p56, %p57
    %p59 = scmp.ne.s32.totalorder %s47, %s48
    %p60 = scmp.eq.s32.totalorder %s17, 1
    %p61 = por %p59, %p60
    %p63 = scmp.ne.s32.totalorder %s48, %s62
    %p64 = scmp.eq.s32.totalorder %s17, 0
    %p65 = por %p63, %p64
    %s67 = sadd.s32 %s66, 1
    %p70 = scmp.eq.s32.totalorder %s11, 1
    %p71 = scmp.ne.s32.totalorder %s66, %s68
    %p72 = scmp.eq.s32.totalorder %s11, 0
    %p73 = por %p71, %p72
    %p74 = scmp.ne.s32.totalorder %s66, %s68
    %p75 = scmp.eq.s32.totalorder %s16, 1
    %p76 = por %p74, %p75
    %p77 = scmp.ne.s32.totalorder %s68, %s69
    %p78 = scmp.eq.s32.totalorder %s16, 0
    %p79 = por %p77, %p78
    %p80 = scmp.ne.s32.totalorder %s68, %s69
    %p81 = scmp.eq.s32.totalorder %s17, 1
    %p82 = por %p80, %p81
    %p84 = scmp.ne.s32.totalorder %s69, %s83
    %p85 = scmp.eq.s32.totalorder %s17, 0
    %p86 = por %p84, %p85
    %s88 = sadd.s32 %s87, 1
    %p91 = scmp.eq.s32.totalorder %s11, 1
    %p92 = scmp.ne.s32.totalorder %s87, %s89
    %p93 = scmp.eq.s32.totalorder %s11, 0
    %p94 = por %p92, %p93
    %p95 = scmp.ne.s32.totalorder %s87, %s89
    %p96 = scmp.eq.s32.totalorder %s16, 1
    %p97 = por %p95, %p96
    %p98 = scmp.ne.s32.totalorder %s89, %s90
    %p99 = scmp.eq.s32.totalorder %s16, 0
    %p100 = por %p98, %p99
    %p101 = scmp.ne.s32.totalorder %s89, %s90
    %p102 = scmp.eq.s32.totalorder %s17, 1
    %p103 = por %p101, %p102
    %p105 = scmp.ne.s32.totalorder %s90, %s104
    %p106 = scmp.eq.s32.totalorder %s17, 0
    %p107 = por %p105, %p106
    %s109 = sadd.s32 %s108, 1
    %p112 = scmp.eq.s32.totalorder %s11, 1
    %p113 = scmp.ne.s32.totalorder %s108, %s110
    %p114 = scmp.eq.s32.totalorder %s11, 0
    %p115 = por %p113, %p114
    %p116 = scmp.ne.s32.totalorder %s108, %s110
    %p117 = scmp.eq.s32.totalorder %s16, 1
    %p118 = por %p116, %p117
    %p119 = scmp.ne.s32.totalorder %s110, %s111
    %p120 = scmp.eq.s32.totalorder %s16, 0
    %p121 = por %p119, %p120
    %p122 = scmp.ne.s32.totalorder %s110, %s111
    %p123 = scmp.eq.s32.totalorder %s17, 1
    %p124 = por %p122, %p123
    %p126 = scmp.ne.s32.totalorder %s111, %s125
    %p127 = scmp.eq.s32.totalorder %s17, 0
    %p128 = por %p126, %p127
    %s129 = ssub.s32 %s11, %s18
    %p130 = scmp.eq.s32.totalorder %s129, 0
    %s132 = sadd.s32 %s131, 1
    %s133 = scalar_select %p130, %s131, %s132
    %p136 = pneg %p130
    %p137 = scmp.eq.s32.totalorder %s11, 1
    %p138 = por %p136, %p137
    %p139 = scmp.ne.s32.totalorder %s131, %s134
    %p140 = scmp.eq.s32.totalorder %s11, 0
    %p141 = por %p139, %p140
    %p142 = scmp.ne.s32.totalorder %s131, %s134
    %p143 = scmp.eq.s32.totalorder %s16, 1
    %p144 = por %p142, %p143
    %p145 = scmp.ne.s32.totalorder %s134, %s135
    %p146 = scmp.eq.s32.totalorder %s16, 0
    %p147 = por %p145, %p146
    %p148 = scmp.ne.s32.totalorder %s134, %s135
    %p149 = scmp.eq.s32.totalorder %s17, 1
    %p150 = por %p148, %p149
    %p152 = scmp.ne.s32.totalorder %s135, %s151
    %p153 = scmp.eq.s32.totalorder %s17, 0
    %p154 = por %p152, %p153
    %p155 = scmp.le.s32.totalorder 1, %s11
    %p156 = scmp.lt.s32.totalorder %s11, 3
    %p157 = pnand %p155, %p156
    %p158 = pneg %p157
    // Predicated region
    $region9: #{upsample_block_forward.1} parent=5 // pred_check
      _
    $region10: #{upsample_block_forward.1} parent=5 // pred_check_branch
      %160 = sbr.rel (%p157) target = $region12
    $region11: #{upsample_block_forward.1} parent=5 // pred_region
      %s161 = ssub.s32 %s11, 1
      // Predicated region
      $region13: #{upsample_block_forward.1} parent=11 // pred_check
        %p162 = pneg %p58
      $region14: #{upsample_block_forward.1} parent=11 // pred_check_branch
        %164 = sbr.rel (%p162) target = $region16
      $region15: #{upsample_block_forward.1} parent=11 // pred_region
        _
      $region16: #{upsample_block_forward.1} parent=11 // pred_fallthru
        _
      // Predicated region
      $region17: #{upsample_block_forward.1} parent=11 // pred_check
        %p165 = pneg %p79
      $region18: #{upsample_block_forward.1} parent=11 // pred_check_branch
        %167 = sbr.rel (%p165) target = $region20
      $region19: #{upsample_block_forward.1} parent=11 // pred_region
        _
      $region20: #{upsample_block_forward.1} parent=11 // pred_fallthru
        _
      // Predicated region
      $region21: #{upsample_block_forward.1} parent=11 // pred_check
        %p168 = pneg %p100
      $region22: #{upsample_block_forward.1} parent=11 // pred_check_branch
        %170 = sbr.rel (%p168) target = $region24
      $region23: #{upsample_block_forward.1} parent=11 // pred_region
        _
      $region24: #{upsample_block_forward.1} parent=11 // pred_fallthru
        _
      // Predicated region
      $region25: #{upsample_block_forward.1} parent=11 // pred_check
        %p171 = pneg %p121
      $region26: #{upsample_block_forward.1} parent=11 // pred_check_branch
        %173 = sbr.rel (%p171) target = $region28
      $region27: #{upsample_block_forward.1} parent=11 // pred_region
        _
      $region28: #{upsample_block_forward.1} parent=11 // pred_fallthru
        _
    $region12: #{upsample_block_forward.1} parent=5 // pred_fallthru
      _
    %p174 = scmp.lt.s32.totalorder %s11, 2
    // Predicated region
    $region29: #{upsample_block_forward.1} parent=5 // pred_check
      %p175 = pneg %p174
    $region30: #{upsample_block_forward.1} parent=5 // pred_check_branch
      %177 = sbr.rel (%p175) target = $region32
    $region31: #{upsample_block_forward.1} parent=5 // pred_region
      // Predicated region
      $region33: #{upsample_block_forward.1} parent=31 // pred_check
        %p178 = pneg %p31
      $region34: #{upsample_block_forward.1} parent=31 // pred_check_branch
        %180 = sbr.rel (%p178) target = $region36
      $region35: #{upsample_block_forward.1} parent=31 // pred_region
        %p181 = scmp.lt.s32.totalorder %s11, 1
        %s182 = scalar_select %p181, %s11, 1
        %s183 = smul.addr %s182, 32
        %s184 = smul.addr %s183, 8
        %s185 = scalar_lea.vmem %s0, %s184
      $region36: #{upsample_block_forward.1} parent=31 // pred_fallthru
        _
    $region32: #{upsample_block_forward.1} parent=5 // pred_fallthru
      _
    %p186 = scmp.le.s32.totalorder 1, %s11
    %p187 = scmp.lt.s32.totalorder %s11, 3
    %p188 = pnand %p186, %p187
    %p189 = pneg %p188
    // Predicated region
    $region37: #{upsample_block_forward.1} parent=5 // pred_check
      _
    $region38: #{upsample_block_forward.1} parent=5 // pred_check_branch
      %191 = sbr.rel (%p188) target = $region40
    $region39: #{upsample_block_forward.1} parent=5 // pred_region
      %s192 = ssub.s32 %s11, 1
      %p193 = scmp.lt.s32.totalorder %s16, 1
      %s194 = scalar_select %p193, %s16, 1
      %s195 = smul.addr %s194, 32
      %s196 = smul.addr %s195, 8
      %s197 = scalar_lea.vmem %s0, %s196
      %p198 = pneg %p37
      %p199 = pneg %p34
      %p200 = pneg %p58
      %p201 = pneg %p55
      %p202 = pneg %p79
      %p203 = pneg %p76
      %p204 = pneg %p100
      %p205 = pneg %p97
      %p206 = pneg %p121
      %p207 = pneg %p118
      %p208 = pneg %p147
      %p209 = pneg %p144
      %p210 = scmp.lt.s32.totalorder %s16, 1
      %s211 = scalar_select %p210, %s16, 1
      %s212 = smul.addr %s211, 32
      %s213 = smul.addr %s212, 8
      %s214 = scalar_lea.vmem %s5, %s213
      %p215 = scmp.lt.s32.totalorder %s16, 1
      %s216 = scalar_select %p215, %s16, 1
      %s217 = smul.addr %s216, 32
      %s218 = smul.addr %s217, 8
      %s219 = scalar_lea.vmem %s0, %s218
      %p220 = scmp.lt.s32.totalorder %s16, 1
      %s221 = scalar_select %p220, %s16, 1
      %s222 = smul.addr %s221, 32
      %s223 = smul.addr %s222, 8
      %s224 = scalar_lea.vmem %s5, %s223
      %vm225 = vcmask 31744
      %226 = vst.msk [vmem:[#allocation2] sm:$0xff] %vm225, 0.0
      %227 = vst.msk [vmem:[#allocation2 + $0x8] sm:$0xff] %vm225, 0.0
      %vm228 = vcmask 25600
      %229 = vst.msk [vmem:[#allocation2 + $0x10] sm:$0x3] %vm228, 0.0
      %230 = vst.msk [vmem:[#allocation2 + $0x18] sm:$0xff] %vm225, 0.0
      %231 = vst.msk [vmem:[#allocation2 + $0x20] sm:$0xff] %vm225, 0.0
      %232 = vst.msk [vmem:[#allocation2 + $0x28] sm:$0x3] %vm228, 0.0
      %233 = vst.msk [vmem:[#allocation2 + $0x30] sm:$0xff] %vm225, 0.0
      %234 = vst.msk [vmem:[#allocation2 + $0x38] sm:$0xff] %vm225, 0.0
      %235 = vst.msk [vmem:[#allocation2 + $0x40] sm:$0x3] %vm228, 0.0
      %236 = vst.msk [vmem:[#allocation2 + $0x48] sm:$0xff] %vm225, 0.0
      %237 = vst.msk [vmem:[#allocation2 + $0x50] sm:$0xff] %vm225, 0.0
      %238 = vst.msk [vmem:[#allocation2 + $0x58] sm:$0x3] %vm228, 0.0
      %239 = vst.msk [vmem:[#allocation2 + $0x60] sm:$0xff] %vm225, 0.0
      %240 = vst.msk [vmem:[#allocation2 + $0x68] sm:$0xff] %vm225, 0.0
      %241 = vst.msk [vmem:[#allocation2 + $0x70] sm:$0x3] %vm228, 0.0
      %242 = vst.msk [vmem:[#allocation2 + $0x78] sm:$0xff] %vm225, 0.0
      %243 = vst.msk [vmem:[#allocation2 + $0x80] sm:$0xff] %vm225, 0.0
      %244 = vst.msk [vmem:[#allocation2 + $0x88] sm:$0x3] %vm228, 0.0
      %245 = vst.msk [vmem:[#allocation2 + $0x90] sm:$0xff] %vm225, 0.0
      %246 = vst.msk [vmem:[#allocation2 + $0x98] sm:$0xff] %vm225, 0.0
      %247 = vst.msk [vmem:[#allocation2 + $0xa0] sm:$0x3] %vm228, 0.0
      %248 = vst.msk [vmem:[#allocation2 + $0xa8] sm:$0xff] %vm225, 0.0
      %249 = vst.msk [vmem:[#allocation2 + $0xb0] sm:$0xff] %vm225, 0.0
      %250 = vst.msk [vmem:[#allocation2 + $0xb8] sm:$0x3] %vm228, 0.0
      %251 = vst.msk [vmem:[#allocation2 + $0xc0] sm:$0xff] %vm225, 0.0
      %252 = vst.msk [vmem:[#allocation2 + $0xc8] sm:$0xff] %vm225, 0.0
      %253 = vst.msk [vmem:[#allocation2 + $0xd0] sm:$0x3] %vm228, 0.0
      %254 = vst.msk [vmem:[#allocation2 + $0xd8] sm:$0xff] %vm225, 0.0
      %255 = vst.msk [vmem:[#allocation2 + $0xe0] sm:$0xff] %vm225, 0.0
      %256 = vst.msk [vmem:[#allocation2 + $0xe8] sm:$0x3] %vm228, 0.0
      %257 = vst.msk [vmem:[#allocation2 + $0xf0] sm:$0xff] %vm225, 0.0
      %258 = vst.msk [vmem:[#allocation2 + $0xf8] sm:$0xff] %vm225, 0.0
      %259 = vst.msk [vmem:[#allocation2 + $0x100] sm:$0x3] %vm228, 0.0
      %260 = vst.msk [vmem:[#allocation2 + $0x108] sm:$0xff] %vm225, 0.0
      %261 = vst.msk [vmem:[#allocation2 + $0x110] sm:$0xff] %vm225, 0.0
      %262 = vst.msk [vmem:[#allocation2 + $0x118] sm:$0x3] %vm228, 0.0
      %263 = vst.msk [vmem:[#allocation2 + $0x120] sm:$0xff] %vm225, 0.0
      %264 = vst.msk [vmem:[#allocation2 + $0x128] sm:$0xff] %vm225, 0.0
      %265 = vst.msk [vmem:[#allocation2 + $0x130] sm:$0x3] %vm228, 0.0
      %266 = vst.msk [vmem:[#allocation2 + $0x138] sm:$0xff] %vm225, 0.0
      %267 = vst.msk [vmem:[#allocation2 + $0x140] sm:$0xff] %vm225, 0.0
      %268 = vst.msk [vmem:[#allocation2 + $0x148] sm:$0x3] %vm228, 0.0
      %269 = vst.msk [vmem:[#allocation2 + $0x150] sm:$0xff] %vm225, 0.0
      %270 = vst.msk [vmem:[#allocation2 + $0x158] sm:$0xff] %vm225, 0.0
      %271 = vst.msk [vmem:[#allocation2 + $0x160] sm:$0x3] %vm228, 0.0
      %272 = vst.msk [vmem:[#allocation2 + $0x168] sm:$0xff] %vm225, 0.0
      %273 = vst.msk [vmem:[#allocation2 + $0x170] sm:$0xff] %vm225, 0.0
      %274 = vst.msk [vmem:[#allocation2 + $0x178] sm:$0x3] %vm228, 0.0
      %275 = vst.msk [vmem:[#allocation2 + $0x180] sm:$0xff] %vm225, 0.0
      %276 = vst.msk [vmem:[#allocation2 + $0x188] sm:$0xff] %vm225, 0.0
      %277 = vst.msk [vmem:[#allocation2 + $0x190] sm:$0x3] %vm228, 0.0
      %278 = vst.msk [vmem:[#allocation2 + $0x198] sm:$0xff] %vm225, 0.0
      %279 = vst.msk [vmem:[#allocation2 + $0x1a0] sm:$0xff] %vm225, 0.0
      %280 = vst.msk [vmem:[#allocation2 + $0x1a8] sm:$0x3] %vm228, 0.0
      %v281 = vld [vmem:[%s219] sm:$0xff]
      %v282 = vld [vmem:[%s219 + $0x8] sm:$0xff]
      %v283 = vld [vmem:[%s219 + $0x10] sm:$0xff]
      %v284 = vld [vmem:[%s219 + $0x18] sm:$0xff]
      %v285 = vld [vmem:[%s219 + $0x20] sm:$0xff]
      %v286 = vld [vmem:[%s219 + $0x28] sm:$0xff]
      %v287 = vld [vmem:[%s219 + $0x30] sm:$0xff]
      %v288 = vld [vmem:[%s219 + $0x38] sm:$0xff]
      %v289 = vld [vmem:[%s219 + $0x40] sm:$0xff]
      %v290 = vld [vmem:[%s219 + $0x48] sm:$0xff]
      %v291 = vld [vmem:[%s219 + $0x50] sm:$0xff]
      %v292 = vld [vmem:[%s219 + $0x58] sm:$0xff]
      %v293 = vld [vmem:[%s219 + $0x60] sm:$0xff]
      %v294 = vld [vmem:[%s219 + $0x68] sm:$0xff]
      %v295 = vld [vmem:[%s219 + $0x70] sm:$0xff]
      %v296 = vld [vmem:[%s219 + $0x78] sm:$0xff]
      %v297 = vld [vmem:[%s219 + $0x80] sm:$0xff]
      %v298 = vld [vmem:[%s219 + $0x88] sm:$0xff]
      %v299 = vld [vmem:[%s219 + $0x90] sm:$0xff]
      %v300 = vld [vmem:[%s219 + $0x98] sm:$0xff]
      %v301 = vld [vmem:[%s219 + $0xa0] sm:$0xff]
      %v302 = vld [vmem:[%s219 + $0xa8] sm:$0xff]
      %v303 = vld [vmem:[%s219 + $0xb0] sm:$0xff]
      %v304 = vld [vmem:[%s219 + $0xb8] sm:$0xff]
      %v305 = vld [vmem:[%s219 + $0xc0] sm:$0xff]
      %v306 = vld [vmem:[%s219 + $0xc8] sm:$0xff]
      %v307 = vld [vmem:[%s219 + $0xd0] sm:$0xff]
      %v308 = vld [vmem:[%s219 + $0xd8] sm:$0xff]
      %v309 = vld [vmem:[%s219 + $0xe0] sm:$0xff]
      %v310 = vld [vmem:[%s219 + $0xe8] sm:$0xff]
      %v311 = vld [vmem:[%s219 + $0xf0] sm:$0xff]
      %v312 = vld [vmem:[%s219 + $0xf8] sm:$0xff]
      %s313 = scalar_lea.vmem [#allocation2], 24
      %314 = vst.msk [vmem:[%s313 + $0x1] sm:$0xff] %vm225, %v281
      %315 = vst.msk [vmem:[%s313 + $0x9] sm:$0xff] %vm225, %v282
      %316 = vst.msk [vmem:[%s313 + $0x19] sm:$0xff] %vm225, %v283
      %317 = vst.msk [vmem:[%s313 + $0x21] sm:$0xff] %vm225, %v284
      %318 = vst.msk [vmem:[%s313 + $0x31] sm:$0xff] %vm225, %v285
      %319 = vst.msk [vmem:[%s313 + $0x39] sm:$0xff] %vm225, %v286
      %320 = vst.msk [vmem:[%s313 + $0x49] sm:$0xff] %vm225, %v287
      %321 = vst.msk [vmem:[%s313 + $0x51] sm:$0xff] %vm225, %v288
      %322 = vst.msk [vmem:[%s313 + $0x61] sm:$0xff] %vm225, %v289
      %323 = vst.msk [vmem:[%s313 + $0x69] sm:$0xff] %vm225, %v290
      %324 = vst.msk [vmem:[%s313 + $0x79] sm:$0xff] %vm225, %v291
      %325 = vst.msk [vmem:[%s313 + $0x81] sm:$0xff] %vm225, %v292
      %326 = vst.msk [vmem:[%s313 + $0x91] sm:$0xff] %vm225, %v293
      %327 = vst.msk [vmem:[%s313 + $0x99] sm:$0xff] %vm225, %v294
      %328 = vst.msk [vmem:[%s313 + $0xa9] sm:$0xff] %vm225, %v295
      %329 = vst.msk [vmem:[%s313 + $0xb1] sm:$0xff] %vm225, %v296
      %330 = vst.msk [vmem:[%s313 + $0xc1] sm:$0xff] %vm225, %v297
      %331 = vst.msk [vmem:[%s313 + $0xc9] sm:$0xff] %vm225, %v298
      %332 = vst.msk [vmem:[%s313 + $0xd9] sm:$0xff] %vm225, %v299
      %333 = vst.msk [vmem:[%s313 + $0xe1] sm:$0xff] %vm225, %v300
      %334 = vst.msk [vmem:[%s313 + $0xf1] sm:$0xff] %vm225, %v301
      %335 = vst.msk [vmem:[%s313 + $0xf9] sm:$0xff] %vm225, %v302
      %336 = vst.msk [vmem:[%s313 + $0x109] sm:$0xff] %vm225, %v303
      %337 = vst.msk [vmem:[%s313 + $0x111] sm:$0xff] %vm225, %v304
      %338 = vst.msk [vmem:[%s313 + $0x121] sm:$0xff] %vm225, %v305
      %339 = vst.msk [vmem:[%s313 + $0x129] sm:$0xff] %vm225, %v306
      %340 = vst.msk [vmem:[%s313 + $0x139] sm:$0xff] %vm225, %v307
      %341 = vst.msk [vmem:[%s313 + $0x141] sm:$0xff] %vm225, %v308
      %342 = vst.msk [vmem:[%s313 + $0x151] sm:$0xff] %vm225, %v309
      %343 = vst.msk [vmem:[%s313 + $0x159] sm:$0xff] %vm225, %v310
      %344 = vst.msk [vmem:[%s313 + $0x169] sm:$0xff] %vm225, %v311
      %345 = vst.msk [vmem:[%s313 + $0x171] sm:$0xff] %vm225, %v312
      %v346 = vld [vmem:[#allocation2] sm:$0xff]
      %v347 = vld [vmem:[#allocation2 + $0x8] sm:$0xff]
      %v348 = vld [vmem:[#allocation2 + $0x18] sm:$0xff]
      %v349 = vld [vmem:[#allocation2 + $0x20] sm:$0xff]
      %v350 = vld [vmem:[#allocation2 + $0x30] sm:$0xff]
      %v351 = vld [vmem:[#allocation2 + $0x38] sm:$0xff]
      %v352 = vld [vmem:[#allocation2 + $0x48] sm:$0xff]
      %v353 = vld [vmem:[#allocation2 + $0x50] sm:$0xff]
      %v354 = vld [vmem:[#allocation2 + $0x60] sm:$0xff]
      %v355 = vld [vmem:[#allocation2 + $0x68] sm:$0xff]
      %v356 = vld [vmem:[#allocation2 + $0x78] sm:$0xff]
      %v357 = vld [vmem:[#allocation2 + $0x80] sm:$0xff]
      %v358 = vld [vmem:[#allocation2 + $0x90] sm:$0xff]
      %v359 = vld [vmem:[#allocation2 + $0x98] sm:$0xff]
      %v360 = vld [vmem:[#allocation2 + $0xa8] sm:$0xff]
      %v361 = vld [vmem:[#allocation2 + $0xb0] sm:$0xff]
      %v362 = vld [vmem:[#allocation2 + $0xc0] sm:$0xff]
      %v363 = vld [vmem:[#allocation2 + $0xc8] sm:$0xff]
      %v364 = vld [vmem:[#allocation2 + $0xd8] sm:$0xff]
      %v365 = vld [vmem:[#allocation2 + $0xe0] sm:$0xff]
      %v366 = vld [vmem:[#allocation2 + $0xf0] sm:$0xff]
      %v367 = vld [vmem:[#allocation2 + $0xf8] sm:$0xff]
      %v368 = vld [vmem:[#allocation2 + $0x108] sm:$0xff]
      %v369 = vld [vmem:[#allocation2 + $0x110] sm:$0xff]
      %v370 = vld [vmem:[#allocation2 + $0x120] sm:$0xff]
      %v371 = vld [vmem:[#allocation2 + $0x128] sm:$0xff]
      %v372 = vld [vmem:[#allocation2 + $0x138] sm:$0xff]
      %v373 = vld [vmem:[#allocation2 + $0x140] sm:$0xff]
      %v374 = vld [vmem:[#allocation2 + $0x150] sm:$0xff]
      %v375 = vld [vmem:[#allocation2 + $0x158] sm:$0xff]
      %v376 = vld [vmem:[#allocation2 + $0x168] sm:$0xff]
      %v377 = vld [vmem:[#allocation2 + $0x170] sm:$0xff]
      %378 = vst.msk [vmem:[#allocation3] sm:$0xff] %vm225, %v346
      %379 = vst.msk [vmem:[#allocation3 + $0x8] sm:$0xff] %vm225, %v347
      %380 = vst.msk [vmem:[#allocation3 + $0x10] sm:$0xff] %vm225, %v348
      %381 = vst.msk [vmem:[#allocation3 + $0x18] sm:$0xff] %vm225, %v349
      %382 = vst.msk [vmem:[#allocation3 + $0x20] sm:$0xff] %vm225, %v350
      %383 = vst.msk [vmem:[#allocation3 + $0x28] sm:$0xff] %vm225, %v351
      %384 = vst.msk [vmem:[#allocation3 + $0x30] sm:$0xff] %vm225, %v352
      %385 = vst.msk [vmem:[#allocation3 + $0x38] sm:$0xff] %vm225, %v353
      %386 = vst.msk [vmem:[#allocation3 + $0x40] sm:$0xff] %vm225, %v354
      %387 = vst.msk [vmem:[#allocation3 + $0x48] sm:$0xff] %vm225, %v355
      %388 = vst.msk [vmem:[#allocation3 + $0x50] sm:$0xff] %vm225, %v356
      %389 = vst.msk [vmem:[#allocation3 + $0x58] sm:$0xff] %vm225, %v357
      %390 = vst.msk [vmem:[#allocation3 + $0x60] sm:$0xff] %vm225, %v358
      %391 = vst.msk [vmem:[#allocation3 + $0x68] sm:$0xff] %vm225, %v359
      %392 = vst.msk [vmem:[#allocation3 + $0x70] sm:$0xff] %vm225, %v360
      %393 = vst.msk [vmem:[#allocation3 + $0x78] sm:$0xff] %vm225, %v361
      %394 = vst.msk [vmem:[#allocation3 + $0x80] sm:$0xff] %vm225, %v362
      %395 = vst.msk [vmem:[#allocation3 + $0x88] sm:$0xff] %vm225, %v363
      %396 = vst.msk [vmem:[#allocation3 + $0x90] sm:$0xff] %vm225, %v364
      %397 = vst.msk [vmem:[#allocation3 + $0x98] sm:$0xff] %vm225, %v365
      %398 = vst.msk [vmem:[#allocation3 + $0xa0] sm:$0xff] %vm225, %v366
      %399 = vst.msk [vmem:[#allocation3 + $0xa8] sm:$0xff] %vm225, %v367
      %400 = vst.msk [vmem:[#allocation3 + $0xb0] sm:$0xff] %vm225, %v368
      %401 = vst.msk [vmem:[#allocation3 + $0xb8] sm:$0xff] %vm225, %v369
      %402 = vst.msk [vmem:[#allocation3 + $0xc0] sm:$0xff] %vm225, %v370
      %403 = vst.msk [vmem:[#allocation3 + $0xc8] sm:$0xff] %vm225, %v371
      %404 = vst.msk [vmem:[#allocation3 + $0xd0] sm:$0xff] %vm225, %v372
      %405 = vst.msk [vmem:[#allocation3 + $0xd8] sm:$0xff] %vm225, %v373
      %406 = vst.msk [vmem:[#allocation3 + $0xe0] sm:$0xff] %vm225, %v374
      %407 = vst.msk [vmem:[#allocation3 + $0xe8] sm:$0xff] %vm225, %v375
      %408 = vst.msk [vmem:[#allocation3 + $0xf0] sm:$0xff] %vm225, %v376
      %409 = vst.msk [vmem:[#allocation3 + $0xf8] sm:$0xff] %vm225, %v377
      %v410 = vld [vmem:[#allocation2 + $0x1] sm:$0xff]
      %v411 = vld [vmem:[#allocation2 + $0x9] sm:$0xff]
      %v412 = vld [vmem:[#allocation2 + $0x19] sm:$0xff]
      %v413 = vld [vmem:[#allocation2 + $0x21] sm:$0xff]
      %v414 = vld [vmem:[#allocation2 + $0x31] sm:$0xff]
      %v415 = vld [vmem:[#allocation2 + $0x39] sm:$0xff]
      %v416 = vld [vmem:[#allocation2 + $0x49] sm:$0xff]
      %v417 = vld [vmem:[#allocation2 + $0x51] sm:$0xff]
      %v418 = vld [vmem:[#allocation2 + $0x61] sm:$0xff]
      %v419 = vld [vmem:[#allocation2 + $0x69] sm:$0xff]
      %v420 = vld [vmem:[#allocation2 + $0x79] sm:$0xff]
      %v421 = vld [vmem:[#allocation2 + $0x81] sm:$0xff]
      %v422 = vld [vmem:[#allocation2 + $0x91] sm:$0xff]
      %v423 = vld [vmem:[#allocation2 + $0x99] sm:$0xff]
      %v424 = vld [vmem:[#allocation2 + $0xa9] sm:$0xff]
      %v425 = vld [vmem:[#allocation2 + $0xb1] sm:$0xff]
      %v426 = vld [vmem:[#allocation2 + $0xc1] sm:$0xff]
      %v427 = vld [vmem:[#allocation2 + $0xc9] sm:$0xff]
      %v428 = vld [vmem:[#allocation2 + $0xd9] sm:$0xff]
      %v429 = vld [vmem:[#allocation2 + $0xe1] sm:$0xff]
      %v430 = vld [vmem:[#allocation2 + $0xf1] sm:$0xff]
      %v431 = vld [vmem:[#allocation2 + $0xf9] sm:$0xff]
      %v432 = vld [vmem:[#allocation2 + $0x109] sm:$0xff]
      %v433 = vld [vmem:[#allocation2 + $0x111] sm:$0xff]
      %v434 = vld [vmem:[#allocation2 + $0x121] sm:$0xff]
      %v435 = vld [vmem:[#allocation2 + $0x129] sm:$0xff]
      %v436 = vld [vmem:[#allocation2 + $0x139] sm:$0xff]
      %v437 = vld [vmem:[#allocation2 + $0x141] sm:$0xff]
      %v438 = vld [vmem:[#allocation2 + $0x151] sm:$0xff]
      %v439 = vld [vmem:[#allocation2 + $0x159] sm:$0xff]
      %v440 = vld [vmem:[#allocation2 + $0x169] sm:$0xff]
      %v441 = vld [vmem:[#allocation2 + $0x171] sm:$0xff]
      %474 = vrot.lane.b32.xlu0 %v410, 4
      %v475 = vpop.permute.xlu0 %474
      %476 = vrot.lane.b32.xlu0 %v411, 4
      %v477 = vpop.permute.xlu0 %476
      %478 = vrot.lane.b32.xlu0 %v412, 4
      %v479 = vpop.permute.xlu0 %478
      %480 = vrot.lane.b32.xlu0 %v413, 4
      %v481 = vpop.permute.xlu0 %480
      %482 = vrot.lane.b32.xlu0 %v414, 4
      %v483 = vpop.permute.xlu0 %482
      %484 = vrot.lane.b32.xlu0 %v415, 4
      %v485 = vpop.permute.xlu0 %484
      %486 = vrot.lane.b32.xlu0 %v416, 4
      %v487 = vpop.permute.xlu0 %486
      %488 = vrot.lane.b32.xlu0 %v417, 4
      %v489 = vpop.permute.xlu0 %488
      %490 = vrot.lane.b32.xlu0 %v418, 4
      %v491 = vpop.permute.xlu0 %490
      %492 = vrot.lane.b32.xlu0 %v419, 4
      %v493 = vpop.permute.xlu0 %492
      %494 = vrot.lane.b32.xlu0 %v420, 4
      %v495 = vpop.permute.xlu0 %494
      %496 = vrot.lane.b32.xlu0 %v421, 4
      %v497 = vpop.permute.xlu0 %496
      %498 = vrot.lane.b32.xlu0 %v422, 4
      %v499 = vpop.permute.xlu0 %498
      %500 = vrot.lane.b32.xlu0 %v423, 4
      %v501 = vpop.permute.xlu0 %500
      %502 = vrot.lane.b32.xlu0 %v424, 4
      %v503 = vpop.permute.xlu0 %502
      %504 = vrot.lane.b32.xlu0 %v425, 4
      %v505 = vpop.permute.xlu0 %504
      %506 = vrot.lane.b32.xlu0 %v426, 4
      %v507 = vpop.permute.xlu0 %506
      %508 = vrot.lane.b32.xlu0 %v427, 4
      %v509 = vpop.permute.xlu0 %508
      %510 = vrot.lane.b32.xlu0 %v428, 4
      %v511 = vpop.permute.xlu0 %510
      %512 = vrot.lane.b32.xlu0 %v429, 4
      %v513 = vpop.permute.xlu0 %512
      %514 = vrot.lane.b32.xlu0 %v430, 4
      %v515 = vpop.permute.xlu0 %514
      %516 = vrot.lane.b32.xlu0 %v431, 4
      %v517 = vpop.permute.xlu0 %516
      %518 = vrot.lane.b32.xlu0 %v432, 4
      %v519 = vpop.permute.xlu0 %518
      %520 = vrot.lane.b32.xlu0 %v433, 4
      %v521 = vpop.permute.xlu0 %520
      %522 = vrot.lane.b32.xlu0 %v434, 4
      %v523 = vpop.permute.xlu0 %522
      %524 = vrot.lane.b32.xlu0 %v435, 4
      %v525 = vpop.permute.xlu0 %524
      %526 = vrot.lane.b32.xlu0 %v436, 4
      %v527 = vpop.permute.xlu0 %526
      %528 = vrot.lane.b32.xlu0 %v437, 4
      %v529 = vpop.permute.xlu0 %528
      %530 = vrot.lane.b32.xlu0 %v438, 4
      %v531 = vpop.permute.xlu0 %530
      %532 = vrot.lane.b32.xlu0 %v439, 4
      %v533 = vpop.permute.xlu0 %532
      %534 = vrot.lane.b32.xlu0 %v440, 4
      %v535 = vpop.permute.xlu0 %534
      %536 = vrot.lane.b32.xlu0 %v441, 4
      %v537 = vpop.permute.xlu0 %536
      %vm570 = vcmask 64544
      %571 = vst.msk [vmem:[#allocation3] sm:$0xff] %vm570, %v475
      %572 = vst.msk [vmem:[#allocation3 + $0x8] sm:$0xff] %vm570, %v477
      %573 = vst.msk [vmem:[#allocation3 + $0x10] sm:$0xff] %vm570, %v479
      %574 = vst.msk [vmem:[#allocation3 + $0x18] sm:$0xff] %vm570, %v481
      %575 = vst.msk [vmem:[#allocation3 + $0x20] sm:$0xff] %vm570, %v483
      %576 = vst.msk [vmem:[#allocation3 + $0x28] sm:$0xff] %vm570, %v485
      %577 = vst.msk [vmem:[#allocation3 + $0x30] sm:$0xff] %vm570, %v487
      %578 = vst.msk [vmem:[#allocation3 + $0x38] sm:$0xff] %vm570, %v489
      %579 = vst.msk [vmem:[#allocation3 + $0x40] sm:$0xff] %vm570, %v491
      %580 = vst.msk [vmem:[#allocation3 + $0x48] sm:$0xff] %vm570, %v493
      %581 = vst.msk [vmem:[#allocation3 + $0x50] sm:$0xff] %vm570, %v495
      %582 = vst.msk [vmem:[#allocation3 + $0x58] sm:$0xff] %vm570, %v497
      %583 = vst.msk [vmem:[#allocation3 + $0x60] sm:$0xff] %vm570, %v499
      %584 = vst.msk [vmem:[#allocation3 + $0x68] sm:$0xff] %vm570, %v501
      %585 = vst.msk [vmem:[#allocation3 + $0x70] sm:$0xff] %vm570, %v503
      %586 = vst.msk [vmem:[#allocation3 + $0x78] sm:$0xff] %vm570, %v505
      %587 = vst.msk [vmem:[#allocation3 + $0x80] sm:$0xff] %vm570, %v507
      %588 = vst.msk [vmem:[#allocation3 + $0x88] sm:$0xff] %vm570, %v509
      %589 = vst.msk [vmem:[#allocation3 + $0x90] sm:$0xff] %vm570, %v511
      %590 = vst.msk [vmem:[#allocation3 + $0x98] sm:$0xff] %vm570, %v513
      %591 = vst.msk [vmem:[#allocation3 + $0xa0] sm:$0xff] %vm570, %v515
      %592 = vst.msk [vmem:[#allocation3 + $0xa8] sm:$0xff] %vm570, %v517
      %593 = vst.msk [vmem:[#allocation3 + $0xb0] sm:$0xff] %vm570, %v519
      %594 = vst.msk [vmem:[#allocation3 + $0xb8] sm:$0xff] %vm570, %v521
      %595 = vst.msk [vmem:[#allocation3 + $0xc0] sm:$0xff] %vm570, %v523
      %596 = vst.msk [vmem:[#allocation3 + $0xc8] sm:$0xff] %vm570, %v525
      %597 = vst.msk [vmem:[#allocation3 + $0xd0] sm:$0xff] %vm570, %v527
      %598 = vst.msk [vmem:[#allocation3 + $0xd8] sm:$0xff] %vm570, %v529
      %599 = vst.msk [vmem:[#allocation3 + $0xe0] sm:$0xff] %vm570, %v531
      %600 = vst.msk [vmem:[#allocation3 + $0xe8] sm:$0xff] %vm570, %v533
      %601 = vst.msk [vmem:[#allocation3 + $0xf0] sm:$0xff] %vm570, %v535
      %602 = vst.msk [vmem:[#allocation3 + $0xf8] sm:$0xff] %vm570, %v537
      %v603 = vld [vmem:[#allocation2 + $0x2] sm:$0xff]
      %v604 = vld [vmem:[#allocation2 + $0xa] sm:$0xff]
      %v605 = vld [vmem:[#allocation2 + $0x1a] sm:$0xff]
      %v606 = vld [vmem:[#allocation2 + $0x22] sm:$0xff]
      %v607 = vld [vmem:[#allocation2 + $0x32] sm:$0xff]
      %v608 = vld [vmem:[#allocation2 + $0x3a] sm:$0xff]
      %v609 = vld [vmem:[#allocation2 + $0x4a] sm:$0xff]
      %v610 = vld [vmem:[#allocation2 + $0x52] sm:$0xff]
      %v611 = vld [vmem:[#allocation2 + $0x62] sm:$0xff]
      %v612 = vld [vmem:[#allocation2 + $0x6a] sm:$0xff]
      %v613 = vld [vmem:[#allocation2 + $0x7a] sm:$0xff]
      %v614 = vld [vmem:[#allocation2 + $0x82] sm:$0xff]
      %v615 = vld [vmem:[#allocation2 + $0x92] sm:$0xff]
      %v616 = vld [vmem:[#allocation2 + $0x9a] sm:$0xff]
      %v617 = vld [vmem:[#allocation2 + $0xaa] sm:$0xff]
      %v618 = vld [vmem:[#allocation2 + $0xb2] sm:$0xff]
      %v619 = vld [vmem:[#allocation2 + $0xc2] sm:$0xff]
      %v620 = vld [vmem:[#allocation2 + $0xca] sm:$0xff]
      %v621 = vld [vmem:[#allocation2 + $0xda] sm:$0xff]
      %v622 = vld [vmem:[#allocation2 + $0xe2] sm:$0xff]
      %v623 = vld [vmem:[#allocation2 + $0xf2] sm:$0xff]
      %v624 = vld [vmem:[#allocation2 + $0xfa] sm:$0xff]
      %v625 = vld [vmem:[#allocation2 + $0x10a] sm:$0xff]
      %v626 = vld [vmem:[#allocation2 + $0x112] sm:$0xff]
      %v627 = vld [vmem:[#allocation2 + $0x122] sm:$0xff]
      %v628 = vld [vmem:[#allocation2 + $0x12a] sm:$0xff]
      %v629 = vld [vmem:[#allocation2 + $0x13a] sm:$0xff]
      %v630 = vld [vmem:[#allocation2 + $0x142] sm:$0xff]
      %v631 = vld [vmem:[#allocation2 + $0x152] sm:$0xff]
      %v632 = vld [vmem:[#allocation2 + $0x15a] sm:$0xff]
      %v633 = vld [vmem:[#allocation2 + $0x16a] sm:$0xff]
      %v634 = vld [vmem:[#allocation2 + $0x172] sm:$0xff]
      %667 = vrot.lane.b32.xlu0 %v603, 8
      %v668 = vpop.permute.xlu0 %667
      %669 = vrot.lane.b32.xlu0 %v604, 8
      %v670 = vpop.permute.xlu0 %669
      %671 = vrot.lane.b32.xlu0 %v605, 8
      %v672 = vpop.permute.xlu0 %671
      %673 = vrot.lane.b32.xlu0 %v606, 8
      %v674 = vpop.permute.xlu0 %673
      %675 = vrot.lane.b32.xlu0 %v607, 8
      %v676 = vpop.permute.xlu0 %675
      %677 = vrot.lane.b32.xlu0 %v608, 8
      %v678 = vpop.permute.xlu0 %677
      %679 = vrot.lane.b32.xlu0 %v609, 8
      %v680 = vpop.permute.xlu0 %679
      %681 = vrot.lane.b32.xlu0 %v610, 8
      %v682 = vpop.permute.xlu0 %681
      %683 = vrot.lane.b32.xlu0 %v611, 8
      %v684 = vpop.permute.xlu0 %683
      %685 = vrot.lane.b32.xlu0 %v612, 8
      %v686 = vpop.permute.xlu0 %685
      %687 = vrot.lane.b32.xlu0 %v613, 8
      %v688 = vpop.permute.xlu0 %687
      %689 = vrot.lane.b32.xlu0 %v614, 8
      %v690 = vpop.permute.xlu0 %689
      %691 = vrot.lane.b32.xlu0 %v615, 8
      %v692 = vpop.permute.xlu0 %691
      %693 = vrot.lane.b32.xlu0 %v616, 8
      %v694 = vpop.permute.xlu0 %693
      %695 = vrot.lane.b32.xlu0 %v617, 8
      %v696 = vpop.permute.xlu0 %695
      %697 = vrot.lane.b32.xlu0 %v618, 8
      %v698 = vpop.permute.xlu0 %697
      %699 = vrot.lane.b32.xlu0 %v619, 8
      %v700 = vpop.permute.xlu0 %699
      %701 = vrot.lane.b32.xlu0 %v620, 8
      %v702 = vpop.permute.xlu0 %701
      %703 = vrot.lane.b32.xlu0 %v621, 8
      %v704 = vpop.permute.xlu0 %703
      %705 = vrot.lane.b32.xlu0 %v622, 8
      %v706 = vpop.permute.xlu0 %705
      %707 = vrot.lane.b32.xlu0 %v623, 8
      %v708 = vpop.permute.xlu0 %707
      %709 = vrot.lane.b32.xlu0 %v624, 8
      %v710 = vpop.permute.xlu0 %709
      %711 = vrot.lane.b32.xlu0 %v625, 8
      %v712 = vpop.permute.xlu0 %711
      %713 = vrot.lane.b32.xlu0 %v626, 8
      %v714 = vpop.permute.xlu0 %713
      %715 = vrot.lane.b32.xlu0 %v627, 8
      %v716 = vpop.permute.xlu0 %715
      %717 = vrot.lane.b32.xlu0 %v628, 8
      %v718 = vpop.permute.xlu0 %717
      %719 = vrot.lane.b32.xlu0 %v629, 8
      %v720 = vpop.permute.xlu0 %719
      %721 = vrot.lane.b32.xlu0 %v630, 8
      %v722 = vpop.permute.xlu0 %721
      %723 = vrot.lane.b32.xlu0 %v631, 8
      %v724 = vpop.permute.xlu0 %723
      %725 = vrot.lane.b32.xlu0 %v632, 8
      %v726 = vpop.permute.xlu0 %725
      %727 = vrot.lane.b32.xlu0 %v633, 8
      %v728 = vpop.permute.xlu0 %727
      %729 = vrot.lane.b32.xlu0 %v634, 8
      %v730 = vpop.permute.xlu0 %729
      %vm763 = vcmask 97344
      %764 = vst.msk [vmem:[#allocation3] sm:$0xff] %vm763, %v668
      %765 = vst.msk [vmem:[#allocation3 + $0x8] sm:$0xff] %vm763, %v670
      %766 = vst.msk [vmem:[#allocation3 + $0x10] sm:$0xff] %vm763, %v672
      %767 = vst.msk [vmem:[#allocation3 + $0x18] sm:$0xff] %vm763, %v674
      %768 = vst.msk [vmem:[#allocation3 + $0x20] sm:$0xff] %vm763, %v676
      %769 = vst.msk [vmem:[#allocation3 + $0x28] sm:$0xff] %vm763, %v678
      %770 = vst.msk [vmem:[#allocation3 + $0x30] sm:$0xff] %vm763, %v680
      %771 = vst.msk [vmem:[#allocation3 + $0x38] sm:$0xff] %vm763, %v682
      %772 = vst.msk [vmem:[#allocation3 + $0x40] sm:$0xff] %vm763, %v684
      %773 = vst.msk [vmem:[#allocation3 + $0x48] sm:$0xff] %vm763, %v686
      %774 = vst.msk [vmem:[#allocation3 + $0x50] sm:$0xff] %vm763, %v688
      %775 = vst.msk [vmem:[#allocation3 + $0x58] sm:$0xff] %vm763, %v690
      %776 = vst.msk [vmem:[#allocation3 + $0x60] sm:$0xff] %vm763, %v692
      %777 = vst.msk [vmem:[#allocation3 + $0x68] sm:$0xff] %vm763, %v694
      %778 = vst.msk [vmem:[#allocation3 + $0x70] sm:$0xff] %vm763, %v696
      %779 = vst.msk [vmem:[#allocation3 + $0x78] sm:$0xff] %vm763, %v698
      %780 = vst.msk [vmem:[#allocation3 + $0x80] sm:$0xff] %vm763, %v700
      %781 = vst.msk [vmem:[#allocation3 + $0x88] sm:$0xff] %vm763, %v702
      %782 = vst.msk [vmem:[#allocation3 + $0x90] sm:$0xff] %vm763, %v704
      %783 = vst.msk [vmem:[#allocation3 + $0x98] sm:$0xff] %vm763, %v706
      %784 = vst.msk [vmem:[#allocation3 + $0xa0] sm:$0xff] %vm763, %v708
      %785 = vst.msk [vmem:[#allocation3 + $0xa8] sm:$0xff] %vm763, %v710
      %786 = vst.msk [vmem:[#allocation3 + $0xb0] sm:$0xff] %vm763, %v712
      %787 = vst.msk [vmem:[#allocation3 + $0xb8] sm:$0xff] %vm763, %v714
      %788 = vst.msk [vmem:[#allocation3 + $0xc0] sm:$0xff] %vm763, %v716
      %789 = vst.msk [vmem:[#allocation3 + $0xc8] sm:$0xff] %vm763, %v718
      %790 = vst.msk [vmem:[#allocation3 + $0xd0] sm:$0xff] %vm763, %v720
      %791 = vst.msk [vmem:[#allocation3 + $0xd8] sm:$0xff] %vm763, %v722
      %792 = vst.msk [vmem:[#allocation3 + $0xe0] sm:$0xff] %vm763, %v724
      %793 = vst.msk [vmem:[#allocation3 + $0xe8] sm:$0xff] %vm763, %v726
      %794 = vst.msk [vmem:[#allocation3 + $0xf0] sm:$0xff] %vm763, %v728
      %795 = vst.msk [vmem:[#allocation3 + $0xf8] sm:$0xff] %vm763, %v730
      %v796 = vld [vmem:[%s313] sm:$0xff]
      %v797 = vld [vmem:[%s313 + $0x8] sm:$0xff]
      %v798 = vld [vmem:[%s313 + $0x18] sm:$0xff]
      %v799 = vld [vmem:[%s313 + $0x20] sm:$0xff]
      %v800 = vld [vmem:[%s313 + $0x30] sm:$0xff]
      %v801 = vld [vmem:[%s313 + $0x38] sm:$0xff]
      %v802 = vld [vmem:[%s313 + $0x48] sm:$0xff]
      %v803 = vld [vmem:[%s313 + $0x50] sm:$0xff]
      %v804 = vld [vmem:[%s313 + $0x60] sm:$0xff]
      %v805 = vld [vmem:[%s313 + $0x68] sm:$0xff]
      %v806 = vld [vmem:[%s313 + $0x78] sm:$0xff]
      %v807 = vld [vmem:[%s313 + $0x80] sm:$0xff]
      %v808 = vld [vmem:[%s313 + $0x90] sm:$0xff]
      %v809 = vld [vmem:[%s313 + $0x98] sm:$0xff]
      %v810 = vld [vmem:[%s313 + $0xa8] sm:$0xff]
      %v811 = vld [vmem:[%s313 + $0xb0] sm:$0xff]
      %v812 = vld [vmem:[%s313 + $0xc0] sm:$0xff]
      %v813 = vld [vmem:[%s313 + $0xc8] sm:$0xff]
      %v814 = vld [vmem:[%s313 + $0xd8] sm:$0xff]
      %v815 = vld [vmem:[%s313 + $0xe0] sm:$0xff]
      %v816 = vld [vmem:[%s313 + $0xf0] sm:$0xff]
      %v817 = vld [vmem:[%s313 + $0xf8] sm:$0xff]
      %v818 = vld [vmem:[%s313 + $0x108] sm:$0xff]
      %v819 = vld [vmem:[%s313 + $0x110] sm:$0xff]
      %v820 = vld [vmem:[%s313 + $0x120] sm:$0xff]
      %v821 = vld [vmem:[%s313 + $0x128] sm:$0xff]
      %v822 = vld [vmem:[%s313 + $0x138] sm:$0xff]
      %v823 = vld [vmem:[%s313 + $0x140] sm:$0xff]
      %v824 = vld [vmem:[%s313 + $0x150] sm:$0xff]
      %v825 = vld [vmem:[%s313 + $0x158] sm:$0xff]
      %v826 = vld [vmem:[%s313 + $0x168] sm:$0xff]
      %v827 = vld [vmem:[%s313 + $0x170] sm:$0xff]
      %860 = vrot.lane.b32.xlu0 %v796, 12
      %v861 = vpop.permute.xlu0 %860
      %862 = vrot.lane.b32.xlu0 %v797, 12
      %v863 = vpop.permute.xlu0 %862
      %864 = vrot.lane.b32.xlu0 %v798, 12
      %v865 = vpop.permute.xlu0 %864
      %866 = vrot.lane.b32.xlu0 %v799, 12
      %v867 = vpop.permute.xlu0 %866
      %868 = vrot.lane.b32.xlu0 %v800, 12
      %v869 = vpop.permute.xlu0 %868
      %870 = vrot.lane.b32.xlu0 %v801, 12
      %v871 = vpop.permute.xlu0 %870
      %872 = vrot.lane.b32.xlu0 %v802, 12
      %v873 = vpop.permute.xlu0 %872
      %874 = vrot.lane.b32.xlu0 %v803, 12
      %v875 = vpop.permute.xlu0 %874
      %876 = vrot.lane.b32.xlu0 %v804, 12
      %v877 = vpop.permute.xlu0 %876
      %878 = vrot.lane.b32.xlu0 %v805, 12
      %v879 = vpop.permute.xlu0 %878
      %880 = vrot.lane.b32.xlu0 %v806, 12
      %v881 = vpop.permute.xlu0 %880
      %882 = vrot.lane.b32.xlu0 %v807, 12
      %v883 = vpop.permute.xlu0 %882
      %884 = vrot.lane.b32.xlu0 %v808, 12
      %v885 = vpop.permute.xlu0 %884
      %886 = vrot.lane.b32.xlu0 %v809, 12
      %v887 = vpop.permute.xlu0 %886
      %888 = vrot.lane.b32.xlu0 %v810, 12
      %v889 = vpop.permute.xlu0 %888
      %890 = vrot.lane.b32.xlu0 %v811, 12
      %v891 = vpop.permute.xlu0 %890
      %892 = vrot.lane.b32.xlu0 %v812, 12
      %v893 = vpop.permute.xlu0 %892
      %894 = vrot.lane.b32.xlu0 %v813, 12
      %v895 = vpop.permute.xlu0 %894
      %896 = vrot.lane.b32.xlu0 %v814, 12
      %v897 = vpop.permute.xlu0 %896
      %898 = vrot.lane.b32.xlu0 %v815, 12
      %v899 = vpop.permute.xlu0 %898
      %900 = vrot.lane.b32.xlu0 %v816, 12
      %v901 = vpop.permute.xlu0 %900
      %902 = vrot.lane.b32.xlu0 %v817, 12
      %v903 = vpop.permute.xlu0 %902
      %904 = vrot.lane.b32.xlu0 %v818, 12
      %v905 = vpop.permute.xlu0 %904
      %906 = vrot.lane.b32.xlu0 %v819, 12
      %v907 = vpop.permute.xlu0 %906
      %908 = vrot.lane.b32.xlu0 %v820, 12
      %v909 = vpop.permute.xlu0 %908
      %910 = vrot.lane.b32.xlu0 %v821, 12
      %v911 = vpop.permute.xlu0 %910
      %912 = vrot.lane.b32.xlu0 %v822, 12
      %v913 = vpop.permute.xlu0 %912
      %914 = vrot.lane.b32.xlu0 %v823, 12
      %v915 = vpop.permute.xlu0 %914
      %916 = vrot.lane.b32.xlu0 %v824, 12
      %v917 = vpop.permute.xlu0 %916
      %918 = vrot.lane.b32.xlu0 %v825, 12
      %v919 = vpop.permute.xlu0 %918
      %920 = vrot.lane.b32.xlu0 %v826, 12
      %v921 = vpop.permute.xlu0 %920
      %922 = vrot.lane.b32.xlu0 %v827, 12
      %v923 = vpop.permute.xlu0 %922
      %vm956 = vcmask 130144
      %957 = vst.msk [vmem:[#allocation3] sm:$0xff] %vm956, %v861
      %958 = vst.msk [vmem:[#allocation3 + $0x8] sm:$0xff] %vm956, %v863
      %959 = vst.msk [vmem:[#allocation3 + $0x10] sm:$0xff] %vm956, %v865
      %960 = vst.msk [vmem:[#allocation3 + $0x18] sm:$0xff] %vm956, %v867
      %961 = vst.msk [vmem:[#allocation3 + $0x20] sm:$0xff] %vm956, %v869
      %962 = vst.msk [vmem:[#allocation3 + $0x28] sm:$0xff] %vm956, %v871
      %963 = vst.msk [vmem:[#allocation3 + $0x30] sm:$0xff] %vm956, %v873
      %964 = vst.msk [vmem:[#allocation3 + $0x38] sm:$0xff] %vm956, %v875
      %965 = vst.msk [vmem:[#allocation3 + $0x40] sm:$0xff] %vm956, %v877
      %966 = vst.msk [vmem:[#allocation3 + $0x48] sm:$0xff] %vm956, %v879
      %967 = vst.msk [vmem:[#allocation3 + $0x50] sm:$0xff] %vm956, %v881
      %968 = vst.msk [vmem:[#allocation3 + $0x58] sm:$0xff] %vm956, %v883
      %969 = vst.msk [vmem:[#allocation3 + $0x60] sm:$0xff] %vm956, %v885
      %970 = vst.msk [vmem:[#allocation3 + $0x68] sm:$0xff] %vm956, %v887
      %971 = vst.msk [vmem:[#allocation3 + $0x70] sm:$0xff] %vm956, %v889
      %972 = vst.msk [vmem:[#allocation3 + $0x78] sm:$0xff] %vm956, %v891
      %973 = vst.msk [vmem:[#allocation3 + $0x80] sm:$0xff] %vm956, %v893
      %974 = vst.msk [vmem:[#allocation3 + $0x88] sm:$0xff] %vm956, %v895
      %975 = vst.msk [vmem:[#allocation3 + $0x90] sm:$0xff] %vm956, %v897
      %976 = vst.msk [vmem:[#allocation3 + $0x98] sm:$0xff] %vm956, %v899
      %977 = vst.msk [vmem:[#allocation3 + $0xa0] sm:$0xff] %vm956, %v901
      %978 = vst.msk [vmem:[#allocation3 + $0xa8] sm:$0xff] %vm956, %v903
      %979 = vst.msk [vmem:[#allocation3 + $0xb0] sm:$0xff] %vm956, %v905
      %980 = vst.msk [vmem:[#allocation3 + $0xb8] sm:$0xff] %vm956, %v907
      %981 = vst.msk [vmem:[#allocation3 + $0xc0] sm:$0xff] %vm956, %v909
      %982 = vst.msk [vmem:[#allocation3 + $0xc8] sm:$0xff] %vm956, %v911
      %983 = vst.msk [vmem:[#allocation3 + $0xd0] sm:$0xff] %vm956, %v913
      %984 = vst.msk [vmem:[#allocation3 + $0xd8] sm:$0xff] %vm956, %v915
      %985 = vst.msk [vmem:[#allocation3 + $0xe0] sm:$0xff] %vm956, %v917
      %986 = vst.msk [vmem:[#allocation3 + $0xe8] sm:$0xff] %vm956, %v919
      %987 = vst.msk [vmem:[#allocation3 + $0xf0] sm:$0xff] %vm956, %v921
      %988 = vst.msk [vmem:[#allocation3 + $0xf8] sm:$0xff] %vm956, %v923
      %v989 = vld [vmem:[%s313 + $0x1] sm:$0xff]
      %v990 = vld [vmem:[%s313 + $0x9] sm:$0xff]
      %v991 = vld [vmem:[%s313 + $0x19] sm:$0xff]
      %v992 = vld [vmem:[%s313 + $0x21] sm:$0xff]
      %v993 = vld [vmem:[%s313 + $0x31] sm:$0xff]
      %v994 = vld [vmem:[%s313 + $0x39] sm:$0xff]
      %v995 = vld [vmem:[%s313 + $0x49] sm:$0xff]
      %v996 = vld [vmem:[%s313 + $0x51] sm:$0xff]
      %v997 = vld [vmem:[%s313 + $0x61] sm:$0xff]
      %v998 = vld [vmem:[%s313 + $0x69] sm:$0xff]
      %v999 = vld [vmem:[%s313 + $0x79] sm:$0xff]
      %v1000 = vld [vmem:[%s313 + $0x81] sm:$0xff]
      %v1001 = vld [vmem:[%s313 + $0x91] sm:$0xff]
      %v1002 = vld [vmem:[%s313 + $0x99] sm:$0xff]
      %v1003 = vld [vmem:[%s313 + $0xa9] sm:$0xff]
      %v1004 = vld [vmem:[%s313 + $0xb1] sm:$0xff]
      %v1005 = vld [vmem:[%s313 + $0xc1] sm:$0xff]
      %v1006 = vld [vmem:[%s313 + $0xc9] sm:$0xff]
      %v1007 = vld [vmem:[%s313 + $0xd9] sm:$0xff]
      %v1008 = vld [vmem:[%s313 + $0xe1] sm:$0xff]
      %v1009 = vld [vmem:[%s313 + $0xf1] sm:$0xff]
      %v1010 = vld [vmem:[%s313 + $0xf9] sm:$0xff]
      %v1011 = vld [vmem:[%s313 + $0x109] sm:$0xff]
      %v1012 = vld [vmem:[%s313 + $0x111] sm:$0xff]
      %v1013 = vld [vmem:[%s313 + $0x121] sm:$0xff]
      %v1014 = vld [vmem:[%s313 + $0x129] sm:$0xff]
      %v1015 = vld [vmem:[%s313 + $0x139] sm:$0xff]
      %v1016 = vld [vmem:[%s313 + $0x141] sm:$0xff]
      %v1017 = vld [vmem:[%s313 + $0x151] sm:$0xff]
      %v1018 = vld [vmem:[%s313 + $0x159] sm:$0xff]
      %v1019 = vld [vmem:[%s313 + $0x169] sm:$0xff]
      %v1020 = vld [vmem:[%s313 + $0x171] sm:$0xff]
      %1053 = vrot.lane.b32.xlu0 %v989, 16
      %v1054 = vpop.permute.xlu0 %1053
      %1055 = vrot.lane.b32.xlu0 %v990, 16
      %v1056 = vpop.permute.xlu0 %1055
      %1057 = vrot.lane.b32.xlu0 %v991, 16
      %v1058 = vpop.permute.xlu0 %1057
      %1059 = vrot.lane.b32.xlu0 %v992, 16
      %v1060 = vpop.permute.xlu0 %1059
      %1061 = vrot.lane.b32.xlu0 %v993, 16
      %v1062 = vpop.permute.xlu0 %1061
      %1063 = vrot.lane.b32.xlu0 %v994, 16
      %v1064 = vpop.permute.xlu0 %1063
      %1065 = vrot.lane.b32.xlu0 %v995, 16
      %v1066 = vpop.permute.xlu0 %1065
      %1067 = vrot.lane.b32.xlu0 %v996, 16
      %v1068 = vpop.permute.xlu0 %1067
      %1069 = vrot.lane.b32.xlu0 %v997, 16
      %v1070 = vpop.permute.xlu0 %1069
      %1071 = vrot.lane.b32.xlu0 %v998, 16
      %v1072 = vpop.permute.xlu0 %1071
      %1073 = vrot.lane.b32.xlu0 %v999, 16
      %v1074 = vpop.permute.xlu0 %1073
      %1075 = vrot.lane.b32.xlu0 %v1000, 16
      %v1076 = vpop.permute.xlu0 %1075
      %1077 = vrot.lane.b32.xlu0 %v1001, 16
      %v1078 = vpop.permute.xlu0 %1077
      %1079 = vrot.lane.b32.xlu0 %v1002, 16
      %v1080 = vpop.permute.xlu0 %1079
      %1081 = vrot.lane.b32.xlu0 %v1003, 16
      %v1082 = vpop.permute.xlu0 %1081
      %1083 = vrot.lane.b32.xlu0 %v1004, 16
      %v1084 = vpop.permute.xlu0 %1083
      %1085 = vrot.lane.b32.xlu0 %v1005, 16
      %v1086 = vpop.permute.xlu0 %1085
      %1087 = vrot.lane.b32.xlu0 %v1006, 16
      %v1088 = vpop.permute.xlu0 %1087
      %1089 = vrot.lane.b32.xlu0 %v1007, 16
      %v1090 = vpop.permute.xlu0 %1089
      %1091 = vrot.lane.b32.xlu0 %v1008, 16
      %v1092 = vpop.permute.xlu0 %1091
      %1093 = vrot.lane.b32.xlu0 %v1009, 16
      %v1094 = vpop.permute.xlu0 %1093
      %1095 = vrot.lane.b32.xlu0 %v1010, 16
      %v1096 = vpop.permute.xlu0 %1095
      %1097 = vrot.lane.b32.xlu0 %v1011, 16
      %v1098 = vpop.permute.xlu0 %1097
      %1099 = vrot.lane.b32.xlu0 %v1012, 16
      %v1100 = vpop.permute.xlu0 %1099
      %1101 = vrot.lane.b32.xlu0 %v1013, 16
      %v1102 = vpop.permute.xlu0 %1101
      %1103 = vrot.lane.b32.xlu0 %v1014, 16
      %v1104 = vpop.permute.xlu0 %1103
      %1105 = vrot.lane.b32.xlu0 %v1015, 16
      %v1106 = vpop.permute.xlu0 %1105
      %1107 = vrot.lane.b32.xlu0 %v1016, 16
      %v1108 = vpop.permute.xlu0 %1107
      %1109 = vrot.lane.b32.xlu0 %v1017, 16
      %v1110 = vpop.permute.xlu0 %1109
      %1111 = vrot.lane.b32.xlu0 %v1018, 16
      %v1112 = vpop.permute.xlu0 %1111
      %1113 = vrot.lane.b32.xlu0 %v1019, 16
      %v1114 = vpop.permute.xlu0 %1113
      %1115 = vrot.lane.b32.xlu0 %v1020, 16
      %v1116 = vpop.permute.xlu0 %1115
      %vm1149 = vcmask 162944
      %1150 = vst.msk [vmem:[#allocation3] sm:$0xff] %vm1149, %v1054
      %1151 = vst.msk [vmem:[#allocation3 + $0x8] sm:$0xff] %vm1149, %v1056
      %1152 = vst.msk [vmem:[#allocation3 + $0x10] sm:$0xff] %vm1149, %v1058
      %1153 = vst.msk [vmem:[#allocation3 + $0x18] sm:$0xff] %vm1149, %v1060
      %1154 = vst.msk [vmem:[#allocation3 + $0x20] sm:$0xff] %vm1149, %v1062
      %1155 = vst.msk [vmem:[#allocation3 + $0x28] sm:$0xff] %vm1149, %v1064
      %1156 = vst.msk [vmem:[#allocation3 + $0x30] sm:$0xff] %vm1149, %v1066
      %1157 = vst.msk [vmem:[#allocation3 + $0x38] sm:$0xff] %vm1149, %v1068
      %1158 = vst.msk [vmem:[#allocation3 + $0x40] sm:$0xff] %vm1149, %v1070
      %1159 = vst.msk [vmem:[#allocation3 + $0x48] sm:$0xff] %vm1149, %v1072
      %1160 = vst.msk [vmem:[#allocation3 + $0x50] sm:$0xff] %vm1149, %v1074
      %1161 = vst.msk [vmem:[#allocation3 + $0x58] sm:$0xff] %vm1149, %v1076
      %1162 = vst.msk [vmem:[#allocation3 + $0x60] sm:$0xff] %vm1149, %v1078
      %1163 = vst.msk [vmem:[#allocation3 + $0x68] sm:$0xff] %vm1149, %v1080
      %1164 = vst.msk [vmem:[#allocation3 + $0x70] sm:$0xff] %vm1149, %v1082
      %1165 = vst.msk [vmem:[#allocation3 + $0x78] sm:$0xff] %vm1149, %v1084
      %1166 = vst.msk [vmem:[#allocation3 + $0x80] sm:$0xff] %vm1149, %v1086
      %1167 = vst.msk [vmem:[#allocation3 + $0x88] sm:$0xff] %vm1149, %v1088
      %1168 = vst.msk [vmem:[#allocation3 + $0x90] sm:$0xff] %vm1149, %v1090
      %1169 = vst.msk [vmem:[#allocation3 + $0x98] sm:$0xff] %vm1149, %v1092
      %1170 = vst.msk [vmem:[#allocation3 + $0xa0] sm:$0xff] %vm1149, %v1094
      %1171 = vst.msk [vmem:[#allocation3 + $0xa8] sm:$0xff] %vm1149, %v1096
      %1172 = vst.msk [vmem:[#allocation3 + $0xb0] sm:$0xff] %vm1149, %v1098
      %1173 = vst.msk [vmem:[#allocation3 + $0xb8] sm:$0xff] %vm1149, %v1100
      %1174 = vst.msk [vmem:[#allocation3 + $0xc0] sm:$0xff] %vm1149, %v1102
      %1175 = vst.msk [vmem:[#allocation3 + $0xc8] sm:$0xff] %vm1149, %v1104
      %1176 = vst.msk [vmem:[#allocation3 + $0xd0] sm:$0xff] %vm1149, %v1106
      %1177 = vst.msk [vmem:[#allocation3 + $0xd8] sm:$0xff] %vm1149, %v1108
      %1178 = vst.msk [vmem:[#allocation3 + $0xe0] sm:$0xff] %vm1149, %v1110
      %1179 = vst.msk [vmem:[#allocation3 + $0xe8] sm:$0xff] %vm1149, %v1112
      %1180 = vst.msk [vmem:[#allocation3 + $0xf0] sm:$0xff] %vm1149, %v1114
      %1181 = vst.msk [vmem:[#allocation3 + $0xf8] sm:$0xff] %vm1149, %v1116
      %v1182 = vld [vmem:[%s313 + $0x2] sm:$0xff]
      %v1183 = vld [vmem:[%s313 + $0xa] sm:$0xff]
      %v1184 = vld [vmem:[%s313 + $0x1a] sm:$0xff]
      %v1185 = vld [vmem:[%s313 + $0x22] sm:$0xff]
      %v1186 = vld [vmem:[%s313 + $0x32] sm:$0xff]
      %v1187 = vld [vmem:[%s313 + $0x3a] sm:$0xff]
      %v1188 = vld [vmem:[%s313 + $0x4a] sm:$0xff]
      %v1189 = vld [vmem:[%s313 + $0x52] sm:$0xff]
      %v1190 = vld [vmem:[%s313 + $0x62] sm:$0xff]
      %v1191 = vld [vmem:[%s313 + $0x6a] sm:$0xff]
      %v1192 = vld [vmem:[%s313 + $0x7a] sm:$0xff]
      %v1193 = vld [vmem:[%s313 + $0x82] sm:$0xff]
      %v1194 = vld [vmem:[%s313 + $0x92] sm:$0xff]
      %v1195 = vld [vmem:[%s313 + $0x9a] sm:$0xff]
      %v1196 = vld [vmem:[%s313 + $0xaa] sm:$0xff]
      %v1197 = vld [vmem:[%s313 + $0xb2] sm:$0xff]
      %v1198 = vld [vmem:[%s313 + $0xc2] sm:$0xff]
      %v1199 = vld [vmem:[%s313 + $0xca] sm:$0xff]
      %v1200 = vld [vmem:[%s313 + $0xda] sm:$0xff]
      %v1201 = vld [vmem:[%s313 + $0xe2] sm:$0xff]
      %v1202 = vld [vmem:[%s313 + $0xf2] sm:$0xff]
      %v1203 = vld [vmem:[%s313 + $0xfa] sm:$0xff]
      %v1204 = vld [vmem:[%s313 + $0x10a] sm:$0xff]
      %v1205 = vld [vmem:[%s313 + $0x112] sm:$0xff]
      %v1206 = vld [vmem:[%s313 + $0x122] sm:$0xff]
      %v1207 = vld [vmem:[%s313 + $0x12a] sm:$0xff]
      %v1208 = vld [vmem:[%s313 + $0x13a] sm:$0xff]
      %v1209 = vld [vmem:[%s313 + $0x142] sm:$0xff]
      %v1210 = vld [vmem:[%s313 + $0x152] sm:$0xff]
      %v1211 = vld [vmem:[%s313 + $0x15a] sm:$0xff]
      %v1212 = vld [vmem:[%s313 + $0x16a] sm:$0xff]
      %v1213 = vld [vmem:[%s313 + $0x172] sm:$0xff]
      %1246 = vrot.lane.b32.xlu0 %v1182, 20
      %v1247 = vpop.permute.xlu0 %1246
      %1248 = vrot.lane.b32.xlu0 %v1183, 20
      %v1249 = vpop.permute.xlu0 %1248
      %1250 = vrot.lane.b32.xlu0 %v1184, 20
      %v1251 = vpop.permute.xlu0 %1250
      %1252 = vrot.lane.b32.xlu0 %v1185, 20
      %v1253 = vpop.permute.xlu0 %1252
      %1254 = vrot.lane.b32.xlu0 %v1186, 20
      %v1255 = vpop.permute.xlu0 %1254
      %1256 = vrot.lane.b32.xlu0 %v1187, 20
      %v1257 = vpop.permute.xlu0 %1256
      %1258 = vrot.lane.b32.xlu0 %v1188, 20
      %v1259 = vpop.permute.xlu0 %1258
      %1260 = vrot.lane.b32.xlu0 %v1189, 20
      %v1261 = vpop.permute.xlu0 %1260
      %1262 = vrot.lane.b32.xlu0 %v1190, 20
      %v1263 = vpop.permute.xlu0 %1262
      %1264 = vrot.lane.b32.xlu0 %v1191, 20
      %v1265 = vpop.permute.xlu0 %1264
      %1266 = vrot.lane.b32.xlu0 %v1192, 20
      %v1267 = vpop.permute.xlu0 %1266
      %1268 = vrot.lane.b32.xlu0 %v1193, 20
      %v1269 = vpop.permute.xlu0 %1268
      %1270 = vrot.lane.b32.xlu0 %v1194, 20
      %v1271 = vpop.permute.xlu0 %1270
      %1272 = vrot.lane.b32.xlu0 %v1195, 20
      %v1273 = vpop.permute.xlu0 %1272
      %1274 = vrot.lane.b32.xlu0 %v1196, 20
      %v1275 = vpop.permute.xlu0 %1274
      %1276 = vrot.lane.b32.xlu0 %v1197, 20
      %v1277 = vpop.permute.xlu0 %1276
      %1278 = vrot.lane.b32.xlu0 %v1198, 20
      %v1279 = vpop.permute.xlu0 %1278
      %1280 = vrot.lane.b32.xlu0 %v1199, 20
      %v1281 = vpop.permute.xlu0 %1280
      %1282 = vrot.lane.b32.xlu0 %v1200, 20
      %v1283 = vpop.permute.xlu0 %1282
      %1284 = vrot.lane.b32.xlu0 %v1201, 20
      %v1285 = vpop.permute.xlu0 %1284
      %1286 = vrot.lane.b32.xlu0 %v1202, 20
      %v1287 = vpop.permute.xlu0 %1286
      %1288 = vrot.lane.b32.xlu0 %v1203, 20
      %v1289 = vpop.permute.xlu0 %1288
      %1290 = vrot.lane.b32.xlu0 %v1204, 20
      %v1291 = vpop.permute.xlu0 %1290
      %1292 = vrot.lane.b32.xlu0 %v1205, 20
      %v1293 = vpop.permute.xlu0 %1292
      %1294 = vrot.lane.b32.xlu0 %v1206, 20
      %v1295 = vpop.permute.xlu0 %1294
      %1296 = vrot.lane.b32.xlu0 %v1207, 20
      %v1297 = vpop.permute.xlu0 %1296
      %1298 = vrot.lane.b32.xlu0 %v1208, 20
      %v1299 = vpop.permute.xlu0 %1298
      %1300 = vrot.lane.b32.xlu0 %v1209, 20
      %v1301 = vpop.permute.xlu0 %1300
      %1302 = vrot.lane.b32.xlu0 %v1210, 20
      %v1303 = vpop.permute.xlu0 %1302
      %1304 = vrot.lane.b32.xlu0 %v1211, 20
      %v1305 = vpop.permute.xlu0 %1304
      %1306 = vrot.lane.b32.xlu0 %v1212, 20
      %v1307 = vpop.permute.xlu0 %1306
      %1308 = vrot.lane.b32.xlu0 %v1213, 20
      %v1309 = vpop.permute.xlu0 %1308
      %vm1342 = vcmask 195744
      %1343 = vst.msk [vmem:[#allocation3] sm:$0xff] %vm1342, %v1247
      %1344 = vst.msk [vmem:[#allocation3 + $0x8] sm:$0xff] %vm1342, %v1249
      %1345 = vst.msk [vmem:[#allocation3 + $0x10] sm:$0xff] %vm1342, %v1251
      %1346 = vst.msk [vmem:[#allocation3 + $0x18] sm:$0xff] %vm1342, %v1253
      %1347 = vst.msk [vmem:[#allocation3 + $0x20] sm:$0xff] %vm1342, %v1255
      %1348 = vst.msk [vmem:[#allocation3 + $0x28] sm:$0xff] %vm1342, %v1257
      %1349 = vst.msk [vmem:[#allocation3 + $0x30] sm:$0xff] %vm1342, %v1259
      %1350 = vst.msk [vmem:[#allocation3 + $0x38] sm:$0xff] %vm1342, %v1261
      %1351 = vst.msk [vmem:[#allocation3 + $0x40] sm:$0xff] %vm1342, %v1263
      %1352 = vst.msk [vmem:[#allocation3 + $0x48] sm:$0xff] %vm1342, %v1265
      %1353 = vst.msk [vmem:[#allocation3 + $0x50] sm:$0xff] %vm1342, %v1267
      %1354 = vst.msk [vmem:[#allocation3 + $0x58] sm:$0xff] %vm1342, %v1269
      %1355 = vst.msk [vmem:[#allocation3 + $0x60] sm:$0xff] %vm1342, %v1271
      %1356 = vst.msk [vmem:[#allocation3 + $0x68] sm:$0xff] %vm1342, %v1273
      %1357 = vst.msk [vmem:[#allocation3 + $0x70] sm:$0xff] %vm1342, %v1275
      %1358 = vst.msk [vmem:[#allocation3 + $0x78] sm:$0xff] %vm1342, %v1277
      %1359 = vst.msk [vmem:[#allocation3 + $0x80] sm:$0xff] %vm1342, %v1279
      %1360 = vst.msk [vmem:[#allocation3 + $0x88] sm:$0xff] %vm1342, %v1281
      %1361 = vst.msk [vmem:[#allocation3 + $0x90] sm:$0xff] %vm1342, %v1283
      %1362 = vst.msk [vmem:[#allocation3 + $0x98] sm:$0xff] %vm1342, %v1285
      %1363 = vst.msk [vmem:[#allocation3 + $0xa0] sm:$0xff] %vm1342, %v1287
      %1364 = vst.msk [vmem:[#allocation3 + $0xa8] sm:$0xff] %vm1342, %v1289
      %1365 = vst.msk [vmem:[#allocation3 + $0xb0] sm:$0xff] %vm1342, %v1291
      %1366 = vst.msk [vmem:[#allocation3 + $0xb8] sm:$0xff] %vm1342, %v1293
      %1367 = vst.msk [vmem:[#allocation3 + $0xc0] sm:$0xff] %vm1342, %v1295
      %1368 = vst.msk [vmem:[#allocation3 + $0xc8] sm:$0xff] %vm1342, %v1297
      %1369 = vst.msk [vmem:[#allocation3 + $0xd0] sm:$0xff] %vm1342, %v1299
      %1370 = vst.msk [vmem:[#allocation3 + $0xd8] sm:$0xff] %vm1342, %v1301
      %1371 = vst.msk [vmem:[#allocation3 + $0xe0] sm:$0xff] %vm1342, %v1303
      %1372 = vst.msk [vmem:[#allocation3 + $0xe8] sm:$0xff] %vm1342, %v1305
      %1373 = vst.msk [vmem:[#allocation3 + $0xf0] sm:$0xff] %vm1342, %v1307
      %1374 = vst.msk [vmem:[#allocation3 + $0xf8] sm:$0xff] %vm1342, %v1309
      %s1375 = scalar_lea.vmem [#allocation2], 48
      %v1376 = vld [vmem:[%s1375] sm:$0xff]
      %v1377 = vld [vmem:[%s1375 + $0x8] sm:$0xff]
      %v1378 = vld [vmem:[%s1375 + $0x18] sm:$0xff]
      %v1379 = vld [vmem:[%s1375 + $0x20] sm:$0xff]
      %v1380 = vld [vmem:[%s1375 + $0x30] sm:$0xff]
      %v1381 = vld [vmem:[%s1375 + $0x38] sm:$0xff]
      %v1382 = vld [vmem:[%s1375 + $0x48] sm:$0xff]
      %v1383 = vld [vmem:[%s1375 + $0x50] sm:$0xff]
      %v1384 = vld [vmem:[%s1375 + $0x60] sm:$0xff]
      %v1385 = vld [vmem:[%s1375 + $0x68] sm:$0xff]
      %v1386 = vld [vmem:[%s1375 + $0x78] sm:$0xff]
      %v1387 = vld [vmem:[%s1375 + $0x80] sm:$0xff]
      %v1388 = vld [vmem:[%s1375 + $0x90] sm:$0xff]
      %v1389 = vld [vmem:[%s1375 + $0x98] sm:$0xff]
      %v1390 = vld [vmem:[%s1375 + $0xa8] sm:$0xff]
      %v1391 = vld [vmem:[%s1375 + $0xb0] sm:$0xff]
      %v1392 = vld [vmem:[%s1375 + $0xc0] sm:$0xff]
      %v1393 = vld [vmem:[%s1375 + $0xc8] sm:$0xff]
      %v1394 = vld [vmem:[%s1375 + $0xd8] sm:$0xff]
      %v1395 = vld [vmem:[%s1375 + $0xe0] sm:$0xff]
      %v1396 = vld [vmem:[%s1375 + $0xf0] sm:$0xff]
      %v1397 = vld [vmem:[%s1375 + $0xf8] sm:$0xff]
      %v1398 = vld [vmem:[%s1375 + $0x108] sm:$0xff]
      %v1399 = vld [vmem:[%s1375 + $0x110] sm:$0xff]
      %v1400 = vld [vmem:[%s1375 + $0x120] sm:$0xff]
      %v1401 = vld [vmem:[%s1375 + $0x128] sm:$0xff]
      %v1402 = vld [vmem:[%s1375 + $0x138] sm:$0xff]
      %v1403 = vld [vmem:[%s1375 + $0x140] sm:$0xff]
      %v1404 = vld [vmem:[%s1375 + $0x150] sm:$0xff]
      %v1405 = vld [vmem:[%s1375 + $0x158] sm:$0xff]
      %v1406 = vld [vmem:[%s1375 + $0x168] sm:$0xff]
      %v1407 = vld [vmem:[%s1375 + $0x170] sm:$0xff]
      %1440 = vrot.lane.b32.xlu0 %v1376, 24
      %v1441 = vpop.permute.xlu0 %1440
      %1442 = vrot.lane.b32.xlu0 %v1377, 24
      %v1443 = vpop.permute.xlu0 %1442
      %1444 = vrot.lane.b32.xlu0 %v1378, 24
      %v1445 = vpop.permute.xlu0 %1444
      %1446 = vrot.lane.b32.xlu0 %v1379, 24
      %v1447 = vpop.permute.xlu0 %1446
      %1448 = vrot.lane.b32.xlu0 %v1380, 24
      %v1449 = vpop.permute.xlu0 %1448
      %1450 = vrot.lane.b32.xlu0 %v1381, 24
      %v1451 = vpop.permute.xlu0 %1450
      %1452 = vrot.lane.b32.xlu0 %v1382, 24
      %v1453 = vpop.permute.xlu0 %1452
      %1454 = vrot.lane.b32.xlu0 %v1383, 24
      %v1455 = vpop.permute.xlu0 %1454
      %1456 = vrot.lane.b32.xlu0 %v1384, 24
      %v1457 = vpop.permute.xlu0 %1456
      %1458 = vrot.lane.b32.xlu0 %v1385, 24
      %v1459 = vpop.permute.xlu0 %1458
      %1460 = vrot.lane.b32.xlu0 %v1386, 24
      %v1461 = vpop.permute.xlu0 %1460
      %1462 = vrot.lane.b32.xlu0 %v1387, 24
      %v1463 = vpop.permute.xlu0 %1462
      %1464 = vrot.lane.b32.xlu0 %v1388, 24
      %v1465 = vpop.permute.xlu0 %1464
      %1466 = vrot.lane.b32.xlu0 %v1389, 24
      %v1467 = vpop.permute.xlu0 %1466
      %1468 = vrot.lane.b32.xlu0 %v1390, 24
      %v1469 = vpop.permute.xlu0 %1468
      %1470 = vrot.lane.b32.xlu0 %v1391, 24
      %v1471 = vpop.permute.xlu0 %1470
      %1472 = vrot.lane.b32.xlu0 %v1392, 24
      %v1473 = vpop.permute.xlu0 %1472
      %1474 = vrot.lane.b32.xlu0 %v1393, 24
      %v1475 = vpop.permute.xlu0 %1474
      %1476 = vrot.lane.b32.xlu0 %v1394, 24
      %v1477 = vpop.permute.xlu0 %1476
      %1478 = vrot.lane.b32.xlu0 %v1395, 24
      %v1479 = vpop.permute.xlu0 %1478
      %1480 = vrot.lane.b32.xlu0 %v1396, 24
      %v1481 = vpop.permute.xlu0 %1480
      %1482 = vrot.lane.b32.xlu0 %v1397, 24
      %v1483 = vpop.permute.xlu0 %1482
      %1484 = vrot.lane.b32.xlu0 %v1398, 24
      %v1485 = vpop.permute.xlu0 %1484
      %1486 = vrot.lane.b32.xlu0 %v1399, 24
      %v1487 = vpop.permute.xlu0 %1486
      %1488 = vrot.lane.b32.xlu0 %v1400, 24
      %v1489 = vpop.permute.xlu0 %1488
      %1490 = vrot.lane.b32.xlu0 %v1401, 24
      %v1491 = vpop.permute.xlu0 %1490
      %1492 = vrot.lane.b32.xlu0 %v1402, 24
      %v1493 = vpop.permute.xlu0 %1492
      %1494 = vrot.lane.b32.xlu0 %v1403, 24
      %v1495 = vpop.permute.xlu0 %1494
      %1496 = vrot.lane.b32.xlu0 %v1404, 24
      %v1497 = vpop.permute.xlu0 %1496
      %1498 = vrot.lane.b32.xlu0 %v1405, 24
      %v1499 = vpop.permute.xlu0 %1498
      %1500 = vrot.lane.b32.xlu0 %v1406, 24
      %v1501 = vpop.permute.xlu0 %1500
      %1502 = vrot.lane.b32.xlu0 %v1407, 24
      %v1503 = vpop.permute.xlu0 %1502
      %vm1536 = vcmask 228544
      %1537 = vst.msk [vmem:[#allocation3] sm:$0xff] %vm1536, %v1441
      %1538 = vst.msk [vmem:[#allocation3 + $0x8] sm:$0xff] %vm1536, %v1443
      %1539 = vst.msk [vmem:[#allocation3 + $0x10] sm:$0xff] %vm1536, %v1445
      %1540 = vst.msk [vmem:[#allocation3 + $0x18] sm:$0xff] %vm1536, %v1447
      %1541 = vst.msk [vmem:[#allocation3 + $0x20] sm:$0xff] %vm1536, %v1449
      %1542 = vst.msk [vmem:[#allocation3 + $0x28] sm:$0xff] %vm1536, %v1451
      %1543 = vst.msk [vmem:[#allocation3 + $0x30] sm:$0xff] %vm1536, %v1453
      %1544 = vst.msk [vmem:[#allocation3 + $0x38] sm:$0xff] %vm1536, %v1455
      %1545 = vst.msk [vmem:[#allocation3 + $0x40] sm:$0xff] %vm1536, %v1457
      %1546 = vst.msk [vmem:[#allocation3 + $0x48] sm:$0xff] %vm1536, %v1459
      %1547 = vst.msk [vmem:[#allocation3 + $0x50] sm:$0xff] %vm1536, %v1461
      %1548 = vst.msk [vmem:[#allocation3 + $0x58] sm:$0xff] %vm1536, %v1463
      %1549 = vst.msk [vmem:[#allocation3 + $0x60] sm:$0xff] %vm1536, %v1465
      %1550 = vst.msk [vmem:[#allocation3 + $0x68] sm:$0xff] %vm1536, %v1467
      %1551 = vst.msk [vmem:[#allocation3 + $0x70] sm:$0xff] %vm1536, %v1469
      %1552 = vst.msk [vmem:[#allocation3 + $0x78] sm:$0xff] %vm1536, %v1471
      %1553 = vst.msk [vmem:[#allocation3 + $0x80] sm:$0xff] %vm1536, %v1473
      %1554 = vst.msk [vmem:[#allocation3 + $0x88] sm:$0xff] %vm1536, %v1475
      %1555 = vst.msk [vmem:[#allocation3 + $0x90] sm:$0xff] %vm1536, %v1477
      %1556 = vst.msk [vmem:[#allocation3 + $0x98] sm:$0xff] %vm1536, %v1479
      %1557 = vst.msk [vmem:[#allocation3 + $0xa0] sm:$0xff] %vm1536, %v1481
      %1558 = vst.msk [vmem:[#allocation3 + $0xa8] sm:$0xff] %vm1536, %v1483
      %1559 = vst.msk [vmem:[#allocation3 + $0xb0] sm:$0xff] %vm1536, %v1485
      %1560 = vst.msk [vmem:[#allocation3 + $0xb8] sm:$0xff] %vm1536, %v1487
      %1561 = vst.msk [vmem:[#allocation3 + $0xc0] sm:$0xff] %vm1536, %v1489
      %1562 = vst.msk [vmem:[#allocation3 + $0xc8] sm:$0xff] %vm1536, %v1491
      %1563 = vst.msk [vmem:[#allocation3 + $0xd0] sm:$0xff] %vm1536, %v1493
      %1564 = vst.msk [vmem:[#allocation3 + $0xd8] sm:$0xff] %vm1536, %v1495
      %1565 = vst.msk [vmem:[#allocation3 + $0xe0] sm:$0xff] %vm1536, %v1497
      %1566 = vst.msk [vmem:[#allocation3 + $0xe8] sm:$0xff] %vm1536, %v1499
      %1567 = vst.msk [vmem:[#allocation3 + $0xf0] sm:$0xff] %vm1536, %v1501
      %1568 = vst.msk [vmem:[#allocation3 + $0xf8] sm:$0xff] %vm1536, %v1503
      %v1569 = vld [vmem:[%s1375 + $0x1] sm:$0xff]
      %v1570 = vld [vmem:[%s1375 + $0x9] sm:$0xff]
      %v1571 = vld [vmem:[%s1375 + $0x19] sm:$0xff]
      %v1572 = vld [vmem:[%s1375 + $0x21] sm:$0xff]
      %v1573 = vld [vmem:[%s1375 + $0x31] sm:$0xff]
      %v1574 = vld [vmem:[%s1375 + $0x39] sm:$0xff]
      %v1575 = vld [vmem:[%s1375 + $0x49] sm:$0xff]
      %v1576 = vld [vmem:[%s1375 + $0x51] sm:$0xff]
      %v1577 = vld [vmem:[%s1375 + $0x61] sm:$0xff]
      %v1578 = vld [vmem:[%s1375 + $0x69] sm:$0xff]
      %v1579 = vld [vmem:[%s1375 + $0x79] sm:$0xff]
      %v1580 = vld [vmem:[%s1375 + $0x81] sm:$0xff]
      %v1581 = vld [vmem:[%s1375 + $0x91] sm:$0xff]
      %v1582 = vld [vmem:[%s1375 + $0x99] sm:$0xff]
      %v1583 = vld [vmem:[%s1375 + $0xa9] sm:$0xff]
      %v1584 = vld [vmem:[%s1375 + $0xb1] sm:$0xff]
      %v1585 = vld [vmem:[%s1375 + $0xc1] sm:$0xff]
      %v1586 = vld [vmem:[%s1375 + $0xc9] sm:$0xff]
      %v1587 = vld [vmem:[%s1375 + $0xd9] sm:$0xff]
      %v1588 = vld [vmem:[%s1375 + $0xe1] sm:$0xff]
      %v1589 = vld [vmem:[%s1375 + $0xf1] sm:$0xff]
      %v1590 = vld [vmem:[%s1375 + $0xf9] sm:$0xff]
      %v1591 = vld [vmem:[%s1375 + $0x109] sm:$0xff]
      %v1592 = vld [vmem:[%s1375 + $0x111] sm:$0xff]
      %v1593 = vld [vmem:[%s1375 + $0x121] sm:$0xff]
      %v1594 = vld [vmem:[%s1375 + $0x129] sm:$0xff]
      %v1595 = vld [vmem:[%s1375 + $0x139] sm:$0xff]
      %v1596 = vld [vmem:[%s1375 + $0x141] sm:$0xff]
      %v1597 = vld [vmem:[%s1375 + $0x151] sm:$0xff]
      %v1598 = vld [vmem:[%s1375 + $0x159] sm:$0xff]
      %v1599 = vld [vmem:[%s1375 + $0x169] sm:$0xff]
      %v1600 = vld [vmem:[%s1375 + $0x171] sm:$0xff]
      %1633 = vrot.lane.b32.xlu0 %v1569, 28
      %v1634 = vpop.permute.xlu0 %1633
      %1635 = vrot.lane.b32.xlu0 %v1570, 28
      %v1636 = vpop.permute.xlu0 %1635
      %1637 = vrot.lane.b32.xlu0 %v1571, 28
      %v1638 = vpop.permute.xlu0 %1637
      %1639 = vrot.lane.b32.xlu0 %v1572, 28
      %v1640 = vpop.permute.xlu0 %1639
      %1641 = vrot.lane.b32.xlu0 %v1573, 28
      %v1642 = vpop.permute.xlu0 %1641
      %1643 = vrot.lane.b32.xlu0 %v1574, 28
      %v1644 = vpop.permute.xlu0 %1643
      %1645 = vrot.lane.b32.xlu0 %v1575, 28
      %v1646 = vpop.permute.xlu0 %1645
      %1647 = vrot.lane.b32.xlu0 %v1576, 28
      %v1648 = vpop.permute.xlu0 %1647
      %1649 = vrot.lane.b32.xlu0 %v1577, 28
      %v1650 = vpop.permute.xlu0 %1649
      %1651 = vrot.lane.b32.xlu0 %v1578, 28
      %v1652 = vpop.permute.xlu0 %1651
      %1653 = vrot.lane.b32.xlu0 %v1579, 28
      %v1654 = vpop.permute.xlu0 %1653
      %1655 = vrot.lane.b32.xlu0 %v1580, 28
      %v1656 = vpop.permute.xlu0 %1655
      %1657 = vrot.lane.b32.xlu0 %v1581, 28
      %v1658 = vpop.permute.xlu0 %1657
      %1659 = vrot.lane.b32.xlu0 %v1582, 28
      %v1660 = vpop.permute.xlu0 %1659
      %1661 = vrot.lane.b32.xlu0 %v1583, 28
      %v1662 = vpop.permute.xlu0 %1661
      %1663 = vrot.lane.b32.xlu0 %v1584, 28
      %v1664 = vpop.permute.xlu0 %1663
      %1665 = vrot.lane.b32.xlu0 %v1585, 28
      %v1666 = vpop.permute.xlu0 %1665
      %1667 = vrot.lane.b32.xlu0 %v1586, 28
      %v1668 = vpop.permute.xlu0 %1667
      %1669 = vrot.lane.b32.xlu0 %v1587, 28
      %v1670 = vpop.permute.xlu0 %1669
      %1671 = vrot.lane.b32.xlu0 %v1588, 28
      %v1672 = vpop.permute.xlu0 %1671
      %1673 = vrot.lane.b32.xlu0 %v1589, 28
      %v1674 = vpop.permute.xlu0 %1673
      %1675 = vrot.lane.b32.xlu0 %v1590, 28
      %v1676 = vpop.permute.xlu0 %1675
      %1677 = vrot.lane.b32.xlu0 %v1591, 28
      %v1678 = vpop.permute.xlu0 %1677
      %1679 = vrot.lane.b32.xlu0 %v1592, 28
      %v1680 = vpop.permute.xlu0 %1679
      %1681 = vrot.lane.b32.xlu0 %v1593, 28
      %v1682 = vpop.permute.xlu0 %1681
      %1683 = vrot.lane.b32.xlu0 %v1594, 28
      %v1684 = vpop.permute.xlu0 %1683
      %1685 = vrot.lane.b32.xlu0 %v1595, 28
      %v1686 = vpop.permute.xlu0 %1685
      %1687 = vrot.lane.b32.xlu0 %v1596, 28
      %v1688 = vpop.permute.xlu0 %1687
      %1689 = vrot.lane.b32.xlu0 %v1597, 28
      %v1690 = vpop.permute.xlu0 %1689
      %1691 = vrot.lane.b32.xlu0 %v1598, 28
      %v1692 = vpop.permute.xlu0 %1691
      %1693 = vrot.lane.b32.xlu0 %v1599, 28
      %v1694 = vpop.permute.xlu0 %1693
      %1695 = vrot.lane.b32.xlu0 %v1600, 28
      %v1696 = vpop.permute.xlu0 %1695
      %vm1729 = vcmask 261344
      %1730 = vst.msk [vmem:[#allocation3] sm:$0xff] %vm1729, %v1634
      %1731 = vst.msk [vmem:[#allocation3 + $0x8] sm:$0xff] %vm1729, %v1636
      %1732 = vst.msk [vmem:[#allocation3 + $0x10] sm:$0xff] %vm1729, %v1638
      %1733 = vst.msk [vmem:[#allocation3 + $0x18] sm:$0xff] %vm1729, %v1640
      %1734 = vst.msk [vmem:[#allocation3 + $0x20] sm:$0xff] %vm1729, %v1642
      %1735 = vst.msk [vmem:[#allocation3 + $0x28] sm:$0xff] %vm1729, %v1644
      %1736 = vst.msk [vmem:[#allocation3 + $0x30] sm:$0xff] %vm1729, %v1646
      %1737 = vst.msk [vmem:[#allocation3 + $0x38] sm:$0xff] %vm1729, %v1648
      %1738 = vst.msk [vmem:[#allocation3 + $0x40] sm:$0xff] %vm1729, %v1650
      %1739 = vst.msk [vmem:[#allocation3 + $0x48] sm:$0xff] %vm1729, %v1652
      %1740 = vst.msk [vmem:[#allocation3 + $0x50] sm:$0xff] %vm1729, %v1654
      %1741 = vst.msk [vmem:[#allocation3 + $0x58] sm:$0xff] %vm1729, %v1656
      %1742 = vst.msk [vmem:[#allocation3 + $0x60] sm:$0xff] %vm1729, %v1658
      %1743 = vst.msk [vmem:[#allocation3 + $0x68] sm:$0xff] %vm1729, %v1660
      %1744 = vst.msk [vmem:[#allocation3 + $0x70] sm:$0xff] %vm1729, %v1662
      %1745 = vst.msk [vmem:[#allocation3 + $0x78] sm:$0xff] %vm1729, %v1664
      %1746 = vst.msk [vmem:[#allocation3 + $0x80] sm:$0xff] %vm1729, %v1666
      %1747 = vst.msk [vmem:[#allocation3 + $0x88] sm:$0xff] %vm1729, %v1668
      %1748 = vst.msk [vmem:[#allocation3 + $0x90] sm:$0xff] %vm1729, %v1670
      %1749 = vst.msk [vmem:[#allocation3 + $0x98] sm:$0xff] %vm1729, %v1672
      %1750 = vst.msk [vmem:[#allocation3 + $0xa0] sm:$0xff] %vm1729, %v1674
      %1751 = vst.msk [vmem:[#allocation3 + $0xa8] sm:$0xff] %vm1729, %v1676
      %1752 = vst.msk [vmem:[#allocation3 + $0xb0] sm:$0xff] %vm1729, %v1678
      %1753 = vst.msk [vmem:[#allocation3 + $0xb8] sm:$0xff] %vm1729, %v1680
      %1754 = vst.msk [vmem:[#allocation3 + $0xc0] sm:$0xff] %vm1729, %v1682
      %1755 = vst.msk [vmem:[#allocation3 + $0xc8] sm:$0xff] %vm1729, %v1684
      %1756 = vst.msk [vmem:[#allocation3 + $0xd0] sm:$0xff] %vm1729, %v1686
      %1757 = vst.msk [vmem:[#allocation3 + $0xd8] sm:$0xff] %vm1729, %v1688
      %1758 = vst.msk [vmem:[#allocation3 + $0xe0] sm:$0xff] %vm1729, %v1690
      %1759 = vst.msk [vmem:[#allocation3 + $0xe8] sm:$0xff] %vm1729, %v1692
      %1760 = vst.msk [vmem:[#allocation3 + $0xf0] sm:$0xff] %vm1729, %v1694
      %1761 = vst.msk [vmem:[#allocation3 + $0xf8] sm:$0xff] %vm1729, %v1696
      %v1762 = vld [vmem:[%s1375 + $0x2] sm:$0xff]
      %v1763 = vld [vmem:[%s1375 + $0xa] sm:$0xff]
      %v1764 = vld [vmem:[%s1375 + $0x1a] sm:$0xff]
      %v1765 = vld [vmem:[%s1375 + $0x22] sm:$0xff]
      %v1766 = vld [vmem:[%s1375 + $0x32] sm:$0xff]
      %v1767 = vld [vmem:[%s1375 + $0x3a] sm:$0xff]
      %v1768 = vld [vmem:[%s1375 + $0x4a] sm:$0xff]
      %v1769 = vld [vmem:[%s1375 + $0x52] sm:$0xff]
      %v1770 = vld [vmem:[%s1375 + $0x62] sm:$0xff]
      %v1771 = vld [vmem:[%s1375 + $0x6a] sm:$0xff]
      %v1772 = vld [vmem:[%s1375 + $0x7a] sm:$0xff]
      %v1773 = vld [vmem:[%s1375 + $0x82] sm:$0xff]
      %v1774 = vld [vmem:[%s1375 + $0x92] sm:$0xff]
      %v1775 = vld [vmem:[%s1375 + $0x9a] sm:$0xff]
      %v1776 = vld [vmem:[%s1375 + $0xaa] sm:$0xff]
      %v1777 = vld [vmem:[%s1375 + $0xb2] sm:$0xff]
      %v1778 = vld [vmem:[%s1375 + $0xc2] sm:$0xff]
      %v1779 = vld [vmem:[%s1375 + $0xca] sm:$0xff]
      %v1780 = vld [vmem:[%s1375 + $0xda] sm:$0xff]
      %v1781 = vld [vmem:[%s1375 + $0xe2] sm:$0xff]
      %v1782 = vld [vmem:[%s1375 + $0xf2] sm:$0xff]
      %v1783 = vld [vmem:[%s1375 + $0xfa] sm:$0xff]
      %v1784 = vld [vmem:[%s1375 + $0x10a] sm:$0xff]
      %v1785 = vld [vmem:[%s1375 + $0x112] sm:$0xff]
      %v1786 = vld [vmem:[%s1375 + $0x122] sm:$0xff]
      %v1787 = vld [vmem:[%s1375 + $0x12a] sm:$0xff]
      %v1788 = vld [vmem:[%s1375 + $0x13a] sm:$0xff]
      %v1789 = vld [vmem:[%s1375 + $0x142] sm:$0xff]
      %v1790 = vld [vmem:[%s1375 + $0x152] sm:$0xff]
      %v1791 = vld [vmem:[%s1375 + $0x15a] sm:$0xff]
      %v1792 = vld [vmem:[%s1375 + $0x16a] sm:$0xff]
      %v1793 = vld [vmem:[%s1375 + $0x172] sm:$0xff]
      %1826 = vrot.lane.b32.xlu0 %v1762, 32
      %v1827 = vpop.permute.xlu0 %1826
      %1828 = vrot.lane.b32.xlu0 %v1763, 32
      %v1829 = vpop.permute.xlu0 %1828
      %1830 = vrot.lane.b32.xlu0 %v1764, 32
      %v1831 = vpop.permute.xlu0 %1830
      %1832 = vrot.lane.b32.xlu0 %v1765, 32
      %v1833 = vpop.permute.xlu0 %1832
      %1834 = vrot.lane.b32.xlu0 %v1766, 32
      %v1835 = vpop.permute.xlu0 %1834
      %1836 = vrot.lane.b32.xlu0 %v1767, 32
      %v1837 = vpop.permute.xlu0 %1836
      %1838 = vrot.lane.b32.xlu0 %v1768, 32
      %v1839 = vpop.permute.xlu0 %1838
      %1840 = vrot.lane.b32.xlu0 %v1769, 32
      %v1841 = vpop.permute.xlu0 %1840
      %1842 = vrot.lane.b32.xlu0 %v1770, 32
      %v1843 = vpop.permute.xlu0 %1842
      %1844 = vrot.lane.b32.xlu0 %v1771, 32
      %v1845 = vpop.permute.xlu0 %1844
      %1846 = vrot.lane.b32.xlu0 %v1772, 32
      %v1847 = vpop.permute.xlu0 %1846
      %1848 = vrot.lane.b32.xlu0 %v1773, 32
      %v1849 = vpop.permute.xlu0 %1848
      %1850 = vrot.lane.b32.xlu0 %v1774, 32
      %v1851 = vpop.permute.xlu0 %1850
      %1852 = vrot.lane.b32.xlu0 %v1775, 32
      %v1853 = vpop.permute.xlu0 %1852
      %1854 = vrot.lane.b32.xlu0 %v1776, 32
      %v1855 = vpop.permute.xlu0 %1854
      %1856 = vrot.lane.b32.xlu0 %v1777, 32
      %v1857 = vpop.permute.xlu0 %1856
      %1858 = vrot.lane.b32.xlu0 %v1778, 32
      %v1859 = vpop.permute.xlu0 %1858
      %1860 = vrot.lane.b32.xlu0 %v1779, 32
      %v1861 = vpop.permute.xlu0 %1860
      %1862 = vrot.lane.b32.xlu0 %v1780, 32
      %v1863 = vpop.permute.xlu0 %1862
      %1864 = vrot.lane.b32.xlu0 %v1781, 32
      %v1865 = vpop.permute.xlu0 %1864
      %1866 = vrot.lane.b32.xlu0 %v1782, 32
      %v1867 = vpop.permute.xlu0 %1866
      %1868 = vrot.lane.b32.xlu0 %v1783, 32
      %v1869 = vpop.permute.xlu0 %1868
      %1870 = vrot.lane.b32.xlu0 %v1784, 32
      %v1871 = vpop.permute.xlu0 %1870
      %1872 = vrot.lane.b32.xlu0 %v1785, 32
      %v1873 = vpop.permute.xlu0 %1872
      %1874 = vrot.lane.b32.xlu0 %v1786, 32
      %v1875 = vpop.permute.xlu0 %1874
      %1876 = vrot.lane.b32.xlu0 %v1787, 32
      %v1877 = vpop.permute.xlu0 %1876
      %1878 = vrot.lane.b32.xlu0 %v1788, 32
      %v1879 = vpop.permute.xlu0 %1878
      %1880 = vrot.lane.b32.xlu0 %v1789, 32
      %v1881 = vpop.permute.xlu0 %1880
      %1882 = vrot.lane.b32.xlu0 %v1790, 32
      %v1883 = vpop.permute.xlu0 %1882
      %1884 = vrot.lane.b32.xlu0 %v1791, 32
      %v1885 = vpop.permute.xlu0 %1884
      %1886 = vrot.lane.b32.xlu0 %v1792, 32
      %v1887 = vpop.permute.xlu0 %1886
      %1888 = vrot.lane.b32.xlu0 %v1793, 32
      %v1889 = vpop.permute.xlu0 %1888
      %vm1922 = vcmask 294144
      %1923 = vst.msk [vmem:[#allocation3] sm:$0xff] %vm1922, %v1827
      %1924 = vst.msk [vmem:[#allocation3 + $0x8] sm:$0xff] %vm1922, %v1829
      %1925 = vst.msk [vmem:[#allocation3 + $0x10] sm:$0xff] %vm1922, %v1831
      %1926 = vst.msk [vmem:[#allocation3 + $0x18] sm:$0xff] %vm1922, %v1833
      %1927 = vst.msk [vmem:[#allocation3 + $0x20] sm:$0xff] %vm1922, %v1835
      %1928 = vst.msk [vmem:[#allocation3 + $0x28] sm:$0xff] %vm1922, %v1837
      %1929 = vst.msk [vmem:[#allocation3 + $0x30] sm:$0xff] %vm1922, %v1839
      %1930 = vst.msk [vmem:[#allocation3 + $0x38] sm:$0xff] %vm1922, %v1841
      %1931 = vst.msk [vmem:[#allocation3 + $0x40] sm:$0xff] %vm1922, %v1843
      %1932 = vst.msk [vmem:[#allocation3 + $0x48] sm:$0xff] %vm1922, %v1845
      %1933 = vst.msk [vmem:[#allocation3 + $0x50] sm:$0xff] %vm1922, %v1847
      %1934 = vst.msk [vmem:[#allocation3 + $0x58] sm:$0xff] %vm1922, %v1849
      %1935 = vst.msk [vmem:[#allocation3 + $0x60] sm:$0xff] %vm1922, %v1851
      %1936 = vst.msk [vmem:[#allocation3 + $0x68] sm:$0xff] %vm1922, %v1853
      %1937 = vst.msk [vmem:[#allocation3 + $0x70] sm:$0xff] %vm1922, %v1855
      %1938 = vst.msk [vmem:[#allocation3 + $0x78] sm:$0xff] %vm1922, %v1857
      %1939 = vst.msk [vmem:[#allocation3 + $0x80] sm:$0xff] %vm1922, %v1859
      %1940 = vst.msk [vmem:[#allocation3 + $0x88] sm:$0xff] %vm1922, %v1861
      %1941 = vst.msk [vmem:[#allocation3 + $0x90] sm:$0xff] %vm1922, %v1863
      %1942 = vst.msk [vmem:[#allocation3 + $0x98] sm:$0xff] %vm1922, %v1865
      %1943 = vst.msk [vmem:[#allocation3 + $0xa0] sm:$0xff] %vm1922, %v1867
      %1944 = vst.msk [vmem:[#allocation3 + $0xa8] sm:$0xff] %vm1922, %v1869
      %1945 = vst.msk [vmem:[#allocation3 + $0xb0] sm:$0xff] %vm1922, %v1871
      %1946 = vst.msk [vmem:[#allocation3 + $0xb8] sm:$0xff] %vm1922, %v1873
      %1947 = vst.msk [vmem:[#allocation3 + $0xc0] sm:$0xff] %vm1922, %v1875
      %1948 = vst.msk [vmem:[#allocation3 + $0xc8] sm:$0xff] %vm1922, %v1877
      %1949 = vst.msk [vmem:[#allocation3 + $0xd0] sm:$0xff] %vm1922, %v1879
      %1950 = vst.msk [vmem:[#allocation3 + $0xd8] sm:$0xff] %vm1922, %v1881
      %1951 = vst.msk [vmem:[#allocation3 + $0xe0] sm:$0xff] %vm1922, %v1883
      %1952 = vst.msk [vmem:[#allocation3 + $0xe8] sm:$0xff] %vm1922, %v1885
      %1953 = vst.msk [vmem:[#allocation3 + $0xf0] sm:$0xff] %vm1922, %v1887
      %1954 = vst.msk [vmem:[#allocation3 + $0xf8] sm:$0xff] %vm1922, %v1889
      %v1955 = vld [vmem:[#allocation3] sm:$0xff]
      %v1956 = vld [vmem:[#allocation3 + $0x8] sm:$0xff]
      %v1957 = vld [vmem:[#allocation3 + $0x10] sm:$0xff]
      %v1958 = vld [vmem:[#allocation3 + $0x18] sm:$0xff]
      %v1959 = vld [vmem:[#allocation3 + $0x20] sm:$0xff]
      %v1960 = vld [vmem:[#allocation3 + $0x28] sm:$0xff]
      %v1961 = vld [vmem:[#allocation3 + $0x30] sm:$0xff]
      %v1962 = vld [vmem:[#allocation3 + $0x38] sm:$0xff]
      %v1963 = vld [vmem:[#allocation3 + $0x40] sm:$0xff]
      %v1964 = vld [vmem:[#allocation3 + $0x48] sm:$0xff]
      %v1965 = vld [vmem:[#allocation3 + $0x50] sm:$0xff]
      %v1966 = vld [vmem:[#allocation3 + $0x58] sm:$0xff]
      %v1967 = vld [vmem:[#allocation3 + $0x60] sm:$0xff]
      %v1968 = vld [vmem:[#allocation3 + $0x68] sm:$0xff]
      %v1969 = vld [vmem:[#allocation3 + $0x70] sm:$0xff]
      %v1970 = vld [vmem:[#allocation3 + $0x78] sm:$0xff]
      %v1971 = vld [vmem:[#allocation3 + $0x80] sm:$0xff]
      %v1972 = vld [vmem:[#allocation3 + $0x88] sm:$0xff]
      %v1973 = vld [vmem:[#allocation3 + $0x90] sm:$0xff]
      %v1974 = vld [vmem:[#allocation3 + $0x98] sm:$0xff]
      %v1975 = vld [vmem:[#allocation3 + $0xa0] sm:$0xff]
      %v1976 = vld [vmem:[#allocation3 + $0xa8] sm:$0xff]
      %v1977 = vld [vmem:[#allocation3 + $0xb0] sm:$0xff]
      %v1978 = vld [vmem:[#allocation3 + $0xb8] sm:$0xff]
      %v1979 = vld [vmem:[#allocation3 + $0xc0] sm:$0xff]
      %v1980 = vld [vmem:[#allocation3 + $0xc8] sm:$0xff]
      %v1981 = vld [vmem:[#allocation3 + $0xd0] sm:$0xff]
      %v1982 = vld [vmem:[#allocation3 + $0xd8] sm:$0xff]
      %v1983 = vld [vmem:[#allocation3 + $0xe0] sm:$0xff]
      %v1984 = vld [vmem:[#allocation3 + $0xe8] sm:$0xff]
      %v1985 = vld [vmem:[#allocation3 + $0xf0] sm:$0xff]
      %v1986 = vld [vmem:[#allocation3 + $0xf8] sm:$0xff]
      %v1987 = vld [vmem:[%s1] sm:$0xff]
      %v1988 = vld [vmem:[%s1 + $0x8] sm:$0xff]
      %v1989 = vld [vmem:[%s1 + $0x10] sm:$0xff]
      %v1990 = vld [vmem:[%s1 + $0x18] sm:$0xff]
      %v1991 = vld [vmem:[%s1 + $0x20] sm:$0xf]
      %v1992 = vld [vmem:[%s2] sm:$0x1]
      %v1994 = vlaneseq
      %v1995 = vshrl.u32 %v1994, 7
      %v1996 = vsub.s32 0, %v1995
      %v1997 = vrot.slane %v1992, %v1996
      %vm1999 = vcmask 293888
      %v2001 = vsel %vm1999, %v1955, 0
      %v2004 = vsel %vm1999, %v1956, 0
      %v2007 = vsel %vm1999, %v1957, 0
      %v2010 = vsel %vm1999, %v1958, 0
      %v2013 = vsel %vm1999, %v1959, 0
      %v2016 = vsel %vm1999, %v1960, 0
      %v2019 = vsel %vm1999, %v1961, 0
      %v2022 = vsel %vm1999, %v1962, 0
      %v2025 = vsel %vm1999, %v1963, 0
      %v2028 = vsel %vm1999, %v1964, 0
      %v2031 = vsel %vm1999, %v1965, 0
      %v2034 = vsel %vm1999, %v1966, 0
      %v2037 = vsel %vm1999, %v1967, 0
      %v2040 = vsel %vm1999, %v1968, 0
      %v2043 = vsel %vm1999, %v1969, 0
      %v2046 = vsel %vm1999, %v1970, 0
      %v2049 = vsel %vm1999, %v1971, 0
      %v2052 = vsel %vm1999, %v1972, 0
      %v2055 = vsel %vm1999, %v1973, 0
      %v2058 = vsel %vm1999, %v1974, 0
      %v2061 = vsel %vm1999, %v1975, 0
      %v2064 = vsel %vm1999, %v1976, 0
      %v2067 = vsel %vm1999, %v1977, 0
      %v2070 = vsel %vm1999, %v1978, 0
      %v2073 = vsel %vm1999, %v1979, 0
      %v2076 = vsel %vm1999, %v1980, 0
      %v2079 = vsel %vm1999, %v1981, 0
      %v2082 = vsel %vm1999, %v1982, 0
      %v2085 = vsel %vm1999, %v1983, 0
      %v2088 = vsel %vm1999, %v1984, 0
      %v2091 = vsel %vm1999, %v1985, 0
      %v2094 = vsel %vm1999, %v1986, 0
      %vm2096 = vcmask 1043456
      %v2098 = vsel %vm2096, %v1991, 0
      %2100 = vmatprep.subr.mxu0 0.0
      %2101 = vmatpush1.msra.mxu0 %v1987
      %2102 = vmatprep.subr.mxu0 0.0
      %2103 = vmatpush1.msra.mxu0 %v1988
      %2104 = vmatprep.subr.mxu0 0.0
      %2105 = vmatpush1.msra.mxu0 %v1989
      %2106 = vmatprep.subr.mxu0 0.0
      %2107 = vmatpush1.msra.mxu0 %v1990
      %2108 = vmatprep.subr.mxu0 0.0
      %2109 = vmatpush1.msra.mxu0 %v2098
      %2110 = vmatprep.subr.mxu0 0.0
      %2111 = vmatpush1.msra.mxu0 0.0
      %2112 = vmatprep.subr.mxu0 0.0
      %2113 = vmatpush1.msra.mxu0 0.0
      %2114 = vmatprep.subr.mxu0 0.0
      %2115 = vmatpush1.msra.mxu0 0.0
      %2116 = vmatprep.subr.mxu0 0.0
      %2117 = vmatpush1.msra.mxu0 0.0
      %2118 = vmatprep.subr.mxu0 0.0
      %2119 = vmatpush1.msra.mxu0 0.0
      %2120 = vmatprep.subr.mxu0 0.0
      %2121 = vmatpush1.msra.mxu0 0.0
      %2122 = vmatprep.subr.mxu0 0.0
      %2123 = vmatpush1.msra.mxu0 0.0
      %2124 = vmatprep.subr.mxu0 0.0
      %2125 = vmatpush1.msra.mxu0 0.0
      %2126 = vmatprep.subr.mxu0 0.0
      %2127 = vmatpush1.msra.mxu0 0.0
      %2128 = vmatprep.subr.mxu0 0.0
      %2129 = vmatpush1.msra.mxu0 0.0
      %2130 = vmatprep.subr.mxu0 0.0
      %2131 = vmatpush1.msra.mxu0 0.0
      %2132 = vmatprep.subr.mxu0 0.0
      %2133 = vmatpush1.msra.mxu0 0.0
      %2134 = vmatprep.subr.mxu0 0.0
      %2135 = vmatpush1.msra.mxu0 0.0
      %2136 = vmatprep.subr.mxu0 0.0
      %2137 = vmatpush1.msra.mxu0 0.0
      %2138 = vmatprep.subr.mxu0 0.0
      %2139 = vmatpush1.msra.mxu0 0.0
      %2140 = vmatprep.subr.mxu0 0.0
      %2141 = vmatpush1.msra.mxu0 0.0
      %2142 = vmatprep.subr.mxu0 0.0
      %2143 = vmatpush1.msra.mxu0 0.0
      %2144 = vmatprep.subr.mxu0 0.0
      %2145 = vmatpush1.msra.mxu0 0.0
      %2146 = vmatprep.subr.mxu0 0.0
      %2147 = vmatpush1.msra.mxu0 0.0
      %2148 = vmatprep.subr.mxu0 0.0
      %2149 = vmatpush1.msra.mxu0 0.0
      %2150 = vmatprep.subr.mxu0 0.0
      %2151 = vmatpush1.msra.mxu0 0.0
      %2152 = vmatprep.subr.mxu0 0.0
      %2153 = vmatpush1.msra.mxu0 0.0
      %2154 = vmatprep.subr.mxu0 0.0
      %2155 = vmatpush1.msra.mxu0 0.0
      %2156 = vmatprep.subr.mxu0 0.0
      %2157 = vmatpush1.msra.mxu0 0.0
      %2158 = vmatprep.subr.mxu0 0.0
      %2159 = vmatpush1.msra.mxu0 0.0
      %2160 = vmatprep.subr.mxu0 0.0
      %2161 = vmatpush1.msra.mxu0 0.0
      %2162 = vmatprep.subr.mxu0 0.0
      %2163 = vmatpush1.msra.mxu0 0.0
      %2164 = vmatprep.mubr.f32.mxu0 0.0
      %2165 = vmatmul.mubr.f32.gmra.mrb[0].mxu0 %v2001
      %v2166 = vpop.f32.mrb[0].mxu0
      %v2167 = vadd.f32 %v1997, %v2166
      %v2168 = vpop.f32.mrb[0].mxu0
      %2169 = vmatprep.mubr.f32.mxu0 0.0
      %2170 = vmatmul.mubr.f32.gmra.mrb[0].mxu0 %v2004
      %v2171 = vpop.f32.mrb[0].mxu0
      %v2172 = vadd.f32 %v1997, %v2171
      %v2173 = vpop.f32.mrb[0].mxu0
      %2174 = vmatprep.mubr.f32.mxu0 0.0
      %2175 = vmatmul.mubr.f32.gmra.mrb[0].mxu0 %v2007
      %v2176 = vpop.f32.mrb[0].mxu0
      %v2177 = vadd.f32 %v1997, %v2176
      %v2178 = vpop.f32.mrb[0].mxu0
      %2179 = vmatprep.mubr.f32.mxu0 0.0
      %2180 = vmatmul.mubr.f32.gmra.mrb[0].mxu0 %v2010
      %v2181 = vpop.f32.mrb[0].mxu0
      %v2182 = vadd.f32 %v1997, %v2181
      %v2183 = vpop.f32.mrb[0].mxu0
      %2184 = vmatprep.mubr.f32.mxu0 0.0
      %2185 = vmatmul.mubr.f32.gmra.mrb[0].mxu0 %v2013
      %v2186 = vpop.f32.mrb[0].mxu0
      %v2187 = vadd.f32 %v1997, %v2186
      %v2188 = vpop.f32.mrb[0].mxu0
      %2189 = vmatprep.mubr.f32.mxu0 0.0
      %2190 = vmatmul.mubr.f32.gmra.mrb[0].mxu0 %v2016
      %v2191 = vpop.f32.mrb[0].mxu0
      %v2192 = vadd.f32 %v1997, %v2191
      %v2193 = vpop.f32.mrb[0].mxu0
      %2194 = vmatprep.mubr.f32.mxu0 0.0
      %2195 = vmatmul.mubr.f32.gmra.mrb[0].mxu0 %v2019
      %v2196 = vpop.f32.mrb[0].mxu0
      %v2197 = vadd.f32 %v1997, %v2196
      %v2198 = vpop.f32.mrb[0].mxu0
      %2199 = vmatprep.mubr.f32.mxu0 0.0
      %2200 = vmatmul.mubr.f32.gmra.mrb[0].mxu0 %v2022
      %v2201 = vpop.f32.mrb[0].mxu0
      %v2202 = vadd.f32 %v1997, %v2201
      %v2203 = vpop.f32.mrb[0].mxu0
      %2204 = vmatprep.mubr.f32.mxu0 0.0
      %2205 = vmatmul.mubr.f32.gmra.mrb[0].mxu0 %v2025
      %v2206 = vpop.f32.mrb[0].mxu0
      %v2207 = vadd.f32 %v1997, %v2206
      %v2208 = vpop.f32.mrb[0].mxu0
      %2209 = vmatprep.mubr.f32.mxu0 0.0
      %2210 = vmatmul.mubr.f32.gmra.mrb[0].mxu0 %v2028
      %v2211 = vpop.f32.mrb[0].mxu0
      %v2212 = vadd.f32 %v1997, %v2211
      %v2213 = vpop.f32.mrb[0].mxu0
      %2214 = vmatprep.mubr.f32.mxu0 0.0
      %2215 = vmatmul.mubr.f32.gmra.mrb[0].mxu0 %v2031
      %v2216 = vpop.f32.mrb[0].mxu0
      %v2217 = vadd.f32 %v1997, %v2216
      %v2218 = vpop.f32.mrb[0].mxu0
      %2219 = vmatprep.mubr.f32.mxu0 0.0
      %2220 = vmatmul.mubr.f32.gmra.mrb[0].mxu0 %v2034
      %v2221 = vpop.f32.mrb[0].mxu0
      %v2222 = vadd.f32 %v1997, %v2221
      %v2223 = vpop.f32.mrb[0].mxu0
      %2224 = vmatprep.mubr.f32.mxu0 0.0
      %2225 = vmatmul.mubr.f32.gmra.mrb[0].mxu0 %v2037
      %v2226 = vpop.f32.mrb[0].mxu0
      %v2227 = vadd.f32 %v1997, %v2226
      %v2228 = vpop.f32.mrb[0].mxu0
      %2229 = vmatprep.mubr.f32.mxu0 0.0
      %2230 = vmatmul.mubr.f32.gmra.mrb[0].mxu0 %v2040
      %v2231 = vpop.f32.mrb[0].mxu0
      %v2232 = vadd.f32 %v1997, %v2231
      %v2233 = vpop.f32.mrb[0].mxu0
      %2234 = vmatprep.mubr.f32.mxu0 0.0
      %2235 = vmatmul.mubr.f32.gmra.mrb[0].mxu0 %v2043
      %v2236 = vpop.f32.mrb[0].mxu0
      %v2237 = vadd.f32 %v1997, %v2236
      %v2238 = vpop.f32.mrb[0].mxu0
      %2239 = vmatprep.mubr.f32.mxu0 0.0
      %2240 = vmatmul.mubr.f32.gmra.mrb[0].mxu0 %v2046
      %v2241 = vpop.f32.mrb[0].mxu0
      %v2242 = vadd.f32 %v1997, %v2241
      %v2243 = vpop.f32.mrb[0].mxu0
      %2244 = vmatprep.mubr.f32.mxu0 0.0
      %2245 = vmatmul.mubr.f32.gmra.mrb[0].mxu0 %v2049
      %v2246 = vpop.f32.mrb[0].mxu0
      %v2247 = vadd.f32 %v1997, %v2246
      %v2248 = vpop.f32.mrb[0].mxu0
      %2249 = vmatprep.mubr.f32.mxu0 0.0
      %2250 = vmatmul.mubr.f32.gmra.mrb[0].mxu0 %v2052
      %v2251 = vpop.f32.mrb[0].mxu0
      %v2252 = vadd.f32 %v1997, %v2251
      %v2253 = vpop.f32.mrb[0].mxu0
      %2254 = vmatprep.mubr.f32.mxu0 0.0
      %2255 = vmatmul.mubr.f32.gmra.mrb[0].mxu0 %v2055
      %v2256 = vpop.f32.mrb[0].mxu0
      %v2257 = vadd.f32 %v1997, %v2256
      %v2258 = vpop.f32.mrb[0].mxu0
      %2259 = vmatprep.mubr.f32.mxu0 0.0
      %2260 = vmatmul.mubr.f32.gmra.mrb[0].mxu0 %v2058
      %v2261 = vpop.f32.mrb[0].mxu0
      %v2262 = vadd.f32 %v1997, %v2261
      %v2263 = vpop.f32.mrb[0].mxu0
      %2264 = vmatprep.mubr.f32.mxu0 0.0
      %2265 = vmatmul.mubr.f32.gmra.mrb[0].mxu0 %v2061
      %v2266 = vpop.f32.mrb[0].mxu0
      %v2267 = vadd.f32 %v1997, %v2266
      %v2268 = vpop.f32.mrb[0].mxu0
      %2269 = vmatprep.mubr.f32.mxu0 0.0
      %2270 = vmatmul.mubr.f32.gmra.mrb[0].mxu0 %v2064
      %v2271 = vpop.f32.mrb[0].mxu0
      %v2272 = vadd.f32 %v1997, %v2271
      %v2273 = vpop.f32.mrb[0].mxu0
      %2274 = vmatprep.mubr.f32.mxu0 0.0
      %2275 = vmatmul.mubr.f32.gmra.mrb[0].mxu0 %v2067
      %v2276 = vpop.f32.mrb[0].mxu0
      %v2277 = vadd.f32 %v1997, %v2276
      %v2278 = vpop.f32.mrb[0].mxu0
      %2279 = vmatprep.mubr.f32.mxu0 0.0
      %2280 = vmatmul.mubr.f32.gmra.mrb[0].mxu0 %v2070
      %v2281 = vpop.f32.mrb[0].mxu0
      %v2282 = vadd.f32 %v1997, %v2281
      %v2283 = vpop.f32.mrb[0].mxu0
      %2284 = vmatprep.mubr.f32.mxu0 0.0
      %2285 = vmatmul.mubr.f32.gmra.mrb[0].mxu0 %v2073
      %v2286 = vpop.f32.mrb[0].mxu0
      %v2287 = vadd.f32 %v1997, %v2286
      %v2288 = vpop.f32.mrb[0].mxu0
      %2289 = vmatprep.mubr.f32.mxu0 0.0
      %2290 = vmatmul.mubr.f32.gmra.mrb[0].mxu0 %v2076
      %v2291 = vpop.f32.mrb[0].mxu0
      %v2292 = vadd.f32 %v1997, %v2291
      %v2293 = vpop.f32.mrb[0].mxu0
      %2294 = vmatprep.mubr.f32.mxu0 0.0
      %2295 = vmatmul.mubr.f32.gmra.mrb[0].mxu0 %v2079
      %v2296 = vpop.f32.mrb[0].mxu0
      %v2297 = vadd.f32 %v1997, %v2296
      %v2298 = vpop.f32.mrb[0].mxu0
      %2299 = vmatprep.mubr.f32.mxu0 0.0
      %2300 = vmatmul.mubr.f32.gmra.mrb[0].mxu0 %v2082
      %v2301 = vpop.f32.mrb[0].mxu0
      %v2302 = vadd.f32 %v1997, %v2301
      %v2303 = vpop.f32.mrb[0].mxu0
      %2304 = vmatprep.mubr.f32.mxu0 0.0
      %2305 = vmatmul.mubr.f32.gmra.mrb[0].mxu0 %v2085
      %v2306 = vpop.f32.mrb[0].mxu0
      %v2307 = vadd.f32 %v1997, %v2306
      %v2308 = vpop.f32.mrb[0].mxu0
      %2309 = vmatprep.mubr.f32.mxu0 0.0
      %2310 = vmatmul.mubr.f32.gmra.mrb[0].mxu0 %v2088
      %v2311 = vpop.f32.mrb[0].mxu0
      %v2312 = vadd.f32 %v1997, %v2311
      %v2313 = vpop.f32.mrb[0].mxu0
      %2314 = vmatprep.mubr.f32.mxu0 0.0
      %2315 = vmatmul.mubr.f32.gmra.mrb[0].mxu0 %v2091
      %v2316 = vpop.f32.mrb[0].mxu0
      %v2317 = vadd.f32 %v1997, %v2316
      %v2318 = vpop.f32.mrb[0].mxu0
      %2319 = vmatprep.mubr.f32.mxu0 0.0
      %2320 = vmatmul.mubr.f32.gmra.mrb[0].mxu0 %v2094
      %v2321 = vpop.f32.mrb[0].mxu0
      %v2322 = vadd.f32 %v1997, %v2321
      %v2323 = vpop.f32.mrb[0].mxu0
      %2324 = vdwg.mxu0
      %2325 = vst.msk [vmem:[#allocation4] sm:$0xff] %vm225, 0.0
      %2326 = vst.msk [vmem:[#allocation4 + $0x8] sm:$0xff] %vm225, 0.0
      %2327 = vst.msk [vmem:[#allocation4 + $0x10] sm:$0x3] %vm228, 0.0
      %2328 = vst.msk [vmem:[#allocation4 + $0x18] sm:$0xff] %vm225, 0.0
      %2329 = vst.msk [vmem:[#allocation4 + $0x20] sm:$0xff] %vm225, 0.0
      %2330 = vst.msk [vmem:[#allocation4 + $0x28] sm:$0x3] %vm228, 0.0
      %2331 = vst.msk [vmem:[#allocation4 + $0x30] sm:$0xff] %vm225, 0.0
      %2332 = vst.msk [vmem:[#allocation4 + $0x38] sm:$0xff] %vm225, 0.0
      %2333 = vst.msk [vmem:[#allocation4 + $0x40] sm:$0x3] %vm228, 0.0
      %2334 = vst.msk [vmem:[#allocation4 + $0x48] sm:$0xff] %vm225, 0.0
      %2335 = vst.msk [vmem:[#allocation4 + $0x50] sm:$0xff] %vm225, 0.0
      %2336 = vst.msk [vmem:[#allocation4 + $0x58] sm:$0x3] %vm228, 0.0
      %2337 = vst.msk [vmem:[#allocation4 + $0x60] sm:$0xff] %vm225, 0.0
      %2338 = vst.msk [vmem:[#allocation4 + $0x68] sm:$0xff] %vm225, 0.0
      %2339 = vst.msk [vmem:[#allocation4 + $0x70] sm:$0x3] %vm228, 0.0
      %2340 = vst.msk [vmem:[#allocation4 + $0x78] sm:$0xff] %vm225, 0.0
      %2341 = vst.msk [vmem:[#allocation4 + $0x80] sm:$0xff] %vm225, 0.0
      %2342 = vst.msk [vmem:[#allocation4 + $0x88] sm:$0x3] %vm228, 0.0
      %2343 = vst.msk [vmem:[#allocation4 + $0x90] sm:$0xff] %vm225, 0.0
      %2344 = vst.msk [vmem:[#allocation4 + $0x98] sm:$0xff] %vm225, 0.0
      %2345 = vst.msk [vmem:[#allocation4 + $0xa0] sm:$0x3] %vm228, 0.0
      %2346 = vst.msk [vmem:[#allocation4 + $0xa8] sm:$0xff] %vm225, 0.0
      %2347 = vst.msk [vmem:[#allocation4 + $0xb0] sm:$0xff] %vm225, 0.0
      %2348 = vst.msk [vmem:[#allocation4 + $0xb8] sm:$0x3] %vm228, 0.0
      %2349 = vst.msk [vmem:[#allocation4 + $0xc0] sm:$0xff] %vm225, 0.0
      %2350 = vst.msk [vmem:[#allocation4 + $0xc8] sm:$0xff] %vm225, 0.0
      %2351 = vst.msk [vmem:[#allocation4 + $0xd0] sm:$0x3] %vm228, 0.0
      %2352 = vst.msk [vmem:[#allocation4 + $0xd8] sm:$0xff] %vm225, 0.0
      %2353 = vst.msk [vmem:[#allocation4 + $0xe0] sm:$0xff] %vm225, 0.0
      %2354 = vst.msk [vmem:[#allocation4 + $0xe8] sm:$0x3] %vm228, 0.0
      %2355 = vst.msk [vmem:[#allocation4 + $0xf0] sm:$0xff] %vm225, 0.0
      %2356 = vst.msk [vmem:[#allocation4 + $0xf8] sm:$0xff] %vm225, 0.0
      %2357 = vst.msk [vmem:[#allocation4 + $0x100] sm:$0x3] %vm228, 0.0
      %2358 = vst.msk [vmem:[#allocation4 + $0x108] sm:$0xff] %vm225, 0.0
      %2359 = vst.msk [vmem:[#allocation4 + $0x110] sm:$0xff] %vm225, 0.0
      %2360 = vst.msk [vmem:[#allocation4 + $0x118] sm:$0x3] %vm228, 0.0
      %2361 = vst.msk [vmem:[#allocation4 + $0x120] sm:$0xff] %vm225, 0.0
      %2362 = vst.msk [vmem:[#allocation4 + $0x128] sm:$0xff] %vm225, 0.0
      %2363 = vst.msk [vmem:[#allocation4 + $0x130] sm:$0x3] %vm228, 0.0
      %2364 = vst.msk [vmem:[#allocation4 + $0x138] sm:$0xff] %vm225, 0.0
      %2365 = vst.msk [vmem:[#allocation4 + $0x140] sm:$0xff] %vm225, 0.0
      %2366 = vst.msk [vmem:[#allocation4 + $0x148] sm:$0x3] %vm228, 0.0
      %2367 = vst.msk [vmem:[#allocation4 + $0x150] sm:$0xff] %vm225, 0.0
      %2368 = vst.msk [vmem:[#allocation4 + $0x158] sm:$0xff] %vm225, 0.0
      %2369 = vst.msk [vmem:[#allocation4 + $0x160] sm:$0x3] %vm228, 0.0
      %2370 = vst.msk [vmem:[#allocation4 + $0x168] sm:$0xff] %vm225, 0.0
      %2371 = vst.msk [vmem:[#allocation4 + $0x170] sm:$0xff] %vm225, 0.0
      %2372 = vst.msk [vmem:[#allocation4 + $0x178] sm:$0x3] %vm228, 0.0
      %2373 = vst.msk [vmem:[#allocation4 + $0x180] sm:$0xff] %vm225, 0.0
      %2374 = vst.msk [vmem:[#allocation4 + $0x188] sm:$0xff] %vm225, 0.0
      %2375 = vst.msk [vmem:[#allocation4 + $0x190] sm:$0x3] %vm228, 0.0
      %2376 = vst.msk [vmem:[#allocation4 + $0x198] sm:$0xff] %vm225, 0.0
      %2377 = vst.msk [vmem:[#allocation4 + $0x1a0] sm:$0xff] %vm225, 0.0
      %2378 = vst.msk [vmem:[#allocation4 + $0x1a8] sm:$0x3] %vm228, 0.0
      %2379 = vst.msk [vmem:[#allocation4 + $0x1b0] sm:$0xff] %vm225, 0.0
      %2380 = vst.msk [vmem:[#allocation4 + $0x1b8] sm:$0xff] %vm225, 0.0
      %2381 = vst.msk [vmem:[#allocation4 + $0x1c0] sm:$0x3] %vm228, 0.0
      %2382 = vst.msk [vmem:[#allocation4 + $0x1c8] sm:$0xff] %vm225, 0.0
      %2383 = vst.msk [vmem:[#allocation4 + $0x1d0] sm:$0xff] %vm225, 0.0
      %2384 = vst.msk [vmem:[#allocation4 + $0x1d8] sm:$0x3] %vm228, 0.0
      %2385 = vst.msk [vmem:[#allocation4 + $0x1e0] sm:$0xff] %vm225, 0.0
      %2386 = vst.msk [vmem:[#allocation4 + $0x1e8] sm:$0xff] %vm225, 0.0
      %2387 = vst.msk [vmem:[#allocation4 + $0x1f0] sm:$0x3] %vm228, 0.0
      %2388 = vst.msk [vmem:[#allocation4 + $0x1f8] sm:$0xff] %vm225, 0.0
      %2389 = vst.msk [vmem:[#allocation4 + $0x200] sm:$0xff] %vm225, 0.0
      %2390 = vst.msk [vmem:[#allocation4 + $0x208] sm:$0x3] %vm228, 0.0
      %2391 = vst.msk [vmem:[#allocation4 + $0x210] sm:$0xff] %vm225, 0.0
      %2392 = vst.msk [vmem:[#allocation4 + $0x218] sm:$0xff] %vm225, 0.0
      %2393 = vst.msk [vmem:[#allocation4 + $0x220] sm:$0x3] %vm228, 0.0
      %2394 = vst.msk [vmem:[#allocation4 + $0x228] sm:$0xff] %vm225, 0.0
      %2395 = vst.msk [vmem:[#allocation4 + $0x230] sm:$0xff] %vm225, 0.0
      %2396 = vst.msk [vmem:[#allocation4 + $0x238] sm:$0x3] %vm228, 0.0
      %2397 = vst.msk [vmem:[#allocation4 + $0x240] sm:$0xff] %vm225, 0.0
      %2398 = vst.msk [vmem:[#allocation4 + $0x248] sm:$0xff] %vm225, 0.0
      %2399 = vst.msk [vmem:[#allocation4 + $0x250] sm:$0x3] %vm228, 0.0
      %2400 = vst.msk [vmem:[#allocation4 + $0x258] sm:$0xff] %vm225, 0.0
      %2401 = vst.msk [vmem:[#allocation4 + $0x260] sm:$0xff] %vm225, 0.0
      %2402 = vst.msk [vmem:[#allocation4 + $0x268] sm:$0x3] %vm228, 0.0
      %2403 = vst.msk [vmem:[#allocation4 + $0x270] sm:$0xff] %vm225, 0.0
      %2404 = vst.msk [vmem:[#allocation4 + $0x278] sm:$0xff] %vm225, 0.0
      %2405 = vst.msk [vmem:[#allocation4 + $0x280] sm:$0x3] %vm228, 0.0
      %2406 = vst.msk [vmem:[#allocation4 + $0x288] sm:$0xff] %vm225, 0.0
      %2407 = vst.msk [vmem:[#allocation4 + $0x290] sm:$0xff] %vm225, 0.0
      %2408 = vst.msk [vmem:[#allocation4 + $0x298] sm:$0x3] %vm228, 0.0
      %2409 = vst.msk [vmem:[#allocation4 + $0x2a0] sm:$0xff] %vm225, 0.0
      %2410 = vst.msk [vmem:[#allocation4 + $0x2a8] sm:$0xff] %vm225, 0.0
      %2411 = vst.msk [vmem:[#allocation4 + $0x2b0] sm:$0x3] %vm228, 0.0
      %2412 = vst.msk [vmem:[#allocation4 + $0x2b8] sm:$0xff] %vm225, 0.0
      %2413 = vst.msk [vmem:[#allocation4 + $0x2c0] sm:$0xff] %vm225, 0.0
      %2414 = vst.msk [vmem:[#allocation4 + $0x2c8] sm:$0x3] %vm228, 0.0
      %2415 = vst.msk [vmem:[#allocation4 + $0x2d0] sm:$0xff] %vm225, 0.0
      %2416 = vst.msk [vmem:[#allocation4 + $0x2d8] sm:$0xff] %vm225, 0.0
      %2417 = vst.msk [vmem:[#allocation4 + $0x2e0] sm:$0x3] %vm228, 0.0
      %2418 = vst.msk [vmem:[#allocation4 + $0x2e8] sm:$0xff] %vm225, 0.0
      %2419 = vst.msk [vmem:[#allocation4 + $0x2f0] sm:$0xff] %vm225, 0.0
      %2420 = vst.msk [vmem:[#allocation4 + $0x2f8] sm:$0x3] %vm228, 0.0
      %2421 = vst.msk [vmem:[#allocation4 + $0x300] sm:$0xff] %vm225, 0.0
      %2422 = vst.msk [vmem:[#allocation4 + $0x308] sm:$0xff] %vm225, 0.0
      %2423 = vst.msk [vmem:[#allocation4 + $0x310] sm:$0x3] %vm228, 0.0
      %2424 = vst.msk [vmem:[#allocation4 + $0x318] sm:$0xff] %vm225, 0.0
      %2425 = vst.msk [vmem:[#allocation4 + $0x320] sm:$0xff] %vm225, 0.0
      %2426 = vst.msk [vmem:[#allocation4 + $0x328] sm:$0x3] %vm228, 0.0
      %2427 = vst.msk [vmem:[#allocation4 + $0x330] sm:$0xff] %vm225, 0.0
      %2428 = vst.msk [vmem:[#allocation4 + $0x338] sm:$0xff] %vm225, 0.0
      %2429 = vst.msk [vmem:[#allocation4 + $0x340] sm:$0x3] %vm228, 0.0
      %2430 = vst.msk [vmem:[#allocation4 + $0x348] sm:$0xff] %vm225, 0.0
      %2431 = vst.msk [vmem:[#allocation4 + $0x350] sm:$0xff] %vm225, 0.0
      %2432 = vst.msk [vmem:[#allocation4 + $0x358] sm:$0x3] %vm228, 0.0
      %2433 = vst.msk [vmem:[#allocation4 + $0x360] sm:$0xff] %vm225, 0.0
      %2434 = vst.msk [vmem:[#allocation4 + $0x368] sm:$0xff] %vm225, 0.0
      %2435 = vst.msk [vmem:[#allocation4 + $0x370] sm:$0x3] %vm228, 0.0
      %2436 = vst.msk [vmem:[#allocation4 + $0x378] sm:$0xff] %vm225, 0.0
      %2437 = vst.msk [vmem:[#allocation4 + $0x380] sm:$0xff] %vm225, 0.0
      %2438 = vst.msk [vmem:[#allocation4 + $0x388] sm:$0x3] %vm228, 0.0
      %2439 = vst.msk [vmem:[#allocation4 + $0x390] sm:$0xff] %vm225, 0.0
      %2440 = vst.msk [vmem:[#allocation4 + $0x398] sm:$0xff] %vm225, 0.0
      %2441 = vst.msk [vmem:[#allocation4 + $0x3a0] sm:$0x3] %vm228, 0.0
      %2442 = vst.msk [vmem:[#allocation4 + $0x3a8] sm:$0xff] %vm225, 0.0
      %2443 = vst.msk [vmem:[#allocation4 + $0x3b0] sm:$0xff] %vm225, 0.0
      %2444 = vst.msk [vmem:[#allocation4 + $0x3b8] sm:$0x3] %vm228, 0.0
      %2445 = vst.msk [vmem:[#allocation4 + $0x3c0] sm:$0xff] %vm225, 0.0
      %2446 = vst.msk [vmem:[#allocation4 + $0x3c8] sm:$0xff] %vm225, 0.0
      %2447 = vst.msk [vmem:[#allocation4 + $0x3d0] sm:$0x3] %vm228, 0.0
      %2448 = vst.msk [vmem:[#allocation4 + $0x3d8] sm:$0xff] %vm225, 0.0
      %2449 = vst.msk [vmem:[#allocation4 + $0x3e0] sm:$0xff] %vm225, 0.0
      %2450 = vst.msk [vmem:[#allocation4 + $0x3e8] sm:$0x3] %vm228, 0.0
      %2451 = vst.msk [vmem:[#allocation4 + $0x3f0] sm:$0xff] %vm225, 0.0
      %2452 = vst.msk [vmem:[#allocation4 + $0x3f8] sm:$0xff] %vm225, 0.0
      %2453 = vst.msk [vmem:[#allocation4 + $0x400] sm:$0x3] %vm228, 0.0
      %2454 = vst.msk [vmem:[#allocation4 + $0x408] sm:$0xff] %vm225, 0.0
      %2455 = vst.msk [vmem:[#allocation4 + $0x410] sm:$0xff] %vm225, 0.0
      %2456 = vst.msk [vmem:[#allocation4 + $0x418] sm:$0x3] %vm228, 0.0
      %2457 = vst.msk [vmem:[#allocation4 + $0x420] sm:$0xff] %vm225, 0.0
      %2458 = vst.msk [vmem:[#allocation4 + $0x428] sm:$0xff] %vm225, 0.0
      %2459 = vst.msk [vmem:[#allocation4 + $0x430] sm:$0x3] %vm228, 0.0
      %2460 = vst.msk [vmem:[#allocation4 + $0x438] sm:$0xff] %vm225, 0.0
      %2461 = vst.msk [vmem:[#allocation4 + $0x440] sm:$0xff] %vm225, 0.0
      %2462 = vst.msk [vmem:[#allocation4 + $0x448] sm:$0x3] %vm228, 0.0
      %2463 = vst.msk [vmem:[#allocation4 + $0x450] sm:$0xff] %vm225, 0.0
      %2464 = vst.msk [vmem:[#allocation4 + $0x458] sm:$0xff] %vm225, 0.0
      %2465 = vst.msk [vmem:[#allocation4 + $0x460] sm:$0x3] %vm228, 0.0
      %2466 = vst.msk [vmem:[#allocation4 + $0x468] sm:$0xff] %vm225, 0.0
      %2467 = vst.msk [vmem:[#allocation4 + $0x470] sm:$0xff] %vm225, 0.0
      %2468 = vst.msk [vmem:[#allocation4 + $0x478] sm:$0x3] %vm228, 0.0
      %2469 = vst.msk [vmem:[#allocation4 + $0x480] sm:$0xff] %vm225, 0.0
      %2470 = vst.msk [vmem:[#allocation4 + $0x488] sm:$0xff] %vm225, 0.0
      %2471 = vst.msk [vmem:[#allocation4 + $0x490] sm:$0x3] %vm228, 0.0
      %2472 = vst.msk [vmem:[#allocation4 + $0x498] sm:$0xff] %vm225, 0.0
      %2473 = vst.msk [vmem:[#allocation4 + $0x4a0] sm:$0xff] %vm225, 0.0
      %2474 = vst.msk [vmem:[#allocation4 + $0x4a8] sm:$0x3] %vm228, 0.0
      %2475 = vst.msk [vmem:[#allocation4 + $0x4b0] sm:$0xff] %vm225, 0.0
      %2476 = vst.msk [vmem:[#allocation4 + $0x4b8] sm:$0xff] %vm225, 0.0
      %2477 = vst.msk [vmem:[#allocation4 + $0x4c0] sm:$0x3] %vm228, 0.0
      %2478 = vst.msk [vmem:[#allocation4 + $0x4c8] sm:$0xff] %vm225, 0.0
      %2479 = vst.msk [vmem:[#allocation4 + $0x4d0] sm:$0xff] %vm225, 0.0
      %2480 = vst.msk [vmem:[#allocation4 + $0x4d8] sm:$0x3] %vm228, 0.0
      %2481 = vst.msk [vmem:[#allocation4 + $0x4e0] sm:$0xff] %vm225, 0.0
      %2482 = vst.msk [vmem:[#allocation4 + $0x4e8] sm:$0xff] %vm225, 0.0
      %2483 = vst.msk [vmem:[#allocation4 + $0x4f0] sm:$0x3] %vm228, 0.0
      %2484 = vst.msk [vmem:[#allocation4 + $0x4f8] sm:$0xff] %vm225, 0.0
      %2485 = vst.msk [vmem:[#allocation4 + $0x500] sm:$0xff] %vm225, 0.0
      %2486 = vst.msk [vmem:[#allocation4 + $0x508] sm:$0x3] %vm228, 0.0
      %2487 = vst.msk [vmem:[#allocation4 + $0x510] sm:$0xff] %vm225, 0.0
      %2488 = vst.msk [vmem:[#allocation4 + $0x518] sm:$0xff] %vm225, 0.0
      %2489 = vst.msk [vmem:[#allocation4 + $0x520] sm:$0x3] %vm228, 0.0
      %2490 = vst.msk [vmem:[#allocation4 + $0x528] sm:$0xff] %vm225, 0.0
      %2491 = vst.msk [vmem:[#allocation4 + $0x530] sm:$0xff] %vm225, 0.0
      %2492 = vst.msk [vmem:[#allocation4 + $0x538] sm:$0x3] %vm228, 0.0
      %2493 = vst.msk [vmem:[#allocation4 + $0x540] sm:$0xff] %vm225, 0.0
      %2494 = vst.msk [vmem:[#allocation4 + $0x548] sm:$0xff] %vm225, 0.0
      %2495 = vst.msk [vmem:[#allocation4 + $0x550] sm:$0x3] %vm228, 0.0
      %2496 = vst.msk [vmem:[#allocation4 + $0x558] sm:$0xff] %vm225, 0.0
      %2497 = vst.msk [vmem:[#allocation4 + $0x560] sm:$0xff] %vm225, 0.0
      %2498 = vst.msk [vmem:[#allocation4 + $0x568] sm:$0x3] %vm228, 0.0
      %2499 = vst.msk [vmem:[#allocation4 + $0x570] sm:$0xff] %vm225, 0.0
      %2500 = vst.msk [vmem:[#allocation4 + $0x578] sm:$0xff] %vm225, 0.0
      %2501 = vst.msk [vmem:[#allocation4 + $0x580] sm:$0x3] %vm228, 0.0
      %2502 = vst.msk [vmem:[#allocation4 + $0x588] sm:$0xff] %vm225, 0.0
      %2503 = vst.msk [vmem:[#allocation4 + $0x590] sm:$0xff] %vm225, 0.0
      %2504 = vst.msk [vmem:[#allocation4 + $0x598] sm:$0x3] %vm228, 0.0
      %2505 = vst.msk [vmem:[#allocation4 + $0x5a0] sm:$0xff] %vm225, 0.0
      %2506 = vst.msk [vmem:[#allocation4 + $0x5a8] sm:$0xff] %vm225, 0.0
      %2507 = vst.msk [vmem:[#allocation4 + $0x5b0] sm:$0x3] %vm228, 0.0
      %2508 = vst.msk [vmem:[#allocation4 + $0x5b8] sm:$0xff] %vm225, 0.0
      %2509 = vst.msk [vmem:[#allocation4 + $0x5c0] sm:$0xff] %vm225, 0.0
      %2510 = vst.msk [vmem:[#allocation4 + $0x5c8] sm:$0x3] %vm228, 0.0
      %2511 = vst.msk [vmem:[#allocation4 + $0x5d0] sm:$0xff] %vm225, 0.0
      %2512 = vst.msk [vmem:[#allocation4 + $0x5d8] sm:$0xff] %vm225, 0.0
      %2513 = vst.msk [vmem:[#allocation4 + $0x5e0] sm:$0x3] %vm228, 0.0
      %2514 = vst.msk [vmem:[#allocation4 + $0x5e8] sm:$0xff] %vm225, 0.0
      %2515 = vst.msk [vmem:[#allocation4 + $0x5f0] sm:$0xff] %vm225, 0.0
      %2516 = vst.msk [vmem:[#allocation4 + $0x5f8] sm:$0x3] %vm228, 0.0
      %2517 = vst.msk [vmem:[#allocation4 + $0x600] sm:$0xff] %vm225, 0.0
      %2518 = vst.msk [vmem:[#allocation4 + $0x608] sm:$0xff] %vm225, 0.0
      %2519 = vst.msk [vmem:[#allocation4 + $0x610] sm:$0x3] %vm228, 0.0
      %2520 = vst.msk [vmem:[#allocation4 + $0x618] sm:$0xff] %vm225, 0.0
      %2521 = vst.msk [vmem:[#allocation4 + $0x620] sm:$0xff] %vm225, 0.0
      %2522 = vst.msk [vmem:[#allocation4 + $0x628] sm:$0x3] %vm228, 0.0
      %2523 = vst.msk [vmem:[#allocation4 + $0x630] sm:$0xff] %vm225, 0.0
      %2524 = vst.msk [vmem:[#allocation4 + $0x638] sm:$0xff] %vm225, 0.0
      %2525 = vst.msk [vmem:[#allocation4 + $0x640] sm:$0x3] %vm228, 0.0
      %2526 = vst.msk [vmem:[#allocation4 + $0x648] sm:$0xff] %vm225, 0.0
      %2527 = vst.msk [vmem:[#allocation4 + $0x650] sm:$0xff] %vm225, 0.0
      %2528 = vst.msk [vmem:[#allocation4 + $0x658] sm:$0x3] %vm228, 0.0
      %2529 = vst.msk [vmem:[#allocation4 + $0x660] sm:$0xff] %vm225, 0.0
      %2530 = vst.msk [vmem:[#allocation4 + $0x668] sm:$0xff] %vm225, 0.0
      %2531 = vst.msk [vmem:[#allocation4 + $0x670] sm:$0x3] %vm228, 0.0
      %2532 = vst.msk [vmem:[#allocation4 + $0x678] sm:$0xff] %vm225, 0.0
      %2533 = vst.msk [vmem:[#allocation4 + $0x680] sm:$0xff] %vm225, 0.0
      %2534 = vst.msk [vmem:[#allocation4 + $0x688] sm:$0x3] %vm228, 0.0
      %2535 = vst.msk [vmem:[#allocation4 + $0x690] sm:$0xff] %vm225, 0.0
      %2536 = vst.msk [vmem:[#allocation4 + $0x698] sm:$0xff] %vm225, 0.0
      %2537 = vst.msk [vmem:[#allocation4 + $0x6a0] sm:$0x3] %vm228, 0.0
      %2538 = vst.msk [vmem:[#allocation4 + $0x6a8] sm:$0xff] %vm225, 0.0
      %2539 = vst.msk [vmem:[#allocation4 + $0x6b0] sm:$0xff] %vm225, 0.0
      %2540 = vst.msk [vmem:[#allocation4 + $0x6b8] sm:$0x3] %vm228, 0.0
      %s2541 = scalar_lea.vmem [#allocation4], 24
      %2542 = vst.msk [vmem:[%s2541 + $0x1] sm:$0xff] %vm225, %v2167
      %2543 = vst.msk [vmem:[%s2541 + $0x9] sm:$0xff] %vm225, %v2172
      %2544 = vst.msk [vmem:[%s2541 + $0x19] sm:$0xff] %vm225, %v2177
      %2545 = vst.msk [vmem:[%s2541 + $0x21] sm:$0xff] %vm225, %v2182
      %2546 = vst.msk [vmem:[%s2541 + $0x31] sm:$0xff] %vm225, %v2187
      %2547 = vst.msk [vmem:[%s2541 + $0x39] sm:$0xff] %vm225, %v2192
      %2548 = vst.msk [vmem:[%s2541 + $0x49] sm:$0xff] %vm225, %v2197
      %2549 = vst.msk [vmem:[%s2541 + $0x51] sm:$0xff] %vm225, %v2202
      %2550 = vst.msk [vmem:[%s2541 + $0x61] sm:$0xff] %vm225, %v2207
      %2551 = vst.msk [vmem:[%s2541 + $0x69] sm:$0xff] %vm225, %v2212
      %2552 = vst.msk [vmem:[%s2541 + $0x79] sm:$0xff] %vm225, %v2217
      %2553 = vst.msk [vmem:[%s2541 + $0x81] sm:$0xff] %vm225, %v2222
      %2554 = vst.msk [vmem:[%s2541 + $0x91] sm:$0xff] %vm225, %v2227
      %2555 = vst.msk [vmem:[%s2541 + $0x99] sm:$0xff] %vm225, %v2232
      %2556 = vst.msk [vmem:[%s2541 + $0xa9] sm:$0xff] %vm225, %v2237
      %2557 = vst.msk [vmem:[%s2541 + $0xb1] sm:$0xff] %vm225, %v2242
      %2558 = vst.msk [vmem:[%s2541 + $0xc1] sm:$0xff] %vm225, %v2247
      %2559 = vst.msk [vmem:[%s2541 + $0xc9] sm:$0xff] %vm225, %v2252
      %2560 = vst.msk [vmem:[%s2541 + $0xd9] sm:$0xff] %vm225, %v2257
      %2561 = vst.msk [vmem:[%s2541 + $0xe1] sm:$0xff] %vm225, %v2262
      %2562 = vst.msk [vmem:[%s2541 + $0xf1] sm:$0xff] %vm225, %v2267
      %2563 = vst.msk [vmem:[%s2541 + $0xf9] sm:$0xff] %vm225, %v2272
      %2564 = vst.msk [vmem:[%s2541 + $0x109] sm:$0xff] %vm225, %v2277
      %2565 = vst.msk [vmem:[%s2541 + $0x111] sm:$0xff] %vm225, %v2282
      %2566 = vst.msk [vmem:[%s2541 + $0x121] sm:$0xff] %vm225, %v2287
      %2567 = vst.msk [vmem:[%s2541 + $0x129] sm:$0xff] %vm225, %v2292
      %2568 = vst.msk [vmem:[%s2541 + $0x139] sm:$0xff] %vm225, %v2297
      %2569 = vst.msk [vmem:[%s2541 + $0x141] sm:$0xff] %vm225, %v2302
      %2570 = vst.msk [vmem:[%s2541 + $0x151] sm:$0xff] %vm225, %v2307
      %2571 = vst.msk [vmem:[%s2541 + $0x159] sm:$0xff] %vm225, %v2312
      %2572 = vst.msk [vmem:[%s2541 + $0x169] sm:$0xff] %vm225, %v2317
      %2573 = vst.msk [vmem:[%s2541 + $0x171] sm:$0xff] %vm225, %v2322
      %2606 = vrot.lane.b32.xlu0 %v2167, 124
      %v2607 = vpop.permute.xlu0 %2606
      %2608 = vrot.lane.b32.xlu0 %v2172, 124
      %v2609 = vpop.permute.xlu0 %2608
      %2610 = vrot.lane.b32.xlu0 %v2177, 124
      %v2611 = vpop.permute.xlu0 %2610
      %2612 = vrot.lane.b32.xlu0 %v2182, 124
      %v2613 = vpop.permute.xlu0 %2612
      %2614 = vrot.lane.b32.xlu0 %v2187, 124
      %v2615 = vpop.permute.xlu0 %2614
      %2616 = vrot.lane.b32.xlu0 %v2192, 124
      %v2617 = vpop.permute.xlu0 %2616
      %2618 = vrot.lane.b32.xlu0 %v2197, 124
      %v2619 = vpop.permute.xlu0 %2618
      %2620 = vrot.lane.b32.xlu0 %v2202, 124
      %v2621 = vpop.permute.xlu0 %2620
      %2622 = vrot.lane.b32.xlu0 %v2207, 124
      %v2623 = vpop.permute.xlu0 %2622
      %2624 = vrot.lane.b32.xlu0 %v2212, 124
      %v2625 = vpop.permute.xlu0 %2624
      %2626 = vrot.lane.b32.xlu0 %v2217, 124
      %v2627 = vpop.permute.xlu0 %2626
      %2628 = vrot.lane.b32.xlu0 %v2222, 124
      %v2629 = vpop.permute.xlu0 %2628
      %2630 = vrot.lane.b32.xlu0 %v2227, 124
      %v2631 = vpop.permute.xlu0 %2630
      %2632 = vrot.lane.b32.xlu0 %v2232, 124
      %v2633 = vpop.permute.xlu0 %2632
      %2634 = vrot.lane.b32.xlu0 %v2237, 124
      %v2635 = vpop.permute.xlu0 %2634
      %2636 = vrot.lane.b32.xlu0 %v2242, 124
      %v2637 = vpop.permute.xlu0 %2636
      %2638 = vrot.lane.b32.xlu0 %v2247, 124
      %v2639 = vpop.permute.xlu0 %2638
      %2640 = vrot.lane.b32.xlu0 %v2252, 124
      %v2641 = vpop.permute.xlu0 %2640
      %2642 = vrot.lane.b32.xlu0 %v2257, 124
      %v2643 = vpop.permute.xlu0 %2642
      %2644 = vrot.lane.b32.xlu0 %v2262, 124
      %v2645 = vpop.permute.xlu0 %2644
      %2646 = vrot.lane.b32.xlu0 %v2267, 124
      %v2647 = vpop.permute.xlu0 %2646
      %2648 = vrot.lane.b32.xlu0 %v2272, 124
      %v2649 = vpop.permute.xlu0 %2648
      %2650 = vrot.lane.b32.xlu0 %v2277, 124
      %v2651 = vpop.permute.xlu0 %2650
      %2652 = vrot.lane.b32.xlu0 %v2282, 124
      %v2653 = vpop.permute.xlu0 %2652
      %2654 = vrot.lane.b32.xlu0 %v2287, 124
      %v2655 = vpop.permute.xlu0 %2654
      %2656 = vrot.lane.b32.xlu0 %v2292, 124
      %v2657 = vpop.permute.xlu0 %2656
      %2658 = vrot.lane.b32.xlu0 %v2297, 124
      %v2659 = vpop.permute.xlu0 %2658
      %2660 = vrot.lane.b32.xlu0 %v2302, 124
      %v2661 = vpop.permute.xlu0 %2660
      %2662 = vrot.lane.b32.xlu0 %v2307, 124
      %v2663 = vpop.permute.xlu0 %2662
      %2664 = vrot.lane.b32.xlu0 %v2312, 124
      %v2665 = vpop.permute.xlu0 %2664
      %2666 = vrot.lane.b32.xlu0 %v2317, 124
      %v2667 = vpop.permute.xlu0 %2666
      %2668 = vrot.lane.b32.xlu0 %v2322, 124
      %v2669 = vpop.permute.xlu0 %2668
      %s2702 = scalar_lea.vmem [#allocation4], 456
      %2703 = vst.msk [vmem:[%s2702 + $0x1] sm:$0xff] %vm225, %v2607
      %2704 = vst.msk [vmem:[%s2702 + $0x9] sm:$0xff] %vm225, %v2609
      %2705 = vst.msk [vmem:[%s2702 + $0x19] sm:$0xff] %vm225, %v2611
      %2706 = vst.msk [vmem:[%s2702 + $0x21] sm:$0xff] %vm225, %v2613
      %2707 = vst.msk [vmem:[%s2702 + $0x31] sm:$0xff] %vm225, %v2615
      %2708 = vst.msk [vmem:[%s2702 + $0x39] sm:$0xff] %vm225, %v2617
      %2709 = vst.msk [vmem:[%s2702 + $0x49] sm:$0xff] %vm225, %v2619
      %2710 = vst.msk [vmem:[%s2702 + $0x51] sm:$0xff] %vm225, %v2621
      %2711 = vst.msk [vmem:[%s2702 + $0x61] sm:$0xff] %vm225, %v2623
      %2712 = vst.msk [vmem:[%s2702 + $0x69] sm:$0xff] %vm225, %v2625
      %2713 = vst.msk [vmem:[%s2702 + $0x79] sm:$0xff] %vm225, %v2627
      %2714 = vst.msk [vmem:[%s2702 + $0x81] sm:$0xff] %vm225, %v2629
      %2715 = vst.msk [vmem:[%s2702 + $0x91] sm:$0xff] %vm225, %v2631
      %2716 = vst.msk [vmem:[%s2702 + $0x99] sm:$0xff] %vm225, %v2633
      %2717 = vst.msk [vmem:[%s2702 + $0xa9] sm:$0xff] %vm225, %v2635
      %2718 = vst.msk [vmem:[%s2702 + $0xb1] sm:$0xff] %vm225, %v2637
      %2719 = vst.msk [vmem:[%s2702 + $0xc1] sm:$0xff] %vm225, %v2639
      %2720 = vst.msk [vmem:[%s2702 + $0xc9] sm:$0xff] %vm225, %v2641
      %2721 = vst.msk [vmem:[%s2702 + $0xd9] sm:$0xff] %vm225, %v2643
      %2722 = vst.msk [vmem:[%s2702 + $0xe1] sm:$0xff] %vm225, %v2645
      %2723 = vst.msk [vmem:[%s2702 + $0xf1] sm:$0xff] %vm225, %v2647
      %2724 = vst.msk [vmem:[%s2702 + $0xf9] sm:$0xff] %vm225, %v2649
      %2725 = vst.msk [vmem:[%s2702 + $0x109] sm:$0xff] %vm225, %v2651
      %2726 = vst.msk [vmem:[%s2702 + $0x111] sm:$0xff] %vm225, %v2653
      %2727 = vst.msk [vmem:[%s2702 + $0x121] sm:$0xff] %vm225, %v2655
      %2728 = vst.msk [vmem:[%s2702 + $0x129] sm:$0xff] %vm225, %v2657
      %2729 = vst.msk [vmem:[%s2702 + $0x139] sm:$0xff] %vm225, %v2659
      %2730 = vst.msk [vmem:[%s2702 + $0x141] sm:$0xff] %vm225, %v2661
      %2731 = vst.msk [vmem:[%s2702 + $0x151] sm:$0xff] %vm225, %v2663
      %2732 = vst.msk [vmem:[%s2702 + $0x159] sm:$0xff] %vm225, %v2665
      %2733 = vst.msk [vmem:[%s2702 + $0x169] sm:$0xff] %vm225, %v2667
      %2734 = vst.msk [vmem:[%s2702 + $0x171] sm:$0xff] %vm225, %v2669
      %2735 = vrot.lane.b32.xlu0 %v2167, 120
      %v2736 = vpop.permute.xlu0 %2735
      %2737 = vrot.lane.b32.xlu0 %v2172, 120
      %v2738 = vpop.permute.xlu0 %2737
      %2739 = vrot.lane.b32.xlu0 %v2177, 120
      %v2740 = vpop.permute.xlu0 %2739
      %2741 = vrot.lane.b32.xlu0 %v2182, 120
      %v2742 = vpop.permute.xlu0 %2741
      %2743 = vrot.lane.b32.xlu0 %v2187, 120
      %v2744 = vpop.permute.xlu0 %2743
      %2745 = vrot.lane.b32.xlu0 %v2192, 120
      %v2746 = vpop.permute.xlu0 %2745
      %2747 = vrot.lane.b32.xlu0 %v2197, 120
      %v2748 = vpop.permute.xlu0 %2747
      %2749 = vrot.lane.b32.xlu0 %v2202, 120
      %v2750 = vpop.permute.xlu0 %2749
      %2751 = vrot.lane.b32.xlu0 %v2207, 120
      %v2752 = vpop.permute.xlu0 %2751
      %2753 = vrot.lane.b32.xlu0 %v2212, 120
      %v2754 = vpop.permute.xlu0 %2753
      %2755 = vrot.lane.b32.xlu0 %v2217, 120
      %v2756 = vpop.permute.xlu0 %2755
      %2757 = vrot.lane.b32.xlu0 %v2222, 120
      %v2758 = vpop.permute.xlu0 %2757
      %2759 = vrot.lane.b32.xlu0 %v2227, 120
      %v2760 = vpop.permute.xlu0 %2759
      %2761 = vrot.lane.b32.xlu0 %v2232, 120
      %v2762 = vpop.permute.xlu0 %2761
      %2763 = vrot.lane.b32.xlu0 %v2237, 120
      %v2764 = vpop.permute.xlu0 %2763
      %2765 = vrot.lane.b32.xlu0 %v2242, 120
      %v2766 = vpop.permute.xlu0 %2765
      %2767 = vrot.lane.b32.xlu0 %v2247, 120
      %v2768 = vpop.permute.xlu0 %2767
      %2769 = vrot.lane.b32.xlu0 %v2252, 120
      %v2770 = vpop.permute.xlu0 %2769
      %2771 = vrot.lane.b32.xlu0 %v2257, 120
      %v2772 = vpop.permute.xlu0 %2771
      %2773 = vrot.lane.b32.xlu0 %v2262, 120
      %v2774 = vpop.permute.xlu0 %2773
      %2775 = vrot.lane.b32.xlu0 %v2267, 120
      %v2776 = vpop.permute.xlu0 %2775
      %2777 = vrot.lane.b32.xlu0 %v2272, 120
      %v2778 = vpop.permute.xlu0 %2777
      %2779 = vrot.lane.b32.xlu0 %v2277, 120
      %v2780 = vpop.permute.xlu0 %2779
      %2781 = vrot.lane.b32.xlu0 %v2282, 120
      %v2782 = vpop.permute.xlu0 %2781
      %2783 = vrot.lane.b32.xlu0 %v2287, 120
      %v2784 = vpop.permute.xlu0 %2783
      %2785 = vrot.lane.b32.xlu0 %v2292, 120
      %v2786 = vpop.permute.xlu0 %2785
      %2787 = vrot.lane.b32.xlu0 %v2297, 120
      %v2788 = vpop.permute.xlu0 %2787
      %2789 = vrot.lane.b32.xlu0 %v2302, 120
      %v2790 = vpop.permute.xlu0 %2789
      %2791 = vrot.lane.b32.xlu0 %v2307, 120
      %v2792 = vpop.permute.xlu0 %2791
      %2793 = vrot.lane.b32.xlu0 %v2312, 120
      %v2794 = vpop.permute.xlu0 %2793
      %2795 = vrot.lane.b32.xlu0 %v2317, 120
      %v2796 = vpop.permute.xlu0 %2795
      %2797 = vrot.lane.b32.xlu0 %v2322, 120
      %v2798 = vpop.permute.xlu0 %2797
      %s2831 = scalar_lea.vmem [#allocation4], 888
      %2832 = vst.msk [vmem:[%s2831 + $0x1] sm:$0xff] %vm225, %v2736
      %2833 = vst.msk [vmem:[%s2831 + $0x9] sm:$0xff] %vm225, %v2738
      %2834 = vst.msk [vmem:[%s2831 + $0x19] sm:$0xff] %vm225, %v2740
      %2835 = vst.msk [vmem:[%s2831 + $0x21] sm:$0xff] %vm225, %v2742
      %2836 = vst.msk [vmem:[%s2831 + $0x31] sm:$0xff] %vm225, %v2744
      %2837 = vst.msk [vmem:[%s2831 + $0x39] sm:$0xff] %vm225, %v2746
      %2838 = vst.msk [vmem:[%s2831 + $0x49] sm:$0xff] %vm225, %v2748
      %2839 = vst.msk [vmem:[%s2831 + $0x51] sm:$0xff] %vm225, %v2750
      %2840 = vst.msk [vmem:[%s2831 + $0x61] sm:$0xff] %vm225, %v2752
      %2841 = vst.msk [vmem:[%s2831 + $0x69] sm:$0xff] %vm225, %v2754
      %2842 = vst.msk [vmem:[%s2831 + $0x79] sm:$0xff] %vm225, %v2756
      %2843 = vst.msk [vmem:[%s2831 + $0x81] sm:$0xff] %vm225, %v2758
      %2844 = vst.msk [vmem:[%s2831 + $0x91] sm:$0xff] %vm225, %v2760
      %2845 = vst.msk [vmem:[%s2831 + $0x99] sm:$0xff] %vm225, %v2762
      %2846 = vst.msk [vmem:[%s2831 + $0xa9] sm:$0xff] %vm225, %v2764
      %2847 = vst.msk [vmem:[%s2831 + $0xb1] sm:$0xff] %vm225, %v2766
      %2848 = vst.msk [vmem:[%s2831 + $0xc1] sm:$0xff] %vm225, %v2768
      %2849 = vst.msk [vmem:[%s2831 + $0xc9] sm:$0xff] %vm225, %v2770
      %2850 = vst.msk [vmem:[%s2831 + $0xd9] sm:$0xff] %vm225, %v2772
      %2851 = vst.msk [vmem:[%s2831 + $0xe1] sm:$0xff] %vm225, %v2774
      %2852 = vst.msk [vmem:[%s2831 + $0xf1] sm:$0xff] %vm225, %v2776
      %2853 = vst.msk [vmem:[%s2831 + $0xf9] sm:$0xff] %vm225, %v2778
      %2854 = vst.msk [vmem:[%s2831 + $0x109] sm:$0xff] %vm225, %v2780
      %2855 = vst.msk [vmem:[%s2831 + $0x111] sm:$0xff] %vm225, %v2782
      %2856 = vst.msk [vmem:[%s2831 + $0x121] sm:$0xff] %vm225, %v2784
      %2857 = vst.msk [vmem:[%s2831 + $0x129] sm:$0xff] %vm225, %v2786
      %2858 = vst.msk [vmem:[%s2831 + $0x139] sm:$0xff] %vm225, %v2788
      %2859 = vst.msk [vmem:[%s2831 + $0x141] sm:$0xff] %vm225, %v2790
      %2860 = vst.msk [vmem:[%s2831 + $0x151] sm:$0xff] %vm225, %v2792
      %2861 = vst.msk [vmem:[%s2831 + $0x159] sm:$0xff] %vm225, %v2794
      %2862 = vst.msk [vmem:[%s2831 + $0x169] sm:$0xff] %vm225, %v2796
      %2863 = vst.msk [vmem:[%s2831 + $0x171] sm:$0xff] %vm225, %v2798
      %2864 = vrot.lane.b32.xlu0 %v2167, 116
      %v2865 = vpop.permute.xlu0 %2864
      %2866 = vrot.lane.b32.xlu0 %v2172, 116
      %v2867 = vpop.permute.xlu0 %2866
      %2868 = vrot.lane.b32.xlu0 %v2177, 116
      %v2869 = vpop.permute.xlu0 %2868
      %2870 = vrot.lane.b32.xlu0 %v2182, 116
      %v2871 = vpop.permute.xlu0 %2870
      %2872 = vrot.lane.b32.xlu0 %v2187, 116
      %v2873 = vpop.permute.xlu0 %2872
      %2874 = vrot.lane.b32.xlu0 %v2192, 116
      %v2875 = vpop.permute.xlu0 %2874
      %2876 = vrot.lane.b32.xlu0 %v2197, 116
      %v2877 = vpop.permute.xlu0 %2876
      %2878 = vrot.lane.b32.xlu0 %v2202, 116
      %v2879 = vpop.permute.xlu0 %2878
      %2880 = vrot.lane.b32.xlu0 %v2207, 116
      %v2881 = vpop.permute.xlu0 %2880
      %2882 = vrot.lane.b32.xlu0 %v2212, 116
      %v2883 = vpop.permute.xlu0 %2882
      %2884 = vrot.lane.b32.xlu0 %v2217, 116
      %v2885 = vpop.permute.xlu0 %2884
      %2886 = vrot.lane.b32.xlu0 %v2222, 116
      %v2887 = vpop.permute.xlu0 %2886
      %2888 = vrot.lane.b32.xlu0 %v2227, 116
      %v2889 = vpop.permute.xlu0 %2888
      %2890 = vrot.lane.b32.xlu0 %v2232, 116
      %v2891 = vpop.permute.xlu0 %2890
      %2892 = vrot.lane.b32.xlu0 %v2237, 116
      %v2893 = vpop.permute.xlu0 %2892
      %2894 = vrot.lane.b32.xlu0 %v2242, 116
      %v2895 = vpop.permute.xlu0 %2894
      %2896 = vrot.lane.b32.xlu0 %v2247, 116
      %v2897 = vpop.permute.xlu0 %2896
      %2898 = vrot.lane.b32.xlu0 %v2252, 116
      %v2899 = vpop.permute.xlu0 %2898
      %2900 = vrot.lane.b32.xlu0 %v2257, 116
      %v2901 = vpop.permute.xlu0 %2900
      %2902 = vrot.lane.b32.xlu0 %v2262, 116
      %v2903 = vpop.permute.xlu0 %2902
      %2904 = vrot.lane.b32.xlu0 %v2267, 116
      %v2905 = vpop.permute.xlu0 %2904
      %2906 = vrot.lane.b32.xlu0 %v2272, 116
      %v2907 = vpop.permute.xlu0 %2906
      %2908 = vrot.lane.b32.xlu0 %v2277, 116
      %v2909 = vpop.permute.xlu0 %2908
      %2910 = vrot.lane.b32.xlu0 %v2282, 116
      %v2911 = vpop.permute.xlu0 %2910
      %2912 = vrot.lane.b32.xlu0 %v2287, 116
      %v2913 = vpop.permute.xlu0 %2912
      %2914 = vrot.lane.b32.xlu0 %v2292, 116
      %v2915 = vpop.permute.xlu0 %2914
      %2916 = vrot.lane.b32.xlu0 %v2297, 116
      %v2917 = vpop.permute.xlu0 %2916
      %2918 = vrot.lane.b32.xlu0 %v2302, 116
      %v2919 = vpop.permute.xlu0 %2918
      %2920 = vrot.lane.b32.xlu0 %v2307, 116
      %v2921 = vpop.permute.xlu0 %2920
      %2922 = vrot.lane.b32.xlu0 %v2312, 116
      %v2923 = vpop.permute.xlu0 %2922
      %2924 = vrot.lane.b32.xlu0 %v2317, 116
      %v2925 = vpop.permute.xlu0 %2924
      %2926 = vrot.lane.b32.xlu0 %v2322, 116
      %v2927 = vpop.permute.xlu0 %2926
      %s2960 = scalar_lea.vmem [#allocation4], 1320
      %2961 = vst.msk [vmem:[%s2960 + $0x1] sm:$0xff] %vm225, %v2865
      %2962 = vst.msk [vmem:[%s2960 + $0x9] sm:$0xff] %vm225, %v2867
      %2963 = vst.msk [vmem:[%s2960 + $0x19] sm:$0xff] %vm225, %v2869
      %2964 = vst.msk [vmem:[%s2960 + $0x21] sm:$0xff] %vm225, %v2871
      %2965 = vst.msk [vmem:[%s2960 + $0x31] sm:$0xff] %vm225, %v2873
      %2966 = vst.msk [vmem:[%s2960 + $0x39] sm:$0xff] %vm225, %v2875
      %2967 = vst.msk [vmem:[%s2960 + $0x49] sm:$0xff] %vm225, %v2877
      %2968 = vst.msk [vmem:[%s2960 + $0x51] sm:$0xff] %vm225, %v2879
      %2969 = vst.msk [vmem:[%s2960 + $0x61] sm:$0xff] %vm225, %v2881
      %2970 = vst.msk [vmem:[%s2960 + $0x69] sm:$0xff] %vm225, %v2883
      %2971 = vst.msk [vmem:[%s2960 + $0x79] sm:$0xff] %vm225, %v2885
      %2972 = vst.msk [vmem:[%s2960 + $0x81] sm:$0xff] %vm225, %v2887
      %2973 = vst.msk [vmem:[%s2960 + $0x91] sm:$0xff] %vm225, %v2889
      %2974 = vst.msk [vmem:[%s2960 + $0x99] sm:$0xff] %vm225, %v2891
      %2975 = vst.msk [vmem:[%s2960 + $0xa9] sm:$0xff] %vm225, %v2893
      %2976 = vst.msk [vmem:[%s2960 + $0xb1] sm:$0xff] %vm225, %v2895
      %2977 = vst.msk [vmem:[%s2960 + $0xc1] sm:$0xff] %vm225, %v2897
      %2978 = vst.msk [vmem:[%s2960 + $0xc9] sm:$0xff] %vm225, %v2899
      %2979 = vst.msk [vmem:[%s2960 + $0xd9] sm:$0xff] %vm225, %v2901
      %2980 = vst.msk [vmem:[%s2960 + $0xe1] sm:$0xff] %vm225, %v2903
      %2981 = vst.msk [vmem:[%s2960 + $0xf1] sm:$0xff] %vm225, %v2905
      %2982 = vst.msk [vmem:[%s2960 + $0xf9] sm:$0xff] %vm225, %v2907
      %2983 = vst.msk [vmem:[%s2960 + $0x109] sm:$0xff] %vm225, %v2909
      %2984 = vst.msk [vmem:[%s2960 + $0x111] sm:$0xff] %vm225, %v2911
      %2985 = vst.msk [vmem:[%s2960 + $0x121] sm:$0xff] %vm225, %v2913
      %2986 = vst.msk [vmem:[%s2960 + $0x129] sm:$0xff] %vm225, %v2915
      %2987 = vst.msk [vmem:[%s2960 + $0x139] sm:$0xff] %vm225, %v2917
      %2988 = vst.msk [vmem:[%s2960 + $0x141] sm:$0xff] %vm225, %v2919
      %2989 = vst.msk [vmem:[%s2960 + $0x151] sm:$0xff] %vm225, %v2921
      %2990 = vst.msk [vmem:[%s2960 + $0x159] sm:$0xff] %vm225, %v2923
      %2991 = vst.msk [vmem:[%s2960 + $0x169] sm:$0xff] %vm225, %v2925
      %2992 = vst.msk [vmem:[%s2960 + $0x171] sm:$0xff] %vm225, %v2927
      %s2993 = scalar_lea.vmem [#allocation4], 1296
      %v2994 = vld [vmem:[%s2993] sm:$0xff]
      %v2995 = vld [vmem:[%s2993 + $0x8] sm:$0xff]
      %v2996 = vld [vmem:[%s2993 + $0x18] sm:$0xff]
      %v2997 = vld [vmem:[%s2993 + $0x20] sm:$0xff]
      %v2998 = vld [vmem:[%s2993 + $0x30] sm:$0xff]
      %v2999 = vld [vmem:[%s2993 + $0x38] sm:$0xff]
      %v3000 = vld [vmem:[%s2993 + $0x48] sm:$0xff]
      %v3001 = vld [vmem:[%s2993 + $0x50] sm:$0xff]
      %v3002 = vld [vmem:[%s2993 + $0x60] sm:$0xff]
      %v3003 = vld [vmem:[%s2993 + $0x68] sm:$0xff]
      %v3004 = vld [vmem:[%s2993 + $0x78] sm:$0xff]
      %v3005 = vld [vmem:[%s2993 + $0x80] sm:$0xff]
      %v3006 = vld [vmem:[%s2993 + $0x90] sm:$0xff]
      %v3007 = vld [vmem:[%s2993 + $0x98] sm:$0xff]
      %v3008 = vld [vmem:[%s2993 + $0xa8] sm:$0xff]
      %v3009 = vld [vmem:[%s2993 + $0xb0] sm:$0xff]
      %v3010 = vld [vmem:[%s2993 + $0xc0] sm:$0xff]
      %v3011 = vld [vmem:[%s2993 + $0xc8] sm:$0xff]
      %v3012 = vld [vmem:[%s2993 + $0xd8] sm:$0xff]
      %v3013 = vld [vmem:[%s2993 + $0xe0] sm:$0xff]
      %v3014 = vld [vmem:[%s2993 + $0xf0] sm:$0xff]
      %v3015 = vld [vmem:[%s2993 + $0xf8] sm:$0xff]
      %v3016 = vld [vmem:[%s2993 + $0x108] sm:$0xff]
      %v3017 = vld [vmem:[%s2993 + $0x110] sm:$0xff]
      %v3018 = vld [vmem:[%s2993 + $0x120] sm:$0xff]
      %v3019 = vld [vmem:[%s2993 + $0x128] sm:$0xff]
      %v3020 = vld [vmem:[%s2993 + $0x138] sm:$0xff]
      %v3021 = vld [vmem:[%s2993 + $0x140] sm:$0xff]
      %v3022 = vld [vmem:[%s2993 + $0x150] sm:$0xff]
      %v3023 = vld [vmem:[%s2993 + $0x158] sm:$0xff]
      %v3024 = vld [vmem:[%s2993 + $0x168] sm:$0xff]
      %v3025 = vld [vmem:[%s2993 + $0x170] sm:$0xff]
      %3026 = vst.msk [vmem:[#allocation3] sm:$0xff] %vm225, %v2994
      %3027 = vst.msk [vmem:[#allocation3 + $0x8] sm:$0xff] %vm225, %v2995
      %3028 = vst.msk [vmem:[#allocation3 + $0x10] sm:$0xff] %vm225, %v2996
      %3029 = vst.msk [vmem:[#allocation3 + $0x18] sm:$0xff] %vm225, %v2997
      %3030 = vst.msk [vmem:[#allocation3 + $0x20] sm:$0xff] %vm225, %v2998
      %3031 = vst.msk [vmem:[#allocation3 + $0x28] sm:$0xff] %vm225, %v2999
      %3032 = vst.msk [vmem:[#allocation3 + $0x30] sm:$0xff] %vm225, %v3000
      %3033 = vst.msk [vmem:[#allocation3 + $0x38] sm:$0xff] %vm225, %v3001
      %3034 = vst.msk [vmem:[#allocation3 + $0x40] sm:$0xff] %vm225, %v3002
      %3035 = vst.msk [vmem:[#allocation3 + $0x48] sm:$0xff] %vm225, %v3003
      %3036 = vst.msk [vmem:[#allocation3 + $0x50] sm:$0xff] %vm225, %v3004
      %3037 = vst.msk [vmem:[#allocation3 + $0x58] sm:$0xff] %vm225, %v3005
      %3038 = vst.msk [vmem:[#allocation3 + $0x60] sm:$0xff] %vm225, %v3006
      %3039 = vst.msk [vmem:[#allocation3 + $0x68] sm:$0xff] %vm225, %v3007
      %3040 = vst.msk [vmem:[#allocation3 + $0x70] sm:$0xff] %vm225, %v3008
      %3041 = vst.msk [vmem:[#allocation3 + $0x78] sm:$0xff] %vm225, %v3009
      %3042 = vst.msk [vmem:[#allocation3 + $0x80] sm:$0xff] %vm225, %v3010
      %3043 = vst.msk [vmem:[#allocation3 + $0x88] sm:$0xff] %vm225, %v3011
      %3044 = vst.msk [vmem:[#allocation3 + $0x90] sm:$0xff] %vm225, %v3012
      %3045 = vst.msk [vmem:[#allocation3 + $0x98] sm:$0xff] %vm225, %v3013
      %3046 = vst.msk [vmem:[#allocation3 + $0xa0] sm:$0xff] %vm225, %v3014
      %3047 = vst.msk [vmem:[#allocation3 + $0xa8] sm:$0xff] %vm225, %v3015
      %3048 = vst.msk [vmem:[#allocation3 + $0xb0] sm:$0xff] %vm225, %v3016
      %3049 = vst.msk [vmem:[#allocation3 + $0xb8] sm:$0xff] %vm225, %v3017
      %3050 = vst.msk [vmem:[#allocation3 + $0xc0] sm:$0xff] %vm225, %v3018
      %3051 = vst.msk [vmem:[#allocation3 + $0xc8] sm:$0xff] %vm225, %v3019
      %3052 = vst.msk [vmem:[#allocation3 + $0xd0] sm:$0xff] %vm225, %v3020
      %3053 = vst.msk [vmem:[#allocation3 + $0xd8] sm:$0xff] %vm225, %v3021
      %3054 = vst.msk [vmem:[#allocation3 + $0xe0] sm:$0xff] %vm225, %v3022
      %3055 = vst.msk [vmem:[#allocation3 + $0xe8] sm:$0xff] %vm225, %v3023
      %3056 = vst.msk [vmem:[#allocation3 + $0xf0] sm:$0xff] %vm225, %v3024
      %3057 = vst.msk [vmem:[#allocation3 + $0xf8] sm:$0xff] %vm225, %v3025
      %s3058 = scalar_lea.vmem [#allocation4], 864
      %v3059 = vld [vmem:[%s3058 + $0x1] sm:$0xff]
      %v3060 = vld [vmem:[%s3058 + $0x9] sm:$0xff]
      %v3061 = vld [vmem:[%s3058 + $0x19] sm:$0xff]
      %v3062 = vld [vmem:[%s3058 + $0x21] sm:$0xff]
      %v3063 = vld [vmem:[%s3058 + $0x31] sm:$0xff]
      %v3064 = vld [vmem:[%s3058 + $0x39] sm:$0xff]
      %v3065 = vld [vmem:[%s3058 + $0x49] sm:$0xff]
      %v3066 = vld [vmem:[%s3058 + $0x51] sm:$0xff]
      %v3067 = vld [vmem:[%s3058 + $0x61] sm:$0xff]
      %v3068 = vld [vmem:[%s3058 + $0x69] sm:$0xff]
      %v3069 = vld [vmem:[%s3058 + $0x79] sm:$0xff]
      %v3070 = vld [vmem:[%s3058 + $0x81] sm:$0xff]
      %v3071 = vld [vmem:[%s3058 + $0x91] sm:$0xff]
      %v3072 = vld [vmem:[%s3058 + $0x99] sm:$0xff]
      %v3073 = vld [vmem:[%s3058 + $0xa9] sm:$0xff]
      %v3074 = vld [vmem:[%s3058 + $0xb1] sm:$0xff]
      %v3075 = vld [vmem:[%s3058 + $0xc1] sm:$0xff]
      %v3076 = vld [vmem:[%s3058 + $0xc9] sm:$0xff]
      %v3077 = vld [vmem:[%s3058 + $0xd9] sm:$0xff]
      %v3078 = vld [vmem:[%s3058 + $0xe1] sm:$0xff]
      %v3079 = vld [vmem:[%s3058 + $0xf1] sm:$0xff]
      %v3080 = vld [vmem:[%s3058 + $0xf9] sm:$0xff]
      %v3081 = vld [vmem:[%s3058 + $0x109] sm:$0xff]
      %v3082 = vld [vmem:[%s3058 + $0x111] sm:$0xff]
      %v3083 = vld [vmem:[%s3058 + $0x121] sm:$0xff]
      %v3084 = vld [vmem:[%s3058 + $0x129] sm:$0xff]
      %v3085 = vld [vmem:[%s3058 + $0x139] sm:$0xff]
      %v3086 = vld [vmem:[%s3058 + $0x141] sm:$0xff]
      %v3087 = vld [vmem:[%s3058 + $0x151] sm:$0xff]
      %v3088 = vld [vmem:[%s3058 + $0x159] sm:$0xff]
      %v3089 = vld [vmem:[%s3058 + $0x169] sm:$0xff]
      %v3090 = vld [vmem:[%s3058 + $0x171] sm:$0xff]
      %3123 = vrot.lane.b32.xlu0 %v3059, 4
      %v3124 = vpop.permute.xlu0 %3123
      %3125 = vrot.lane.b32.xlu0 %v3060, 4
      %v3126 = vpop.permute.xlu0 %3125
      %3127 = vrot.lane.b32.xlu0 %v3061, 4
      %v3128 = vpop.permute.xlu0 %3127
      %3129 = vrot.lane.b32.xlu0 %v3062, 4
      %v3130 = vpop.permute.xlu0 %3129
      %3131 = vrot.lane.b32.xlu0 %v3063, 4
      %v3132 = vpop.permute.xlu0 %3131
      %3133 = vrot.lane.b32.xlu0 %v3064, 4
      %v3134 = vpop.permute.xlu0 %3133
      %3135 = vrot.lane.b32.xlu0 %v3065, 4
      %v3136 = vpop.permute.xlu0 %3135
      %3137 = vrot.lane.b32.xlu0 %v3066, 4
      %v3138 = vpop.permute.xlu0 %3137
      %3139 = vrot.lane.b32.xlu0 %v3067, 4
      %v3140 = vpop.permute.xlu0 %3139
      %3141 = vrot.lane.b32.xlu0 %v3068, 4
      %v3142 = vpop.permute.xlu0 %3141
      %3143 = vrot.lane.b32.xlu0 %v3069, 4
      %v3144 = vpop.permute.xlu0 %3143
      %3145 = vrot.lane.b32.xlu0 %v3070, 4
      %v3146 = vpop.permute.xlu0 %3145
      %3147 = vrot.lane.b32.xlu0 %v3071, 4
      %v3148 = vpop.permute.xlu0 %3147
      %3149 = vrot.lane.b32.xlu0 %v3072, 4
      %v3150 = vpop.permute.xlu0 %3149
      %3151 = vrot.lane.b32.xlu0 %v3073, 4
      %v3152 = vpop.permute.xlu0 %3151
      %3153 = vrot.lane.b32.xlu0 %v3074, 4
      %v3154 = vpop.permute.xlu0 %3153
      %3155 = vrot.lane.b32.xlu0 %v3075, 4
      %v3156 = vpop.permute.xlu0 %3155
      %3157 = vrot.lane.b32.xlu0 %v3076, 4
      %v3158 = vpop.permute.xlu0 %3157
      %3159 = vrot.lane.b32.xlu0 %v3077, 4
      %v3160 = vpop.permute.xlu0 %3159
      %3161 = vrot.lane.b32.xlu0 %v3078, 4
      %v3162 = vpop.permute.xlu0 %3161
      %3163 = vrot.lane.b32.xlu0 %v3079, 4
      %v3164 = vpop.permute.xlu0 %3163
      %3165 = vrot.lane.b32.xlu0 %v3080, 4
      %v3166 = vpop.permute.xlu0 %3165
      %3167 = vrot.lane.b32.xlu0 %v3081, 4
      %v3168 = vpop.permute.xlu0 %3167
      %3169 = vrot.lane.b32.xlu0 %v3082, 4
      %v3170 = vpop.permute.xlu0 %3169
      %3171 = vrot.lane.b32.xlu0 %v3083, 4
      %v3172 = vpop.permute.xlu0 %3171
      %3173 = vrot.lane.b32.xlu0 %v3084, 4
      %v3174 = vpop.permute.xlu0 %3173
      %3175 = vrot.lane.b32.xlu0 %v3085, 4
      %v3176 = vpop.permute.xlu0 %3175
      %3177 = vrot.lane.b32.xlu0 %v3086, 4
      %v3178 = vpop.permute.xlu0 %3177
      %3179 = vrot.lane.b32.xlu0 %v3087, 4
      %v3180 = vpop.permute.xlu0 %3179
      %3181 = vrot.lane.b32.xlu0 %v3088, 4
      %v3182 = vpop.permute.xlu0 %3181
      %3183 = vrot.lane.b32.xlu0 %v3089, 4
      %v3184 = vpop.permute.xlu0 %3183
      %3185 = vrot.lane.b32.xlu0 %v3090, 4
      %v3186 = vpop.permute.xlu0 %3185
      %3219 = vst.msk [vmem:[#allocation3] sm:$0xff] %vm570, %v3124
      %3220 = vst.msk [vmem:[#allocation3 + $0x8] sm:$0xff] %vm570, %v3126
      %3221 = vst.msk [vmem:[#allocation3 + $0x10] sm:$0xff] %vm570, %v3128
      %3222 = vst.msk [vmem:[#allocation3 + $0x18] sm:$0xff] %vm570, %v3130
      %3223 = vst.msk [vmem:[#allocation3 + $0x20] sm:$0xff] %vm570, %v3132
      %3224 = vst.msk [vmem:[#allocation3 + $0x28] sm:$0xff] %vm570, %v3134
      %3225 = vst.msk [vmem:[#allocation3 + $0x30] sm:$0xff] %vm570, %v3136
      %3226 = vst.msk [vmem:[#allocation3 + $0x38] sm:$0xff] %vm570, %v3138
      %3227 = vst.msk [vmem:[#allocation3 + $0x40] sm:$0xff] %vm570, %v3140
      %3228 = vst.msk [vmem:[#allocation3 + $0x48] sm:$0xff] %vm570, %v3142
      %3229 = vst.msk [vmem:[#allocation3 + $0x50] sm:$0xff] %vm570, %v3144
      %3230 = vst.msk [vmem:[#allocation3 + $0x58] sm:$0xff] %vm570, %v3146
      %3231 = vst.msk [vmem:[#allocation3 + $0x60] sm:$0xff] %vm570, %v3148
      %3232 = vst.msk [vmem:[#allocation3 + $0x68] sm:$0xff] %vm570, %v3150
      %3233 = vst.msk [vmem:[#allocation3 + $0x70] sm:$0xff] %vm570, %v3152
      %3234 = vst.msk [vmem:[#allocation3 + $0x78] sm:$0xff] %vm570, %v3154
      %3235 = vst.msk [vmem:[#allocation3 + $0x80] sm:$0xff] %vm570, %v3156
      %3236 = vst.msk [vmem:[#allocation3 + $0x88] sm:$0xff] %vm570, %v3158
      %3237 = vst.msk [vmem:[#allocation3 + $0x90] sm:$0xff] %vm570, %v3160
      %3238 = vst.msk [vmem:[#allocation3 + $0x98] sm:$0xff] %vm570, %v3162
      %3239 = vst.msk [vmem:[#allocation3 + $0xa0] sm:$0xff] %vm570, %v3164
      %3240 = vst.msk [vmem:[#allocation3 + $0xa8] sm:$0xff] %vm570, %v3166
      %3241 = vst.msk [vmem:[#allocation3 + $0xb0] sm:$0xff] %vm570, %v3168
      %3242 = vst.msk [vmem:[#allocation3 + $0xb8] sm:$0xff] %vm570, %v3170
      %3243 = vst.msk [vmem:[#allocation3 + $0xc0] sm:$0xff] %vm570, %v3172
      %3244 = vst.msk [vmem:[#allocation3 + $0xc8] sm:$0xff] %vm570, %v3174
      %3245 = vst.msk [vmem:[#allocation3 + $0xd0] sm:$0xff] %vm570, %v3176
      %3246 = vst.msk [vmem:[#allocation3 + $0xd8] sm:$0xff] %vm570, %v3178
      %3247 = vst.msk [vmem:[#allocation3 + $0xe0] sm:$0xff] %vm570, %v3180
      %3248 = vst.msk [vmem:[#allocation3 + $0xe8] sm:$0xff] %vm570, %v3182
      %3249 = vst.msk [vmem:[#allocation3 + $0xf0] sm:$0xff] %vm570, %v3184
      %3250 = vst.msk [vmem:[#allocation3 + $0xf8] sm:$0xff] %vm570, %v3186
      %v3251 = vld [vmem:[%s2993 + $0x1] sm:$0xff]
      %v3252 = vld [vmem:[%s2993 + $0x9] sm:$0xff]
      %v3253 = vld [vmem:[%s2993 + $0x19] sm:$0xff]
      %v3254 = vld [vmem:[%s2993 + $0x21] sm:$0xff]
      %v3255 = vld [vmem:[%s2993 + $0x31] sm:$0xff]
      %v3256 = vld [vmem:[%s2993 + $0x39] sm:$0xff]
      %v3257 = vld [vmem:[%s2993 + $0x49] sm:$0xff]
      %v3258 = vld [vmem:[%s2993 + $0x51] sm:$0xff]
      %v3259 = vld [vmem:[%s2993 + $0x61] sm:$0xff]
      %v3260 = vld [vmem:[%s2993 + $0x69] sm:$0xff]
      %v3261 = vld [vmem:[%s2993 + $0x79] sm:$0xff]
      %v3262 = vld [vmem:[%s2993 + $0x81] sm:$0xff]
      %v3263 = vld [vmem:[%s2993 + $0x91] sm:$0xff]
      %v3264 = vld [vmem:[%s2993 + $0x99] sm:$0xff]
      %v3265 = vld [vmem:[%s2993 + $0xa9] sm:$0xff]
      %v3266 = vld [vmem:[%s2993 + $0xb1] sm:$0xff]
      %v3267 = vld [vmem:[%s2993 + $0xc1] sm:$0xff]
      %v3268 = vld [vmem:[%s2993 + $0xc9] sm:$0xff]
      %v3269 = vld [vmem:[%s2993 + $0xd9] sm:$0xff]
      %v3270 = vld [vmem:[%s2993 + $0xe1] sm:$0xff]
      %v3271 = vld [vmem:[%s2993 + $0xf1] sm:$0xff]
      %v3272 = vld [vmem:[%s2993 + $0xf9] sm:$0xff]
      %v3273 = vld [vmem:[%s2993 + $0x109] sm:$0xff]
      %v3274 = vld [vmem:[%s2993 + $0x111] sm:$0xff]
      %v3275 = vld [vmem:[%s2993 + $0x121] sm:$0xff]
      %v3276 = vld [vmem:[%s2993 + $0x129] sm:$0xff]
      %v3277 = vld [vmem:[%s2993 + $0x139] sm:$0xff]
      %v3278 = vld [vmem:[%s2993 + $0x141] sm:$0xff]
      %v3279 = vld [vmem:[%s2993 + $0x151] sm:$0xff]
      %v3280 = vld [vmem:[%s2993 + $0x159] sm:$0xff]
      %v3281 = vld [vmem:[%s2993 + $0x169] sm:$0xff]
      %v3282 = vld [vmem:[%s2993 + $0x171] sm:$0xff]
      %3315 = vrot.lane.b32.xlu0 %v3251, 8
      %v3316 = vpop.permute.xlu0 %3315
      %3317 = vrot.lane.b32.xlu0 %v3252, 8
      %v3318 = vpop.permute.xlu0 %3317
      %3319 = vrot.lane.b32.xlu0 %v3253, 8
      %v3320 = vpop.permute.xlu0 %3319
      %3321 = vrot.lane.b32.xlu0 %v3254, 8
      %v3322 = vpop.permute.xlu0 %3321
      %3323 = vrot.lane.b32.xlu0 %v3255, 8
      %v3324 = vpop.permute.xlu0 %3323
      %3325 = vrot.lane.b32.xlu0 %v3256, 8
      %v3326 = vpop.permute.xlu0 %3325
      %3327 = vrot.lane.b32.xlu0 %v3257, 8
      %v3328 = vpop.permute.xlu0 %3327
      %3329 = vrot.lane.b32.xlu0 %v3258, 8
      %v3330 = vpop.permute.xlu0 %3329
      %3331 = vrot.lane.b32.xlu0 %v3259, 8
      %v3332 = vpop.permute.xlu0 %3331
      %3333 = vrot.lane.b32.xlu0 %v3260, 8
      %v3334 = vpop.permute.xlu0 %3333
      %3335 = vrot.lane.b32.xlu0 %v3261, 8
      %v3336 = vpop.permute.xlu0 %3335
      %3337 = vrot.lane.b32.xlu0 %v3262, 8
      %v3338 = vpop.permute.xlu0 %3337
      %3339 = vrot.lane.b32.xlu0 %v3263, 8
      %v3340 = vpop.permute.xlu0 %3339
      %3341 = vrot.lane.b32.xlu0 %v3264, 8
      %v3342 = vpop.permute.xlu0 %3341
      %3343 = vrot.lane.b32.xlu0 %v3265, 8
      %v3344 = vpop.permute.xlu0 %3343
      %3345 = vrot.lane.b32.xlu0 %v3266, 8
      %v3346 = vpop.permute.xlu0 %3345
      %3347 = vrot.lane.b32.xlu0 %v3267, 8
      %v3348 = vpop.permute.xlu0 %3347
      %3349 = vrot.lane.b32.xlu0 %v3268, 8
      %v3350 = vpop.permute.xlu0 %3349
      %3351 = vrot.lane.b32.xlu0 %v3269, 8
      %v3352 = vpop.permute.xlu0 %3351
      %3353 = vrot.lane.b32.xlu0 %v3270, 8
      %v3354 = vpop.permute.xlu0 %3353
      %3355 = vrot.lane.b32.xlu0 %v3271, 8
      %v3356 = vpop.permute.xlu0 %3355
      %3357 = vrot.lane.b32.xlu0 %v3272, 8
      %v3358 = vpop.permute.xlu0 %3357
      %3359 = vrot.lane.b32.xlu0 %v3273, 8
      %v3360 = vpop.permute.xlu0 %3359
      %3361 = vrot.lane.b32.xlu0 %v3274, 8
      %v3362 = vpop.permute.xlu0 %3361
      %3363 = vrot.lane.b32.xlu0 %v3275, 8
      %v3364 = vpop.permute.xlu0 %3363
      %3365 = vrot.lane.b32.xlu0 %v3276, 8
      %v3366 = vpop.permute.xlu0 %3365
      %3367 = vrot.lane.b32.xlu0 %v3277, 8
      %v3368 = vpop.permute.xlu0 %3367
      %3369 = vrot.lane.b32.xlu0 %v3278, 8
      %v3370 = vpop.permute.xlu0 %3369
      %3371 = vrot.lane.b32.xlu0 %v3279, 8
      %v3372 = vpop.permute.xlu0 %3371
      %3373 = vrot.lane.b32.xlu0 %v3280, 8
      %v3374 = vpop.permute.xlu0 %3373
      %3375 = vrot.lane.b32.xlu0 %v3281, 8
      %v3376 = vpop.permute.xlu0 %3375
      %3377 = vrot.lane.b32.xlu0 %v3282, 8
      %v3378 = vpop.permute.xlu0 %3377
      %3411 = vst.msk [vmem:[#allocation3] sm:$0xff] %vm763, %v3316
      %3412 = vst.msk [vmem:[#allocation3 + $0x8] sm:$0xff] %vm763, %v3318
      %3413 = vst.msk [vmem:[#allocation3 + $0x10] sm:$0xff] %vm763, %v3320
      %3414 = vst.msk [vmem:[#allocation3 + $0x18] sm:$0xff] %vm763, %v3322
      %3415 = vst.msk [vmem:[#allocation3 + $0x20] sm:$0xff] %vm763, %v3324
      %3416 = vst.msk [vmem:[#allocation3 + $0x28] sm:$0xff] %vm763, %v3326
      %3417 = vst.msk [vmem:[#allocation3 + $0x30] sm:$0xff] %vm763, %v3328
      %3418 = vst.msk [vmem:[#allocation3 + $0x38] sm:$0xff] %vm763, %v3330
      %3419 = vst.msk [vmem:[#allocation3 + $0x40] sm:$0xff] %vm763, %v3332
      %3420 = vst.msk [vmem:[#allocation3 + $0x48] sm:$0xff] %vm763, %v3334
      %3421 = vst.msk [vmem:[#allocation3 + $0x50] sm:$0xff] %vm763, %v3336
      %3422 = vst.msk [vmem:[#allocation3 + $0x58] sm:$0xff] %vm763, %v3338
      %3423 = vst.msk [vmem:[#allocation3 + $0x60] sm:$0xff] %vm763, %v3340
      %3424 = vst.msk [vmem:[#allocation3 + $0x68] sm:$0xff] %vm763, %v3342
      %3425 = vst.msk [vmem:[#allocation3 + $0x70] sm:$0xff] %vm763, %v3344
      %3426 = vst.msk [vmem:[#allocation3 + $0x78] sm:$0xff] %vm763, %v3346
      %3427 = vst.msk [vmem:[#allocation3 + $0x80] sm:$0xff] %vm763, %v3348
      %3428 = vst.msk [vmem:[#allocation3 + $0x88] sm:$0xff] %vm763, %v3350
      %3429 = vst.msk [vmem:[#allocation3 + $0x90] sm:$0xff] %vm763, %v3352
      %3430 = vst.msk [vmem:[#allocation3 + $0x98] sm:$0xff] %vm763, %v3354
      %3431 = vst.msk [vmem:[#allocation3 + $0xa0] sm:$0xff] %vm763, %v3356
      %3432 = vst.msk [vmem:[#allocation3 + $0xa8] sm:$0xff] %vm763, %v3358
      %3433 = vst.msk [vmem:[#allocation3 + $0xb0] sm:$0xff] %vm763, %v3360
      %3434 = vst.msk [vmem:[#allocation3 + $0xb8] sm:$0xff] %vm763, %v3362
      %3435 = vst.msk [vmem:[#allocation3 + $0xc0] sm:$0xff] %vm763, %v3364
      %3436 = vst.msk [vmem:[#allocation3 + $0xc8] sm:$0xff] %vm763, %v3366
      %3437 = vst.msk [vmem:[#allocation3 + $0xd0] sm:$0xff] %vm763, %v3368
      %3438 = vst.msk [vmem:[#allocation3 + $0xd8] sm:$0xff] %vm763, %v3370
      %3439 = vst.msk [vmem:[#allocation3 + $0xe0] sm:$0xff] %vm763, %v3372
      %3440 = vst.msk [vmem:[#allocation3 + $0xe8] sm:$0xff] %vm763, %v3374
      %3441 = vst.msk [vmem:[#allocation3 + $0xf0] sm:$0xff] %vm763, %v3376
      %3442 = vst.msk [vmem:[#allocation3 + $0xf8] sm:$0xff] %vm763, %v3378
      %v3443 = vld [vmem:[%s2702] sm:$0xff]
      %v3444 = vld [vmem:[%s2702 + $0x8] sm:$0xff]
      %v3445 = vld [vmem:[%s2702 + $0x18] sm:$0xff]
      %v3446 = vld [vmem:[%s2702 + $0x20] sm:$0xff]
      %v3447 = vld [vmem:[%s2702 + $0x30] sm:$0xff]
      %v3448 = vld [vmem:[%s2702 + $0x38] sm:$0xff]
      %v3449 = vld [vmem:[%s2702 + $0x48] sm:$0xff]
      %v3450 = vld [vmem:[%s2702 + $0x50] sm:$0xff]
      %v3451 = vld [vmem:[%s2702 + $0x60] sm:$0xff]
      %v3452 = vld [vmem:[%s2702 + $0x68] sm:$0xff]
      %v3453 = vld [vmem:[%s2702 + $0x78] sm:$0xff]
      %v3454 = vld [vmem:[%s2702 + $0x80] sm:$0xff]
      %v3455 = vld [vmem:[%s2702 + $0x90] sm:$0xff]
      %v3456 = vld [vmem:[%s2702 + $0x98] sm:$0xff]
      %v3457 = vld [vmem:[%s2702 + $0xa8] sm:$0xff]
      %v3458 = vld [vmem:[%s2702 + $0xb0] sm:$0xff]
      %v3459 = vld [vmem:[%s2702 + $0xc0] sm:$0xff]
      %v3460 = vld [vmem:[%s2702 + $0xc8] sm:$0xff]
      %v3461 = vld [vmem:[%s2702 + $0xd8] sm:$0xff]
      %v3462 = vld [vmem:[%s2702 + $0xe0] sm:$0xff]
      %v3463 = vld [vmem:[%s2702 + $0xf0] sm:$0xff]
      %v3464 = vld [vmem:[%s2702 + $0xf8] sm:$0xff]
      %v3465 = vld [vmem:[%s2702 + $0x108] sm:$0xff]
      %v3466 = vld [vmem:[%s2702 + $0x110] sm:$0xff]
      %v3467 = vld [vmem:[%s2702 + $0x120] sm:$0xff]
      %v3468 = vld [vmem:[%s2702 + $0x128] sm:$0xff]
      %v3469 = vld [vmem:[%s2702 + $0x138] sm:$0xff]
      %v3470 = vld [vmem:[%s2702 + $0x140] sm:$0xff]
      %v3471 = vld [vmem:[%s2702 + $0x150] sm:$0xff]
      %v3472 = vld [vmem:[%s2702 + $0x158] sm:$0xff]
      %v3473 = vld [vmem:[%s2702 + $0x168] sm:$0xff]
      %v3474 = vld [vmem:[%s2702 + $0x170] sm:$0xff]
      %3507 = vrot.lane.b32.xlu0 %v3443, 12
      %v3508 = vpop.permute.xlu0 %3507
      %3509 = vrot.lane.b32.xlu0 %v3444, 12
      %v3510 = vpop.permute.xlu0 %3509
      %3511 = vrot.lane.b32.xlu0 %v3445, 12
      %v3512 = vpop.permute.xlu0 %3511
      %3513 = vrot.lane.b32.xlu0 %v3446, 12
      %v3514 = vpop.permute.xlu0 %3513
      %3515 = vrot.lane.b32.xlu0 %v3447, 12
      %v3516 = vpop.permute.xlu0 %3515
      %3517 = vrot.lane.b32.xlu0 %v3448, 12
      %v3518 = vpop.permute.xlu0 %3517
      %3519 = vrot.lane.b32.xlu0 %v3449, 12
      %v3520 = vpop.permute.xlu0 %3519
      %3521 = vrot.lane.b32.xlu0 %v3450, 12
      %v3522 = vpop.permute.xlu0 %3521
      %3523 = vrot.lane.b32.xlu0 %v3451, 12
      %v3524 = vpop.permute.xlu0 %3523
      %3525 = vrot.lane.b32.xlu0 %v3452, 12
      %v3526 = vpop.permute.xlu0 %3525
      %3527 = vrot.lane.b32.xlu0 %v3453, 12
      %v3528 = vpop.permute.xlu0 %3527
      %3529 = vrot.lane.b32.xlu0 %v3454, 12
      %v3530 = vpop.permute.xlu0 %3529
      %3531 = vrot.lane.b32.xlu0 %v3455, 12
      %v3532 = vpop.permute.xlu0 %3531
      %3533 = vrot.lane.b32.xlu0 %v3456, 12
      %v3534 = vpop.permute.xlu0 %3533
      %3535 = vrot.lane.b32.xlu0 %v3457, 12
      %v3536 = vpop.permute.xlu0 %3535
      %3537 = vrot.lane.b32.xlu0 %v3458, 12
      %v3538 = vpop.permute.xlu0 %3537
      %3539 = vrot.lane.b32.xlu0 %v3459, 12
      %v3540 = vpop.permute.xlu0 %3539
      %3541 = vrot.lane.b32.xlu0 %v3460, 12
      %v3542 = vpop.permute.xlu0 %3541
      %3543 = vrot.lane.b32.xlu0 %v3461, 12
      %v3544 = vpop.permute.xlu0 %3543
      %3545 = vrot.lane.b32.xlu0 %v3462, 12
      %v3546 = vpop.permute.xlu0 %3545
      %3547 = vrot.lane.b32.xlu0 %v3463, 12
      %v3548 = vpop.permute.xlu0 %3547
      %3549 = vrot.lane.b32.xlu0 %v3464, 12
      %v3550 = vpop.permute.xlu0 %3549
      %3551 = vrot.lane.b32.xlu0 %v3465, 12
      %v3552 = vpop.permute.xlu0 %3551
      %3553 = vrot.lane.b32.xlu0 %v3466, 12
      %v3554 = vpop.permute.xlu0 %3553
      %3555 = vrot.lane.b32.xlu0 %v3467, 12
      %v3556 = vpop.permute.xlu0 %3555
      %3557 = vrot.lane.b32.xlu0 %v3468, 12
      %v3558 = vpop.permute.xlu0 %3557
      %3559 = vrot.lane.b32.xlu0 %v3469, 12
      %v3560 = vpop.permute.xlu0 %3559
      %3561 = vrot.lane.b32.xlu0 %v3470, 12
      %v3562 = vpop.permute.xlu0 %3561
      %3563 = vrot.lane.b32.xlu0 %v3471, 12
      %v3564 = vpop.permute.xlu0 %3563
      %3565 = vrot.lane.b32.xlu0 %v3472, 12
      %v3566 = vpop.permute.xlu0 %3565
      %3567 = vrot.lane.b32.xlu0 %v3473, 12
      %v3568 = vpop.permute.xlu0 %3567
      %3569 = vrot.lane.b32.xlu0 %v3474, 12
      %v3570 = vpop.permute.xlu0 %3569
      %3603 = vst.msk [vmem:[#allocation3] sm:$0xff] %vm956, %v3508
      %3604 = vst.msk [vmem:[#allocation3 + $0x8] sm:$0xff] %vm956, %v3510
      %3605 = vst.msk [vmem:[#allocation3 + $0x10] sm:$0xff] %vm956, %v3512
      %3606 = vst.msk [vmem:[#allocation3 + $0x18] sm:$0xff] %vm956, %v3514
      %3607 = vst.msk [vmem:[#allocation3 + $0x20] sm:$0xff] %vm956, %v3516
      %3608 = vst.msk [vmem:[#allocation3 + $0x28] sm:$0xff] %vm956, %v3518
      %3609 = vst.msk [vmem:[#allocation3 + $0x30] sm:$0xff] %vm956, %v3520
      %3610 = vst.msk [vmem:[#allocation3 + $0x38] sm:$0xff] %vm956, %v3522
      %3611 = vst.msk [vmem:[#allocation3 + $0x40] sm:$0xff] %vm956, %v3524
      %3612 = vst.msk [vmem:[#allocation3 + $0x48] sm:$0xff] %vm956, %v3526
      %3613 = vst.msk [vmem:[#allocation3 + $0x50] sm:$0xff] %vm956, %v3528
      %3614 = vst.msk [vmem:[#allocation3 + $0x58] sm:$0xff] %vm956, %v3530
      %3615 = vst.msk [vmem:[#allocation3 + $0x60] sm:$0xff] %vm956, %v3532
      %3616 = vst.msk [vmem:[#allocation3 + $0x68] sm:$0xff] %vm956, %v3534
      %3617 = vst.msk [vmem:[#allocation3 + $0x70] sm:$0xff] %vm956, %v3536
      %3618 = vst.msk [vmem:[#allocation3 + $0x78] sm:$0xff] %vm956, %v3538
      %3619 = vst.msk [vmem:[#allocation3 + $0x80] sm:$0xff] %vm956, %v3540
      %3620 = vst.msk [vmem:[#allocation3 + $0x88] sm:$0xff] %vm956, %v3542
      %3621 = vst.msk [vmem:[#allocation3 + $0x90] sm:$0xff] %vm956, %v3544
      %3622 = vst.msk [vmem:[#allocation3 + $0x98] sm:$0xff] %vm956, %v3546
      %3623 = vst.msk [vmem:[#allocation3 + $0xa0] sm:$0xff] %vm956, %v3548
      %3624 = vst.msk [vmem:[#allocation3 + $0xa8] sm:$0xff] %vm956, %v3550
      %3625 = vst.msk [vmem:[#allocation3 + $0xb0] sm:$0xff] %vm956, %v3552
      %3626 = vst.msk [vmem:[#allocation3 + $0xb8] sm:$0xff] %vm956, %v3554
      %3627 = vst.msk [vmem:[#allocation3 + $0xc0] sm:$0xff] %vm956, %v3556
      %3628 = vst.msk [vmem:[#allocation3 + $0xc8] sm:$0xff] %vm956, %v3558
      %3629 = vst.msk [vmem:[#allocation3 + $0xd0] sm:$0xff] %vm956, %v3560
      %3630 = vst.msk [vmem:[#allocation3 + $0xd8] sm:$0xff] %vm956, %v3562
      %3631 = vst.msk [vmem:[#allocation3 + $0xe0] sm:$0xff] %vm956, %v3564
      %3632 = vst.msk [vmem:[#allocation3 + $0xe8] sm:$0xff] %vm956, %v3566
      %3633 = vst.msk [vmem:[#allocation3 + $0xf0] sm:$0xff] %vm956, %v3568
      %3634 = vst.msk [vmem:[#allocation3 + $0xf8] sm:$0xff] %vm956, %v3570
      %v3635 = vld [vmem:[%s2541 + $0x1] sm:$0xff]
      %v3636 = vld [vmem:[%s2541 + $0x9] sm:$0xff]
      %v3637 = vld [vmem:[%s2541 + $0x19] sm:$0xff]
      %v3638 = vld [vmem:[%s2541 + $0x21] sm:$0xff]
      %v3639 = vld [vmem:[%s2541 + $0x31] sm:$0xff]
      %v3640 = vld [vmem:[%s2541 + $0x39] sm:$0xff]
      %v3641 = vld [vmem:[%s2541 + $0x49] sm:$0xff]
      %v3642 = vld [vmem:[%s2541 + $0x51] sm:$0xff]
      %v3643 = vld [vmem:[%s2541 + $0x61] sm:$0xff]
      %v3644 = vld [vmem:[%s2541 + $0x69] sm:$0xff]
      %v3645 = vld [vmem:[%s2541 + $0x79] sm:$0xff]
      %v3646 = vld [vmem:[%s2541 + $0x81] sm:$0xff]
      %v3647 = vld [vmem:[%s2541 + $0x91] sm:$0xff]
      %v3648 = vld [vmem:[%s2541 + $0x99] sm:$0xff]
      %v3649 = vld [vmem:[%s2541 + $0xa9] sm:$0xff]
      %v3650 = vld [vmem:[%s2541 + $0xb1] sm:$0xff]
      %v3651 = vld [vmem:[%s2541 + $0xc1] sm:$0xff]
      %v3652 = vld [vmem:[%s2541 + $0xc9] sm:$0xff]
      %v3653 = vld [vmem:[%s2541 + $0xd9] sm:$0xff]
      %v3654 = vld [vmem:[%s2541 + $0xe1] sm:$0xff]
      %v3655 = vld [vmem:[%s2541 + $0xf1] sm:$0xff]
      %v3656 = vld [vmem:[%s2541 + $0xf9] sm:$0xff]
      %v3657 = vld [vmem:[%s2541 + $0x109] sm:$0xff]
      %v3658 = vld [vmem:[%s2541 + $0x111] sm:$0xff]
      %v3659 = vld [vmem:[%s2541 + $0x121] sm:$0xff]
      %v3660 = vld [vmem:[%s2541 + $0x129] sm:$0xff]
      %v3661 = vld [vmem:[%s2541 + $0x139] sm:$0xff]
      %v3662 = vld [vmem:[%s2541 + $0x141] sm:$0xff]
      %v3663 = vld [vmem:[%s2541 + $0x151] sm:$0xff]
      %v3664 = vld [vmem:[%s2541 + $0x159] sm:$0xff]
      %v3665 = vld [vmem:[%s2541 + $0x169] sm:$0xff]
      %v3666 = vld [vmem:[%s2541 + $0x171] sm:$0xff]
      %3699 = vrot.lane.b32.xlu0 %v3635, 16
      %v3700 = vpop.permute.xlu0 %3699
      %3701 = vrot.lane.b32.xlu0 %v3636, 16
      %v3702 = vpop.permute.xlu0 %3701
      %3703 = vrot.lane.b32.xlu0 %v3637, 16
      %v3704 = vpop.permute.xlu0 %3703
      %3705 = vrot.lane.b32.xlu0 %v3638, 16
      %v3706 = vpop.permute.xlu0 %3705
      %3707 = vrot.lane.b32.xlu0 %v3639, 16
      %v3708 = vpop.permute.xlu0 %3707
      %3709 = vrot.lane.b32.xlu0 %v3640, 16
      %v3710 = vpop.permute.xlu0 %3709
      %3711 = vrot.lane.b32.xlu0 %v3641, 16
      %v3712 = vpop.permute.xlu0 %3711
      %3713 = vrot.lane.b32.xlu0 %v3642, 16
      %v3714 = vpop.permute.xlu0 %3713
      %3715 = vrot.lane.b32.xlu0 %v3643, 16
      %v3716 = vpop.permute.xlu0 %3715
      %3717 = vrot.lane.b32.xlu0 %v3644, 16
      %v3718 = vpop.permute.xlu0 %3717
      %3719 = vrot.lane.b32.xlu0 %v3645, 16
      %v3720 = vpop.permute.xlu0 %3719
      %3721 = vrot.lane.b32.xlu0 %v3646, 16
      %v3722 = vpop.permute.xlu0 %3721
      %3723 = vrot.lane.b32.xlu0 %v3647, 16
      %v3724 = vpop.permute.xlu0 %3723
      %3725 = vrot.lane.b32.xlu0 %v3648, 16
      %v3726 = vpop.permute.xlu0 %3725
      %3727 = vrot.lane.b32.xlu0 %v3649, 16
      %v3728 = vpop.permute.xlu0 %3727
      %3729 = vrot.lane.b32.xlu0 %v3650, 16
      %v3730 = vpop.permute.xlu0 %3729
      %3731 = vrot.lane.b32.xlu0 %v3651, 16
      %v3732 = vpop.permute.xlu0 %3731
      %3733 = vrot.lane.b32.xlu0 %v3652, 16
      %v3734 = vpop.permute.xlu0 %3733
      %3735 = vrot.lane.b32.xlu0 %v3653, 16
      %v3736 = vpop.permute.xlu0 %3735
      %3737 = vrot.lane.b32.xlu0 %v3654, 16
      %v3738 = vpop.permute.xlu0 %3737
      %3739 = vrot.lane.b32.xlu0 %v3655, 16
      %v3740 = vpop.permute.xlu0 %3739
      %3741 = vrot.lane.b32.xlu0 %v3656, 16
      %v3742 = vpop.permute.xlu0 %3741
      %3743 = vrot.lane.b32.xlu0 %v3657, 16
      %v3744 = vpop.permute.xlu0 %3743
      %3745 = vrot.lane.b32.xlu0 %v3658, 16
      %v3746 = vpop.permute.xlu0 %3745
      %3747 = vrot.lane.b32.xlu0 %v3659, 16
      %v3748 = vpop.permute.xlu0 %3747
      %3749 = vrot.lane.b32.xlu0 %v3660, 16
      %v3750 = vpop.permute.xlu0 %3749
      %3751 = vrot.lane.b32.xlu0 %v3661, 16
      %v3752 = vpop.permute.xlu0 %3751
      %3753 = vrot.lane.b32.xlu0 %v3662, 16
      %v3754 = vpop.permute.xlu0 %3753
      %3755 = vrot.lane.b32.xlu0 %v3663, 16
      %v3756 = vpop.permute.xlu0 %3755
      %3757 = vrot.lane.b32.xlu0 %v3664, 16
      %v3758 = vpop.permute.xlu0 %3757
      %3759 = vrot.lane.b32.xlu0 %v3665, 16
      %v3760 = vpop.permute.xlu0 %3759
      %3761 = vrot.lane.b32.xlu0 %v3666, 16
      %v3762 = vpop.permute.xlu0 %3761
      %3795 = vst.msk [vmem:[#allocation3] sm:$0xff] %vm1149, %v3700
      %3796 = vst.msk [vmem:[#allocation3 + $0x8] sm:$0xff] %vm1149, %v3702
      %3797 = vst.msk [vmem:[#allocation3 + $0x10] sm:$0xff] %vm1149, %v3704
      %3798 = vst.msk [vmem:[#allocation3 + $0x18] sm:$0xff] %vm1149, %v3706
      %3799 = vst.msk [vmem:[#allocation3 + $0x20] sm:$0xff] %vm1149, %v3708
      %3800 = vst.msk [vmem:[#allocation3 + $0x28] sm:$0xff] %vm1149, %v3710
      %3801 = vst.msk [vmem:[#allocation3 + $0x30] sm:$0xff] %vm1149, %v3712
      %3802 = vst.msk [vmem:[#allocation3 + $0x38] sm:$0xff] %vm1149, %v3714
      %3803 = vst.msk [vmem:[#allocation3 + $0x40] sm:$0xff] %vm1149, %v3716
      %3804 = vst.msk [vmem:[#allocation3 + $0x48] sm:$0xff] %vm1149, %v3718
      %3805 = vst.msk [vmem:[#allocation3 + $0x50] sm:$0xff] %vm1149, %v3720
      %3806 = vst.msk [vmem:[#allocation3 + $0x58] sm:$0xff] %vm1149, %v3722
      %3807 = vst.msk [vmem:[#allocation3 + $0x60] sm:$0xff] %vm1149, %v3724
      %3808 = vst.msk [vmem:[#allocation3 + $0x68] sm:$0xff] %vm1149, %v3726
      %3809 = vst.msk [vmem:[#allocation3 + $0x70] sm:$0xff] %vm1149, %v3728
      %3810 = vst.msk [vmem:[#allocation3 + $0x78] sm:$0xff] %vm1149, %v3730
      %3811 = vst.msk [vmem:[#allocation3 + $0x80] sm:$0xff] %vm1149, %v3732
      %3812 = vst.msk [vmem:[#allocation3 + $0x88] sm:$0xff] %vm1149, %v3734
      %3813 = vst.msk [vmem:[#allocation3 + $0x90] sm:$0xff] %vm1149, %v3736
      %3814 = vst.msk [vmem:[#allocation3 + $0x98] sm:$0xff] %vm1149, %v3738
      %3815 = vst.msk [vmem:[#allocation3 + $0xa0] sm:$0xff] %vm1149, %v3740
      %3816 = vst.msk [vmem:[#allocation3 + $0xa8] sm:$0xff] %vm1149, %v3742
      %3817 = vst.msk [vmem:[#allocation3 + $0xb0] sm:$0xff] %vm1149, %v3744
      %3818 = vst.msk [vmem:[#allocation3 + $0xb8] sm:$0xff] %vm1149, %v3746
      %3819 = vst.msk [vmem:[#allocation3 + $0xc0] sm:$0xff] %vm1149, %v3748
      %3820 = vst.msk [vmem:[#allocation3 + $0xc8] sm:$0xff] %vm1149, %v3750
      %3821 = vst.msk [vmem:[#allocation3 + $0xd0] sm:$0xff] %vm1149, %v3752
      %3822 = vst.msk [vmem:[#allocation3 + $0xd8] sm:$0xff] %vm1149, %v3754
      %3823 = vst.msk [vmem:[#allocation3 + $0xe0] sm:$0xff] %vm1149, %v3756
      %3824 = vst.msk [vmem:[#allocation3 + $0xe8] sm:$0xff] %vm1149, %v3758
      %3825 = vst.msk [vmem:[#allocation3 + $0xf0] sm:$0xff] %vm1149, %v3760
      %3826 = vst.msk [vmem:[#allocation3 + $0xf8] sm:$0xff] %vm1149, %v3762
      %v3827 = vld [vmem:[%s2702 + $0x1] sm:$0xff]
      %v3828 = vld [vmem:[%s2702 + $0x9] sm:$0xff]
      %v3829 = vld [vmem:[%s2702 + $0x19] sm:$0xff]
      %v3830 = vld [vmem:[%s2702 + $0x21] sm:$0xff]
      %v3831 = vld [vmem:[%s2702 + $0x31] sm:$0xff]
      %v3832 = vld [vmem:[%s2702 + $0x39] sm:$0xff]
      %v3833 = vld [vmem:[%s2702 + $0x49] sm:$0xff]
      %v3834 = vld [vmem:[%s2702 + $0x51] sm:$0xff]
      %v3835 = vld [vmem:[%s2702 + $0x61] sm:$0xff]
      %v3836 = vld [vmem:[%s2702 + $0x69] sm:$0xff]
      %v3837 = vld [vmem:[%s2702 + $0x79] sm:$0xff]
      %v3838 = vld [vmem:[%s2702 + $0x81] sm:$0xff]
      %v3839 = vld [vmem:[%s2702 + $0x91] sm:$0xff]
      %v3840 = vld [vmem:[%s2702 + $0x99] sm:$0xff]
      %v3841 = vld [vmem:[%s2702 + $0xa9] sm:$0xff]
      %v3842 = vld [vmem:[%s2702 + $0xb1] sm:$0xff]
      %v3843 = vld [vmem:[%s2702 + $0xc1] sm:$0xff]
      %v3844 = vld [vmem:[%s2702 + $0xc9] sm:$0xff]
      %v3845 = vld [vmem:[%s2702 + $0xd9] sm:$0xff]
      %v3846 = vld [vmem:[%s2702 + $0xe1] sm:$0xff]
      %v3847 = vld [vmem:[%s2702 + $0xf1] sm:$0xff]
      %v3848 = vld [vmem:[%s2702 + $0xf9] sm:$0xff]
      %v3849 = vld [vmem:[%s2702 + $0x109] sm:$0xff]
      %v3850 = vld [vmem:[%s2702 + $0x111] sm:$0xff]
      %v3851 = vld [vmem:[%s2702 + $0x121] sm:$0xff]
      %v3852 = vld [vmem:[%s2702 + $0x129] sm:$0xff]
      %v3853 = vld [vmem:[%s2702 + $0x139] sm:$0xff]
      %v3854 = vld [vmem:[%s2702 + $0x141] sm:$0xff]
      %v3855 = vld [vmem:[%s2702 + $0x151] sm:$0xff]
      %v3856 = vld [vmem:[%s2702 + $0x159] sm:$0xff]
      %v3857 = vld [vmem:[%s2702 + $0x169] sm:$0xff]
      %v3858 = vld [vmem:[%s2702 + $0x171] sm:$0xff]
      %3891 = vrot.lane.b32.xlu0 %v3827, 20
      %v3892 = vpop.permute.xlu0 %3891
      %3893 = vrot.lane.b32.xlu0 %v3828, 20
      %v3894 = vpop.permute.xlu0 %3893
      %3895 = vrot.lane.b32.xlu0 %v3829, 20
      %v3896 = vpop.permute.xlu0 %3895
      %3897 = vrot.lane.b32.xlu0 %v3830, 20
      %v3898 = vpop.permute.xlu0 %3897
      %3899 = vrot.lane.b32.xlu0 %v3831, 20
      %v3900 = vpop.permute.xlu0 %3899
      %3901 = vrot.lane.b32.xlu0 %v3832, 20
      %v3902 = vpop.permute.xlu0 %3901
      %3903 = vrot.lane.b32.xlu0 %v3833, 20
      %v3904 = vpop.permute.xlu0 %3903
      %3905 = vrot.lane.b32.xlu0 %v3834, 20
      %v3906 = vpop.permute.xlu0 %3905
      %3907 = vrot.lane.b32.xlu0 %v3835, 20
      %v3908 = vpop.permute.xlu0 %3907
      %3909 = vrot.lane.b32.xlu0 %v3836, 20
      %v3910 = vpop.permute.xlu0 %3909
      %3911 = vrot.lane.b32.xlu0 %v3837, 20
      %v3912 = vpop.permute.xlu0 %3911
      %3913 = vrot.lane.b32.xlu0 %v3838, 20
      %v3914 = vpop.permute.xlu0 %3913
      %3915 = vrot.lane.b32.xlu0 %v3839, 20
      %v3916 = vpop.permute.xlu0 %3915
      %3917 = vrot.lane.b32.xlu0 %v3840, 20
      %v3918 = vpop.permute.xlu0 %3917
      %3919 = vrot.lane.b32.xlu0 %v3841, 20
      %v3920 = vpop.permute.xlu0 %3919
      %3921 = vrot.lane.b32.xlu0 %v3842, 20
      %v3922 = vpop.permute.xlu0 %3921
      %3923 = vrot.lane.b32.xlu0 %v3843, 20
      %v3924 = vpop.permute.xlu0 %3923
      %3925 = vrot.lane.b32.xlu0 %v3844, 20
      %v3926 = vpop.permute.xlu0 %3925
      %3927 = vrot.lane.b32.xlu0 %v3845, 20
      %v3928 = vpop.permute.xlu0 %3927
      %3929 = vrot.lane.b32.xlu0 %v3846, 20
      %v3930 = vpop.permute.xlu0 %3929
      %3931 = vrot.lane.b32.xlu0 %v3847, 20
      %v3932 = vpop.permute.xlu0 %3931
      %3933 = vrot.lane.b32.xlu0 %v3848, 20
      %v3934 = vpop.permute.xlu0 %3933
      %3935 = vrot.lane.b32.xlu0 %v3849, 20
      %v3936 = vpop.permute.xlu0 %3935
      %3937 = vrot.lane.b32.xlu0 %v3850, 20
      %v3938 = vpop.permute.xlu0 %3937
      %3939 = vrot.lane.b32.xlu0 %v3851, 20
      %v3940 = vpop.permute.xlu0 %3939
      %3941 = vrot.lane.b32.xlu0 %v3852, 20
      %v3942 = vpop.permute.xlu0 %3941
      %3943 = vrot.lane.b32.xlu0 %v3853, 20
      %v3944 = vpop.permute.xlu0 %3943
      %3945 = vrot.lane.b32.xlu0 %v3854, 20
      %v3946 = vpop.permute.xlu0 %3945
      %3947 = vrot.lane.b32.xlu0 %v3855, 20
      %v3948 = vpop.permute.xlu0 %3947
      %3949 = vrot.lane.b32.xlu0 %v3856, 20
      %v3950 = vpop.permute.xlu0 %3949
      %3951 = vrot.lane.b32.xlu0 %v3857, 20
      %v3952 = vpop.permute.xlu0 %3951
      %3953 = vrot.lane.b32.xlu0 %v3858, 20
      %v3954 = vpop.permute.xlu0 %3953
      %3987 = vst.msk [vmem:[#allocation3] sm:$0xff] %vm1342, %v3892
      %3988 = vst.msk [vmem:[#allocation3 + $0x8] sm:$0xff] %vm1342, %v3894
      %3989 = vst.msk [vmem:[#allocation3 + $0x10] sm:$0xff] %vm1342, %v3896
      %3990 = vst.msk [vmem:[#allocation3 + $0x18] sm:$0xff] %vm1342, %v3898
      %3991 = vst.msk [vmem:[#allocation3 + $0x20] sm:$0xff] %vm1342, %v3900
      %3992 = vst.msk [vmem:[#allocation3 + $0x28] sm:$0xff] %vm1342, %v3902
      %3993 = vst.msk [vmem:[#allocation3 + $0x30] sm:$0xff] %vm1342, %v3904
      %3994 = vst.msk [vmem:[#allocation3 + $0x38] sm:$0xff] %vm1342, %v3906
      %3995 = vst.msk [vmem:[#allocation3 + $0x40] sm:$0xff] %vm1342, %v3908
      %3996 = vst.msk [vmem:[#allocation3 + $0x48] sm:$0xff] %vm1342, %v3910
      %3997 = vst.msk [vmem:[#allocation3 + $0x50] sm:$0xff] %vm1342, %v3912
      %3998 = vst.msk [vmem:[#allocation3 + $0x58] sm:$0xff] %vm1342, %v3914
      %3999 = vst.msk [vmem:[#allocation3 + $0x60] sm:$0xff] %vm1342, %v3916
      %4000 = vst.msk [vmem:[#allocation3 + $0x68] sm:$0xff] %vm1342, %v3918
      %4001 = vst.msk [vmem:[#allocation3 + $0x70] sm:$0xff] %vm1342, %v3920
      %4002 = vst.msk [vmem:[#allocation3 + $0x78] sm:$0xff] %vm1342, %v3922
      %4003 = vst.msk [vmem:[#allocation3 + $0x80] sm:$0xff] %vm1342, %v3924
      %4004 = vst.msk [vmem:[#allocation3 + $0x88] sm:$0xff] %vm1342, %v3926
      %4005 = vst.msk [vmem:[#allocation3 + $0x90] sm:$0xff] %vm1342, %v3928
      %4006 = vst.msk [vmem:[#allocation3 + $0x98] sm:$0xff] %vm1342, %v3930
      %4007 = vst.msk [vmem:[#allocation3 + $0xa0] sm:$0xff] %vm1342, %v3932
      %4008 = vst.msk [vmem:[#allocation3 + $0xa8] sm:$0xff] %vm1342, %v3934
      %4009 = vst.msk [vmem:[#allocation3 + $0xb0] sm:$0xff] %vm1342, %v3936
      %4010 = vst.msk [vmem:[#allocation3 + $0xb8] sm:$0xff] %vm1342, %v3938
      %4011 = vst.msk [vmem:[#allocation3 + $0xc0] sm:$0xff] %vm1342, %v3940
      %4012 = vst.msk [vmem:[#allocation3 + $0xc8] sm:$0xff] %vm1342, %v3942
      %4013 = vst.msk [vmem:[#allocation3 + $0xd0] sm:$0xff] %vm1342, %v3944
      %4014 = vst.msk [vmem:[#allocation3 + $0xd8] sm:$0xff] %vm1342, %v3946
      %4015 = vst.msk [vmem:[#allocation3 + $0xe0] sm:$0xff] %vm1342, %v3948
      %4016 = vst.msk [vmem:[#allocation3 + $0xe8] sm:$0xff] %vm1342, %v3950
      %4017 = vst.msk [vmem:[#allocation3 + $0xf0] sm:$0xff] %vm1342, %v3952
      %4018 = vst.msk [vmem:[#allocation3 + $0xf8] sm:$0xff] %vm1342, %v3954
      %v4019 = vld [vmem:[%s2960] sm:$0xff]
      %v4020 = vld [vmem:[%s2960 + $0x8] sm:$0xff]
      %v4021 = vld [vmem:[%s2960 + $0x18] sm:$0xff]
      %v4022 = vld [vmem:[%s2960 + $0x20] sm:$0xff]
      %v4023 = vld [vmem:[%s2960 + $0x30] sm:$0xff]
      %v4024 = vld [vmem:[%s2960 + $0x38] sm:$0xff]
      %v4025 = vld [vmem:[%s2960 + $0x48] sm:$0xff]
      %v4026 = vld [vmem:[%s2960 + $0x50] sm:$0xff]
      %v4027 = vld [vmem:[%s2960 + $0x60] sm:$0xff]
      %v4028 = vld [vmem:[%s2960 + $0x68] sm:$0xff]
      %v4029 = vld [vmem:[%s2960 + $0x78] sm:$0xff]
      %v4030 = vld [vmem:[%s2960 + $0x80] sm:$0xff]
      %v4031 = vld [vmem:[%s2960 + $0x90] sm:$0xff]
      %v4032 = vld [vmem:[%s2960 + $0x98] sm:$0xff]
      %v4033 = vld [vmem:[%s2960 + $0xa8] sm:$0xff]
      %v4034 = vld [vmem:[%s2960 + $0xb0] sm:$0xff]
      %v4035 = vld [vmem:[%s2960 + $0xc0] sm:$0xff]
      %v4036 = vld [vmem:[%s2960 + $0xc8] sm:$0xff]
      %v4037 = vld [vmem:[%s2960 + $0xd8] sm:$0xff]
      %v4038 = vld [vmem:[%s2960 + $0xe0] sm:$0xff]
      %v4039 = vld [vmem:[%s2960 + $0xf0] sm:$0xff]
      %v4040 = vld [vmem:[%s2960 + $0xf8] sm:$0xff]
      %v4041 = vld [vmem:[%s2960 + $0x108] sm:$0xff]
      %v4042 = vld [vmem:[%s2960 + $0x110] sm:$0xff]
      %v4043 = vld [vmem:[%s2960 + $0x120] sm:$0xff]
      %v4044 = vld [vmem:[%s2960 + $0x128] sm:$0xff]
      %v4045 = vld [vmem:[%s2960 + $0x138] sm:$0xff]
      %v4046 = vld [vmem:[%s2960 + $0x140] sm:$0xff]
      %v4047 = vld [vmem:[%s2960 + $0x150] sm:$0xff]
      %v4048 = vld [vmem:[%s2960 + $0x158] sm:$0xff]
      %v4049 = vld [vmem:[%s2960 + $0x168] sm:$0xff]
      %v4050 = vld [vmem:[%s2960 + $0x170] sm:$0xff]
      %4083 = vrot.lane.b32.xlu0 %v4019, 24
      %v4084 = vpop.permute.xlu0 %4083
      %4085 = vrot.lane.b32.xlu0 %v4020, 24
      %v4086 = vpop.permute.xlu0 %4085
      %4087 = vrot.lane.b32.xlu0 %v4021, 24
      %v4088 = vpop.permute.xlu0 %4087
      %4089 = vrot.lane.b32.xlu0 %v4022, 24
      %v4090 = vpop.permute.xlu0 %4089
      %4091 = vrot.lane.b32.xlu0 %v4023, 24
      %v4092 = vpop.permute.xlu0 %4091
      %4093 = vrot.lane.b32.xlu0 %v4024, 24
      %v4094 = vpop.permute.xlu0 %4093
      %4095 = vrot.lane.b32.xlu0 %v4025, 24
      %v4096 = vpop.permute.xlu0 %4095
      %4097 = vrot.lane.b32.xlu0 %v4026, 24
      %v4098 = vpop.permute.xlu0 %4097
      %4099 = vrot.lane.b32.xlu0 %v4027, 24
      %v4100 = vpop.permute.xlu0 %4099
      %4101 = vrot.lane.b32.xlu0 %v4028, 24
      %v4102 = vpop.permute.xlu0 %4101
      %4103 = vrot.lane.b32.xlu0 %v4029, 24
      %v4104 = vpop.permute.xlu0 %4103
      %4105 = vrot.lane.b32.xlu0 %v4030, 24
      %v4106 = vpop.permute.xlu0 %4105
      %4107 = vrot.lane.b32.xlu0 %v4031, 24
      %v4108 = vpop.permute.xlu0 %4107
      %4109 = vrot.lane.b32.xlu0 %v4032, 24
      %v4110 = vpop.permute.xlu0 %4109
      %4111 = vrot.lane.b32.xlu0 %v4033, 24
      %v4112 = vpop.permute.xlu0 %4111
      %4113 = vrot.lane.b32.xlu0 %v4034, 24
      %v4114 = vpop.permute.xlu0 %4113
      %4115 = vrot.lane.b32.xlu0 %v4035, 24
      %v4116 = vpop.permute.xlu0 %4115
      %4117 = vrot.lane.b32.xlu0 %v4036, 24
      %v4118 = vpop.permute.xlu0 %4117
      %4119 = vrot.lane.b32.xlu0 %v4037, 24
      %v4120 = vpop.permute.xlu0 %4119
      %4121 = vrot.lane.b32.xlu0 %v4038, 24
      %v4122 = vpop.permute.xlu0 %4121
      %4123 = vrot.lane.b32.xlu0 %v4039, 24
      %v4124 = vpop.permute.xlu0 %4123
      %4125 = vrot.lane.b32.xlu0 %v4040, 24
      %v4126 = vpop.permute.xlu0 %4125
      %4127 = vrot.lane.b32.xlu0 %v4041, 24
      %v4128 = vpop.permute.xlu0 %4127
      %4129 = vrot.lane.b32.xlu0 %v4042, 24
      %v4130 = vpop.permute.xlu0 %4129
      %4131 = vrot.lane.b32.xlu0 %v4043, 24
      %v4132 = vpop.permute.xlu0 %4131
      %4133 = vrot.lane.b32.xlu0 %v4044, 24
      %v4134 = vpop.permute.xlu0 %4133
      %4135 = vrot.lane.b32.xlu0 %v4045, 24
      %v4136 = vpop.permute.xlu0 %4135
      %4137 = vrot.lane.b32.xlu0 %v4046, 24
      %v4138 = vpop.permute.xlu0 %4137
      %4139 = vrot.lane.b32.xlu0 %v4047, 24
      %v4140 = vpop.permute.xlu0 %4139
      %4141 = vrot.lane.b32.xlu0 %v4048, 24
      %v4142 = vpop.permute.xlu0 %4141
      %4143 = vrot.lane.b32.xlu0 %v4049, 24
      %v4144 = vpop.permute.xlu0 %4143
      %4145 = vrot.lane.b32.xlu0 %v4050, 24
      %v4146 = vpop.permute.xlu0 %4145
      %4179 = vst.msk [vmem:[#allocation3] sm:$0xff] %vm1536, %v4084
      %4180 = vst.msk [vmem:[#allocation3 + $0x8] sm:$0xff] %vm1536, %v4086
      %4181 = vst.msk [vmem:[#allocation3 + $0x10] sm:$0xff] %vm1536, %v4088
      %4182 = vst.msk [vmem:[#allocation3 + $0x18] sm:$0xff] %vm1536, %v4090
      %4183 = vst.msk [vmem:[#allocation3 + $0x20] sm:$0xff] %vm1536, %v4092
      %4184 = vst.msk [vmem:[#allocation3 + $0x28] sm:$0xff] %vm1536, %v4094
      %4185 = vst.msk [vmem:[#allocation3 + $0x30] sm:$0xff] %vm1536, %v4096
      %4186 = vst.msk [vmem:[#allocation3 + $0x38] sm:$0xff] %vm1536, %v4098
      %4187 = vst.msk [vmem:[#allocation3 + $0x40] sm:$0xff] %vm1536, %v4100
      %4188 = vst.msk [vmem:[#allocation3 + $0x48] sm:$0xff] %vm1536, %v4102
      %4189 = vst.msk [vmem:[#allocation3 + $0x50] sm:$0xff] %vm1536, %v4104
      %4190 = vst.msk [vmem:[#allocation3 + $0x58] sm:$0xff] %vm1536, %v4106
      %4191 = vst.msk [vmem:[#allocation3 + $0x60] sm:$0xff] %vm1536, %v4108
      %4192 = vst.msk [vmem:[#allocation3 + $0x68] sm:$0xff] %vm1536, %v4110
      %4193 = vst.msk [vmem:[#allocation3 + $0x70] sm:$0xff] %vm1536, %v4112
      %4194 = vst.msk [vmem:[#allocation3 + $0x78] sm:$0xff] %vm1536, %v4114
      %4195 = vst.msk [vmem:[#allocation3 + $0x80] sm:$0xff] %vm1536, %v4116
      %4196 = vst.msk [vmem:[#allocation3 + $0x88] sm:$0xff] %vm1536, %v4118
      %4197 = vst.msk [vmem:[#allocation3 + $0x90] sm:$0xff] %vm1536, %v4120
      %4198 = vst.msk [vmem:[#allocation3 + $0x98] sm:$0xff] %vm1536, %v4122
      %4199 = vst.msk [vmem:[#allocation3 + $0xa0] sm:$0xff] %vm1536, %v4124
      %4200 = vst.msk [vmem:[#allocation3 + $0xa8] sm:$0xff] %vm1536, %v4126
      %4201 = vst.msk [vmem:[#allocation3 + $0xb0] sm:$0xff] %vm1536, %v4128
      %4202 = vst.msk [vmem:[#allocation3 + $0xb8] sm:$0xff] %vm1536, %v4130
      %4203 = vst.msk [vmem:[#allocation3 + $0xc0] sm:$0xff] %vm1536, %v4132
      %4204 = vst.msk [vmem:[#allocation3 + $0xc8] sm:$0xff] %vm1536, %v4134
      %4205 = vst.msk [vmem:[#allocation3 + $0xd0] sm:$0xff] %vm1536, %v4136
      %4206 = vst.msk [vmem:[#allocation3 + $0xd8] sm:$0xff] %vm1536, %v4138
      %4207 = vst.msk [vmem:[#allocation3 + $0xe0] sm:$0xff] %vm1536, %v4140
      %4208 = vst.msk [vmem:[#allocation3 + $0xe8] sm:$0xff] %vm1536, %v4142
      %4209 = vst.msk [vmem:[#allocation3 + $0xf0] sm:$0xff] %vm1536, %v4144
      %4210 = vst.msk [vmem:[#allocation3 + $0xf8] sm:$0xff] %vm1536, %v4146
      %v4211 = vld [vmem:[%s2831 + $0x1] sm:$0xff]
      %v4212 = vld [vmem:[%s2831 + $0x9] sm:$0xff]
      %v4213 = vld [vmem:[%s2831 + $0x19] sm:$0xff]
      %v4214 = vld [vmem:[%s2831 + $0x21] sm:$0xff]
      %v4215 = vld [vmem:[%s2831 + $0x31] sm:$0xff]
      %v4216 = vld [vmem:[%s2831 + $0x39] sm:$0xff]
      %v4217 = vld [vmem:[%s2831 + $0x49] sm:$0xff]
      %v4218 = vld [vmem:[%s2831 + $0x51] sm:$0xff]
      %v4219 = vld [vmem:[%s2831 + $0x61] sm:$0xff]
      %v4220 = vld [vmem:[%s2831 + $0x69] sm:$0xff]
      %v4221 = vld [vmem:[%s2831 + $0x79] sm:$0xff]
      %v4222 = vld [vmem:[%s2831 + $0x81] sm:$0xff]
      %v4223 = vld [vmem:[%s2831 + $0x91] sm:$0xff]
      %v4224 = vld [vmem:[%s2831 + $0x99] sm:$0xff]
      %v4225 = vld [vmem:[%s2831 + $0xa9] sm:$0xff]
      %v4226 = vld [vmem:[%s2831 + $0xb1] sm:$0xff]
      %v4227 = vld [vmem:[%s2831 + $0xc1] sm:$0xff]
      %v4228 = vld [vmem:[%s2831 + $0xc9] sm:$0xff]
      %v4229 = vld [vmem:[%s2831 + $0xd9] sm:$0xff]
      %v4230 = vld [vmem:[%s2831 + $0xe1] sm:$0xff]
      %v4231 = vld [vmem:[%s2831 + $0xf1] sm:$0xff]
      %v4232 = vld [vmem:[%s2831 + $0xf9] sm:$0xff]
      %v4233 = vld [vmem:[%s2831 + $0x109] sm:$0xff]
      %v4234 = vld [vmem:[%s2831 + $0x111] sm:$0xff]
      %v4235 = vld [vmem:[%s2831 + $0x121] sm:$0xff]
      %v4236 = vld [vmem:[%s2831 + $0x129] sm:$0xff]
      %v4237 = vld [vmem:[%s2831 + $0x139] sm:$0xff]
      %v4238 = vld [vmem:[%s2831 + $0x141] sm:$0xff]
      %v4239 = vld [vmem:[%s2831 + $0x151] sm:$0xff]
      %v4240 = vld [vmem:[%s2831 + $0x159] sm:$0xff]
      %v4241 = vld [vmem:[%s2831 + $0x169] sm:$0xff]
      %v4242 = vld [vmem:[%s2831 + $0x171] sm:$0xff]
      %4275 = vrot.lane.b32.xlu0 %v4211, 28
      %v4276 = vpop.permute.xlu0 %4275
      %4277 = vrot.lane.b32.xlu0 %v4212, 28
      %v4278 = vpop.permute.xlu0 %4277
      %4279 = vrot.lane.b32.xlu0 %v4213, 28
      %v4280 = vpop.permute.xlu0 %4279
      %4281 = vrot.lane.b32.xlu0 %v4214, 28
      %v4282 = vpop.permute.xlu0 %4281
      %4283 = vrot.lane.b32.xlu0 %v4215, 28
      %v4284 = vpop.permute.xlu0 %4283
      %4285 = vrot.lane.b32.xlu0 %v4216, 28
      %v4286 = vpop.permute.xlu0 %4285
      %4287 = vrot.lane.b32.xlu0 %v4217, 28
      %v4288 = vpop.permute.xlu0 %4287
      %4289 = vrot.lane.b32.xlu0 %v4218, 28
      %v4290 = vpop.permute.xlu0 %4289
      %4291 = vrot.lane.b32.xlu0 %v4219, 28
      %v4292 = vpop.permute.xlu0 %4291
      %4293 = vrot.lane.b32.xlu0 %v4220, 28
      %v4294 = vpop.permute.xlu0 %4293
      %4295 = vrot.lane.b32.xlu0 %v4221, 28
      %v4296 = vpop.permute.xlu0 %4295
      %4297 = vrot.lane.b32.xlu0 %v4222, 28
      %v4298 = vpop.permute.xlu0 %4297
      %4299 = vrot.lane.b32.xlu0 %v4223, 28
      %v4300 = vpop.permute.xlu0 %4299
      %4301 = vrot.lane.b32.xlu0 %v4224, 28
      %v4302 = vpop.permute.xlu0 %4301
      %4303 = vrot.lane.b32.xlu0 %v4225, 28
      %v4304 = vpop.permute.xlu0 %4303
      %4305 = vrot.lane.b32.xlu0 %v4226, 28
      %v4306 = vpop.permute.xlu0 %4305
      %4307 = vrot.lane.b32.xlu0 %v4227, 28
      %v4308 = vpop.permute.xlu0 %4307
      %4309 = vrot.lane.b32.xlu0 %v4228, 28
      %v4310 = vpop.permute.xlu0 %4309
      %4311 = vrot.lane.b32.xlu0 %v4229, 28
      %v4312 = vpop.permute.xlu0 %4311
      %4313 = vrot.lane.b32.xlu0 %v4230, 28
      %v4314 = vpop.permute.xlu0 %4313
      %4315 = vrot.lane.b32.xlu0 %v4231, 28
      %v4316 = vpop.permute.xlu0 %4315
      %4317 = vrot.lane.b32.xlu0 %v4232, 28
      %v4318 = vpop.permute.xlu0 %4317
      %4319 = vrot.lane.b32.xlu0 %v4233, 28
      %v4320 = vpop.permute.xlu0 %4319
      %4321 = vrot.lane.b32.xlu0 %v4234, 28
      %v4322 = vpop.permute.xlu0 %4321
      %4323 = vrot.lane.b32.xlu0 %v4235, 28
      %v4324 = vpop.permute.xlu0 %4323
      %4325 = vrot.lane.b32.xlu0 %v4236, 28
      %v4326 = vpop.permute.xlu0 %4325
      %4327 = vrot.lane.b32.xlu0 %v4237, 28
      %v4328 = vpop.permute.xlu0 %4327
      %4329 = vrot.lane.b32.xlu0 %v4238, 28
      %v4330 = vpop.permute.xlu0 %4329
      %4331 = vrot.lane.b32.xlu0 %v4239, 28
      %v4332 = vpop.permute.xlu0 %4331
      %4333 = vrot.lane.b32.xlu0 %v4240, 28
      %v4334 = vpop.permute.xlu0 %4333
      %4335 = vrot.lane.b32.xlu0 %v4241, 28
      %v4336 = vpop.permute.xlu0 %4335
      %4337 = vrot.lane.b32.xlu0 %v4242, 28
      %v4338 = vpop.permute.xlu0 %4337
      %4371 = vst.msk [vmem:[#allocation3] sm:$0xff] %vm1729, %v4276
      %4372 = vst.msk [vmem:[#allocation3 + $0x8] sm:$0xff] %vm1729, %v4278
      %4373 = vst.msk [vmem:[#allocation3 + $0x10] sm:$0xff] %vm1729, %v4280
      %4374 = vst.msk [vmem:[#allocation3 + $0x18] sm:$0xff] %vm1729, %v4282
      %4375 = vst.msk [vmem:[#allocation3 + $0x20] sm:$0xff] %vm1729, %v4284
      %4376 = vst.msk [vmem:[#allocation3 + $0x28] sm:$0xff] %vm1729, %v4286
      %4377 = vst.msk [vmem:[#allocation3 + $0x30] sm:$0xff] %vm1729, %v4288
      %4378 = vst.msk [vmem:[#allocation3 + $0x38] sm:$0xff] %vm1729, %v4290
      %4379 = vst.msk [vmem:[#allocation3 + $0x40] sm:$0xff] %vm1729, %v4292
      %4380 = vst.msk [vmem:[#allocation3 + $0x48] sm:$0xff] %vm1729, %v4294
      %4381 = vst.msk [vmem:[#allocation3 + $0x50] sm:$0xff] %vm1729, %v4296
      %4382 = vst.msk [vmem:[#allocation3 + $0x58] sm:$0xff] %vm1729, %v4298
      %4383 = vst.msk [vmem:[#allocation3 + $0x60] sm:$0xff] %vm1729, %v4300
      %4384 = vst.msk [vmem:[#allocation3 + $0x68] sm:$0xff] %vm1729, %v4302
      %4385 = vst.msk [vmem:[#allocation3 + $0x70] sm:$0xff] %vm1729, %v4304
      %4386 = vst.msk [vmem:[#allocation3 + $0x78] sm:$0xff] %vm1729, %v4306
      %4387 = vst.msk [vmem:[#allocation3 + $0x80] sm:$0xff] %vm1729, %v4308
      %4388 = vst.msk [vmem:[#allocation3 + $0x88] sm:$0xff] %vm1729, %v4310
      %4389 = vst.msk [vmem:[#allocation3 + $0x90] sm:$0xff] %vm1729, %v4312
      %4390 = vst.msk [vmem:[#allocation3 + $0x98] sm:$0xff] %vm1729, %v4314
      %4391 = vst.msk [vmem:[#allocation3 + $0xa0] sm:$0xff] %vm1729, %v4316
      %4392 = vst.msk [vmem:[#allocation3 + $0xa8] sm:$0xff] %vm1729, %v4318
      %4393 = vst.msk [vmem:[#allocation3 + $0xb0] sm:$0xff] %vm1729, %v4320
      %4394 = vst.msk [vmem:[#allocation3 + $0xb8] sm:$0xff] %vm1729, %v4322
      %4395 = vst.msk [vmem:[#allocation3 + $0xc0] sm:$0xff] %vm1729, %v4324
      %4396 = vst.msk [vmem:[#allocation3 + $0xc8] sm:$0xff] %vm1729, %v4326
      %4397 = vst.msk [vmem:[#allocation3 + $0xd0] sm:$0xff] %vm1729, %v4328
      %4398 = vst.msk [vmem:[#allocation3 + $0xd8] sm:$0xff] %vm1729, %v4330
      %4399 = vst.msk [vmem:[#allocation3 + $0xe0] sm:$0xff] %vm1729, %v4332
      %4400 = vst.msk [vmem:[#allocation3 + $0xe8] sm:$0xff] %vm1729, %v4334
      %4401 = vst.msk [vmem:[#allocation3 + $0xf0] sm:$0xff] %vm1729, %v4336
      %4402 = vst.msk [vmem:[#allocation3 + $0xf8] sm:$0xff] %vm1729, %v4338
      %v4403 = vld [vmem:[%s2960 + $0x1] sm:$0xff]
      %v4404 = vld [vmem:[%s2960 + $0x9] sm:$0xff]
      %v4405 = vld [vmem:[%s2960 + $0x19] sm:$0xff]
      %v4406 = vld [vmem:[%s2960 + $0x21] sm:$0xff]
      %v4407 = vld [vmem:[%s2960 + $0x31] sm:$0xff]
      %v4408 = vld [vmem:[%s2960 + $0x39] sm:$0xff]
      %v4409 = vld [vmem:[%s2960 + $0x49] sm:$0xff]
      %v4410 = vld [vmem:[%s2960 + $0x51] sm:$0xff]
      %v4411 = vld [vmem:[%s2960 + $0x61] sm:$0xff]
      %v4412 = vld [vmem:[%s2960 + $0x69] sm:$0xff]
      %v4413 = vld [vmem:[%s2960 + $0x79] sm:$0xff]
      %v4414 = vld [vmem:[%s2960 + $0x81] sm:$0xff]
      %v4415 = vld [vmem:[%s2960 + $0x91] sm:$0xff]
      %v4416 = vld [vmem:[%s2960 + $0x99] sm:$0xff]
      %v4417 = vld [vmem:[%s2960 + $0xa9] sm:$0xff]
      %v4418 = vld [vmem:[%s2960 + $0xb1] sm:$0xff]
      %v4419 = vld [vmem:[%s2960 + $0xc1] sm:$0xff]
      %v4420 = vld [vmem:[%s2960 + $0xc9] sm:$0xff]
      %v4421 = vld [vmem:[%s2960 + $0xd9] sm:$0xff]
      %v4422 = vld [vmem:[%s2960 + $0xe1] sm:$0xff]
      %v4423 = vld [vmem:[%s2960 + $0xf1] sm:$0xff]
      %v4424 = vld [vmem:[%s2960 + $0xf9] sm:$0xff]
      %v4425 = vld [vmem:[%s2960 + $0x109] sm:$0xff]
      %v4426 = vld [vmem:[%s2960 + $0x111] sm:$0xff]
      %v4427 = vld [vmem:[%s2960 + $0x121] sm:$0xff]
      %v4428 = vld [vmem:[%s2960 + $0x129] sm:$0xff]
      %v4429 = vld [vmem:[%s2960 + $0x139] sm:$0xff]
      %v4430 = vld [vmem:[%s2960 + $0x141] sm:$0xff]
      %v4431 = vld [vmem:[%s2960 + $0x151] sm:$0xff]
      %v4432 = vld [vmem:[%s2960 + $0x159] sm:$0xff]
      %v4433 = vld [vmem:[%s2960 + $0x169] sm:$0xff]
      %v4434 = vld [vmem:[%s2960 + $0x171] sm:$0xff]
      %4467 = vrot.lane.b32.xlu0 %v4403, 32
      %v4468 = vpop.permute.xlu0 %4467
      %4469 = vrot.lane.b32.xlu0 %v4404, 32
      %v4470 = vpop.permute.xlu0 %4469
      %4471 = vrot.lane.b32.xlu0 %v4405, 32
      %v4472 = vpop.permute.xlu0 %4471
      %4473 = vrot.lane.b32.xlu0 %v4406, 32
      %v4474 = vpop.permute.xlu0 %4473
      %4475 = vrot.lane.b32.xlu0 %v4407, 32
      %v4476 = vpop.permute.xlu0 %4475
      %4477 = vrot.lane.b32.xlu0 %v4408, 32
      %v4478 = vpop.permute.xlu0 %4477
      %4479 = vrot.lane.b32.xlu0 %v4409, 32
      %v4480 = vpop.permute.xlu0 %4479
      %4481 = vrot.lane.b32.xlu0 %v4410, 32
      %v4482 = vpop.permute.xlu0 %4481
      %4483 = vrot.lane.b32.xlu0 %v4411, 32
      %v4484 = vpop.permute.xlu0 %4483
      %4485 = vrot.lane.b32.xlu0 %v4412, 32
      %v4486 = vpop.permute.xlu0 %4485
      %4487 = vrot.lane.b32.xlu0 %v4413, 32
      %v4488 = vpop.permute.xlu0 %4487
      %4489 = vrot.lane.b32.xlu0 %v4414, 32
      %v4490 = vpop.permute.xlu0 %4489
      %4491 = vrot.lane.b32.xlu0 %v4415, 32
      %v4492 = vpop.permute.xlu0 %4491
      %4493 = vrot.lane.b32.xlu0 %v4416, 32
      %v4494 = vpop.permute.xlu0 %4493
      %4495 = vrot.lane.b32.xlu0 %v4417, 32
      %v4496 = vpop.permute.xlu0 %4495
      %4497 = vrot.lane.b32.xlu0 %v4418, 32
      %v4498 = vpop.permute.xlu0 %4497
      %4499 = vrot.lane.b32.xlu0 %v4419, 32
      %v4500 = vpop.permute.xlu0 %4499
      %4501 = vrot.lane.b32.xlu0 %v4420, 32
      %v4502 = vpop.permute.xlu0 %4501
      %4503 = vrot.lane.b32.xlu0 %v4421, 32
      %v4504 = vpop.permute.xlu0 %4503
      %4505 = vrot.lane.b32.xlu0 %v4422, 32
      %v4506 = vpop.permute.xlu0 %4505
      %4507 = vrot.lane.b32.xlu0 %v4423, 32
      %v4508 = vpop.permute.xlu0 %4507
      %4509 = vrot.lane.b32.xlu0 %v4424, 32
      %v4510 = vpop.permute.xlu0 %4509
      %4511 = vrot.lane.b32.xlu0 %v4425, 32
      %v4512 = vpop.permute.xlu0 %4511
      %4513 = vrot.lane.b32.xlu0 %v4426, 32
      %v4514 = vpop.permute.xlu0 %4513
      %4515 = vrot.lane.b32.xlu0 %v4427, 32
      %v4516 = vpop.permute.xlu0 %4515
      %4517 = vrot.lane.b32.xlu0 %v4428, 32
      %v4518 = vpop.permute.xlu0 %4517
      %4519 = vrot.lane.b32.xlu0 %v4429, 32
      %v4520 = vpop.permute.xlu0 %4519
      %4521 = vrot.lane.b32.xlu0 %v4430, 32
      %v4522 = vpop.permute.xlu0 %4521
      %4523 = vrot.lane.b32.xlu0 %v4431, 32
      %v4524 = vpop.permute.xlu0 %4523
      %4525 = vrot.lane.b32.xlu0 %v4432, 32
      %v4526 = vpop.permute.xlu0 %4525
      %4527 = vrot.lane.b32.xlu0 %v4433, 32
      %v4528 = vpop.permute.xlu0 %4527
      %4529 = vrot.lane.b32.xlu0 %v4434, 32
      %v4530 = vpop.permute.xlu0 %4529
      %4563 = vst.msk [vmem:[#allocation3] sm:$0xff] %vm1922, %v4468
      %4564 = vst.msk [vmem:[#allocation3 + $0x8] sm:$0xff] %vm1922, %v4470
      %4565 = vst.msk [vmem:[#allocation3 + $0x10] sm:$0xff] %vm1922, %v4472
      %4566 = vst.msk [vmem:[#allocation3 + $0x18] sm:$0xff] %vm1922, %v4474
      %4567 = vst.msk [vmem:[#allocation3 + $0x20] sm:$0xff] %vm1922, %v4476
      %4568 = vst.msk [vmem:[#allocation3 + $0x28] sm:$0xff] %vm1922, %v4478
      %4569 = vst.msk [vmem:[#allocation3 + $0x30] sm:$0xff] %vm1922, %v4480
      %4570 = vst.msk [vmem:[#allocation3 + $0x38] sm:$0xff] %vm1922, %v4482
      %4571 = vst.msk [vmem:[#allocation3 + $0x40] sm:$0xff] %vm1922, %v4484
      %4572 = vst.msk [vmem:[#allocation3 + $0x48] sm:$0xff] %vm1922, %v4486
      %4573 = vst.msk [vmem:[#allocation3 + $0x50] sm:$0xff] %vm1922, %v4488
      %4574 = vst.msk [vmem:[#allocation3 + $0x58] sm:$0xff] %vm1922, %v4490
      %4575 = vst.msk [vmem:[#allocation3 + $0x60] sm:$0xff] %vm1922, %v4492
      %4576 = vst.msk [vmem:[#allocation3 + $0x68] sm:$0xff] %vm1922, %v4494
      %4577 = vst.msk [vmem:[#allocation3 + $0x70] sm:$0xff] %vm1922, %v4496
      %4578 = vst.msk [vmem:[#allocation3 + $0x78] sm:$0xff] %vm1922, %v4498
      %4579 = vst.msk [vmem:[#allocation3 + $0x80] sm:$0xff] %vm1922, %v4500
      %4580 = vst.msk [vmem:[#allocation3 + $0x88] sm:$0xff] %vm1922, %v4502
      %4581 = vst.msk [vmem:[#allocation3 + $0x90] sm:$0xff] %vm1922, %v4504
      %4582 = vst.msk [vmem:[#allocation3 + $0x98] sm:$0xff] %vm1922, %v4506
      %4583 = vst.msk [vmem:[#allocation3 + $0xa0] sm:$0xff] %vm1922, %v4508
      %4584 = vst.msk [vmem:[#allocation3 + $0xa8] sm:$0xff] %vm1922, %v4510
      %4585 = vst.msk [vmem:[#allocation3 + $0xb0] sm:$0xff] %vm1922, %v4512
      %4586 = vst.msk [vmem:[#allocation3 + $0xb8] sm:$0xff] %vm1922, %v4514
      %4587 = vst.msk [vmem:[#allocation3 + $0xc0] sm:$0xff] %vm1922, %v4516
      %4588 = vst.msk [vmem:[#allocation3 + $0xc8] sm:$0xff] %vm1922, %v4518
      %4589 = vst.msk [vmem:[#allocation3 + $0xd0] sm:$0xff] %vm1922, %v4520
      %4590 = vst.msk [vmem:[#allocation3 + $0xd8] sm:$0xff] %vm1922, %v4522
      %4591 = vst.msk [vmem:[#allocation3 + $0xe0] sm:$0xff] %vm1922, %v4524
      %4592 = vst.msk [vmem:[#allocation3 + $0xe8] sm:$0xff] %vm1922, %v4526
      %4593 = vst.msk [vmem:[#allocation3 + $0xf0] sm:$0xff] %vm1922, %v4528
      %4594 = vst.msk [vmem:[#allocation3 + $0xf8] sm:$0xff] %vm1922, %v4530
      %v4595 = vld [vmem:[#allocation3] sm:$0xff]
      %v4596 = vld [vmem:[#allocation3 + $0x8] sm:$0xff]
      %v4597 = vld [vmem:[#allocation3 + $0x10] sm:$0xff]
      %v4598 = vld [vmem:[#allocation3 + $0x18] sm:$0xff]
      %v4599 = vld [vmem:[#allocation3 + $0x20] sm:$0xff]
      %v4600 = vld [vmem:[#allocation3 + $0x28] sm:$0xff]
      %v4601 = vld [vmem:[#allocation3 + $0x30] sm:$0xff]
      %v4602 = vld [vmem:[#allocation3 + $0x38] sm:$0xff]
      %v4603 = vld [vmem:[#allocation3 + $0x40] sm:$0xff]
      %v4604 = vld [vmem:[#allocation3 + $0x48] sm:$0xff]
      %v4605 = vld [vmem:[#allocation3 + $0x50] sm:$0xff]
      %v4606 = vld [vmem:[#allocation3 + $0x58] sm:$0xff]
      %v4607 = vld [vmem:[#allocation3 + $0x60] sm:$0xff]
      %v4608 = vld [vmem:[#allocation3 + $0x68] sm:$0xff]
      %v4609 = vld [vmem:[#allocation3 + $0x70] sm:$0xff]
      %v4610 = vld [vmem:[#allocation3 + $0x78] sm:$0xff]
      %v4611 = vld [vmem:[#allocation3 + $0x80] sm:$0xff]
      %v4612 = vld [vmem:[#allocation3 + $0x88] sm:$0xff]
      %v4613 = vld [vmem:[#allocation3 + $0x90] sm:$0xff]
      %v4614 = vld [vmem:[#allocation3 + $0x98] sm:$0xff]
      %v4615 = vld [vmem:[#allocation3 + $0xa0] sm:$0xff]
      %v4616 = vld [vmem:[#allocation3 + $0xa8] sm:$0xff]
      %v4617 = vld [vmem:[#allocation3 + $0xb0] sm:$0xff]
      %v4618 = vld [vmem:[#allocation3 + $0xb8] sm:$0xff]
      %v4619 = vld [vmem:[#allocation3 + $0xc0] sm:$0xff]
      %v4620 = vld [vmem:[#allocation3 + $0xc8] sm:$0xff]
      %v4621 = vld [vmem:[#allocation3 + $0xd0] sm:$0xff]
      %v4622 = vld [vmem:[#allocation3 + $0xd8] sm:$0xff]
      %v4623 = vld [vmem:[#allocation3 + $0xe0] sm:$0xff]
      %v4624 = vld [vmem:[#allocation3 + $0xe8] sm:$0xff]
      %v4625 = vld [vmem:[#allocation3 + $0xf0] sm:$0xff]
      %v4626 = vld [vmem:[#allocation3 + $0xf8] sm:$0xff]
      %v4627 = vld [vmem:[%s3] sm:$0xff]
      %v4628 = vld [vmem:[%s3 + $0x8] sm:$0xff]
      %v4629 = vld [vmem:[%s3 + $0x10] sm:$0xff]
      %v4630 = vld [vmem:[%s3 + $0x18] sm:$0xff]
      %v4631 = vld [vmem:[%s3 + $0x20] sm:$0xf]
      %v4632 = vld [vmem:[%s4] sm:$0x1]
      %v4634 = vlaneseq
      %v4635 = vshrl.u32 %v4634, 7
      %v4636 = vsub.s32 0, %v4635
      %v4637 = vrot.slane %v4632, %v4636
      %v4640 = vsel %vm1999, %v4595, 0
      %v4643 = vsel %vm1999, %v4596, 0
      %v4646 = vsel %vm1999, %v4597, 0
      %v4649 = vsel %vm1999, %v4598, 0
      %v4652 = vsel %vm1999, %v4599, 0
      %v4655 = vsel %vm1999, %v4600, 0
      %v4658 = vsel %vm1999, %v4601, 0
      %v4661 = vsel %vm1999, %v4602, 0
      %v4664 = vsel %vm1999, %v4603, 0
      %v4667 = vsel %vm1999, %v4604, 0
      %v4670 = vsel %vm1999, %v4605, 0
      %v4673 = vsel %vm1999, %v4606, 0
      %v4676 = vsel %vm1999, %v4607, 0
      %v4679 = vsel %vm1999, %v4608, 0
      %v4682 = vsel %vm1999, %v4609, 0
      %v4685 = vsel %vm1999, %v4610, 0
      %v4688 = vsel %vm1999, %v4611, 0
      %v4691 = vsel %vm1999, %v4612, 0
      %v4694 = vsel %vm1999, %v4613, 0
      %v4697 = vsel %vm1999, %v4614, 0
      %v4700 = vsel %vm1999, %v4615, 0
      %v4703 = vsel %vm1999, %v4616, 0
      %v4706 = vsel %vm1999, %v4617, 0
      %v4709 = vsel %vm1999, %v4618, 0
      %v4712 = vsel %vm1999, %v4619, 0
      %v4715 = vsel %vm1999, %v4620, 0
      %v4718 = vsel %vm1999, %v4621, 0
      %v4721 = vsel %vm1999, %v4622, 0
      %v4724 = vsel %vm1999, %v4623, 0
      %v4727 = vsel %vm1999, %v4624, 0
      %v4730 = vsel %vm1999, %v4625, 0
      %v4733 = vsel %vm1999, %v4626, 0
      %v4736 = vsel %vm2096, %v4631, 0
      %4738 = vmatprep.subr.mxu0 0.0
      %4739 = vmatpush1.msra.mxu0 %v4627
      %4740 = vmatprep.subr.mxu0 0.0
      %4741 = vmatpush1.msra.mxu0 %v4628
      %4742 = vmatprep.subr.mxu0 0.0
      %4743 = vmatpush1.msra.mxu0 %v4629
      %4744 = vmatprep.subr.mxu0 0.0
      %4745 = vmatpush1.msra.mxu0 %v4630
      %4746 = vmatprep.subr.mxu0 0.0
      %4747 = vmatpush1.msra.mxu0 %v4736
      %4748 = vmatprep.subr.mxu0 0.0
      %4749 = vmatpush1.msra.mxu0 0.0
      %4750 = vmatprep.subr.mxu0 0.0
      %4751 = vmatpush1.msra.mxu0 0.0
      %4752 = vmatprep.subr.mxu0 0.0
      %4753 = vmatpush1.msra.mxu0 0.0
      %4754 = vmatprep.subr.mxu0 0.0
      %4755 = vmatpush1.msra.mxu0 0.0
      %4756 = vmatprep.subr.mxu0 0.0
      %4757 = vmatpush1.msra.mxu0 0.0
      %4758 = vmatprep.subr.mxu0 0.0
      %4759 = vmatpush1.msra.mxu0 0.0
      %4760 = vmatprep.subr.mxu0 0.0
      %4761 = vmatpush1.msra.mxu0 0.0
      %4762 = vmatprep.subr.mxu0 0.0
      %4763 = vmatpush1.msra.mxu0 0.0
      %4764 = vmatprep.subr.mxu0 0.0
      %4765 = vmatpush1.msra.mxu0 0.0
      %4766 = vmatprep.subr.mxu0 0.0
      %4767 = vmatpush1.msra.mxu0 0.0
      %4768 = vmatprep.subr.mxu0 0.0
      %4769 = vmatpush1.msra.mxu0 0.0
      %4770 = vmatprep.subr.mxu0 0.0
      %4771 = vmatpush1.msra.mxu0 0.0
      %4772 = vmatprep.subr.mxu0 0.0
      %4773 = vmatpush1.msra.mxu0 0.0
      %4774 = vmatprep.subr.mxu0 0.0
      %4775 = vmatpush1.msra.mxu0 0.0
      %4776 = vmatprep.subr.mxu0 0.0
      %4777 = vmatpush1.msra.mxu0 0.0
      %4778 = vmatprep.subr.mxu0 0.0
      %4779 = vmatpush1.msra.mxu0 0.0
      %4780 = vmatprep.subr.mxu0 0.0
      %4781 = vmatpush1.msra.mxu0 0.0
      %4782 = vmatprep.subr.mxu0 0.0
      %4783 = vmatpush1.msra.mxu0 0.0
      %4784 = vmatprep.subr.mxu0 0.0
      %4785 = vmatpush1.msra.mxu0 0.0
      %4786 = vmatprep.subr.mxu0 0.0
      %4787 = vmatpush1.msra.mxu0 0.0
      %4788 = vmatprep.subr.mxu0 0.0
      %4789 = vmatpush1.msra.mxu0 0.0
      %4790 = vmatprep.subr.mxu0 0.0
      %4791 = vmatpush1.msra.mxu0 0.0
      %4792 = vmatprep.subr.mxu0 0.0
      %4793 = vmatpush1.msra.mxu0 0.0
      %4794 = vmatprep.subr.mxu0 0.0
      %4795 = vmatpush1.msra.mxu0 0.0
      %4796 = vmatprep.subr.mxu0 0.0
      %4797 = vmatpush1.msra.mxu0 0.0
      %4798 = vmatprep.subr.mxu0 0.0
      %4799 = vmatpush1.msra.mxu0 0.0
      %4800 = vmatprep.subr.mxu0 0.0
      %4801 = vmatpush1.msra.mxu0 0.0
      %4802 = vmatprep.mubr.f32.mxu0 0.0
      %4803 = vmatmul.mubr.f32.gmra.mrb[0].mxu0 %v4640
      %v4804 = vpop.f32.mrb[0].mxu0
      %v4805 = vadd.f32 %v4637, %v4804
      %v4806 = vpop.f32.mrb[0].mxu0
      %4807 = vmatprep.mubr.f32.mxu0 0.0
      %4808 = vmatmul.mubr.f32.gmra.mrb[0].mxu0 %v4643
      %v4809 = vpop.f32.mrb[0].mxu0
      %v4810 = vadd.f32 %v4637, %v4809
      %v4811 = vpop.f32.mrb[0].mxu0
      %4812 = vmatprep.mubr.f32.mxu0 0.0
      %4813 = vmatmul.mubr.f32.gmra.mrb[0].mxu0 %v4646
      %v4814 = vpop.f32.mrb[0].mxu0
      %v4815 = vadd.f32 %v4637, %v4814
      %v4816 = vpop.f32.mrb[0].mxu0
      %4817 = vmatprep.mubr.f32.mxu0 0.0
      %4818 = vmatmul.mubr.f32.gmra.mrb[0].mxu0 %v4649
      %v4819 = vpop.f32.mrb[0].mxu0
      %v4820 = vadd.f32 %v4637, %v4819
      %v4821 = vpop.f32.mrb[0].mxu0
      %4822 = vmatprep.mubr.f32.mxu0 0.0
      %4823 = vmatmul.mubr.f32.gmra.mrb[0].mxu0 %v4652
      %v4824 = vpop.f32.mrb[0].mxu0
      %v4825 = vadd.f32 %v4637, %v4824
      %v4826 = vpop.f32.mrb[0].mxu0
      %4827 = vmatprep.mubr.f32.mxu0 0.0
      %4828 = vmatmul.mubr.f32.gmra.mrb[0].mxu0 %v4655
      %v4829 = vpop.f32.mrb[0].mxu0
      %v4830 = vadd.f32 %v4637, %v4829
      %v4831 = vpop.f32.mrb[0].mxu0
      %4832 = vmatprep.mubr.f32.mxu0 0.0
      %4833 = vmatmul.mubr.f32.gmra.mrb[0].mxu0 %v4658
      %v4834 = vpop.f32.mrb[0].mxu0
      %v4835 = vadd.f32 %v4637, %v4834
      %v4836 = vpop.f32.mrb[0].mxu0
      %4837 = vmatprep.mubr.f32.mxu0 0.0
      %4838 = vmatmul.mubr.f32.gmra.mrb[0].mxu0 %v4661
      %v4839 = vpop.f32.mrb[0].mxu0
      %v4840 = vadd.f32 %v4637, %v4839
      %v4841 = vpop.f32.mrb[0].mxu0
      %4842 = vmatprep.mubr.f32.mxu0 0.0
      %4843 = vmatmul.mubr.f32.gmra.mrb[0].mxu0 %v4664
      %v4844 = vpop.f32.mrb[0].mxu0
      %v4845 = vadd.f32 %v4637, %v4844
      %v4846 = vpop.f32.mrb[0].mxu0
      %4847 = vmatprep.mubr.f32.mxu0 0.0
      %4848 = vmatmul.mubr.f32.gmra.mrb[0].mxu0 %v4667
      %v4849 = vpop.f32.mrb[0].mxu0
      %v4850 = vadd.f32 %v4637, %v4849
      %v4851 = vpop.f32.mrb[0].mxu0
      %4852 = vmatprep.mubr.f32.mxu0 0.0
      %4853 = vmatmul.mubr.f32.gmra.mrb[0].mxu0 %v4670
      %v4854 = vpop.f32.mrb[0].mxu0
      %v4855 = vadd.f32 %v4637, %v4854
      %v4856 = vpop.f32.mrb[0].mxu0
      %4857 = vmatprep.mubr.f32.mxu0 0.0
      %4858 = vmatmul.mubr.f32.gmra.mrb[0].mxu0 %v4673
      %v4859 = vpop.f32.mrb[0].mxu0
      %v4860 = vadd.f32 %v4637, %v4859
      %v4861 = vpop.f32.mrb[0].mxu0
      %4862 = vmatprep.mubr.f32.mxu0 0.0
      %4863 = vmatmul.mubr.f32.gmra.mrb[0].mxu0 %v4676
      %v4864 = vpop.f32.mrb[0].mxu0
      %v4865 = vadd.f32 %v4637, %v4864
      %v4866 = vpop.f32.mrb[0].mxu0
      %4867 = vmatprep.mubr.f32.mxu0 0.0
      %4868 = vmatmul.mubr.f32.gmra.mrb[0].mxu0 %v4679
      %v4869 = vpop.f32.mrb[0].mxu0
      %v4870 = vadd.f32 %v4637, %v4869
      %v4871 = vpop.f32.mrb[0].mxu0
      %4872 = vmatprep.mubr.f32.mxu0 0.0
      %4873 = vmatmul.mubr.f32.gmra.mrb[0].mxu0 %v4682
      %v4874 = vpop.f32.mrb[0].mxu0
      %v4875 = vadd.f32 %v4637, %v4874
      %v4876 = vpop.f32.mrb[0].mxu0
      %4877 = vmatprep.mubr.f32.mxu0 0.0
      %4878 = vmatmul.mubr.f32.gmra.mrb[0].mxu0 %v4685
      %v4879 = vpop.f32.mrb[0].mxu0
      %v4880 = vadd.f32 %v4637, %v4879
      %v4881 = vpop.f32.mrb[0].mxu0
      %4882 = vmatprep.mubr.f32.mxu0 0.0
      %4883 = vmatmul.mubr.f32.gmra.mrb[0].mxu0 %v4688
      %v4884 = vpop.f32.mrb[0].mxu0
      %v4885 = vadd.f32 %v4637, %v4884
      %v4886 = vpop.f32.mrb[0].mxu0
      %4887 = vmatprep.mubr.f32.mxu0 0.0
      %4888 = vmatmul.mubr.f32.gmra.mrb[0].mxu0 %v4691
      %v4889 = vpop.f32.mrb[0].mxu0
      %v4890 = vadd.f32 %v4637, %v4889
      %v4891 = vpop.f32.mrb[0].mxu0
      %4892 = vmatprep.mubr.f32.mxu0 0.0
      %4893 = vmatmul.mubr.f32.gmra.mrb[0].mxu0 %v4694
      %v4894 = vpop.f32.mrb[0].mxu0
      %v4895 = vadd.f32 %v4637, %v4894
      %v4896 = vpop.f32.mrb[0].mxu0
      %4897 = vmatprep.mubr.f32.mxu0 0.0
      %4898 = vmatmul.mubr.f32.gmra.mrb[0].mxu0 %v4697
      %v4899 = vpop.f32.mrb[0].mxu0
      %v4900 = vadd.f32 %v4637, %v4899
      %v4901 = vpop.f32.mrb[0].mxu0
      %4902 = vmatprep.mubr.f32.mxu0 0.0
      %4903 = vmatmul.mubr.f32.gmra.mrb[0].mxu0 %v4700
      %v4904 = vpop.f32.mrb[0].mxu0
      %v4905 = vadd.f32 %v4637, %v4904
      %v4906 = vpop.f32.mrb[0].mxu0
      %4907 = vmatprep.mubr.f32.mxu0 0.0
      %4908 = vmatmul.mubr.f32.gmra.mrb[0].mxu0 %v4703
      %v4909 = vpop.f32.mrb[0].mxu0
      %v4910 = vadd.f32 %v4637, %v4909
      %v4911 = vpop.f32.mrb[0].mxu0
      %4912 = vmatprep.mubr.f32.mxu0 0.0
      %4913 = vmatmul.mubr.f32.gmra.mrb[0].mxu0 %v4706
      %v4914 = vpop.f32.mrb[0].mxu0
      %v4915 = vadd.f32 %v4637, %v4914
      %v4916 = vpop.f32.mrb[0].mxu0
      %4917 = vmatprep.mubr.f32.mxu0 0.0
      %4918 = vmatmul.mubr.f32.gmra.mrb[0].mxu0 %v4709
      %v4919 = vpop.f32.mrb[0].mxu0
      %v4920 = vadd.f32 %v4637, %v4919
      %v4921 = vpop.f32.mrb[0].mxu0
      %4922 = vmatprep.mubr.f32.mxu0 0.0
      %4923 = vmatmul.mubr.f32.gmra.mrb[0].mxu0 %v4712
      %v4924 = vpop.f32.mrb[0].mxu0
      %v4925 = vadd.f32 %v4637, %v4924
      %v4926 = vpop.f32.mrb[0].mxu0
      %4927 = vmatprep.mubr.f32.mxu0 0.0
      %4928 = vmatmul.mubr.f32.gmra.mrb[0].mxu0 %v4715
      %v4929 = vpop.f32.mrb[0].mxu0
      %v4930 = vadd.f32 %v4637, %v4929
      %v4931 = vpop.f32.mrb[0].mxu0
      %4932 = vmatprep.mubr.f32.mxu0 0.0
      %4933 = vmatmul.mubr.f32.gmra.mrb[0].mxu0 %v4718
      %v4934 = vpop.f32.mrb[0].mxu0
      %v4935 = vadd.f32 %v4637, %v4934
      %v4936 = vpop.f32.mrb[0].mxu0
      %4937 = vmatprep.mubr.f32.mxu0 0.0
      %4938 = vmatmul.mubr.f32.gmra.mrb[0].mxu0 %v4721
      %v4939 = vpop.f32.mrb[0].mxu0
      %v4940 = vadd.f32 %v4637, %v4939
      %v4941 = vpop.f32.mrb[0].mxu0
      %4942 = vmatprep.mubr.f32.mxu0 0.0
      %4943 = vmatmul.mubr.f32.gmra.mrb[0].mxu0 %v4724
      %v4944 = vpop.f32.mrb[0].mxu0
      %v4945 = vadd.f32 %v4637, %v4944
      %v4946 = vpop.f32.mrb[0].mxu0
      %4947 = vmatprep.mubr.f32.mxu0 0.0
      %4948 = vmatmul.mubr.f32.gmra.mrb[0].mxu0 %v4727
      %v4949 = vpop.f32.mrb[0].mxu0
      %v4950 = vadd.f32 %v4637, %v4949
      %v4951 = vpop.f32.mrb[0].mxu0
      %4952 = vmatprep.mubr.f32.mxu0 0.0
      %4953 = vmatmul.mubr.f32.gmra.mrb[0].mxu0 %v4730
      %v4954 = vpop.f32.mrb[0].mxu0
      %v4955 = vadd.f32 %v4637, %v4954
      %v4956 = vpop.f32.mrb[0].mxu0
      %4957 = vmatprep.mubr.f32.mxu0 0.0
      %4958 = vmatmul.mubr.f32.gmra.mrb[0].mxu0 %v4733
      %v4959 = vpop.f32.mrb[0].mxu0
      %v4960 = vadd.f32 %v4637, %v4959
      %v4961 = vpop.f32.mrb[0].mxu0
      %4962 = vdwg.mxu0
      %vm4963 = vcmask 130048
      %4964 = vst.msk [vmem:[%s224] sm:$0xff] %vm4963, %v4805
      %4965 = vst.msk [vmem:[%s224 + $0x8] sm:$0xff] %vm4963, %v4810
      %4966 = vst.msk [vmem:[%s224 + $0x10] sm:$0xff] %vm4963, %v4815
      %4967 = vst.msk [vmem:[%s224 + $0x18] sm:$0xff] %vm4963, %v4820
      %4968 = vst.msk [vmem:[%s224 + $0x20] sm:$0xff] %vm4963, %v4825
      %4969 = vst.msk [vmem:[%s224 + $0x28] sm:$0xff] %vm4963, %v4830
      %4970 = vst.msk [vmem:[%s224 + $0x30] sm:$0xff] %vm4963, %v4835
      %4971 = vst.msk [vmem:[%s224 + $0x38] sm:$0xff] %vm4963, %v4840
      %4972 = vst.msk [vmem:[%s224 + $0x40] sm:$0xff] %vm4963, %v4845
      %4973 = vst.msk [vmem:[%s224 + $0x48] sm:$0xff] %vm4963, %v4850
      %4974 = vst.msk [vmem:[%s224 + $0x50] sm:$0xff] %vm4963, %v4855
      %4975 = vst.msk [vmem:[%s224 + $0x58] sm:$0xff] %vm4963, %v4860
      %4976 = vst.msk [vmem:[%s224 + $0x60] sm:$0xff] %vm4963, %v4865
      %4977 = vst.msk [vmem:[%s224 + $0x68] sm:$0xff] %vm4963, %v4870
      %4978 = vst.msk [vmem:[%s224 + $0x70] sm:$0xff] %vm4963, %v4875
      %4979 = vst.msk [vmem:[%s224 + $0x78] sm:$0xff] %vm4963, %v4880
      %4980 = vst.msk [vmem:[%s224 + $0x80] sm:$0xff] %vm4963, %v4885
      %4981 = vst.msk [vmem:[%s224 + $0x88] sm:$0xff] %vm4963, %v4890
      %4982 = vst.msk [vmem:[%s224 + $0x90] sm:$0xff] %vm4963, %v4895
      %4983 = vst.msk [vmem:[%s224 + $0x98] sm:$0xff] %vm4963, %v4900
      %4984 = vst.msk [vmem:[%s224 + $0xa0] sm:$0xff] %vm4963, %v4905
      %4985 = vst.msk [vmem:[%s224 + $0xa8] sm:$0xff] %vm4963, %v4910
      %4986 = vst.msk [vmem:[%s224 + $0xb0] sm:$0xff] %vm4963, %v4915
      %4987 = vst.msk [vmem:[%s224 + $0xb8] sm:$0xff] %vm4963, %v4920
      %4988 = vst.msk [vmem:[%s224 + $0xc0] sm:$0xff] %vm4963, %v4925
      %4989 = vst.msk [vmem:[%s224 + $0xc8] sm:$0xff] %vm4963, %v4930
      %4990 = vst.msk [vmem:[%s224 + $0xd0] sm:$0xff] %vm4963, %v4935
      %4991 = vst.msk [vmem:[%s224 + $0xd8] sm:$0xff] %vm4963, %v4940
      %4992 = vst.msk [vmem:[%s224 + $0xe0] sm:$0xff] %vm4963, %v4945
      %4993 = vst.msk [vmem:[%s224 + $0xe8] sm:$0xff] %vm4963, %v4950
      %4994 = vst.msk [vmem:[%s224 + $0xf0] sm:$0xff] %vm4963, %v4955
      %4995 = vst.msk [vmem:[%s224 + $0xf8] sm:$0xff] %vm4963, %v4960
      %v4996 = vld [vmem:[%s3058 + $0x1] sm:$0xff]
      %v4997 = vld [vmem:[%s3058 + $0x9] sm:$0xff]
      %v4998 = vld [vmem:[%s3058 + $0x19] sm:$0xff]
      %v4999 = vld [vmem:[%s3058 + $0x21] sm:$0xff]
      %v5000 = vld [vmem:[%s3058 + $0x31] sm:$0xff]
      %v5001 = vld [vmem:[%s3058 + $0x39] sm:$0xff]
      %v5002 = vld [vmem:[%s3058 + $0x49] sm:$0xff]
      %v5003 = vld [vmem:[%s3058 + $0x51] sm:$0xff]
      %v5004 = vld [vmem:[%s3058 + $0x61] sm:$0xff]
      %v5005 = vld [vmem:[%s3058 + $0x69] sm:$0xff]
      %v5006 = vld [vmem:[%s3058 + $0x79] sm:$0xff]
      %v5007 = vld [vmem:[%s3058 + $0x81] sm:$0xff]
      %v5008 = vld [vmem:[%s3058 + $0x91] sm:$0xff]
      %v5009 = vld [vmem:[%s3058 + $0x99] sm:$0xff]
      %v5010 = vld [vmem:[%s3058 + $0xa9] sm:$0xff]
      %v5011 = vld [vmem:[%s3058 + $0xb1] sm:$0xff]
      %v5012 = vld [vmem:[%s3058 + $0xc1] sm:$0xff]
      %v5013 = vld [vmem:[%s3058 + $0xc9] sm:$0xff]
      %v5014 = vld [vmem:[%s3058 + $0xd9] sm:$0xff]
      %v5015 = vld [vmem:[%s3058 + $0xe1] sm:$0xff]
      %v5016 = vld [vmem:[%s3058 + $0xf1] sm:$0xff]
      %v5017 = vld [vmem:[%s3058 + $0xf9] sm:$0xff]
      %v5018 = vld [vmem:[%s3058 + $0x109] sm:$0xff]
      %v5019 = vld [vmem:[%s3058 + $0x111] sm:$0xff]
      %v5020 = vld [vmem:[%s3058 + $0x121] sm:$0xff]
      %v5021 = vld [vmem:[%s3058 + $0x129] sm:$0xff]
      %v5022 = vld [vmem:[%s3058 + $0x139] sm:$0xff]
      %v5023 = vld [vmem:[%s3058 + $0x141] sm:$0xff]
      %v5024 = vld [vmem:[%s3058 + $0x151] sm:$0xff]
      %v5025 = vld [vmem:[%s3058 + $0x159] sm:$0xff]
      %v5026 = vld [vmem:[%s3058 + $0x169] sm:$0xff]
      %v5027 = vld [vmem:[%s3058 + $0x171] sm:$0xff]
      %5028 = vst.msk [vmem:[#allocation3] sm:$0xff] %vm225, %v4996
      %5029 = vst.msk [vmem:[#allocation3 + $0x8] sm:$0xff] %vm225, %v4997
      %5030 = vst.msk [vmem:[#allocation3 + $0x10] sm:$0xff] %vm225, %v4998
      %5031 = vst.msk [vmem:[#allocation3 + $0x18] sm:$0xff] %vm225, %v4999
      %5032 = vst.msk [vmem:[#allocation3 + $0x20] sm:$0xff] %vm225, %v5000
      %5033 = vst.msk [vmem:[#allocation3 + $0x28] sm:$0xff] %vm225, %v5001
      %5034 = vst.msk [vmem:[#allocation3 + $0x30] sm:$0xff] %vm225, %v5002
      %5035 = vst.msk [vmem:[#allocation3 + $0x38] sm:$0xff] %vm225, %v5003
      %5036 = vst.msk [vmem:[#allocation3 + $0x40] sm:$0xff] %vm225, %v5004
      %5037 = vst.msk [vmem:[#allocation3 + $0x48] sm:$0xff] %vm225, %v5005
      %5038 = vst.msk [vmem:[#allocation3 + $0x50] sm:$0xff] %vm225, %v5006
      %5039 = vst.msk [vmem:[#allocation3 + $0x58] sm:$0xff] %vm225, %v5007
      %5040 = vst.msk [vmem:[#allocation3 + $0x60] sm:$0xff] %vm225, %v5008
      %5041 = vst.msk [vmem:[#allocation3 + $0x68] sm:$0xff] %vm225, %v5009
      %5042 = vst.msk [vmem:[#allocation3 + $0x70] sm:$0xff] %vm225, %v5010
      %5043 = vst.msk [vmem:[#allocation3 + $0x78] sm:$0xff] %vm225, %v5011
      %5044 = vst.msk [vmem:[#allocation3 + $0x80] sm:$0xff] %vm225, %v5012
      %5045 = vst.msk [vmem:[#allocation3 + $0x88] sm:$0xff] %vm225, %v5013
      %5046 = vst.msk [vmem:[#allocation3 + $0x90] sm:$0xff] %vm225, %v5014
      %5047 = vst.msk [vmem:[#allocation3 + $0x98] sm:$0xff] %vm225, %v5015
      %5048 = vst.msk [vmem:[#allocation3 + $0xa0] sm:$0xff] %vm225, %v5016
      %5049 = vst.msk [vmem:[#allocation3 + $0xa8] sm:$0xff] %vm225, %v5017
      %5050 = vst.msk [vmem:[#allocation3 + $0xb0] sm:$0xff] %vm225, %v5018
      %5051 = vst.msk [vmem:[#allocation3 + $0xb8] sm:$0xff] %vm225, %v5019
      %5052 = vst.msk [vmem:[#allocation3 + $0xc0] sm:$0xff] %vm225, %v5020
      %5053 = vst.msk [vmem:[#allocation3 + $0xc8] sm:$0xff] %vm225, %v5021
      %5054 = vst.msk [vmem:[#allocation3 + $0xd0] sm:$0xff] %vm225, %v5022
      %5055 = vst.msk [vmem:[#allocation3 + $0xd8] sm:$0xff] %vm225, %v5023
      %5056 = vst.msk [vmem:[#allocation3 + $0xe0] sm:$0xff] %vm225, %v5024
      %5057 = vst.msk [vmem:[#allocation3 + $0xe8] sm:$0xff] %vm225, %v5025
      %5058 = vst.msk [vmem:[#allocation3 + $0xf0] sm:$0xff] %vm225, %v5026
      %5059 = vst.msk [vmem:[#allocation3 + $0xf8] sm:$0xff] %vm225, %v5027
      %v5060 = vld [vmem:[%s2993 + $0x1] sm:$0xff]
      %v5061 = vld [vmem:[%s2993 + $0x9] sm:$0xff]
      %v5062 = vld [vmem:[%s2993 + $0x19] sm:$0xff]
      %v5063 = vld [vmem:[%s2993 + $0x21] sm:$0xff]
      %v5064 = vld [vmem:[%s2993 + $0x31] sm:$0xff]
      %v5065 = vld [vmem:[%s2993 + $0x39] sm:$0xff]
      %v5066 = vld [vmem:[%s2993 + $0x49] sm:$0xff]
      %v5067 = vld [vmem:[%s2993 + $0x51] sm:$0xff]
      %v5068 = vld [vmem:[%s2993 + $0x61] sm:$0xff]
      %v5069 = vld [vmem:[%s2993 + $0x69] sm:$0xff]
      %v5070 = vld [vmem:[%s2993 + $0x79] sm:$0xff]
      %v5071 = vld [vmem:[%s2993 + $0x81] sm:$0xff]
      %v5072 = vld [vmem:[%s2993 + $0x91] sm:$0xff]
      %v5073 = vld [vmem:[%s2993 + $0x99] sm:$0xff]
      %v5074 = vld [vmem:[%s2993 + $0xa9] sm:$0xff]
      %v5075 = vld [vmem:[%s2993 + $0xb1] sm:$0xff]
      %v5076 = vld [vmem:[%s2993 + $0xc1] sm:$0xff]
      %v5077 = vld [vmem:[%s2993 + $0xc9] sm:$0xff]
      %v5078 = vld [vmem:[%s2993 + $0xd9] sm:$0xff]
      %v5079 = vld [vmem:[%s2993 + $0xe1] sm:$0xff]
      %v5080 = vld [vmem:[%s2993 + $0xf1] sm:$0xff]
      %v5081 = vld [vmem:[%s2993 + $0xf9] sm:$0xff]
      %v5082 = vld [vmem:[%s2993 + $0x109] sm:$0xff]
      %v5083 = vld [vmem:[%s2993 + $0x111] sm:$0xff]
      %v5084 = vld [vmem:[%s2993 + $0x121] sm:$0xff]
      %v5085 = vld [vmem:[%s2993 + $0x129] sm:$0xff]
      %v5086 = vld [vmem:[%s2993 + $0x139] sm:$0xff]
      %v5087 = vld [vmem:[%s2993 + $0x141] sm:$0xff]
      %v5088 = vld [vmem:[%s2993 + $0x151] sm:$0xff]
      %v5089 = vld [vmem:[%s2993 + $0x159] sm:$0xff]
      %v5090 = vld [vmem:[%s2993 + $0x169] sm:$0xff]
      %v5091 = vld [vmem:[%s2993 + $0x171] sm:$0xff]
      %5124 = vrot.lane.b32.xlu0 %v5060, 4
      %v5125 = vpop.permute.xlu0 %5124
      %5126 = vrot.lane.b32.xlu0 %v5061, 4
      %v5127 = vpop.permute.xlu0 %5126
      %5128 = vrot.lane.b32.xlu0 %v5062, 4
      %v5129 = vpop.permute.xlu0 %5128
      %5130 = vrot.lane.b32.xlu0 %v5063, 4
      %v5131 = vpop.permute.xlu0 %5130
      %5132 = vrot.lane.b32.xlu0 %v5064, 4
      %v5133 = vpop.permute.xlu0 %5132
      %5134 = vrot.lane.b32.xlu0 %v5065, 4
      %v5135 = vpop.permute.xlu0 %5134
      %5136 = vrot.lane.b32.xlu0 %v5066, 4
      %v5137 = vpop.permute.xlu0 %5136
      %5138 = vrot.lane.b32.xlu0 %v5067, 4
      %v5139 = vpop.permute.xlu0 %5138
      %5140 = vrot.lane.b32.xlu0 %v5068, 4
      %v5141 = vpop.permute.xlu0 %5140
      %5142 = vrot.lane.b32.xlu0 %v5069, 4
      %v5143 = vpop.permute.xlu0 %5142
      %5144 = vrot.lane.b32.xlu0 %v5070, 4
      %v5145 = vpop.permute.xlu0 %5144
      %5146 = vrot.lane.b32.xlu0 %v5071, 4
      %v5147 = vpop.permute.xlu0 %5146
      %5148 = vrot.lane.b32.xlu0 %v5072, 4
      %v5149 = vpop.permute.xlu0 %5148
      %5150 = vrot.lane.b32.xlu0 %v5073, 4
      %v5151 = vpop.permute.xlu0 %5150
      %5152 = vrot.lane.b32.xlu0 %v5074, 4
      %v5153 = vpop.permute.xlu0 %5152
      %5154 = vrot.lane.b32.xlu0 %v5075, 4
      %v5155 = vpop.permute.xlu0 %5154
      %5156 = vrot.lane.b32.xlu0 %v5076, 4
      %v5157 = vpop.permute.xlu0 %5156
      %5158 = vrot.lane.b32.xlu0 %v5077, 4
      %v5159 = vpop.permute.xlu0 %5158
      %5160 = vrot.lane.b32.xlu0 %v5078, 4
      %v5161 = vpop.permute.xlu0 %5160
      %5162 = vrot.lane.b32.xlu0 %v5079, 4
      %v5163 = vpop.permute.xlu0 %5162
      %5164 = vrot.lane.b32.xlu0 %v5080, 4
      %v5165 = vpop.permute.xlu0 %5164
      %5166 = vrot.lane.b32.xlu0 %v5081, 4
      %v5167 = vpop.permute.xlu0 %5166
      %5168 = vrot.lane.b32.xlu0 %v5082, 4
      %v5169 = vpop.permute.xlu0 %5168
      %5170 = vrot.lane.b32.xlu0 %v5083, 4
      %v5171 = vpop.permute.xlu0 %5170
      %5172 = vrot.lane.b32.xlu0 %v5084, 4
      %v5173 = vpop.permute.xlu0 %5172
      %5174 = vrot.lane.b32.xlu0 %v5085, 4
      %v5175 = vpop.permute.xlu0 %5174
      %5176 = vrot.lane.b32.xlu0 %v5086, 4
      %v5177 = vpop.permute.xlu0 %5176
      %5178 = vrot.lane.b32.xlu0 %v5087, 4
      %v5179 = vpop.permute.xlu0 %5178
      %5180 = vrot.lane.b32.xlu0 %v5088, 4
      %v5181 = vpop.permute.xlu0 %5180
      %5182 = vrot.lane.b32.xlu0 %v5089, 4
      %v5183 = vpop.permute.xlu0 %5182
      %5184 = vrot.lane.b32.xlu0 %v5090, 4
      %v5185 = vpop.permute.xlu0 %5184
      %5186 = vrot.lane.b32.xlu0 %v5091, 4
      %v5187 = vpop.permute.xlu0 %5186
      %5220 = vst.msk [vmem:[#allocation3] sm:$0xff] %vm570, %v5125
      %5221 = vst.msk [vmem:[#allocation3 + $0x8] sm:$0xff] %vm570, %v5127
      %5222 = vst.msk [vmem:[#allocation3 + $0x10] sm:$0xff] %vm570, %v5129
      %5223 = vst.msk [vmem:[#allocation3 + $0x18] sm:$0xff] %vm570, %v5131
      %5224 = vst.msk [vmem:[#allocation3 + $0x20] sm:$0xff] %vm570, %v5133
      %5225 = vst.msk [vmem:[#allocation3 + $0x28] sm:$0xff] %vm570, %v5135
      %5226 = vst.msk [vmem:[#allocation3 + $0x30] sm:$0xff] %vm570, %v5137
      %5227 = vst.msk [vmem:[#allocation3 + $0x38] sm:$0xff] %vm570, %v5139
      %5228 = vst.msk [vmem:[#allocation3 + $0x40] sm:$0xff] %vm570, %v5141
      %5229 = vst.msk [vmem:[#allocation3 + $0x48] sm:$0xff] %vm570, %v5143
      %5230 = vst.msk [vmem:[#allocation3 + $0x50] sm:$0xff] %vm570, %v5145
      %5231 = vst.msk [vmem:[#allocation3 + $0x58] sm:$0xff] %vm570, %v5147
      %5232 = vst.msk [vmem:[#allocation3 + $0x60] sm:$0xff] %vm570, %v5149
      %5233 = vst.msk [vmem:[#allocation3 + $0x68] sm:$0xff] %vm570, %v5151
      %5234 = vst.msk [vmem:[#allocation3 + $0x70] sm:$0xff] %vm570, %v5153
      %5235 = vst.msk [vmem:[#allocation3 + $0x78] sm:$0xff] %vm570, %v5155
      %5236 = vst.msk [vmem:[#allocation3 + $0x80] sm:$0xff] %vm570, %v5157
      %5237 = vst.msk [vmem:[#allocation3 + $0x88] sm:$0xff] %vm570, %v5159
      %5238 = vst.msk [vmem:[#allocation3 + $0x90] sm:$0xff] %vm570, %v5161
      %5239 = vst.msk [vmem:[#allocation3 + $0x98] sm:$0xff] %vm570, %v5163
      %5240 = vst.msk [vmem:[#allocation3 + $0xa0] sm:$0xff] %vm570, %v5165
      %5241 = vst.msk [vmem:[#allocation3 + $0xa8] sm:$0xff] %vm570, %v5167
      %5242 = vst.msk [vmem:[#allocation3 + $0xb0] sm:$0xff] %vm570, %v5169
      %5243 = vst.msk [vmem:[#allocation3 + $0xb8] sm:$0xff] %vm570, %v5171
      %5244 = vst.msk [vmem:[#allocation3 + $0xc0] sm:$0xff] %vm570, %v5173
      %5245 = vst.msk [vmem:[#allocation3 + $0xc8] sm:$0xff] %vm570, %v5175
      %5246 = vst.msk [vmem:[#allocation3 + $0xd0] sm:$0xff] %vm570, %v5177
      %5247 = vst.msk [vmem:[#allocation3 + $0xd8] sm:$0xff] %vm570, %v5179
      %5248 = vst.msk [vmem:[#allocation3 + $0xe0] sm:$0xff] %vm570, %v5181
      %5249 = vst.msk [vmem:[#allocation3 + $0xe8] sm:$0xff] %vm570, %v5183
      %5250 = vst.msk [vmem:[#allocation3 + $0xf0] sm:$0xff] %vm570, %v5185
      %5251 = vst.msk [vmem:[#allocation3 + $0xf8] sm:$0xff] %vm570, %v5187
      %v5252 = vld [vmem:[%s3058 + $0x2] sm:$0xff]
      %v5253 = vld [vmem:[%s3058 + $0xa] sm:$0xff]
      %v5254 = vld [vmem:[%s3058 + $0x1a] sm:$0xff]
      %v5255 = vld [vmem:[%s3058 + $0x22] sm:$0xff]
      %v5256 = vld [vmem:[%s3058 + $0x32] sm:$0xff]
      %v5257 = vld [vmem:[%s3058 + $0x3a] sm:$0xff]
      %v5258 = vld [vmem:[%s3058 + $0x4a] sm:$0xff]
      %v5259 = vld [vmem:[%s3058 + $0x52] sm:$0xff]
      %v5260 = vld [vmem:[%s3058 + $0x62] sm:$0xff]
      %v5261 = vld [vmem:[%s3058 + $0x6a] sm:$0xff]
      %v5262 = vld [vmem:[%s3058 + $0x7a] sm:$0xff]
      %v5263 = vld [vmem:[%s3058 + $0x82] sm:$0xff]
      %v5264 = vld [vmem:[%s3058 + $0x92] sm:$0xff]
      %v5265 = vld [vmem:[%s3058 + $0x9a] sm:$0xff]
      %v5266 = vld [vmem:[%s3058 + $0xaa] sm:$0xff]
      %v5267 = vld [vmem:[%s3058 + $0xb2] sm:$0xff]
      %v5268 = vld [vmem:[%s3058 + $0xc2] sm:$0xff]
      %v5269 = vld [vmem:[%s3058 + $0xca] sm:$0xff]
      %v5270 = vld [vmem:[%s3058 + $0xda] sm:$0xff]
      %v5271 = vld [vmem:[%s3058 + $0xe2] sm:$0xff]
      %v5272 = vld [vmem:[%s3058 + $0xf2] sm:$0xff]
      %v5273 = vld [vmem:[%s3058 + $0xfa] sm:$0xff]
      %v5274 = vld [vmem:[%s3058 + $0x10a] sm:$0xff]
      %v5275 = vld [vmem:[%s3058 + $0x112] sm:$0xff]
      %v5276 = vld [vmem:[%s3058 + $0x122] sm:$0xff]
      %v5277 = vld [vmem:[%s3058 + $0x12a] sm:$0xff]
      %v5278 = vld [vmem:[%s3058 + $0x13a] sm:$0xff]
      %v5279 = vld [vmem:[%s3058 + $0x142] sm:$0xff]
      %v5280 = vld [vmem:[%s3058 + $0x152] sm:$0xff]
      %v5281 = vld [vmem:[%s3058 + $0x15a] sm:$0xff]
      %v5282 = vld [vmem:[%s3058 + $0x16a] sm:$0xff]
      %v5283 = vld [vmem:[%s3058 + $0x172] sm:$0xff]
      %5316 = vrot.lane.b32.xlu0 %v5252, 8
      %v5317 = vpop.permute.xlu0 %5316
      %5318 = vrot.lane.b32.xlu0 %v5253, 8
      %v5319 = vpop.permute.xlu0 %5318
      %5320 = vrot.lane.b32.xlu0 %v5254, 8
      %v5321 = vpop.permute.xlu0 %5320
      %5322 = vrot.lane.b32.xlu0 %v5255, 8
      %v5323 = vpop.permute.xlu0 %5322
      %5324 = vrot.lane.b32.xlu0 %v5256, 8
      %v5325 = vpop.permute.xlu0 %5324
      %5326 = vrot.lane.b32.xlu0 %v5257, 8
      %v5327 = vpop.permute.xlu0 %5326
      %5328 = vrot.lane.b32.xlu0 %v5258, 8
      %v5329 = vpop.permute.xlu0 %5328
      %5330 = vrot.lane.b32.xlu0 %v5259, 8
      %v5331 = vpop.permute.xlu0 %5330
      %5332 = vrot.lane.b32.xlu0 %v5260, 8
      %v5333 = vpop.permute.xlu0 %5332
      %5334 = vrot.lane.b32.xlu0 %v5261, 8
      %v5335 = vpop.permute.xlu0 %5334
      %5336 = vrot.lane.b32.xlu0 %v5262, 8
      %v5337 = vpop.permute.xlu0 %5336
      %5338 = vrot.lane.b32.xlu0 %v5263, 8
      %v5339 = vpop.permute.xlu0 %5338
      %5340 = vrot.lane.b32.xlu0 %v5264, 8
      %v5341 = vpop.permute.xlu0 %5340
      %5342 = vrot.lane.b32.xlu0 %v5265, 8
      %v5343 = vpop.permute.xlu0 %5342
      %5344 = vrot.lane.b32.xlu0 %v5266, 8
      %v5345 = vpop.permute.xlu0 %5344
      %5346 = vrot.lane.b32.xlu0 %v5267, 8
      %v5347 = vpop.permute.xlu0 %5346
      %5348 = vrot.lane.b32.xlu0 %v5268, 8
      %v5349 = vpop.permute.xlu0 %5348
      %5350 = vrot.lane.b32.xlu0 %v5269, 8
      %v5351 = vpop.permute.xlu0 %5350
      %5352 = vrot.lane.b32.xlu0 %v5270, 8
      %v5353 = vpop.permute.xlu0 %5352
      %5354 = vrot.lane.b32.xlu0 %v5271, 8
      %v5355 = vpop.permute.xlu0 %5354
      %5356 = vrot.lane.b32.xlu0 %v5272, 8
      %v5357 = vpop.permute.xlu0 %5356
      %5358 = vrot.lane.b32.xlu0 %v5273, 8
      %v5359 = vpop.permute.xlu0 %5358
      %5360 = vrot.lane.b32.xlu0 %v5274, 8
      %v5361 = vpop.permute.xlu0 %5360
      %5362 = vrot.lane.b32.xlu0 %v5275, 8
      %v5363 = vpop.permute.xlu0 %5362
      %5364 = vrot.lane.b32.xlu0 %v5276, 8
      %v5365 = vpop.permute.xlu0 %5364
      %5366 = vrot.lane.b32.xlu0 %v5277, 8
      %v5367 = vpop.permute.xlu0 %5366
      %5368 = vrot.lane.b32.xlu0 %v5278, 8
      %v5369 = vpop.permute.xlu0 %5368
      %5370 = vrot.lane.b32.xlu0 %v5279, 8
      %v5371 = vpop.permute.xlu0 %5370
      %5372 = vrot.lane.b32.xlu0 %v5280, 8
      %v5373 = vpop.permute.xlu0 %5372
      %5374 = vrot.lane.b32.xlu0 %v5281, 8
      %v5375 = vpop.permute.xlu0 %5374
      %5376 = vrot.lane.b32.xlu0 %v5282, 8
      %v5377 = vpop.permute.xlu0 %5376
      %5378 = vrot.lane.b32.xlu0 %v5283, 8
      %v5379 = vpop.permute.xlu0 %5378
      %5412 = vst.msk [vmem:[#allocation3] sm:$0xff] %vm763, %v5317
      %5413 = vst.msk [vmem:[#allocation3 + $0x8] sm:$0xff] %vm763, %v5319
      %5414 = vst.msk [vmem:[#allocation3 + $0x10] sm:$0xff] %vm763, %v5321
      %5415 = vst.msk [vmem:[#allocation3 + $0x18] sm:$0xff] %vm763, %v5323
      %5416 = vst.msk [vmem:[#allocation3 + $0x20] sm:$0xff] %vm763, %v5325
      %5417 = vst.msk [vmem:[#allocation3 + $0x28] sm:$0xff] %vm763, %v5327
      %5418 = vst.msk [vmem:[#allocation3 + $0x30] sm:$0xff] %vm763, %v5329
      %5419 = vst.msk [vmem:[#allocation3 + $0x38] sm:$0xff] %vm763, %v5331
      %5420 = vst.msk [vmem:[#allocation3 + $0x40] sm:$0xff] %vm763, %v5333
      %5421 = vst.msk [vmem:[#allocation3 + $0x48] sm:$0xff] %vm763, %v5335
      %5422 = vst.msk [vmem:[#allocation3 + $0x50] sm:$0xff] %vm763, %v5337
      %5423 = vst.msk [vmem:[#allocation3 + $0x58] sm:$0xff] %vm763, %v5339
      %5424 = vst.msk [vmem:[#allocation3 + $0x60] sm:$0xff] %vm763, %v5341
      %5425 = vst.msk [vmem:[#allocation3 + $0x68] sm:$0xff] %vm763, %v5343
      %5426 = vst.msk [vmem:[#allocation3 + $0x70] sm:$0xff] %vm763, %v5345
      %5427 = vst.msk [vmem:[#allocation3 + $0x78] sm:$0xff] %vm763, %v5347
      %5428 = vst.msk [vmem:[#allocation3 + $0x80] sm:$0xff] %vm763, %v5349
      %5429 = vst.msk [vmem:[#allocation3 + $0x88] sm:$0xff] %vm763, %v5351
      %5430 = vst.msk [vmem:[#allocation3 + $0x90] sm:$0xff] %vm763, %v5353
      %5431 = vst.msk [vmem:[#allocation3 + $0x98] sm:$0xff] %vm763, %v5355
      %5432 = vst.msk [vmem:[#allocation3 + $0xa0] sm:$0xff] %vm763, %v5357
      %5433 = vst.msk [vmem:[#allocation3 + $0xa8] sm:$0xff] %vm763, %v5359
      %5434 = vst.msk [vmem:[#allocation3 + $0xb0] sm:$0xff] %vm763, %v5361
      %5435 = vst.msk [vmem:[#allocation3 + $0xb8] sm:$0xff] %vm763, %v5363
      %5436 = vst.msk [vmem:[#allocation3 + $0xc0] sm:$0xff] %vm763, %v5365
      %5437 = vst.msk [vmem:[#allocation3 + $0xc8] sm:$0xff] %vm763, %v5367
      %5438 = vst.msk [vmem:[#allocation3 + $0xd0] sm:$0xff] %vm763, %v5369
      %5439 = vst.msk [vmem:[#allocation3 + $0xd8] sm:$0xff] %vm763, %v5371
      %5440 = vst.msk [vmem:[#allocation3 + $0xe0] sm:$0xff] %vm763, %v5373
      %5441 = vst.msk [vmem:[#allocation3 + $0xe8] sm:$0xff] %vm763, %v5375
      %5442 = vst.msk [vmem:[#allocation3 + $0xf0] sm:$0xff] %vm763, %v5377
      %5443 = vst.msk [vmem:[#allocation3 + $0xf8] sm:$0xff] %vm763, %v5379
      %v5444 = vld [vmem:[%s2541 + $0x1] sm:$0xff]
      %v5445 = vld [vmem:[%s2541 + $0x9] sm:$0xff]
      %v5446 = vld [vmem:[%s2541 + $0x19] sm:$0xff]
      %v5447 = vld [vmem:[%s2541 + $0x21] sm:$0xff]
      %v5448 = vld [vmem:[%s2541 + $0x31] sm:$0xff]
      %v5449 = vld [vmem:[%s2541 + $0x39] sm:$0xff]
      %v5450 = vld [vmem:[%s2541 + $0x49] sm:$0xff]
      %v5451 = vld [vmem:[%s2541 + $0x51] sm:$0xff]
      %v5452 = vld [vmem:[%s2541 + $0x61] sm:$0xff]
      %v5453 = vld [vmem:[%s2541 + $0x69] sm:$0xff]
      %v5454 = vld [vmem:[%s2541 + $0x79] sm:$0xff]
      %v5455 = vld [vmem:[%s2541 + $0x81] sm:$0xff]
      %v5456 = vld [vmem:[%s2541 + $0x91] sm:$0xff]
      %v5457 = vld [vmem:[%s2541 + $0x99] sm:$0xff]
      %v5458 = vld [vmem:[%s2541 + $0xa9] sm:$0xff]
      %v5459 = vld [vmem:[%s2541 + $0xb1] sm:$0xff]
      %v5460 = vld [vmem:[%s2541 + $0xc1] sm:$0xff]
      %v5461 = vld [vmem:[%s2541 + $0xc9] sm:$0xff]
      %v5462 = vld [vmem:[%s2541 + $0xd9] sm:$0xff]
      %v5463 = vld [vmem:[%s2541 + $0xe1] sm:$0xff]
      %v5464 = vld [vmem:[%s2541 + $0xf1] sm:$0xff]
      %v5465 = vld [vmem:[%s2541 + $0xf9] sm:$0xff]
      %v5466 = vld [vmem:[%s2541 + $0x109] sm:$0xff]
      %v5467 = vld [vmem:[%s2541 + $0x111] sm:$0xff]
      %v5468 = vld [vmem:[%s2541 + $0x121] sm:$0xff]
      %v5469 = vld [vmem:[%s2541 + $0x129] sm:$0xff]
      %v5470 = vld [vmem:[%s2541 + $0x139] sm:$0xff]
      %v5471 = vld [vmem:[%s2541 + $0x141] sm:$0xff]
      %v5472 = vld [vmem:[%s2541 + $0x151] sm:$0xff]
      %v5473 = vld [vmem:[%s2541 + $0x159] sm:$0xff]
      %v5474 = vld [vmem:[%s2541 + $0x169] sm:$0xff]
      %v5475 = vld [vmem:[%s2541 + $0x171] sm:$0xff]
      %5508 = vrot.lane.b32.xlu0 %v5444, 12
      %v5509 = vpop.permute.xlu0 %5508
      %5510 = vrot.lane.b32.xlu0 %v5445, 12
      %v5511 = vpop.permute.xlu0 %5510
      %5512 = vrot.lane.b32.xlu0 %v5446, 12
      %v5513 = vpop.permute.xlu0 %5512
      %5514 = vrot.lane.b32.xlu0 %v5447, 12
      %v5515 = vpop.permute.xlu0 %5514
      %5516 = vrot.lane.b32.xlu0 %v5448, 12
      %v5517 = vpop.permute.xlu0 %5516
      %5518 = vrot.lane.b32.xlu0 %v5449, 12
      %v5519 = vpop.permute.xlu0 %5518
      %5520 = vrot.lane.b32.xlu0 %v5450, 12
      %v5521 = vpop.permute.xlu0 %5520
      %5522 = vrot.lane.b32.xlu0 %v5451, 12
      %v5523 = vpop.permute.xlu0 %5522
      %5524 = vrot.lane.b32.xlu0 %v5452, 12
      %v5525 = vpop.permute.xlu0 %5524
      %5526 = vrot.lane.b32.xlu0 %v5453, 12
      %v5527 = vpop.permute.xlu0 %5526
      %5528 = vrot.lane.b32.xlu0 %v5454, 12
      %v5529 = vpop.permute.xlu0 %5528
      %5530 = vrot.lane.b32.xlu0 %v5455, 12
      %v5531 = vpop.permute.xlu0 %5530
      %5532 = vrot.lane.b32.xlu0 %v5456, 12
      %v5533 = vpop.permute.xlu0 %5532
      %5534 = vrot.lane.b32.xlu0 %v5457, 12
      %v5535 = vpop.permute.xlu0 %5534
      %5536 = vrot.lane.b32.xlu0 %v5458, 12
      %v5537 = vpop.permute.xlu0 %5536
      %5538 = vrot.lane.b32.xlu0 %v5459, 12
      %v5539 = vpop.permute.xlu0 %5538
      %5540 = vrot.lane.b32.xlu0 %v5460, 12
      %v5541 = vpop.permute.xlu0 %5540
      %5542 = vrot.lane.b32.xlu0 %v5461, 12
      %v5543 = vpop.permute.xlu0 %5542
      %5544 = vrot.lane.b32.xlu0 %v5462, 12
      %v5545 = vpop.permute.xlu0 %5544
      %5546 = vrot.lane.b32.xlu0 %v5463, 12
      %v5547 = vpop.permute.xlu0 %5546
      %5548 = vrot.lane.b32.xlu0 %v5464, 12
      %v5549 = vpop.permute.xlu0 %5548
      %5550 = vrot.lane.b32.xlu0 %v5465, 12
      %v5551 = vpop.permute.xlu0 %5550
      %5552 = vrot.lane.b32.xlu0 %v5466, 12
      %v5553 = vpop.permute.xlu0 %5552
      %5554 = vrot.lane.b32.xlu0 %v5467, 12
      %v5555 = vpop.permute.xlu0 %5554
      %5556 = vrot.lane.b32.xlu0 %v5468, 12
      %v5557 = vpop.permute.xlu0 %5556
      %5558 = vrot.lane.b32.xlu0 %v5469, 12
      %v5559 = vpop.permute.xlu0 %5558
      %5560 = vrot.lane.b32.xlu0 %v5470, 12
      %v5561 = vpop.permute.xlu0 %5560
      %5562 = vrot.lane.b32.xlu0 %v5471, 12
      %v5563 = vpop.permute.xlu0 %5562
      %5564 = vrot.lane.b32.xlu0 %v5472, 12
      %v5565 = vpop.permute.xlu0 %5564
      %5566 = vrot.lane.b32.xlu0 %v5473, 12
      %v5567 = vpop.permute.xlu0 %5566
      %5568 = vrot.lane.b32.xlu0 %v5474, 12
      %v5569 = vpop.permute.xlu0 %5568
      %5570 = vrot.lane.b32.xlu0 %v5475, 12
      %v5571 = vpop.permute.xlu0 %5570
      %5604 = vst.msk [vmem:[#allocation3] sm:$0xff] %vm956, %v5509
      %5605 = vst.msk [vmem:[#allocation3 + $0x8] sm:$0xff] %vm956, %v5511
      %5606 = vst.msk [vmem:[#allocation3 + $0x10] sm:$0xff] %vm956, %v5513
      %5607 = vst.msk [vmem:[#allocation3 + $0x18] sm:$0xff] %vm956, %v5515
      %5608 = vst.msk [vmem:[#allocation3 + $0x20] sm:$0xff] %vm956, %v5517
      %5609 = vst.msk [vmem:[#allocation3 + $0x28] sm:$0xff] %vm956, %v5519
      %5610 = vst.msk [vmem:[#allocation3 + $0x30] sm:$0xff] %vm956, %v5521
      %5611 = vst.msk [vmem:[#allocation3 + $0x38] sm:$0xff] %vm956, %v5523
      %5612 = vst.msk [vmem:[#allocation3 + $0x40] sm:$0xff] %vm956, %v5525
      %5613 = vst.msk [vmem:[#allocation3 + $0x48] sm:$0xff] %vm956, %v5527
      %5614 = vst.msk [vmem:[#allocation3 + $0x50] sm:$0xff] %vm956, %v5529
      %5615 = vst.msk [vmem:[#allocation3 + $0x58] sm:$0xff] %vm956, %v5531
      %5616 = vst.msk [vmem:[#allocation3 + $0x60] sm:$0xff] %vm956, %v5533
      %5617 = vst.msk [vmem:[#allocation3 + $0x68] sm:$0xff] %vm956, %v5535
      %5618 = vst.msk [vmem:[#allocation3 + $0x70] sm:$0xff] %vm956, %v5537
      %5619 = vst.msk [vmem:[#allocation3 + $0x78] sm:$0xff] %vm956, %v5539
      %5620 = vst.msk [vmem:[#allocation3 + $0x80] sm:$0xff] %vm956, %v5541
      %5621 = vst.msk [vmem:[#allocation3 + $0x88] sm:$0xff] %vm956, %v5543
      %5622 = vst.msk [vmem:[#allocation3 + $0x90] sm:$0xff] %vm956, %v5545
      %5623 = vst.msk [vmem:[#allocation3 + $0x98] sm:$0xff] %vm956, %v5547
      %5624 = vst.msk [vmem:[#allocation3 + $0xa0] sm:$0xff] %vm956, %v5549
      %5625 = vst.msk [vmem:[#allocation3 + $0xa8] sm:$0xff] %vm956, %v5551
      %5626 = vst.msk [vmem:[#allocation3 + $0xb0] sm:$0xff] %vm956, %v5553
      %5627 = vst.msk [vmem:[#allocation3 + $0xb8] sm:$0xff] %vm956, %v5555
      %5628 = vst.msk [vmem:[#allocation3 + $0xc0] sm:$0xff] %vm956, %v5557
      %5629 = vst.msk [vmem:[#allocation3 + $0xc8] sm:$0xff] %vm956, %v5559
      %5630 = vst.msk [vmem:[#allocation3 + $0xd0] sm:$0xff] %vm956, %v5561
      %5631 = vst.msk [vmem:[#allocation3 + $0xd8] sm:$0xff] %vm956, %v5563
      %5632 = vst.msk [vmem:[#allocation3 + $0xe0] sm:$0xff] %vm956, %v5565
      %5633 = vst.msk [vmem:[#allocation3 + $0xe8] sm:$0xff] %vm956, %v5567
      %5634 = vst.msk [vmem:[#allocation3 + $0xf0] sm:$0xff] %vm956, %v5569
      %5635 = vst.msk [vmem:[#allocation3 + $0xf8] sm:$0xff] %vm956, %v5571
      %v5636 = vld [vmem:[%s2702 + $0x1] sm:$0xff]
      %v5637 = vld [vmem:[%s2702 + $0x9] sm:$0xff]
      %v5638 = vld [vmem:[%s2702 + $0x19] sm:$0xff]
      %v5639 = vld [vmem:[%s2702 + $0x21] sm:$0xff]
      %v5640 = vld [vmem:[%s2702 + $0x31] sm:$0xff]
      %v5641 = vld [vmem:[%s2702 + $0x39] sm:$0xff]
      %v5642 = vld [vmem:[%s2702 + $0x49] sm:$0xff]
      %v5643 = vld [vmem:[%s2702 + $0x51] sm:$0xff]
      %v5644 = vld [vmem:[%s2702 + $0x61] sm:$0xff]
      %v5645 = vld [vmem:[%s2702 + $0x69] sm:$0xff]
      %v5646 = vld [vmem:[%s2702 + $0x79] sm:$0xff]
      %v5647 = vld [vmem:[%s2702 + $0x81] sm:$0xff]
      %v5648 = vld [vmem:[%s2702 + $0x91] sm:$0xff]
      %v5649 = vld [vmem:[%s2702 + $0x99] sm:$0xff]
      %v5650 = vld [vmem:[%s2702 + $0xa9] sm:$0xff]
      %v5651 = vld [vmem:[%s2702 + $0xb1] sm:$0xff]
      %v5652 = vld [vmem:[%s2702 + $0xc1] sm:$0xff]
      %v5653 = vld [vmem:[%s2702 + $0xc9] sm:$0xff]
      %v5654 = vld [vmem:[%s2702 + $0xd9] sm:$0xff]
      %v5655 = vld [vmem:[%s2702 + $0xe1] sm:$0xff]
      %v5656 = vld [vmem:[%s2702 + $0xf1] sm:$0xff]
      %v5657 = vld [vmem:[%s2702 + $0xf9] sm:$0xff]
      %v5658 = vld [vmem:[%s2702 + $0x109] sm:$0xff]
      %v5659 = vld [vmem:[%s2702 + $0x111] sm:$0xff]
      %v5660 = vld [vmem:[%s2702 + $0x121] sm:$0xff]
      %v5661 = vld [vmem:[%s2702 + $0x129] sm:$0xff]
      %v5662 = vld [vmem:[%s2702 + $0x139] sm:$0xff]
      %v5663 = vld [vmem:[%s2702 + $0x141] sm:$0xff]
      %v5664 = vld [vmem:[%s2702 + $0x151] sm:$0xff]
      %v5665 = vld [vmem:[%s2702 + $0x159] sm:$0xff]
      %v5666 = vld [vmem:[%s2702 + $0x169] sm:$0xff]
      %v5667 = vld [vmem:[%s2702 + $0x171] sm:$0xff]
      %5700 = vrot.lane.b32.xlu0 %v5636, 16
      %v5701 = vpop.permute.xlu0 %5700
      %5702 = vrot.lane.b32.xlu0 %v5637, 16
      %v5703 = vpop.permute.xlu0 %5702
      %5704 = vrot.lane.b32.xlu0 %v5638, 16
      %v5705 = vpop.permute.xlu0 %5704
      %5706 = vrot.lane.b32.xlu0 %v5639, 16
      %v5707 = vpop.permute.xlu0 %5706
      %5708 = vrot.lane.b32.xlu0 %v5640, 16
      %v5709 = vpop.permute.xlu0 %5708
      %5710 = vrot.lane.b32.xlu0 %v5641, 16
      %v5711 = vpop.permute.xlu0 %5710
      %5712 = vrot.lane.b32.xlu0 %v5642, 16
      %v5713 = vpop.permute.xlu0 %5712
      %5714 = vrot.lane.b32.xlu0 %v5643, 16
      %v5715 = vpop.permute.xlu0 %5714
      %5716 = vrot.lane.b32.xlu0 %v5644, 16
      %v5717 = vpop.permute.xlu0 %5716
      %5718 = vrot.lane.b32.xlu0 %v5645, 16
      %v5719 = vpop.permute.xlu0 %5718
      %5720 = vrot.lane.b32.xlu0 %v5646, 16
      %v5721 = vpop.permute.xlu0 %5720
      %5722 = vrot.lane.b32.xlu0 %v5647, 16
      %v5723 = vpop.permute.xlu0 %5722
      %5724 = vrot.lane.b32.xlu0 %v5648, 16
      %v5725 = vpop.permute.xlu0 %5724
      %5726 = vrot.lane.b32.xlu0 %v5649, 16
      %v5727 = vpop.permute.xlu0 %5726
      %5728 = vrot.lane.b32.xlu0 %v5650, 16
      %v5729 = vpop.permute.xlu0 %5728
      %5730 = vrot.lane.b32.xlu0 %v5651, 16
      %v5731 = vpop.permute.xlu0 %5730
      %5732 = vrot.lane.b32.xlu0 %v5652, 16
      %v5733 = vpop.permute.xlu0 %5732
      %5734 = vrot.lane.b32.xlu0 %v5653, 16
      %v5735 = vpop.permute.xlu0 %5734
      %5736 = vrot.lane.b32.xlu0 %v5654, 16
      %v5737 = vpop.permute.xlu0 %5736
      %5738 = vrot.lane.b32.xlu0 %v5655, 16
      %v5739 = vpop.permute.xlu0 %5738
      %5740 = vrot.lane.b32.xlu0 %v5656, 16
      %v5741 = vpop.permute.xlu0 %5740
      %5742 = vrot.lane.b32.xlu0 %v5657, 16
      %v5743 = vpop.permute.xlu0 %5742
      %5744 = vrot.lane.b32.xlu0 %v5658, 16
      %v5745 = vpop.permute.xlu0 %5744
      %5746 = vrot.lane.b32.xlu0 %v5659, 16
      %v5747 = vpop.permute.xlu0 %5746
      %5748 = vrot.lane.b32.xlu0 %v5660, 16
      %v5749 = vpop.permute.xlu0 %5748
      %5750 = vrot.lane.b32.xlu0 %v5661, 16
      %v5751 = vpop.permute.xlu0 %5750
      %5752 = vrot.lane.b32.xlu0 %v5662, 16
      %v5753 = vpop.permute.xlu0 %5752
      %5754 = vrot.lane.b32.xlu0 %v5663, 16
      %v5755 = vpop.permute.xlu0 %5754
      %5756 = vrot.lane.b32.xlu0 %v5664, 16
      %v5757 = vpop.permute.xlu0 %5756
      %5758 = vrot.lane.b32.xlu0 %v5665, 16
      %v5759 = vpop.permute.xlu0 %5758
      %5760 = vrot.lane.b32.xlu0 %v5666, 16
      %v5761 = vpop.permute.xlu0 %5760
      %5762 = vrot.lane.b32.xlu0 %v5667, 16
      %v5763 = vpop.permute.xlu0 %5762
      %5796 = vst.msk [vmem:[#allocation3] sm:$0xff] %vm1149, %v5701
      %5797 = vst.msk [vmem:[#allocation3 + $0x8] sm:$0xff] %vm1149, %v5703
      %5798 = vst.msk [vmem:[#allocation3 + $0x10] sm:$0xff] %vm1149, %v5705
      %5799 = vst.msk [vmem:[#allocation3 + $0x18] sm:$0xff] %vm1149, %v5707
      %5800 = vst.msk [vmem:[#allocation3 + $0x20] sm:$0xff] %vm1149, %v5709
      %5801 = vst.msk [vmem:[#allocation3 + $0x28] sm:$0xff] %vm1149, %v5711
      %5802 = vst.msk [vmem:[#allocation3 + $0x30] sm:$0xff] %vm1149, %v5713
      %5803 = vst.msk [vmem:[#allocation3 + $0x38] sm:$0xff] %vm1149, %v5715
      %5804 = vst.msk [vmem:[#allocation3 + $0x40] sm:$0xff] %vm1149, %v5717
      %5805 = vst.msk [vmem:[#allocation3 + $0x48] sm:$0xff] %vm1149, %v5719
      %5806 = vst.msk [vmem:[#allocation3 + $0x50] sm:$0xff] %vm1149, %v5721
      %5807 = vst.msk [vmem:[#allocation3 + $0x58] sm:$0xff] %vm1149, %v5723
      %5808 = vst.msk [vmem:[#allocation3 + $0x60] sm:$0xff] %vm1149, %v5725
      %5809 = vst.msk [vmem:[#allocation3 + $0x68] sm:$0xff] %vm1149, %v5727
      %5810 = vst.msk [vmem:[#allocation3 + $0x70] sm:$0xff] %vm1149, %v5729
      %5811 = vst.msk [vmem:[#allocation3 + $0x78] sm:$0xff] %vm1149, %v5731
      %5812 = vst.msk [vmem:[#allocation3 + $0x80] sm:$0xff] %vm1149, %v5733
      %5813 = vst.msk [vmem:[#allocation3 + $0x88] sm:$0xff] %vm1149, %v5735
      %5814 = vst.msk [vmem:[#allocation3 + $0x90] sm:$0xff] %vm1149, %v5737
      %5815 = vst.msk [vmem:[#allocation3 + $0x98] sm:$0xff] %vm1149, %v5739
      %5816 = vst.msk [vmem:[#allocation3 + $0xa0] sm:$0xff] %vm1149, %v5741
      %5817 = vst.msk [vmem:[#allocation3 + $0xa8] sm:$0xff] %vm1149, %v5743
      %5818 = vst.msk [vmem:[#allocation3 + $0xb0] sm:$0xff] %vm1149, %v5745
      %5819 = vst.msk [vmem:[#allocation3 + $0xb8] sm:$0xff] %vm1149, %v5747
      %5820 = vst.msk [vmem:[#allocation3 + $0xc0] sm:$0xff] %vm1149, %v5749
      %5821 = vst.msk [vmem:[#allocation3 + $0xc8] sm:$0xff] %vm1149, %v5751
      %5822 = vst.msk [vmem:[#allocation3 + $0xd0] sm:$0xff] %vm1149, %v5753
      %5823 = vst.msk [vmem:[#allocation3 + $0xd8] sm:$0xff] %vm1149, %v5755
      %5824 = vst.msk [vmem:[#allocation3 + $0xe0] sm:$0xff] %vm1149, %v5757
      %5825 = vst.msk [vmem:[#allocation3 + $0xe8] sm:$0xff] %vm1149, %v5759
      %5826 = vst.msk [vmem:[#allocation3 + $0xf0] sm:$0xff] %vm1149, %v5761
      %5827 = vst.msk [vmem:[#allocation3 + $0xf8] sm:$0xff] %vm1149, %v5763
      %v5828 = vld [vmem:[%s2541 + $0x2] sm:$0xff]
      %v5829 = vld [vmem:[%s2541 + $0xa] sm:$0xff]
      %v5830 = vld [vmem:[%s2541 + $0x1a] sm:$0xff]
      %v5831 = vld [vmem:[%s2541 + $0x22] sm:$0xff]
      %v5832 = vld [vmem:[%s2541 + $0x32] sm:$0xff]
      %v5833 = vld [vmem:[%s2541 + $0x3a] sm:$0xff]
      %v5834 = vld [vmem:[%s2541 + $0x4a] sm:$0xff]
      %v5835 = vld [vmem:[%s2541 + $0x52] sm:$0xff]
      %v5836 = vld [vmem:[%s2541 + $0x62] sm:$0xff]
      %v5837 = vld [vmem:[%s2541 + $0x6a] sm:$0xff]
      %v5838 = vld [vmem:[%s2541 + $0x7a] sm:$0xff]
      %v5839 = vld [vmem:[%s2541 + $0x82] sm:$0xff]
      %v5840 = vld [vmem:[%s2541 + $0x92] sm:$0xff]
      %v5841 = vld [vmem:[%s2541 + $0x9a] sm:$0xff]
      %v5842 = vld [vmem:[%s2541 + $0xaa] sm:$0xff]
      %v5843 = vld [vmem:[%s2541 + $0xb2] sm:$0xff]
      %v5844 = vld [vmem:[%s2541 + $0xc2] sm:$0xff]
      %v5845 = vld [vmem:[%s2541 + $0xca] sm:$0xff]
      %v5846 = vld [vmem:[%s2541 + $0xda] sm:$0xff]
      %v5847 = vld [vmem:[%s2541 + $0xe2] sm:$0xff]
      %v5848 = vld [vmem:[%s2541 + $0xf2] sm:$0xff]
      %v5849 = vld [vmem:[%s2541 + $0xfa] sm:$0xff]
      %v5850 = vld [vmem:[%s2541 + $0x10a] sm:$0xff]
      %v5851 = vld [vmem:[%s2541 + $0x112] sm:$0xff]
      %v5852 = vld [vmem:[%s2541 + $0x122] sm:$0xff]
      %v5853 = vld [vmem:[%s2541 + $0x12a] sm:$0xff]
      %v5854 = vld [vmem:[%s2541 + $0x13a] sm:$0xff]
      %v5855 = vld [vmem:[%s2541 + $0x142] sm:$0xff]
      %v5856 = vld [vmem:[%s2541 + $0x152] sm:$0xff]
      %v5857 = vld [vmem:[%s2541 + $0x15a] sm:$0xff]
      %v5858 = vld [vmem:[%s2541 + $0x16a] sm:$0xff]
      %v5859 = vld [vmem:[%s2541 + $0x172] sm:$0xff]
      %5892 = vrot.lane.b32.xlu0 %v5828, 20
      %v5893 = vpop.permute.xlu0 %5892
      %5894 = vrot.lane.b32.xlu0 %v5829, 20
      %v5895 = vpop.permute.xlu0 %5894
      %5896 = vrot.lane.b32.xlu0 %v5830, 20
      %v5897 = vpop.permute.xlu0 %5896
      %5898 = vrot.lane.b32.xlu0 %v5831, 20
      %v5899 = vpop.permute.xlu0 %5898
      %5900 = vrot.lane.b32.xlu0 %v5832, 20
      %v5901 = vpop.permute.xlu0 %5900
      %5902 = vrot.lane.b32.xlu0 %v5833, 20
      %v5903 = vpop.permute.xlu0 %5902
      %5904 = vrot.lane.b32.xlu0 %v5834, 20
      %v5905 = vpop.permute.xlu0 %5904
      %5906 = vrot.lane.b32.xlu0 %v5835, 20
      %v5907 = vpop.permute.xlu0 %5906
      %5908 = vrot.lane.b32.xlu0 %v5836, 20
      %v5909 = vpop.permute.xlu0 %5908
      %5910 = vrot.lane.b32.xlu0 %v5837, 20
      %v5911 = vpop.permute.xlu0 %5910
      %5912 = vrot.lane.b32.xlu0 %v5838, 20
      %v5913 = vpop.permute.xlu0 %5912
      %5914 = vrot.lane.b32.xlu0 %v5839, 20
      %v5915 = vpop.permute.xlu0 %5914
      %5916 = vrot.lane.b32.xlu0 %v5840, 20
      %v5917 = vpop.permute.xlu0 %5916
      %5918 = vrot.lane.b32.xlu0 %v5841, 20
      %v5919 = vpop.permute.xlu0 %5918
      %5920 = vrot.lane.b32.xlu0 %v5842, 20
      %v5921 = vpop.permute.xlu0 %5920
      %5922 = vrot.lane.b32.xlu0 %v5843, 20
      %v5923 = vpop.permute.xlu0 %5922
      %5924 = vrot.lane.b32.xlu0 %v5844, 20
      %v5925 = vpop.permute.xlu0 %5924
      %5926 = vrot.lane.b32.xlu0 %v5845, 20
      %v5927 = vpop.permute.xlu0 %5926
      %5928 = vrot.lane.b32.xlu0 %v5846, 20
      %v5929 = vpop.permute.xlu0 %5928
      %5930 = vrot.lane.b32.xlu0 %v5847, 20
      %v5931 = vpop.permute.xlu0 %5930
      %5932 = vrot.lane.b32.xlu0 %v5848, 20
      %v5933 = vpop.permute.xlu0 %5932
      %5934 = vrot.lane.b32.xlu0 %v5849, 20
      %v5935 = vpop.permute.xlu0 %5934
      %5936 = vrot.lane.b32.xlu0 %v5850, 20
      %v5937 = vpop.permute.xlu0 %5936
      %5938 = vrot.lane.b32.xlu0 %v5851, 20
      %v5939 = vpop.permute.xlu0 %5938
      %5940 = vrot.lane.b32.xlu0 %v5852, 20
      %v5941 = vpop.permute.xlu0 %5940
      %5942 = vrot.lane.b32.xlu0 %v5853, 20
      %v5943 = vpop.permute.xlu0 %5942
      %5944 = vrot.lane.b32.xlu0 %v5854, 20
      %v5945 = vpop.permute.xlu0 %5944
      %5946 = vrot.lane.b32.xlu0 %v5855, 20
      %v5947 = vpop.permute.xlu0 %5946
      %5948 = vrot.lane.b32.xlu0 %v5856, 20
      %v5949 = vpop.permute.xlu0 %5948
      %5950 = vrot.lane.b32.xlu0 %v5857, 20
      %v5951 = vpop.permute.xlu0 %5950
      %5952 = vrot.lane.b32.xlu0 %v5858, 20
      %v5953 = vpop.permute.xlu0 %5952
      %5954 = vrot.lane.b32.xlu0 %v5859, 20
      %v5955 = vpop.permute.xlu0 %5954
      %5988 = vst.msk [vmem:[#allocation3] sm:$0xff] %vm1342, %v5893
      %5989 = vst.msk [vmem:[#allocation3 + $0x8] sm:$0xff] %vm1342, %v5895
      %5990 = vst.msk [vmem:[#allocation3 + $0x10] sm:$0xff] %vm1342, %v5897
      %5991 = vst.msk [vmem:[#allocation3 + $0x18] sm:$0xff] %vm1342, %v5899
      %5992 = vst.msk [vmem:[#allocation3 + $0x20] sm:$0xff] %vm1342, %v5901
      %5993 = vst.msk [vmem:[#allocation3 + $0x28] sm:$0xff] %vm1342, %v5903
      %5994 = vst.msk [vmem:[#allocation3 + $0x30] sm:$0xff] %vm1342, %v5905
      %5995 = vst.msk [vmem:[#allocation3 + $0x38] sm:$0xff] %vm1342, %v5907
      %5996 = vst.msk [vmem:[#allocation3 + $0x40] sm:$0xff] %vm1342, %v5909
      %5997 = vst.msk [vmem:[#allocation3 + $0x48] sm:$0xff] %vm1342, %v5911
      %5998 = vst.msk [vmem:[#allocation3 + $0x50] sm:$0xff] %vm1342, %v5913
      %5999 = vst.msk [vmem:[#allocation3 + $0x58] sm:$0xff] %vm1342, %v5915
      %6000 = vst.msk [vmem:[#allocation3 + $0x60] sm:$0xff] %vm1342, %v5917
      %6001 = vst.msk [vmem:[#allocation3 + $0x68] sm:$0xff] %vm1342, %v5919
      %6002 = vst.msk [vmem:[#allocation3 + $0x70] sm:$0xff] %vm1342, %v5921
      %6003 = vst.msk [vmem:[#allocation3 + $0x78] sm:$0xff] %vm1342, %v5923
      %6004 = vst.msk [vmem:[#allocation3 + $0x80] sm:$0xff] %vm1342, %v5925
      %6005 = vst.msk [vmem:[#allocation3 + $0x88] sm:$0xff] %vm1342, %v5927
      %6006 = vst.msk [vmem:[#allocation3 + $0x90] sm:$0xff] %vm1342, %v5929
      %6007 = vst.msk [vmem:[#allocation3 + $0x98] sm:$0xff] %vm1342, %v5931
      %6008 = vst.msk [vmem:[#allocation3 + $0xa0] sm:$0xff] %vm1342, %v5933
      %6009 = vst.msk [vmem:[#allocation3 + $0xa8] sm:$0xff] %vm1342, %v5935
      %6010 = vst.msk [vmem:[#allocation3 + $0xb0] sm:$0xff] %vm1342, %v5937
      %6011 = vst.msk [vmem:[#allocation3 + $0xb8] sm:$0xff] %vm1342, %v5939
      %6012 = vst.msk [vmem:[#allocation3 + $0xc0] sm:$0xff] %vm1342, %v5941
      %6013 = vst.msk [vmem:[#allocation3 + $0xc8] sm:$0xff] %vm1342, %v5943
      %6014 = vst.msk [vmem:[#allocation3 + $0xd0] sm:$0xff] %vm1342, %v5945
      %6015 = vst.msk [vmem:[#allocation3 + $0xd8] sm:$0xff] %vm1342, %v5947
      %6016 = vst.msk [vmem:[#allocation3 + $0xe0] sm:$0xff] %vm1342, %v5949
      %6017 = vst.msk [vmem:[#allocation3 + $0xe8] sm:$0xff] %vm1342, %v5951
      %6018 = vst.msk [vmem:[#allocation3 + $0xf0] sm:$0xff] %vm1342, %v5953
      %6019 = vst.msk [vmem:[#allocation3 + $0xf8] sm:$0xff] %vm1342, %v5955
      %v6020 = vld [vmem:[%s2831 + $0x1] sm:$0xff]
      %v6021 = vld [vmem:[%s2831 + $0x9] sm:$0xff]
      %v6022 = vld [vmem:[%s2831 + $0x19] sm:$0xff]
      %v6023 = vld [vmem:[%s2831 + $0x21] sm:$0xff]
      %v6024 = vld [vmem:[%s2831 + $0x31] sm:$0xff]
      %v6025 = vld [vmem:[%s2831 + $0x39] sm:$0xff]
      %v6026 = vld [vmem:[%s2831 + $0x49] sm:$0xff]
      %v6027 = vld [vmem:[%s2831 + $0x51] sm:$0xff]
      %v6028 = vld [vmem:[%s2831 + $0x61] sm:$0xff]
      %v6029 = vld [vmem:[%s2831 + $0x69] sm:$0xff]
      %v6030 = vld [vmem:[%s2831 + $0x79] sm:$0xff]
      %v6031 = vld [vmem:[%s2831 + $0x81] sm:$0xff]
      %v6032 = vld [vmem:[%s2831 + $0x91] sm:$0xff]
      %v6033 = vld [vmem:[%s2831 + $0x99] sm:$0xff]
      %v6034 = vld [vmem:[%s2831 + $0xa9] sm:$0xff]
      %v6035 = vld [vmem:[%s2831 + $0xb1] sm:$0xff]
      %v6036 = vld [vmem:[%s2831 + $0xc1] sm:$0xff]
      %v6037 = vld [vmem:[%s2831 + $0xc9] sm:$0xff]
      %v6038 = vld [vmem:[%s2831 + $0xd9] sm:$0xff]
      %v6039 = vld [vmem:[%s2831 + $0xe1] sm:$0xff]
      %v6040 = vld [vmem:[%s2831 + $0xf1] sm:$0xff]
      %v6041 = vld [vmem:[%s2831 + $0xf9] sm:$0xff]
      %v6042 = vld [vmem:[%s2831 + $0x109] sm:$0xff]
      %v6043 = vld [vmem:[%s2831 + $0x111] sm:$0xff]
      %v6044 = vld [vmem:[%s2831 + $0x121] sm:$0xff]
      %v6045 = vld [vmem:[%s2831 + $0x129] sm:$0xff]
      %v6046 = vld [vmem:[%s2831 + $0x139] sm:$0xff]
      %v6047 = vld [vmem:[%s2831 + $0x141] sm:$0xff]
      %v6048 = vld [vmem:[%s2831 + $0x151] sm:$0xff]
      %v6049 = vld [vmem:[%s2831 + $0x159] sm:$0xff]
      %v6050 = vld [vmem:[%s2831 + $0x169] sm:$0xff]
      %v6051 = vld [vmem:[%s2831 + $0x171] sm:$0xff]
      %6084 = vrot.lane.b32.xlu0 %v6020, 24
      %v6085 = vpop.permute.xlu0 %6084
      %6086 = vrot.lane.b32.xlu0 %v6021, 24
      %v6087 = vpop.permute.xlu0 %6086
      %6088 = vrot.lane.b32.xlu0 %v6022, 24
      %v6089 = vpop.permute.xlu0 %6088
      %6090 = vrot.lane.b32.xlu0 %v6023, 24
      %v6091 = vpop.permute.xlu0 %6090
      %6092 = vrot.lane.b32.xlu0 %v6024, 24
      %v6093 = vpop.permute.xlu0 %6092
      %6094 = vrot.lane.b32.xlu0 %v6025, 24
      %v6095 = vpop.permute.xlu0 %6094
      %6096 = vrot.lane.b32.xlu0 %v6026, 24
      %v6097 = vpop.permute.xlu0 %6096
      %6098 = vrot.lane.b32.xlu0 %v6027, 24
      %v6099 = vpop.permute.xlu0 %6098
      %6100 = vrot.lane.b32.xlu0 %v6028, 24
      %v6101 = vpop.permute.xlu0 %6100
      %6102 = vrot.lane.b32.xlu0 %v6029, 24
      %v6103 = vpop.permute.xlu0 %6102
      %6104 = vrot.lane.b32.xlu0 %v6030, 24
      %v6105 = vpop.permute.xlu0 %6104
      %6106 = vrot.lane.b32.xlu0 %v6031, 24
      %v6107 = vpop.permute.xlu0 %6106
      %6108 = vrot.lane.b32.xlu0 %v6032, 24
      %v6109 = vpop.permute.xlu0 %6108
      %6110 = vrot.lane.b32.xlu0 %v6033, 24
      %v6111 = vpop.permute.xlu0 %6110
      %6112 = vrot.lane.b32.xlu0 %v6034, 24
      %v6113 = vpop.permute.xlu0 %6112
      %6114 = vrot.lane.b32.xlu0 %v6035, 24
      %v6115 = vpop.permute.xlu0 %6114
      %6116 = vrot.lane.b32.xlu0 %v6036, 24
      %v6117 = vpop.permute.xlu0 %6116
      %6118 = vrot.lane.b32.xlu0 %v6037, 24
      %v6119 = vpop.permute.xlu0 %6118
      %6120 = vrot.lane.b32.xlu0 %v6038, 24
      %v6121 = vpop.permute.xlu0 %6120
      %6122 = vrot.lane.b32.xlu0 %v6039, 24
      %v6123 = vpop.permute.xlu0 %6122
      %6124 = vrot.lane.b32.xlu0 %v6040, 24
      %v6125 = vpop.permute.xlu0 %6124
      %6126 = vrot.lane.b32.xlu0 %v6041, 24
      %v6127 = vpop.permute.xlu0 %6126
      %6128 = vrot.lane.b32.xlu0 %v6042, 24
      %v6129 = vpop.permute.xlu0 %6128
      %6130 = vrot.lane.b32.xlu0 %v6043, 24
      %v6131 = vpop.permute.xlu0 %6130
      %6132 = vrot.lane.b32.xlu0 %v6044, 24
      %v6133 = vpop.permute.xlu0 %6132
      %6134 = vrot.lane.b32.xlu0 %v6045, 24
      %v6135 = vpop.permute.xlu0 %6134
      %6136 = vrot.lane.b32.xlu0 %v6046, 24
      %v6137 = vpop.permute.xlu0 %6136
      %6138 = vrot.lane.b32.xlu0 %v6047, 24
      %v6139 = vpop.permute.xlu0 %6138
      %6140 = vrot.lane.b32.xlu0 %v6048, 24
      %v6141 = vpop.permute.xlu0 %6140
      %6142 = vrot.lane.b32.xlu0 %v6049, 24
      %v6143 = vpop.permute.xlu0 %6142
      %6144 = vrot.lane.b32.xlu0 %v6050, 24
      %v6145 = vpop.permute.xlu0 %6144
      %6146 = vrot.lane.b32.xlu0 %v6051, 24
      %v6147 = vpop.permute.xlu0 %6146
      %6180 = vst.msk [vmem:[#allocation3] sm:$0xff] %vm1536, %v6085
      %6181 = vst.msk [vmem:[#allocation3 + $0x8] sm:$0xff] %vm1536, %v6087
      %6182 = vst.msk [vmem:[#allocation3 + $0x10] sm:$0xff] %vm1536, %v6089
      %6183 = vst.msk [vmem:[#allocation3 + $0x18] sm:$0xff] %vm1536, %v6091
      %6184 = vst.msk [vmem:[#allocation3 + $0x20] sm:$0xff] %vm1536, %v6093
      %6185 = vst.msk [vmem:[#allocation3 + $0x28] sm:$0xff] %vm1536, %v6095
      %6186 = vst.msk [vmem:[#allocation3 + $0x30] sm:$0xff] %vm1536, %v6097
      %6187 = vst.msk [vmem:[#allocation3 + $0x38] sm:$0xff] %vm1536, %v6099
      %6188 = vst.msk [vmem:[#allocation3 + $0x40] sm:$0xff] %vm1536, %v6101
      %6189 = vst.msk [vmem:[#allocation3 + $0x48] sm:$0xff] %vm1536, %v6103
      %6190 = vst.msk [vmem:[#allocation3 + $0x50] sm:$0xff] %vm1536, %v6105
      %6191 = vst.msk [vmem:[#allocation3 + $0x58] sm:$0xff] %vm1536, %v6107
      %6192 = vst.msk [vmem:[#allocation3 + $0x60] sm:$0xff] %vm1536, %v6109
      %6193 = vst.msk [vmem:[#allocation3 + $0x68] sm:$0xff] %vm1536, %v6111
      %6194 = vst.msk [vmem:[#allocation3 + $0x70] sm:$0xff] %vm1536, %v6113
      %6195 = vst.msk [vmem:[#allocation3 + $0x78] sm:$0xff] %vm1536, %v6115
      %6196 = vst.msk [vmem:[#allocation3 + $0x80] sm:$0xff] %vm1536, %v6117
      %6197 = vst.msk [vmem:[#allocation3 + $0x88] sm:$0xff] %vm1536, %v6119
      %6198 = vst.msk [vmem:[#allocation3 + $0x90] sm:$0xff] %vm1536, %v6121
      %6199 = vst.msk [vmem:[#allocation3 + $0x98] sm:$0xff] %vm1536, %v6123
      %6200 = vst.msk [vmem:[#allocation3 + $0xa0] sm:$0xff] %vm1536, %v6125
      %6201 = vst.msk [vmem:[#allocation3 + $0xa8] sm:$0xff] %vm1536, %v6127
      %6202 = vst.msk [vmem:[#allocation3 + $0xb0] sm:$0xff] %vm1536, %v6129
      %6203 = vst.msk [vmem:[#allocation3 + $0xb8] sm:$0xff] %vm1536, %v6131
      %6204 = vst.msk [vmem:[#allocation3 + $0xc0] sm:$0xff] %vm1536, %v6133
      %6205 = vst.msk [vmem:[#allocation3 + $0xc8] sm:$0xff] %vm1536, %v6135
      %6206 = vst.msk [vmem:[#allocation3 + $0xd0] sm:$0xff] %vm1536, %v6137
      %6207 = vst.msk [vmem:[#allocation3 + $0xd8] sm:$0xff] %vm1536, %v6139
      %6208 = vst.msk [vmem:[#allocation3 + $0xe0] sm:$0xff] %vm1536, %v6141
      %6209 = vst.msk [vmem:[#allocation3 + $0xe8] sm:$0xff] %vm1536, %v6143
      %6210 = vst.msk [vmem:[#allocation3 + $0xf0] sm:$0xff] %vm1536, %v6145
      %6211 = vst.msk [vmem:[#allocation3 + $0xf8] sm:$0xff] %vm1536, %v6147
      %v6212 = vld [vmem:[%s2960 + $0x1] sm:$0xff]
      %v6213 = vld [vmem:[%s2960 + $0x9] sm:$0xff]
      %v6214 = vld [vmem:[%s2960 + $0x19] sm:$0xff]
      %v6215 = vld [vmem:[%s2960 + $0x21] sm:$0xff]
      %v6216 = vld [vmem:[%s2960 + $0x31] sm:$0xff]
      %v6217 = vld [vmem:[%s2960 + $0x39] sm:$0xff]
      %v6218 = vld [vmem:[%s2960 + $0x49] sm:$0xff]
      %v6219 = vld [vmem:[%s2960 + $0x51] sm:$0xff]
      %v6220 = vld [vmem:[%s2960 + $0x61] sm:$0xff]
      %v6221 = vld [vmem:[%s2960 + $0x69] sm:$0xff]
      %v6222 = vld [vmem:[%s2960 + $0x79] sm:$0xff]
      %v6223 = vld [vmem:[%s2960 + $0x81] sm:$0xff]
      %v6224 = vld [vmem:[%s2960 + $0x91] sm:$0xff]
      %v6225 = vld [vmem:[%s2960 + $0x99] sm:$0xff]
      %v6226 = vld [vmem:[%s2960 + $0xa9] sm:$0xff]
      %v6227 = vld [vmem:[%s2960 + $0xb1] sm:$0xff]
      %v6228 = vld [vmem:[%s2960 + $0xc1] sm:$0xff]
      %v6229 = vld [vmem:[%s2960 + $0xc9] sm:$0xff]
      %v6230 = vld [vmem:[%s2960 + $0xd9] sm:$0xff]
      %v6231 = vld [vmem:[%s2960 + $0xe1] sm:$0xff]
      %v6232 = vld [vmem:[%s2960 + $0xf1] sm:$0xff]
      %v6233 = vld [vmem:[%s2960 + $0xf9] sm:$0xff]
      %v6234 = vld [vmem:[%s2960 + $0x109] sm:$0xff]
      %v6235 = vld [vmem:[%s2960 + $0x111] sm:$0xff]
      %v6236 = vld [vmem:[%s2960 + $0x121] sm:$0xff]
      %v6237 = vld [vmem:[%s2960 + $0x129] sm:$0xff]
      %v6238 = vld [vmem:[%s2960 + $0x139] sm:$0xff]
      %v6239 = vld [vmem:[%s2960 + $0x141] sm:$0xff]
      %v6240 = vld [vmem:[%s2960 + $0x151] sm:$0xff]
      %v6241 = vld [vmem:[%s2960 + $0x159] sm:$0xff]
      %v6242 = vld [vmem:[%s2960 + $0x169] sm:$0xff]
      %v6243 = vld [vmem:[%s2960 + $0x171] sm:$0xff]
      %6276 = vrot.lane.b32.xlu0 %v6212, 28
      %v6277 = vpop.permute.xlu0 %6276
      %6278 = vrot.lane.b32.xlu0 %v6213, 28
      %v6279 = vpop.permute.xlu0 %6278
      %6280 = vrot.lane.b32.xlu0 %v6214, 28
      %v6281 = vpop.permute.xlu0 %6280
      %6282 = vrot.lane.b32.xlu0 %v6215, 28
      %v6283 = vpop.permute.xlu0 %6282
      %6284 = vrot.lane.b32.xlu0 %v6216, 28
      %v6285 = vpop.permute.xlu0 %6284
      %6286 = vrot.lane.b32.xlu0 %v6217, 28
      %v6287 = vpop.permute.xlu0 %6286
      %6288 = vrot.lane.b32.xlu0 %v6218, 28
      %v6289 = vpop.permute.xlu0 %6288
      %6290 = vrot.lane.b32.xlu0 %v6219, 28
      %v6291 = vpop.permute.xlu0 %6290
      %6292 = vrot.lane.b32.xlu0 %v6220, 28
      %v6293 = vpop.permute.xlu0 %6292
      %6294 = vrot.lane.b32.xlu0 %v6221, 28
      %v6295 = vpop.permute.xlu0 %6294
      %6296 = vrot.lane.b32.xlu0 %v6222, 28
      %v6297 = vpop.permute.xlu0 %6296
      %6298 = vrot.lane.b32.xlu0 %v6223, 28
      %v6299 = vpop.permute.xlu0 %6298
      %6300 = vrot.lane.b32.xlu0 %v6224, 28
      %v6301 = vpop.permute.xlu0 %6300
      %6302 = vrot.lane.b32.xlu0 %v6225, 28
      %v6303 = vpop.permute.xlu0 %6302
      %6304 = vrot.lane.b32.xlu0 %v6226, 28
      %v6305 = vpop.permute.xlu0 %6304
      %6306 = vrot.lane.b32.xlu0 %v6227, 28
      %v6307 = vpop.permute.xlu0 %6306
      %6308 = vrot.lane.b32.xlu0 %v6228, 28
      %v6309 = vpop.permute.xlu0 %6308
      %6310 = vrot.lane.b32.xlu0 %v6229, 28
      %v6311 = vpop.permute.xlu0 %6310
      %6312 = vrot.lane.b32.xlu0 %v6230, 28
      %v6313 = vpop.permute.xlu0 %6312
      %6314 = vrot.lane.b32.xlu0 %v6231, 28
      %v6315 = vpop.permute.xlu0 %6314
      %6316 = vrot.lane.b32.xlu0 %v6232, 28
      %v6317 = vpop.permute.xlu0 %6316
      %6318 = vrot.lane.b32.xlu0 %v6233, 28
      %v6319 = vpop.permute.xlu0 %6318
      %6320 = vrot.lane.b32.xlu0 %v6234, 28
      %v6321 = vpop.permute.xlu0 %6320
      %6322 = vrot.lane.b32.xlu0 %v6235, 28
      %v6323 = vpop.permute.xlu0 %6322
      %6324 = vrot.lane.b32.xlu0 %v6236, 28
      %v6325 = vpop.permute.xlu0 %6324
      %6326 = vrot.lane.b32.xlu0 %v6237, 28
      %v6327 = vpop.permute.xlu0 %6326
      %6328 = vrot.lane.b32.xlu0 %v6238, 28
      %v6329 = vpop.permute.xlu0 %6328
      %6330 = vrot.lane.b32.xlu0 %v6239, 28
      %v6331 = vpop.permute.xlu0 %6330
      %6332 = vrot.lane.b32.xlu0 %v6240, 28
      %v6333 = vpop.permute.xlu0 %6332
      %6334 = vrot.lane.b32.xlu0 %v6241, 28
      %v6335 = vpop.permute.xlu0 %6334
      %6336 = vrot.lane.b32.xlu0 %v6242, 28
      %v6337 = vpop.permute.xlu0 %6336
      %6338 = vrot.lane.b32.xlu0 %v6243, 28
      %v6339 = vpop.permute.xlu0 %6338
      %6372 = vst.msk [vmem:[#allocation3] sm:$0xff] %vm1729, %v6277
      %6373 = vst.msk [vmem:[#allocation3 + $0x8] sm:$0xff] %vm1729, %v6279
      %6374 = vst.msk [vmem:[#allocation3 + $0x10] sm:$0xff] %vm1729, %v6281
      %6375 = vst.msk [vmem:[#allocation3 + $0x18] sm:$0xff] %vm1729, %v6283
      %6376 = vst.msk [vmem:[#allocation3 + $0x20] sm:$0xff] %vm1729, %v6285
      %6377 = vst.msk [vmem:[#allocation3 + $0x28] sm:$0xff] %vm1729, %v6287
      %6378 = vst.msk [vmem:[#allocation3 + $0x30] sm:$0xff] %vm1729, %v6289
      %6379 = vst.msk [vmem:[#allocation3 + $0x38] sm:$0xff] %vm1729, %v6291
      %6380 = vst.msk [vmem:[#allocation3 + $0x40] sm:$0xff] %vm1729, %v6293
      %6381 = vst.msk [vmem:[#allocation3 + $0x48] sm:$0xff] %vm1729, %v6295
      %6382 = vst.msk [vmem:[#allocation3 + $0x50] sm:$0xff] %vm1729, %v6297
      %6383 = vst.msk [vmem:[#allocation3 + $0x58] sm:$0xff] %vm1729, %v6299
      %6384 = vst.msk [vmem:[#allocation3 + $0x60] sm:$0xff] %vm1729, %v6301
      %6385 = vst.msk [vmem:[#allocation3 + $0x68] sm:$0xff] %vm1729, %v6303
      %6386 = vst.msk [vmem:[#allocation3 + $0x70] sm:$0xff] %vm1729, %v6305
      %6387 = vst.msk [vmem:[#allocation3 + $0x78] sm:$0xff] %vm1729, %v6307
      %6388 = vst.msk [vmem:[#allocation3 + $0x80] sm:$0xff] %vm1729, %v6309
      %6389 = vst.msk [vmem:[#allocation3 + $0x88] sm:$0xff] %vm1729, %v6311
      %6390 = vst.msk [vmem:[#allocation3 + $0x90] sm:$0xff] %vm1729, %v6313
      %6391 = vst.msk [vmem:[#allocation3 + $0x98] sm:$0xff] %vm1729, %v6315
      %6392 = vst.msk [vmem:[#allocation3 + $0xa0] sm:$0xff] %vm1729, %v6317
      %6393 = vst.msk [vmem:[#allocation3 + $0xa8] sm:$0xff] %vm1729, %v6319
      %6394 = vst.msk [vmem:[#allocation3 + $0xb0] sm:$0xff] %vm1729, %v6321
      %6395 = vst.msk [vmem:[#allocation3 + $0xb8] sm:$0xff] %vm1729, %v6323
      %6396 = vst.msk [vmem:[#allocation3 + $0xc0] sm:$0xff] %vm1729, %v6325
      %6397 = vst.msk [vmem:[#allocation3 + $0xc8] sm:$0xff] %vm1729, %v6327
      %6398 = vst.msk [vmem:[#allocation3 + $0xd0] sm:$0xff] %vm1729, %v6329
      %6399 = vst.msk [vmem:[#allocation3 + $0xd8] sm:$0xff] %vm1729, %v6331
      %6400 = vst.msk [vmem:[#allocation3 + $0xe0] sm:$0xff] %vm1729, %v6333
      %6401 = vst.msk [vmem:[#allocation3 + $0xe8] sm:$0xff] %vm1729, %v6335
      %6402 = vst.msk [vmem:[#allocation3 + $0xf0] sm:$0xff] %vm1729, %v6337
      %6403 = vst.msk [vmem:[#allocation3 + $0xf8] sm:$0xff] %vm1729, %v6339
      %v6404 = vld [vmem:[%s2831 + $0x2] sm:$0xff]
      %v6405 = vld [vmem:[%s2831 + $0xa] sm:$0xff]
      %v6406 = vld [vmem:[%s2831 + $0x1a] sm:$0xff]
      %v6407 = vld [vmem:[%s2831 + $0x22] sm:$0xff]
      %v6408 = vld [vmem:[%s2831 + $0x32] sm:$0xff]
      %v6409 = vld [vmem:[%s2831 + $0x3a] sm:$0xff]
      %v6410 = vld [vmem:[%s2831 + $0x4a] sm:$0xff]
      %v6411 = vld [vmem:[%s2831 + $0x52] sm:$0xff]
      %v6412 = vld [vmem:[%s2831 + $0x62] sm:$0xff]
      %v6413 = vld [vmem:[%s2831 + $0x6a] sm:$0xff]
      %v6414 = vld [vmem:[%s2831 + $0x7a] sm:$0xff]
      %v6415 = vld [vmem:[%s2831 + $0x82] sm:$0xff]
      %v6416 = vld [vmem:[%s2831 + $0x92] sm:$0xff]
      %v6417 = vld [vmem:[%s2831 + $0x9a] sm:$0xff]
      %v6418 = vld [vmem:[%s2831 + $0xaa] sm:$0xff]
      %v6419 = vld [vmem:[%s2831 + $0xb2] sm:$0xff]
      %v6420 = vld [vmem:[%s2831 + $0xc2] sm:$0xff]
      %v6421 = vld [vmem:[%s2831 + $0xca] sm:$0xff]
      %v6422 = vld [vmem:[%s2831 + $0xda] sm:$0xff]
      %v6423 = vld [vmem:[%s2831 + $0xe2] sm:$0xff]
      %v6424 = vld [vmem:[%s2831 + $0xf2] sm:$0xff]
      %v6425 = vld [vmem:[%s2831 + $0xfa] sm:$0xff]
      %v6426 = vld [vmem:[%s2831 + $0x10a] sm:$0xff]
      %v6427 = vld [vmem:[%s2831 + $0x112] sm:$0xff]
      %v6428 = vld [vmem:[%s2831 + $0x122] sm:$0xff]
      %v6429 = vld [vmem:[%s2831 + $0x12a] sm:$0xff]
      %v6430 = vld [vmem:[%s2831 + $0x13a] sm:$0xff]
      %v6431 = vld [vmem:[%s2831 + $0x142] sm:$0xff]
      %v6432 = vld [vmem:[%s2831 + $0x152] sm:$0xff]
      %v6433 = vld [vmem:[%s2831 + $0x15a] sm:$0xff]
      %v6434 = vld [vmem:[%s2831 + $0x16a] sm:$0xff]
      %v6435 = vld [vmem:[%s2831 + $0x172] sm:$0xff]
      %6468 = vrot.lane.b32.xlu0 %v6404, 32
      %v6469 = vpop.permute.xlu0 %6468
      %6470 = vrot.lane.b32.xlu0 %v6405, 32
      %v6471 = vpop.permute.xlu0 %6470
      %6472 = vrot.lane.b32.xlu0 %v6406, 32
      %v6473 = vpop.permute.xlu0 %6472
      %6474 = vrot.lane.b32.xlu0 %v6407, 32
      %v6475 = vpop.permute.xlu0 %6474
      %6476 = vrot.lane.b32.xlu0 %v6408, 32
      %v6477 = vpop.permute.xlu0 %6476
      %6478 = vrot.lane.b32.xlu0 %v6409, 32
      %v6479 = vpop.permute.xlu0 %6478
      %6480 = vrot.lane.b32.xlu0 %v6410, 32
      %v6481 = vpop.permute.xlu0 %6480
      %6482 = vrot.lane.b32.xlu0 %v6411, 32
      %v6483 = vpop.permute.xlu0 %6482
      %6484 = vrot.lane.b32.xlu0 %v6412, 32
      %v6485 = vpop.permute.xlu0 %6484
      %6486 = vrot.lane.b32.xlu0 %v6413, 32
      %v6487 = vpop.permute.xlu0 %6486
      %6488 = vrot.lane.b32.xlu0 %v6414, 32
      %v6489 = vpop.permute.xlu0 %6488
      %6490 = vrot.lane.b32.xlu0 %v6415, 32
      %v6491 = vpop.permute.xlu0 %6490
      %6492 = vrot.lane.b32.xlu0 %v6416, 32
      %v6493 = vpop.permute.xlu0 %6492
      %6494 = vrot.lane.b32.xlu0 %v6417, 32
      %v6495 = vpop.permute.xlu0 %6494
      %6496 = vrot.lane.b32.xlu0 %v6418, 32
      %v6497 = vpop.permute.xlu0 %6496
      %6498 = vrot.lane.b32.xlu0 %v6419, 32
      %v6499 = vpop.permute.xlu0 %6498
      %6500 = vrot.lane.b32.xlu0 %v6420, 32
      %v6501 = vpop.permute.xlu0 %6500
      %6502 = vrot.lane.b32.xlu0 %v6421, 32
      %v6503 = vpop.permute.xlu0 %6502
      %6504 = vrot.lane.b32.xlu0 %v6422, 32
      %v6505 = vpop.permute.xlu0 %6504
      %6506 = vrot.lane.b32.xlu0 %v6423, 32
      %v6507 = vpop.permute.xlu0 %6506
      %6508 = vrot.lane.b32.xlu0 %v6424, 32
      %v6509 = vpop.permute.xlu0 %6508
      %6510 = vrot.lane.b32.xlu0 %v6425, 32
      %v6511 = vpop.permute.xlu0 %6510
      %6512 = vrot.lane.b32.xlu0 %v6426, 32
      %v6513 = vpop.permute.xlu0 %6512
      %6514 = vrot.lane.b32.xlu0 %v6427, 32
      %v6515 = vpop.permute.xlu0 %6514
      %6516 = vrot.lane.b32.xlu0 %v6428, 32
      %v6517 = vpop.permute.xlu0 %6516
      %6518 = vrot.lane.b32.xlu0 %v6429, 32
      %v6519 = vpop.permute.xlu0 %6518
      %6520 = vrot.lane.b32.xlu0 %v6430, 32
      %v6521 = vpop.permute.xlu0 %6520
      %6522 = vrot.lane.b32.xlu0 %v6431, 32
      %v6523 = vpop.permute.xlu0 %6522
      %6524 = vrot.lane.b32.xlu0 %v6432, 32
      %v6525 = vpop.permute.xlu0 %6524
      %6526 = vrot.lane.b32.xlu0 %v6433, 32
      %v6527 = vpop.permute.xlu0 %6526
      %6528 = vrot.lane.b32.xlu0 %v6434, 32
      %v6529 = vpop.permute.xlu0 %6528
      %6530 = vrot.lane.b32.xlu0 %v6435, 32
      %v6531 = vpop.permute.xlu0 %6530
      %6564 = vst.msk [vmem:[#allocation3] sm:$0xff] %vm1922, %v6469
      %6565 = vst.msk [vmem:[#allocation3 + $0x8] sm:$0xff] %vm1922, %v6471
      %6566 = vst.msk [vmem:[#allocation3 + $0x10] sm:$0xff] %vm1922, %v6473
      %6567 = vst.msk [vmem:[#allocation3 + $0x18] sm:$0xff] %vm1922, %v6475
      %6568 = vst.msk [vmem:[#allocation3 + $0x20] sm:$0xff] %vm1922, %v6477
      %6569 = vst.msk [vmem:[#allocation3 + $0x28] sm:$0xff] %vm1922, %v6479
      %6570 = vst.msk [vmem:[#allocation3 + $0x30] sm:$0xff] %vm1922, %v6481
      %6571 = vst.msk [vmem:[#allocation3 + $0x38] sm:$0xff] %vm1922, %v6483
      %6572 = vst.msk [vmem:[#allocation3 + $0x40] sm:$0xff] %vm1922, %v6485
      %6573 = vst.msk [vmem:[#allocation3 + $0x48] sm:$0xff] %vm1922, %v6487
      %6574 = vst.msk [vmem:[#allocation3 + $0x50] sm:$0xff] %vm1922, %v6489
      %6575 = vst.msk [vmem:[#allocation3 + $0x58] sm:$0xff] %vm1922, %v6491
      %6576 = vst.msk [vmem:[#allocation3 + $0x60] sm:$0xff] %vm1922, %v6493
      %6577 = vst.msk [vmem:[#allocation3 + $0x68] sm:$0xff] %vm1922, %v6495
      %6578 = vst.msk [vmem:[#allocation3 + $0x70] sm:$0xff] %vm1922, %v6497
      %6579 = vst.msk [vmem:[#allocation3 + $0x78] sm:$0xff] %vm1922, %v6499
      %6580 = vst.msk [vmem:[#allocation3 + $0x80] sm:$0xff] %vm1922, %v6501
      %6581 = vst.msk [vmem:[#allocation3 + $0x88] sm:$0xff] %vm1922, %v6503
      %6582 = vst.msk [vmem:[#allocation3 + $0x90] sm:$0xff] %vm1922, %v6505
      %6583 = vst.msk [vmem:[#allocation3 + $0x98] sm:$0xff] %vm1922, %v6507
      %6584 = vst.msk [vmem:[#allocation3 + $0xa0] sm:$0xff] %vm1922, %v6509
      %6585 = vst.msk [vmem:[#allocation3 + $0xa8] sm:$0xff] %vm1922, %v6511
      %6586 = vst.msk [vmem:[#allocation3 + $0xb0] sm:$0xff] %vm1922, %v6513
      %6587 = vst.msk [vmem:[#allocation3 + $0xb8] sm:$0xff] %vm1922, %v6515
      %6588 = vst.msk [vmem:[#allocation3 + $0xc0] sm:$0xff] %vm1922, %v6517
      %6589 = vst.msk [vmem:[#allocation3 + $0xc8] sm:$0xff] %vm1922, %v6519
      %6590 = vst.msk [vmem:[#allocation3 + $0xd0] sm:$0xff] %vm1922, %v6521
      %6591 = vst.msk [vmem:[#allocation3 + $0xd8] sm:$0xff] %vm1922, %v6523
      %6592 = vst.msk [vmem:[#allocation3 + $0xe0] sm:$0xff] %vm1922, %v6525
      %6593 = vst.msk [vmem:[#allocation3 + $0xe8] sm:$0xff] %vm1922, %v6527
      %6594 = vst.msk [vmem:[#allocation3 + $0xf0] sm:$0xff] %vm1922, %v6529
      %6595 = vst.msk [vmem:[#allocation3 + $0xf8] sm:$0xff] %vm1922, %v6531
      %v6596 = vld [vmem:[#allocation3] sm:$0xff]
      %v6597 = vld [vmem:[#allocation3 + $0x8] sm:$0xff]
      %v6598 = vld [vmem:[#allocation3 + $0x10] sm:$0xff]
      %v6599 = vld [vmem:[#allocation3 + $0x18] sm:$0xff]
      %v6600 = vld [vmem:[#allocation3 + $0x20] sm:$0xff]
      %v6601 = vld [vmem:[#allocation3 + $0x28] sm:$0xff]
      %v6602 = vld [vmem:[#allocation3 + $0x30] sm:$0xff]
      %v6603 = vld [vmem:[#allocation3 + $0x38] sm:$0xff]
      %v6604 = vld [vmem:[#allocation3 + $0x40] sm:$0xff]
      %v6605 = vld [vmem:[#allocation3 + $0x48] sm:$0xff]
      %v6606 = vld [vmem:[#allocation3 + $0x50] sm:$0xff]
      %v6607 = vld [vmem:[#allocation3 + $0x58] sm:$0xff]
      %v6608 = vld [vmem:[#allocation3 + $0x60] sm:$0xff]
      %v6609 = vld [vmem:[#allocation3 + $0x68] sm:$0xff]
      %v6610 = vld [vmem:[#allocation3 + $0x70] sm:$0xff]
      %v6611 = vld [vmem:[#allocation3 + $0x78] sm:$0xff]
      %v6612 = vld [vmem:[#allocation3 + $0x80] sm:$0xff]
      %v6613 = vld [vmem:[#allocation3 + $0x88] sm:$0xff]
      %v6614 = vld [vmem:[#allocation3 + $0x90] sm:$0xff]
      %v6615 = vld [vmem:[#allocation3 + $0x98] sm:$0xff]
      %v6616 = vld [vmem:[#allocation3 + $0xa0] sm:$0xff]
      %v6617 = vld [vmem:[#allocation3 + $0xa8] sm:$0xff]
      %v6618 = vld [vmem:[#allocation3 + $0xb0] sm:$0xff]
      %v6619 = vld [vmem:[#allocation3 + $0xb8] sm:$0xff]
      %v6620 = vld [vmem:[#allocation3 + $0xc0] sm:$0xff]
      %v6621 = vld [vmem:[#allocation3 + $0xc8] sm:$0xff]
      %v6622 = vld [vmem:[#allocation3 + $0xd0] sm:$0xff]
      %v6623 = vld [vmem:[#allocation3 + $0xd8] sm:$0xff]
      %v6624 = vld [vmem:[#allocation3 + $0xe0] sm:$0xff]
      %v6625 = vld [vmem:[#allocation3 + $0xe8] sm:$0xff]
      %v6626 = vld [vmem:[#allocation3 + $0xf0] sm:$0xff]
      %v6627 = vld [vmem:[#allocation3 + $0xf8] sm:$0xff]
      %v6628 = vld [vmem:[%s3] sm:$0xff]
      %v6629 = vld [vmem:[%s3 + $0x8] sm:$0xff]
      %v6630 = vld [vmem:[%s3 + $0x10] sm:$0xff]
      %v6631 = vld [vmem:[%s3 + $0x18] sm:$0xff]
      %v6632 = vld [vmem:[%s3 + $0x20] sm:$0xf]
      %v6633 = vld [vmem:[%s4] sm:$0x1]
      %v6635 = vlaneseq
      %v6636 = vshrl.u32 %v6635, 7
      %v6637 = vsub.s32 0, %v6636
      %v6638 = vrot.slane %v6633, %v6637
      %v6641 = vsel %vm1999, %v6596, 0
      %v6644 = vsel %vm1999, %v6597, 0
      %v6647 = vsel %vm1999, %v6598, 0
      %v6650 = vsel %vm1999, %v6599, 0
      %v6653 = vsel %vm1999, %v6600, 0
      %v6656 = vsel %vm1999, %v6601, 0
      %v6659 = vsel %vm1999, %v6602, 0
      %v6662 = vsel %vm1999, %v6603, 0
      %v6665 = vsel %vm1999, %v6604, 0
      %v6668 = vsel %vm1999, %v6605, 0
      %v6671 = vsel %vm1999, %v6606, 0
      %v6674 = vsel %vm1999, %v6607, 0
      %v6677 = vsel %vm1999, %v6608, 0
      %v6680 = vsel %vm1999, %v6609, 0
      %v6683 = vsel %vm1999, %v6610, 0
      %v6686 = vsel %vm1999, %v6611, 0
      %v6689 = vsel %vm1999, %v6612, 0
      %v6692 = vsel %vm1999, %v6613, 0
      %v6695 = vsel %vm1999, %v6614, 0
      %v6698 = vsel %vm1999, %v6615, 0
      %v6701 = vsel %vm1999, %v6616, 0
      %v6704 = vsel %vm1999, %v6617, 0
      %v6707 = vsel %vm1999, %v6618, 0
      %v6710 = vsel %vm1999, %v6619, 0
      %v6713 = vsel %vm1999, %v6620, 0
      %v6716 = vsel %vm1999, %v6621, 0
      %v6719 = vsel %vm1999, %v6622, 0
      %v6722 = vsel %vm1999, %v6623, 0
      %v6725 = vsel %vm1999, %v6624, 0
      %v6728 = vsel %vm1999, %v6625, 0
      %v6731 = vsel %vm1999, %v6626, 0
      %v6734 = vsel %vm1999, %v6627, 0
      %v6737 = vsel %vm2096, %v6632, 0
      %6739 = vmatprep.subr.mxu0 0.0
      %6740 = vmatpush1.msra.mxu0 %v6628
      %6741 = vmatprep.subr.mxu0 0.0
      %6742 = vmatpush1.msra.mxu0 %v6629
      %6743 = vmatprep.subr.mxu0 0.0
      %6744 = vmatpush1.msra.mxu0 %v6630
      %6745 = vmatprep.subr.mxu0 0.0
      %6746 = vmatpush1.msra.mxu0 %v6631
      %6747 = vmatprep.subr.mxu0 0.0
      %6748 = vmatpush1.msra.mxu0 %v6737
      %6749 = vmatprep.subr.mxu0 0.0
      %6750 = vmatpush1.msra.mxu0 0.0
      %6751 = vmatprep.subr.mxu0 0.0
      %6752 = vmatpush1.msra.mxu0 0.0
      %6753 = vmatprep.subr.mxu0 0.0
      %6754 = vmatpush1.msra.mxu0 0.0
      %6755 = vmatprep.subr.mxu0 0.0
      %6756 = vmatpush1.msra.mxu0 0.0
      %6757 = vmatprep.subr.mxu0 0.0
      %6758 = vmatpush1.msra.mxu0 0.0
      %6759 = vmatprep.subr.mxu0 0.0
      %6760 = vmatpush1.msra.mxu0 0.0
      %6761 = vmatprep.subr.mxu0 0.0
      %6762 = vmatpush1.msra.mxu0 0.0
      %6763 = vmatprep.subr.mxu0 0.0
      %6764 = vmatpush1.msra.mxu0 0.0
      %6765 = vmatprep.subr.mxu0 0.0
      %6766 = vmatpush1.msra.mxu0 0.0
      %6767 = vmatprep.subr.mxu0 0.0
      %6768 = vmatpush1.msra.mxu0 0.0
      %6769 = vmatprep.subr.mxu0 0.0
      %6770 = vmatpush1.msra.mxu0 0.0
      %6771 = vmatprep.subr.mxu0 0.0
      %6772 = vmatpush1.msra.mxu0 0.0
      %6773 = vmatprep.subr.mxu0 0.0
      %6774 = vmatpush1.msra.mxu0 0.0
      %6775 = vmatprep.subr.mxu0 0.0
      %6776 = vmatpush1.msra.mxu0 0.0
      %6777 = vmatprep.subr.mxu0 0.0
      %6778 = vmatpush1.msra.mxu0 0.0
      %6779 = vmatprep.subr.mxu0 0.0
      %6780 = vmatpush1.msra.mxu0 0.0
      %6781 = vmatprep.subr.mxu0 0.0
      %6782 = vmatpush1.msra.mxu0 0.0
      %6783 = vmatprep.subr.mxu0 0.0
      %6784 = vmatpush1.msra.mxu0 0.0
      %6785 = vmatprep.subr.mxu0 0.0
      %6786 = vmatpush1.msra.mxu0 0.0
      %6787 = vmatprep.subr.mxu0 0.0
      %6788 = vmatpush1.msra.mxu0 0.0
      %6789 = vmatprep.subr.mxu0 0.0
      %6790 = vmatpush1.msra.mxu0 0.0
      %6791 = vmatprep.subr.mxu0 0.0
      %6792 = vmatpush1.msra.mxu0 0.0
      %6793 = vmatprep.subr.mxu0 0.0
      %6794 = vmatpush1.msra.mxu0 0.0
      %6795 = vmatprep.subr.mxu0 0.0
      %6796 = vmatpush1.msra.mxu0 0.0
      %6797 = vmatprep.subr.mxu0 0.0
      %6798 = vmatpush1.msra.mxu0 0.0
      %6799 = vmatprep.subr.mxu0 0.0
      %6800 = vmatpush1.msra.mxu0 0.0
      %6801 = vmatprep.subr.mxu0 0.0
      %6802 = vmatpush1.msra.mxu0 0.0
      %6803 = vmatprep.mubr.f32.mxu0 0.0
      %6804 = vmatmul.mubr.f32.gmra.mrb[0].mxu0 %v6641
      %v6805 = vpop.f32.mrb[0].mxu0
      %v6806 = vadd.f32 %v6638, %v6805
      %v6807 = vpop.f32.mrb[0].mxu0
      %6808 = vmatprep.mubr.f32.mxu0 0.0
      %6809 = vmatmul.mubr.f32.gmra.mrb[0].mxu0 %v6644
      %v6810 = vpop.f32.mrb[0].mxu0
      %v6811 = vadd.f32 %v6638, %v6810
      %v6812 = vpop.f32.mrb[0].mxu0
      %6813 = vmatprep.mubr.f32.mxu0 0.0
      %6814 = vmatmul.mubr.f32.gmra.mrb[0].mxu0 %v6647
      %v6815 = vpop.f32.mrb[0].mxu0
      %v6816 = vadd.f32 %v6638, %v6815
      %v6817 = vpop.f32.mrb[0].mxu0
      %6818 = vmatprep.mubr.f32.mxu0 0.0
      %6819 = vmatmul.mubr.f32.gmra.mrb[0].mxu0 %v6650
      %v6820 = vpop.f32.mrb[0].mxu0
      %v6821 = vadd.f32 %v6638, %v6820
      %v6822 = vpop.f32.mrb[0].mxu0
      %6823 = vmatprep.mubr.f32.mxu0 0.0
      %6824 = vmatmul.mubr.f32.gmra.mrb[0].mxu0 %v6653
      %v6825 = vpop.f32.mrb[0].mxu0
      %v6826 = vadd.f32 %v6638, %v6825
      %v6827 = vpop.f32.mrb[0].mxu0
      %6828 = vmatprep.mubr.f32.mxu0 0.0
      %6829 = vmatmul.mubr.f32.gmra.mrb[0].mxu0 %v6656
      %v6830 = vpop.f32.mrb[0].mxu0
      %v6831 = vadd.f32 %v6638, %v6830
      %v6832 = vpop.f32.mrb[0].mxu0
      %6833 = vmatprep.mubr.f32.mxu0 0.0
      %6834 = vmatmul.mubr.f32.gmra.mrb[0].mxu0 %v6659
      %v6835 = vpop.f32.mrb[0].mxu0
      %v6836 = vadd.f32 %v6638, %v6835
      %v6837 = vpop.f32.mrb[0].mxu0
      %6838 = vmatprep.mubr.f32.mxu0 0.0
      %6839 = vmatmul.mubr.f32.gmra.mrb[0].mxu0 %v6662
      %v6840 = vpop.f32.mrb[0].mxu0
      %v6841 = vadd.f32 %v6638, %v6840
      %v6842 = vpop.f32.mrb[0].mxu0
      %6843 = vmatprep.mubr.f32.mxu0 0.0
      %6844 = vmatmul.mubr.f32.gmra.mrb[0].mxu0 %v6665
      %v6845 = vpop.f32.mrb[0].mxu0
      %v6846 = vadd.f32 %v6638, %v6845
      %v6847 = vpop.f32.mrb[0].mxu0
      %6848 = vmatprep.mubr.f32.mxu0 0.0
      %6849 = vmatmul.mubr.f32.gmra.mrb[0].mxu0 %v6668
      %v6850 = vpop.f32.mrb[0].mxu0
      %v6851 = vadd.f32 %v6638, %v6850
      %v6852 = vpop.f32.mrb[0].mxu0
      %6853 = vmatprep.mubr.f32.mxu0 0.0
      %6854 = vmatmul.mubr.f32.gmra.mrb[0].mxu0 %v6671
      %v6855 = vpop.f32.mrb[0].mxu0
      %v6856 = vadd.f32 %v6638, %v6855
      %v6857 = vpop.f32.mrb[0].mxu0
      %6858 = vmatprep.mubr.f32.mxu0 0.0
      %6859 = vmatmul.mubr.f32.gmra.mrb[0].mxu0 %v6674
      %v6860 = vpop.f32.mrb[0].mxu0
      %v6861 = vadd.f32 %v6638, %v6860
      %v6862 = vpop.f32.mrb[0].mxu0
      %6863 = vmatprep.mubr.f32.mxu0 0.0
      %6864 = vmatmul.mubr.f32.gmra.mrb[0].mxu0 %v6677
      %v6865 = vpop.f32.mrb[0].mxu0
      %v6866 = vadd.f32 %v6638, %v6865
      %v6867 = vpop.f32.mrb[0].mxu0
      %6868 = vmatprep.mubr.f32.mxu0 0.0
      %6869 = vmatmul.mubr.f32.gmra.mrb[0].mxu0 %v6680
      %v6870 = vpop.f32.mrb[0].mxu0
      %v6871 = vadd.f32 %v6638, %v6870
      %v6872 = vpop.f32.mrb[0].mxu0
      %6873 = vmatprep.mubr.f32.mxu0 0.0
      %6874 = vmatmul.mubr.f32.gmra.mrb[0].mxu0 %v6683
      %v6875 = vpop.f32.mrb[0].mxu0
      %v6876 = vadd.f32 %v6638, %v6875
      %v6877 = vpop.f32.mrb[0].mxu0
      %6878 = vmatprep.mubr.f32.mxu0 0.0
      %6879 = vmatmul.mubr.f32.gmra.mrb[0].mxu0 %v6686
      %v6880 = vpop.f32.mrb[0].mxu0
      %v6881 = vadd.f32 %v6638, %v6880
      %v6882 = vpop.f32.mrb[0].mxu0
      %6883 = vmatprep.mubr.f32.mxu0 0.0
      %6884 = vmatmul.mubr.f32.gmra.mrb[0].mxu0 %v6689
      %v6885 = vpop.f32.mrb[0].mxu0
      %v6886 = vadd.f32 %v6638, %v6885
      %v6887 = vpop.f32.mrb[0].mxu0
      %6888 = vmatprep.mubr.f32.mxu0 0.0
      %6889 = vmatmul.mubr.f32.gmra.mrb[0].mxu0 %v6692
      %v6890 = vpop.f32.mrb[0].mxu0
      %v6891 = vadd.f32 %v6638, %v6890
      %v6892 = vpop.f32.mrb[0].mxu0
      %6893 = vmatprep.mubr.f32.mxu0 0.0
      %6894 = vmatmul.mubr.f32.gmra.mrb[0].mxu0 %v6695
      %v6895 = vpop.f32.mrb[0].mxu0
      %v6896 = vadd.f32 %v6638, %v6895
      %v6897 = vpop.f32.mrb[0].mxu0
      %6898 = vmatprep.mubr.f32.mxu0 0.0
      %6899 = vmatmul.mubr.f32.gmra.mrb[0].mxu0 %v6698
      %v6900 = vpop.f32.mrb[0].mxu0
      %v6901 = vadd.f32 %v6638, %v6900
      %v6902 = vpop.f32.mrb[0].mxu0
      %6903 = vmatprep.mubr.f32.mxu0 0.0
      %6904 = vmatmul.mubr.f32.gmra.mrb[0].mxu0 %v6701
      %v6905 = vpop.f32.mrb[0].mxu0
      %v6906 = vadd.f32 %v6638, %v6905
      %v6907 = vpop.f32.mrb[0].mxu0
      %6908 = vmatprep.mubr.f32.mxu0 0.0
      %6909 = vmatmul.mubr.f32.gmra.mrb[0].mxu0 %v6704
      %v6910 = vpop.f32.mrb[0].mxu0
      %v6911 = vadd.f32 %v6638, %v6910
      %v6912 = vpop.f32.mrb[0].mxu0
      %6913 = vmatprep.mubr.f32.mxu0 0.0
      %6914 = vmatmul.mubr.f32.gmra.mrb[0].mxu0 %v6707
      %v6915 = vpop.f32.mrb[0].mxu0
      %v6916 = vadd.f32 %v6638, %v6915
      %v6917 = vpop.f32.mrb[0].mxu0
      %6918 = vmatprep.mubr.f32.mxu0 0.0
      %6919 = vmatmul.mubr.f32.gmra.mrb[0].mxu0 %v6710
      %v6920 = vpop.f32.mrb[0].mxu0
      %v6921 = vadd.f32 %v6638, %v6920
      %v6922 = vpop.f32.mrb[0].mxu0
      %6923 = vmatprep.mubr.f32.mxu0 0.0
      %6924 = vmatmul.mubr.f32.gmra.mrb[0].mxu0 %v6713
      %v6925 = vpop.f32.mrb[0].mxu0
      %v6926 = vadd.f32 %v6638, %v6925
      %v6927 = vpop.f32.mrb[0].mxu0
      %6928 = vmatprep.mubr.f32.mxu0 0.0
      %6929 = vmatmul.mubr.f32.gmra.mrb[0].mxu0 %v6716
      %v6930 = vpop.f32.mrb[0].mxu0
      %v6931 = vadd.f32 %v6638, %v6930
      %v6932 = vpop.f32.mrb[0].mxu0
      %6933 = vmatprep.mubr.f32.mxu0 0.0
      %6934 = vmatmul.mubr.f32.gmra.mrb[0].mxu0 %v6719
      %v6935 = vpop.f32.mrb[0].mxu0
      %v6936 = vadd.f32 %v6638, %v6935
      %v6937 = vpop.f32.mrb[0].mxu0
      %6938 = vmatprep.mubr.f32.mxu0 0.0
      %6939 = vmatmul.mubr.f32.gmra.mrb[0].mxu0 %v6722
      %v6940 = vpop.f32.mrb[0].mxu0
      %v6941 = vadd.f32 %v6638, %v6940
      %v6942 = vpop.f32.mrb[0].mxu0
      %6943 = vmatprep.mubr.f32.mxu0 0.0
      %6944 = vmatmul.mubr.f32.gmra.mrb[0].mxu0 %v6725
      %v6945 = vpop.f32.mrb[0].mxu0
      %v6946 = vadd.f32 %v6638, %v6945
      %v6947 = vpop.f32.mrb[0].mxu0
      %6948 = vmatprep.mubr.f32.mxu0 0.0
      %6949 = vmatmul.mubr.f32.gmra.mrb[0].mxu0 %v6728
      %v6950 = vpop.f32.mrb[0].mxu0
      %v6951 = vadd.f32 %v6638, %v6950
      %v6952 = vpop.f32.mrb[0].mxu0
      %6953 = vmatprep.mubr.f32.mxu0 0.0
      %6954 = vmatmul.mubr.f32.gmra.mrb[0].mxu0 %v6731
      %v6955 = vpop.f32.mrb[0].mxu0
      %v6956 = vadd.f32 %v6638, %v6955
      %v6957 = vpop.f32.mrb[0].mxu0
      %6958 = vmatprep.mubr.f32.mxu0 0.0
      %6959 = vmatmul.mubr.f32.gmra.mrb[0].mxu0 %v6734
      %v6960 = vpop.f32.mrb[0].mxu0
      %v6961 = vadd.f32 %v6638, %v6960
      %v6962 = vpop.f32.mrb[0].mxu0
      %6963 = vdwg.mxu0
      %6996 = vrot.lane.b32.xlu0 %v6806, 16
      %v6997 = vpop.permute.xlu0 %6996
      %6998 = vrot.lane.b32.xlu0 %v6811, 16
      %v6999 = vpop.permute.xlu0 %6998
      %7000 = vrot.lane.b32.xlu0 %v6816, 16
      %v7001 = vpop.permute.xlu0 %7000
      %7002 = vrot.lane.b32.xlu0 %v6821, 16
      %v7003 = vpop.permute.xlu0 %7002
      %7004 = vrot.lane.b32.xlu0 %v6826, 16
      %v7005 = vpop.permute.xlu0 %7004
      %7006 = vrot.lane.b32.xlu0 %v6831, 16
      %v7007 = vpop.permute.xlu0 %7006
      %7008 = vrot.lane.b32.xlu0 %v6836, 16
      %v7009 = vpop.permute.xlu0 %7008
      %7010 = vrot.lane.b32.xlu0 %v6841, 16
      %v7011 = vpop.permute.xlu0 %7010
      %7012 = vrot.lane.b32.xlu0 %v6846, 16
      %v7013 = vpop.permute.xlu0 %7012
      %7014 = vrot.lane.b32.xlu0 %v6851, 16
      %v7015 = vpop.permute.xlu0 %7014
      %7016 = vrot.lane.b32.xlu0 %v6856, 16
      %v7017 = vpop.permute.xlu0 %7016
      %7018 = vrot.lane.b32.xlu0 %v6861, 16
      %v7019 = vpop.permute.xlu0 %7018
      %7020 = vrot.lane.b32.xlu0 %v6866, 16
      %v7021 = vpop.permute.xlu0 %7020
      %7022 = vrot.lane.b32.xlu0 %v6871, 16
      %v7023 = vpop.permute.xlu0 %7022
      %7024 = vrot.lane.b32.xlu0 %v6876, 16
      %v7025 = vpop.permute.xlu0 %7024
      %7026 = vrot.lane.b32.xlu0 %v6881, 16
      %v7027 = vpop.permute.xlu0 %7026
      %7028 = vrot.lane.b32.xlu0 %v6886, 16
      %v7029 = vpop.permute.xlu0 %7028
      %7030 = vrot.lane.b32.xlu0 %v6891, 16
      %v7031 = vpop.permute.xlu0 %7030
      %7032 = vrot.lane.b32.xlu0 %v6896, 16
      %v7033 = vpop.permute.xlu0 %7032
      %7034 = vrot.lane.b32.xlu0 %v6901, 16
      %v7035 = vpop.permute.xlu0 %7034
      %7036 = vrot.lane.b32.xlu0 %v6906, 16
      %v7037 = vpop.permute.xlu0 %7036
      %7038 = vrot.lane.b32.xlu0 %v6911, 16
      %v7039 = vpop.permute.xlu0 %7038
      %7040 = vrot.lane.b32.xlu0 %v6916, 16
      %v7041 = vpop.permute.xlu0 %7040
      %7042 = vrot.lane.b32.xlu0 %v6921, 16
      %v7043 = vpop.permute.xlu0 %7042
      %7044 = vrot.lane.b32.xlu0 %v6926, 16
      %v7045 = vpop.permute.xlu0 %7044
      %7046 = vrot.lane.b32.xlu0 %v6931, 16
      %v7047 = vpop.permute.xlu0 %7046
      %7048 = vrot.lane.b32.xlu0 %v6936, 16
      %v7049 = vpop.permute.xlu0 %7048
      %7050 = vrot.lane.b32.xlu0 %v6941, 16
      %v7051 = vpop.permute.xlu0 %7050
      %7052 = vrot.lane.b32.xlu0 %v6946, 16
      %v7053 = vpop.permute.xlu0 %7052
      %7054 = vrot.lane.b32.xlu0 %v6951, 16
      %v7055 = vpop.permute.xlu0 %7054
      %7056 = vrot.lane.b32.xlu0 %v6956, 16
      %v7057 = vpop.permute.xlu0 %7056
      %7058 = vrot.lane.b32.xlu0 %v6961, 16
      %v7059 = vpop.permute.xlu0 %7058
      %vm7092 = vcmask 261248
      %7093 = vst.msk [vmem:[%s224] sm:$0xff] %vm7092, %v6997
      %7094 = vst.msk [vmem:[%s224 + $0x8] sm:$0xff] %vm7092, %v6999
      %7095 = vst.msk [vmem:[%s224 + $0x10] sm:$0xff] %vm7092, %v7001
      %7096 = vst.msk [vmem:[%s224 + $0x18] sm:$0xff] %vm7092, %v7003
      %7097 = vst.msk [vmem:[%s224 + $0x20] sm:$0xff] %vm7092, %v7005
      %7098 = vst.msk [vmem:[%s224 + $0x28] sm:$0xff] %vm7092, %v7007
      %7099 = vst.msk [vmem:[%s224 + $0x30] sm:$0xff] %vm7092, %v7009
      %7100 = vst.msk [vmem:[%s224 + $0x38] sm:$0xff] %vm7092, %v7011
      %7101 = vst.msk [vmem:[%s224 + $0x40] sm:$0xff] %vm7092, %v7013
      %7102 = vst.msk [vmem:[%s224 + $0x48] sm:$0xff] %vm7092, %v7015
      %7103 = vst.msk [vmem:[%s224 + $0x50] sm:$0xff] %vm7092, %v7017
      %7104 = vst.msk [vmem:[%s224 + $0x58] sm:$0xff] %vm7092, %v7019
      %7105 = vst.msk [vmem:[%s224 + $0x60] sm:$0xff] %vm7092, %v7021
      %7106 = vst.msk [vmem:[%s224 + $0x68] sm:$0xff] %vm7092, %v7023
      %7107 = vst.msk [vmem:[%s224 + $0x70] sm:$0xff] %vm7092, %v7025
      %7108 = vst.msk [vmem:[%s224 + $0x78] sm:$0xff] %vm7092, %v7027
      %7109 = vst.msk [vmem:[%s224 + $0x80] sm:$0xff] %vm7092, %v7029
      %7110 = vst.msk [vmem:[%s224 + $0x88] sm:$0xff] %vm7092, %v7031
      %7111 = vst.msk [vmem:[%s224 + $0x90] sm:$0xff] %vm7092, %v7033
      %7112 = vst.msk [vmem:[%s224 + $0x98] sm:$0xff] %vm7092, %v7035
      %7113 = vst.msk [vmem:[%s224 + $0xa0] sm:$0xff] %vm7092, %v7037
      %7114 = vst.msk [vmem:[%s224 + $0xa8] sm:$0xff] %vm7092, %v7039
      %7115 = vst.msk [vmem:[%s224 + $0xb0] sm:$0xff] %vm7092, %v7041
      %7116 = vst.msk [vmem:[%s224 + $0xb8] sm:$0xff] %vm7092, %v7043
      %7117 = vst.msk [vmem:[%s224 + $0xc0] sm:$0xff] %vm7092, %v7045
      %7118 = vst.msk [vmem:[%s224 + $0xc8] sm:$0xff] %vm7092, %v7047
      %7119 = vst.msk [vmem:[%s224 + $0xd0] sm:$0xff] %vm7092, %v7049
      %7120 = vst.msk [vmem:[%s224 + $0xd8] sm:$0xff] %vm7092, %v7051
      %7121 = vst.msk [vmem:[%s224 + $0xe0] sm:$0xff] %vm7092, %v7053
      %7122 = vst.msk [vmem:[%s224 + $0xe8] sm:$0xff] %vm7092, %v7055
      %7123 = vst.msk [vmem:[%s224 + $0xf0] sm:$0xff] %vm7092, %v7057
      %7124 = vst.msk [vmem:[%s224 + $0xf8] sm:$0xff] %vm7092, %v7059
      %v7125 = vld [vmem:[%s2702] sm:$0xff]
      %v7126 = vld [vmem:[%s2702 + $0x8] sm:$0xff]
      %v7127 = vld [vmem:[%s2702 + $0x18] sm:$0xff]
      %v7128 = vld [vmem:[%s2702 + $0x20] sm:$0xff]
      %v7129 = vld [vmem:[%s2702 + $0x30] sm:$0xff]
      %v7130 = vld [vmem:[%s2702 + $0x38] sm:$0xff]
      %v7131 = vld [vmem:[%s2702 + $0x48] sm:$0xff]
      %v7132 = vld [vmem:[%s2702 + $0x50] sm:$0xff]
      %v7133 = vld [vmem:[%s2702 + $0x60] sm:$0xff]
      %v7134 = vld [vmem:[%s2702 + $0x68] sm:$0xff]
      %v7135 = vld [vmem:[%s2702 + $0x78] sm:$0xff]
      %v7136 = vld [vmem:[%s2702 + $0x80] sm:$0xff]
      %v7137 = vld [vmem:[%s2702 + $0x90] sm:$0xff]
      %v7138 = vld [vmem:[%s2702 + $0x98] sm:$0xff]
      %v7139 = vld [vmem:[%s2702 + $0xa8] sm:$0xff]
      %v7140 = vld [vmem:[%s2702 + $0xb0] sm:$0xff]
      %v7141 = vld [vmem:[%s2702 + $0xc0] sm:$0xff]
      %v7142 = vld [vmem:[%s2702 + $0xc8] sm:$0xff]
      %v7143 = vld [vmem:[%s2702 + $0xd8] sm:$0xff]
      %v7144 = vld [vmem:[%s2702 + $0xe0] sm:$0xff]
      %v7145 = vld [vmem:[%s2702 + $0xf0] sm:$0xff]
      %v7146 = vld [vmem:[%s2702 + $0xf8] sm:$0xff]
      %v7147 = vld [vmem:[%s2702 + $0x108] sm:$0xff]
      %v7148 = vld [vmem:[%s2702 + $0x110] sm:$0xff]
      %v7149 = vld [vmem:[%s2702 + $0x120] sm:$0xff]
      %v7150 = vld [vmem:[%s2702 + $0x128] sm:$0xff]
      %v7151 = vld [vmem:[%s2702 + $0x138] sm:$0xff]
      %v7152 = vld [vmem:[%s2702 + $0x140] sm:$0xff]
      %v7153 = vld [vmem:[%s2702 + $0x150] sm:$0xff]
      %v7154 = vld [vmem:[%s2702 + $0x158] sm:$0xff]
      %v7155 = vld [vmem:[%s2702 + $0x168] sm:$0xff]
      %v7156 = vld [vmem:[%s2702 + $0x170] sm:$0xff]
      %7157 = vst.msk [vmem:[#allocation3] sm:$0xff] %vm225, %v7125
      %7158 = vst.msk [vmem:[#allocation3 + $0x8] sm:$0xff] %vm225, %v7126
      %7159 = vst.msk [vmem:[#allocation3 + $0x10] sm:$0xff] %vm225, %v7127
      %7160 = vst.msk [vmem:[#allocation3 + $0x18] sm:$0xff] %vm225, %v7128
      %7161 = vst.msk [vmem:[#allocation3 + $0x20] sm:$0xff] %vm225, %v7129
      %7162 = vst.msk [vmem:[#allocation3 + $0x28] sm:$0xff] %vm225, %v7130
      %7163 = vst.msk [vmem:[#allocation3 + $0x30] sm:$0xff] %vm225, %v7131
      %7164 = vst.msk [vmem:[#allocation3 + $0x38] sm:$0xff] %vm225, %v7132
      %7165 = vst.msk [vmem:[#allocation3 + $0x40] sm:$0xff] %vm225, %v7133
      %7166 = vst.msk [vmem:[#allocation3 + $0x48] sm:$0xff] %vm225, %v7134
      %7167 = vst.msk [vmem:[#allocation3 + $0x50] sm:$0xff] %vm225, %v7135
      %7168 = vst.msk [vmem:[#allocation3 + $0x58] sm:$0xff] %vm225, %v7136
      %7169 = vst.msk [vmem:[#allocation3 + $0x60] sm:$0xff] %vm225, %v7137
      %7170 = vst.msk [vmem:[#allocation3 + $0x68] sm:$0xff] %vm225, %v7138
      %7171 = vst.msk [vmem:[#allocation3 + $0x70] sm:$0xff] %vm225, %v7139
      %7172 = vst.msk [vmem:[#allocation3 + $0x78] sm:$0xff] %vm225, %v7140
      %7173 = vst.msk [vmem:[#allocation3 + $0x80] sm:$0xff] %vm225, %v7141
      %7174 = vst.msk [vmem:[#allocation3 + $0x88] sm:$0xff] %vm225, %v7142
      %7175 = vst.msk [vmem:[#allocation3 + $0x90] sm:$0xff] %vm225, %v7143
      %7176 = vst.msk [vmem:[#allocation3 + $0x98] sm:$0xff] %vm225, %v7144
      %7177 = vst.msk [vmem:[#allocation3 + $0xa0] sm:$0xff] %vm225, %v7145
      %7178 = vst.msk [vmem:[#allocation3 + $0xa8] sm:$0xff] %vm225, %v7146
      %7179 = vst.msk [vmem:[#allocation3 + $0xb0] sm:$0xff] %vm225, %v7147
      %7180 = vst.msk [vmem:[#allocation3 + $0xb8] sm:$0xff] %vm225, %v7148
      %7181 = vst.msk [vmem:[#allocation3 + $0xc0] sm:$0xff] %vm225, %v7149
      %7182 = vst.msk [vmem:[#allocation3 + $0xc8] sm:$0xff] %vm225, %v7150
      %7183 = vst.msk [vmem:[#allocation3 + $0xd0] sm:$0xff] %vm225, %v7151
      %7184 = vst.msk [vmem:[#allocation3 + $0xd8] sm:$0xff] %vm225, %v7152
      %7185 = vst.msk [vmem:[#allocation3 + $0xe0] sm:$0xff] %vm225, %v7153
      %7186 = vst.msk [vmem:[#allocation3 + $0xe8] sm:$0xff] %vm225, %v7154
      %7187 = vst.msk [vmem:[#allocation3 + $0xf0] sm:$0xff] %vm225, %v7155
      %7188 = vst.msk [vmem:[#allocation3 + $0xf8] sm:$0xff] %vm225, %v7156
      %v7189 = vld [vmem:[%s2541 + $0x1] sm:$0xff]
      %v7190 = vld [vmem:[%s2541 + $0x9] sm:$0xff]
      %v7191 = vld [vmem:[%s2541 + $0x19] sm:$0xff]
      %v7192 = vld [vmem:[%s2541 + $0x21] sm:$0xff]
      %v7193 = vld [vmem:[%s2541 + $0x31] sm:$0xff]
      %v7194 = vld [vmem:[%s2541 + $0x39] sm:$0xff]
      %v7195 = vld [vmem:[%s2541 + $0x49] sm:$0xff]
      %v7196 = vld [vmem:[%s2541 + $0x51] sm:$0xff]
      %v7197 = vld [vmem:[%s2541 + $0x61] sm:$0xff]
      %v7198 = vld [vmem:[%s2541 + $0x69] sm:$0xff]
      %v7199 = vld [vmem:[%s2541 + $0x79] sm:$0xff]
      %v7200 = vld [vmem:[%s2541 + $0x81] sm:$0xff]
      %v7201 = vld [vmem:[%s2541 + $0x91] sm:$0xff]
      %v7202 = vld [vmem:[%s2541 + $0x99] sm:$0xff]
      %v7203 = vld [vmem:[%s2541 + $0xa9] sm:$0xff]
      %v7204 = vld [vmem:[%s2541 + $0xb1] sm:$0xff]
      %v7205 = vld [vmem:[%s2541 + $0xc1] sm:$0xff]
      %v7206 = vld [vmem:[%s2541 + $0xc9] sm:$0xff]
      %v7207 = vld [vmem:[%s2541 + $0xd9] sm:$0xff]
      %v7208 = vld [vmem:[%s2541 + $0xe1] sm:$0xff]
      %v7209 = vld [vmem:[%s2541 + $0xf1] sm:$0xff]
      %v7210 = vld [vmem:[%s2541 + $0xf9] sm:$0xff]
      %v7211 = vld [vmem:[%s2541 + $0x109] sm:$0xff]
      %v7212 = vld [vmem:[%s2541 + $0x111] sm:$0xff]
      %v7213 = vld [vmem:[%s2541 + $0x121] sm:$0xff]
      %v7214 = vld [vmem:[%s2541 + $0x129] sm:$0xff]
      %v7215 = vld [vmem:[%s2541 + $0x139] sm:$0xff]
      %v7216 = vld [vmem:[%s2541 + $0x141] sm:$0xff]
      %v7217 = vld [vmem:[%s2541 + $0x151] sm:$0xff]
      %v7218 = vld [vmem:[%s2541 + $0x159] sm:$0xff]
      %v7219 = vld [vmem:[%s2541 + $0x169] sm:$0xff]
      %v7220 = vld [vmem:[%s2541 + $0x171] sm:$0xff]
      %7253 = vrot.lane.b32.xlu0 %v7189, 4
      %v7254 = vpop.permute.xlu0 %7253
      %7255 = vrot.lane.b32.xlu0 %v7190, 4
      %v7256 = vpop.permute.xlu0 %7255
      %7257 = vrot.lane.b32.xlu0 %v7191, 4
      %v7258 = vpop.permute.xlu0 %7257
      %7259 = vrot.lane.b32.xlu0 %v7192, 4
      %v7260 = vpop.permute.xlu0 %7259
      %7261 = vrot.lane.b32.xlu0 %v7193, 4
      %v7262 = vpop.permute.xlu0 %7261
      %7263 = vrot.lane.b32.xlu0 %v7194, 4
      %v7264 = vpop.permute.xlu0 %7263
      %7265 = vrot.lane.b32.xlu0 %v7195, 4
      %v7266 = vpop.permute.xlu0 %7265
      %7267 = vrot.lane.b32.xlu0 %v7196, 4
      %v7268 = vpop.permute.xlu0 %7267
      %7269 = vrot.lane.b32.xlu0 %v7197, 4
      %v7270 = vpop.permute.xlu0 %7269
      %7271 = vrot.lane.b32.xlu0 %v7198, 4
      %v7272 = vpop.permute.xlu0 %7271
      %7273 = vrot.lane.b32.xlu0 %v7199, 4
      %v7274 = vpop.permute.xlu0 %7273
      %7275 = vrot.lane.b32.xlu0 %v7200, 4
      %v7276 = vpop.permute.xlu0 %7275
      %7277 = vrot.lane.b32.xlu0 %v7201, 4
      %v7278 = vpop.permute.xlu0 %7277
      %7279 = vrot.lane.b32.xlu0 %v7202, 4
      %v7280 = vpop.permute.xlu0 %7279
      %7281 = vrot.lane.b32.xlu0 %v7203, 4
      %v7282 = vpop.permute.xlu0 %7281
      %7283 = vrot.lane.b32.xlu0 %v7204, 4
      %v7284 = vpop.permute.xlu0 %7283
      %7285 = vrot.lane.b32.xlu0 %v7205, 4
      %v7286 = vpop.permute.xlu0 %7285
      %7287 = vrot.lane.b32.xlu0 %v7206, 4
      %v7288 = vpop.permute.xlu0 %7287
      %7289 = vrot.lane.b32.xlu0 %v7207, 4
      %v7290 = vpop.permute.xlu0 %7289
      %7291 = vrot.lane.b32.xlu0 %v7208, 4
      %v7292 = vpop.permute.xlu0 %7291
      %7293 = vrot.lane.b32.xlu0 %v7209, 4
      %v7294 = vpop.permute.xlu0 %7293
      %7295 = vrot.lane.b32.xlu0 %v7210, 4
      %v7296 = vpop.permute.xlu0 %7295
      %7297 = vrot.lane.b32.xlu0 %v7211, 4
      %v7298 = vpop.permute.xlu0 %7297
      %7299 = vrot.lane.b32.xlu0 %v7212, 4
      %v7300 = vpop.permute.xlu0 %7299
      %7301 = vrot.lane.b32.xlu0 %v7213, 4
      %v7302 = vpop.permute.xlu0 %7301
      %7303 = vrot.lane.b32.xlu0 %v7214, 4
      %v7304 = vpop.permute.xlu0 %7303
      %7305 = vrot.lane.b32.xlu0 %v7215, 4
      %v7306 = vpop.permute.xlu0 %7305
      %7307 = vrot.lane.b32.xlu0 %v7216, 4
      %v7308 = vpop.permute.xlu0 %7307
      %7309 = vrot.lane.b32.xlu0 %v7217, 4
      %v7310 = vpop.permute.xlu0 %7309
      %7311 = vrot.lane.b32.xlu0 %v7218, 4
      %v7312 = vpop.permute.xlu0 %7311
      %7313 = vrot.lane.b32.xlu0 %v7219, 4
      %v7314 = vpop.permute.xlu0 %7313
      %7315 = vrot.lane.b32.xlu0 %v7220, 4
      %v7316 = vpop.permute.xlu0 %7315
      %7349 = vst.msk [vmem:[#allocation3] sm:$0xff] %vm570, %v7254
      %7350 = vst.msk [vmem:[#allocation3 + $0x8] sm:$0xff] %vm570, %v7256
      %7351 = vst.msk [vmem:[#allocation3 + $0x10] sm:$0xff] %vm570, %v7258
      %7352 = vst.msk [vmem:[#allocation3 + $0x18] sm:$0xff] %vm570, %v7260
      %7353 = vst.msk [vmem:[#allocation3 + $0x20] sm:$0xff] %vm570, %v7262
      %7354 = vst.msk [vmem:[#allocation3 + $0x28] sm:$0xff] %vm570, %v7264
      %7355 = vst.msk [vmem:[#allocation3 + $0x30] sm:$0xff] %vm570, %v7266
      %7356 = vst.msk [vmem:[#allocation3 + $0x38] sm:$0xff] %vm570, %v7268
      %7357 = vst.msk [vmem:[#allocation3 + $0x40] sm:$0xff] %vm570, %v7270
      %7358 = vst.msk [vmem:[#allocation3 + $0x48] sm:$0xff] %vm570, %v7272
      %7359 = vst.msk [vmem:[#allocation3 + $0x50] sm:$0xff] %vm570, %v7274
      %7360 = vst.msk [vmem:[#allocation3 + $0x58] sm:$0xff] %vm570, %v7276
      %7361 = vst.msk [vmem:[#allocation3 + $0x60] sm:$0xff] %vm570, %v7278
      %7362 = vst.msk [vmem:[#allocation3 + $0x68] sm:$0xff] %vm570, %v7280
      %7363 = vst.msk [vmem:[#allocation3 + $0x70] sm:$0xff] %vm570, %v7282
      %7364 = vst.msk [vmem:[#allocation3 + $0x78] sm:$0xff] %vm570, %v7284
      %7365 = vst.msk [vmem:[#allocation3 + $0x80] sm:$0xff] %vm570, %v7286
      %7366 = vst.msk [vmem:[#allocation3 + $0x88] sm:$0xff] %vm570, %v7288
      %7367 = vst.msk [vmem:[#allocation3 + $0x90] sm:$0xff] %vm570, %v7290
      %7368 = vst.msk [vmem:[#allocation3 + $0x98] sm:$0xff] %vm570, %v7292
      %7369 = vst.msk [vmem:[#allocation3 + $0xa0] sm:$0xff] %vm570, %v7294
      %7370 = vst.msk [vmem:[#allocation3 + $0xa8] sm:$0xff] %vm570, %v7296
      %7371 = vst.msk [vmem:[#allocation3 + $0xb0] sm:$0xff] %vm570, %v7298
      %7372 = vst.msk [vmem:[#allocation3 + $0xb8] sm:$0xff] %vm570, %v7300
      %7373 = vst.msk [vmem:[#allocation3 + $0xc0] sm:$0xff] %vm570, %v7302
      %7374 = vst.msk [vmem:[#allocation3 + $0xc8] sm:$0xff] %vm570, %v7304
      %7375 = vst.msk [vmem:[#allocation3 + $0xd0] sm:$0xff] %vm570, %v7306
      %7376 = vst.msk [vmem:[#allocation3 + $0xd8] sm:$0xff] %vm570, %v7308
      %7377 = vst.msk [vmem:[#allocation3 + $0xe0] sm:$0xff] %vm570, %v7310
      %7378 = vst.msk [vmem:[#allocation3 + $0xe8] sm:$0xff] %vm570, %v7312
      %7379 = vst.msk [vmem:[#allocation3 + $0xf0] sm:$0xff] %vm570, %v7314
      %7380 = vst.msk [vmem:[#allocation3 + $0xf8] sm:$0xff] %vm570, %v7316
      %v7381 = vld [vmem:[%s2702 + $0x1] sm:$0xff]
      %v7382 = vld [vmem:[%s2702 + $0x9] sm:$0xff]
      %v7383 = vld [vmem:[%s2702 + $0x19] sm:$0xff]
      %v7384 = vld [vmem:[%s2702 + $0x21] sm:$0xff]
      %v7385 = vld [vmem:[%s2702 + $0x31] sm:$0xff]
      %v7386 = vld [vmem:[%s2702 + $0x39] sm:$0xff]
      %v7387 = vld [vmem:[%s2702 + $0x49] sm:$0xff]
      %v7388 = vld [vmem:[%s2702 + $0x51] sm:$0xff]
      %v7389 = vld [vmem:[%s2702 + $0x61] sm:$0xff]
      %v7390 = vld [vmem:[%s2702 + $0x69] sm:$0xff]
      %v7391 = vld [vmem:[%s2702 + $0x79] sm:$0xff]
      %v7392 = vld [vmem:[%s2702 + $0x81] sm:$0xff]
      %v7393 = vld [vmem:[%s2702 + $0x91] sm:$0xff]
      %v7394 = vld [vmem:[%s2702 + $0x99] sm:$0xff]
      %v7395 = vld [vmem:[%s2702 + $0xa9] sm:$0xff]
      %v7396 = vld [vmem:[%s2702 + $0xb1] sm:$0xff]
      %v7397 = vld [vmem:[%s2702 + $0xc1] sm:$0xff]
      %v7398 = vld [vmem:[%s2702 + $0xc9] sm:$0xff]
      %v7399 = vld [vmem:[%s2702 + $0xd9] sm:$0xff]
      %v7400 = vld [vmem:[%s2702 + $0xe1] sm:$0xff]
      %v7401 = vld [vmem:[%s2702 + $0xf1] sm:$0xff]
      %v7402 = vld [vmem:[%s2702 + $0xf9] sm:$0xff]
      %v7403 = vld [vmem:[%s2702 + $0x109] sm:$0xff]
      %v7404 = vld [vmem:[%s2702 + $0x111] sm:$0xff]
      %v7405 = vld [vmem:[%s2702 + $0x121] sm:$0xff]
      %v7406 = vld [vmem:[%s2702 + $0x129] sm:$0xff]
      %v7407 = vld [vmem:[%s2702 + $0x139] sm:$0xff]
      %v7408 = vld [vmem:[%s2702 + $0x141] sm:$0xff]
      %v7409 = vld [vmem:[%s2702 + $0x151] sm:$0xff]
      %v7410 = vld [vmem:[%s2702 + $0x159] sm:$0xff]
      %v7411 = vld [vmem:[%s2702 + $0x169] sm:$0xff]
      %v7412 = vld [vmem:[%s2702 + $0x171] sm:$0xff]
      %7445 = vrot.lane.b32.xlu0 %v7381, 8
      %v7446 = vpop.permute.xlu0 %7445
      %7447 = vrot.lane.b32.xlu0 %v7382, 8
      %v7448 = vpop.permute.xlu0 %7447
      %7449 = vrot.lane.b32.xlu0 %v7383, 8
      %v7450 = vpop.permute.xlu0 %7449
      %7451 = vrot.lane.b32.xlu0 %v7384, 8
      %v7452 = vpop.permute.xlu0 %7451
      %7453 = vrot.lane.b32.xlu0 %v7385, 8
      %v7454 = vpop.permute.xlu0 %7453
      %7455 = vrot.lane.b32.xlu0 %v7386, 8
      %v7456 = vpop.permute.xlu0 %7455
      %7457 = vrot.lane.b32.xlu0 %v7387, 8
      %v7458 = vpop.permute.xlu0 %7457
      %7459 = vrot.lane.b32.xlu0 %v7388, 8
      %v7460 = vpop.permute.xlu0 %7459
      %7461 = vrot.lane.b32.xlu0 %v7389, 8
      %v7462 = vpop.permute.xlu0 %7461
      %7463 = vrot.lane.b32.xlu0 %v7390, 8
      %v7464 = vpop.permute.xlu0 %7463
      %7465 = vrot.lane.b32.xlu0 %v7391, 8
      %v7466 = vpop.permute.xlu0 %7465
      %7467 = vrot.lane.b32.xlu0 %v7392, 8
      %v7468 = vpop.permute.xlu0 %7467
      %7469 = vrot.lane.b32.xlu0 %v7393, 8
      %v7470 = vpop.permute.xlu0 %7469
      %7471 = vrot.lane.b32.xlu0 %v7394, 8
      %v7472 = vpop.permute.xlu0 %7471
      %7473 = vrot.lane.b32.xlu0 %v7395, 8
      %v7474 = vpop.permute.xlu0 %7473
      %7475 = vrot.lane.b32.xlu0 %v7396, 8
      %v7476 = vpop.permute.xlu0 %7475
      %7477 = vrot.lane.b32.xlu0 %v7397, 8
      %v7478 = vpop.permute.xlu0 %7477
      %7479 = vrot.lane.b32.xlu0 %v7398, 8
      %v7480 = vpop.permute.xlu0 %7479
      %7481 = vrot.lane.b32.xlu0 %v7399, 8
      %v7482 = vpop.permute.xlu0 %7481
      %7483 = vrot.lane.b32.xlu0 %v7400, 8
      %v7484 = vpop.permute.xlu0 %7483
      %7485 = vrot.lane.b32.xlu0 %v7401, 8
      %v7486 = vpop.permute.xlu0 %7485
      %7487 = vrot.lane.b32.xlu0 %v7402, 8
      %v7488 = vpop.permute.xlu0 %7487
      %7489 = vrot.lane.b32.xlu0 %v7403, 8
      %v7490 = vpop.permute.xlu0 %7489
      %7491 = vrot.lane.b32.xlu0 %v7404, 8
      %v7492 = vpop.permute.xlu0 %7491
      %7493 = vrot.lane.b32.xlu0 %v7405, 8
      %v7494 = vpop.permute.xlu0 %7493
      %7495 = vrot.lane.b32.xlu0 %v7406, 8
      %v7496 = vpop.permute.xlu0 %7495
      %7497 = vrot.lane.b32.xlu0 %v7407, 8
      %v7498 = vpop.permute.xlu0 %7497
      %7499 = vrot.lane.b32.xlu0 %v7408, 8
      %v7500 = vpop.permute.xlu0 %7499
      %7501 = vrot.lane.b32.xlu0 %v7409, 8
      %v7502 = vpop.permute.xlu0 %7501
      %7503 = vrot.lane.b32.xlu0 %v7410, 8
      %v7504 = vpop.permute.xlu0 %7503
      %7505 = vrot.lane.b32.xlu0 %v7411, 8
      %v7506 = vpop.permute.xlu0 %7505
      %7507 = vrot.lane.b32.xlu0 %v7412, 8
      %v7508 = vpop.permute.xlu0 %7507
      %7541 = vst.msk [vmem:[#allocation3] sm:$0xff] %vm763, %v7446
      %7542 = vst.msk [vmem:[#allocation3 + $0x8] sm:$0xff] %vm763, %v7448
      %7543 = vst.msk [vmem:[#allocation3 + $0x10] sm:$0xff] %vm763, %v7450
      %7544 = vst.msk [vmem:[#allocation3 + $0x18] sm:$0xff] %vm763, %v7452
      %7545 = vst.msk [vmem:[#allocation3 + $0x20] sm:$0xff] %vm763, %v7454
      %7546 = vst.msk [vmem:[#allocation3 + $0x28] sm:$0xff] %vm763, %v7456
      %7547 = vst.msk [vmem:[#allocation3 + $0x30] sm:$0xff] %vm763, %v7458
      %7548 = vst.msk [vmem:[#allocation3 + $0x38] sm:$0xff] %vm763, %v7460
      %7549 = vst.msk [vmem:[#allocation3 + $0x40] sm:$0xff] %vm763, %v7462
      %7550 = vst.msk [vmem:[#allocation3 + $0x48] sm:$0xff] %vm763, %v7464
      %7551 = vst.msk [vmem:[#allocation3 + $0x50] sm:$0xff] %vm763, %v7466
      %7552 = vst.msk [vmem:[#allocation3 + $0x58] sm:$0xff] %vm763, %v7468
      %7553 = vst.msk [vmem:[#allocation3 + $0x60] sm:$0xff] %vm763, %v7470
      %7554 = vst.msk [vmem:[#allocation3 + $0x68] sm:$0xff] %vm763, %v7472
      %7555 = vst.msk [vmem:[#allocation3 + $0x70] sm:$0xff] %vm763, %v7474
      %7556 = vst.msk [vmem:[#allocation3 + $0x78] sm:$0xff] %vm763, %v7476
      %7557 = vst.msk [vmem:[#allocation3 + $0x80] sm:$0xff] %vm763, %v7478
      %7558 = vst.msk [vmem:[#allocation3 + $0x88] sm:$0xff] %vm763, %v7480
      %7559 = vst.msk [vmem:[#allocation3 + $0x90] sm:$0xff] %vm763, %v7482
      %7560 = vst.msk [vmem:[#allocation3 + $0x98] sm:$0xff] %vm763, %v7484
      %7561 = vst.msk [vmem:[#allocation3 + $0xa0] sm:$0xff] %vm763, %v7486
      %7562 = vst.msk [vmem:[#allocation3 + $0xa8] sm:$0xff] %vm763, %v7488
      %7563 = vst.msk [vmem:[#allocation3 + $0xb0] sm:$0xff] %vm763, %v7490
      %7564 = vst.msk [vmem:[#allocation3 + $0xb8] sm:$0xff] %vm763, %v7492
      %7565 = vst.msk [vmem:[#allocation3 + $0xc0] sm:$0xff] %vm763, %v7494
      %7566 = vst.msk [vmem:[#allocation3 + $0xc8] sm:$0xff] %vm763, %v7496
      %7567 = vst.msk [vmem:[#allocation3 + $0xd0] sm:$0xff] %vm763, %v7498
      %7568 = vst.msk [vmem:[#allocation3 + $0xd8] sm:$0xff] %vm763, %v7500
      %7569 = vst.msk [vmem:[#allocation3 + $0xe0] sm:$0xff] %vm763, %v7502
      %7570 = vst.msk [vmem:[#allocation3 + $0xe8] sm:$0xff] %vm763, %v7504
      %7571 = vst.msk [vmem:[#allocation3 + $0xf0] sm:$0xff] %vm763, %v7506
      %7572 = vst.msk [vmem:[#allocation3 + $0xf8] sm:$0xff] %vm763, %v7508
      %v7573 = vld [vmem:[%s2960] sm:$0xff]
      %v7574 = vld [vmem:[%s2960 + $0x8] sm:$0xff]
      %v7575 = vld [vmem:[%s2960 + $0x18] sm:$0xff]
      %v7576 = vld [vmem:[%s2960 + $0x20] sm:$0xff]
      %v7577 = vld [vmem:[%s2960 + $0x30] sm:$0xff]
      %v7578 = vld [vmem:[%s2960 + $0x38] sm:$0xff]
      %v7579 = vld [vmem:[%s2960 + $0x48] sm:$0xff]
      %v7580 = vld [vmem:[%s2960 + $0x50] sm:$0xff]
      %v7581 = vld [vmem:[%s2960 + $0x60] sm:$0xff]
      %v7582 = vld [vmem:[%s2960 + $0x68] sm:$0xff]
      %v7583 = vld [vmem:[%s2960 + $0x78] sm:$0xff]
      %v7584 = vld [vmem:[%s2960 + $0x80] sm:$0xff]
      %v7585 = vld [vmem:[%s2960 + $0x90] sm:$0xff]
      %v7586 = vld [vmem:[%s2960 + $0x98] sm:$0xff]
      %v7587 = vld [vmem:[%s2960 + $0xa8] sm:$0xff]
      %v7588 = vld [vmem:[%s2960 + $0xb0] sm:$0xff]
      %v7589 = vld [vmem:[%s2960 + $0xc0] sm:$0xff]
      %v7590 = vld [vmem:[%s2960 + $0xc8] sm:$0xff]
      %v7591 = vld [vmem:[%s2960 + $0xd8] sm:$0xff]
      %v7592 = vld [vmem:[%s2960 + $0xe0] sm:$0xff]
      %v7593 = vld [vmem:[%s2960 + $0xf0] sm:$0xff]
      %v7594 = vld [vmem:[%s2960 + $0xf8] sm:$0xff]
      %v7595 = vld [vmem:[%s2960 + $0x108] sm:$0xff]
      %v7596 = vld [vmem:[%s2960 + $0x110] sm:$0xff]
      %v7597 = vld [vmem:[%s2960 + $0x120] sm:$0xff]
      %v7598 = vld [vmem:[%s2960 + $0x128] sm:$0xff]
      %v7599 = vld [vmem:[%s2960 + $0x138] sm:$0xff]
      %v7600 = vld [vmem:[%s2960 + $0x140] sm:$0xff]
      %v7601 = vld [vmem:[%s2960 + $0x150] sm:$0xff]
      %v7602 = vld [vmem:[%s2960 + $0x158] sm:$0xff]
      %v7603 = vld [vmem:[%s2960 + $0x168] sm:$0xff]
      %v7604 = vld [vmem:[%s2960 + $0x170] sm:$0xff]
      %7637 = vrot.lane.b32.xlu0 %v7573, 12
      %v7638 = vpop.permute.xlu0 %7637
      %7639 = vrot.lane.b32.xlu0 %v7574, 12
      %v7640 = vpop.permute.xlu0 %7639
      %7641 = vrot.lane.b32.xlu0 %v7575, 12
      %v7642 = vpop.permute.xlu0 %7641
      %7643 = vrot.lane.b32.xlu0 %v7576, 12
      %v7644 = vpop.permute.xlu0 %7643
      %7645 = vrot.lane.b32.xlu0 %v7577, 12
      %v7646 = vpop.permute.xlu0 %7645
      %7647 = vrot.lane.b32.xlu0 %v7578, 12
      %v7648 = vpop.permute.xlu0 %7647
      %7649 = vrot.lane.b32.xlu0 %v7579, 12
      %v7650 = vpop.permute.xlu0 %7649
      %7651 = vrot.lane.b32.xlu0 %v7580, 12
      %v7652 = vpop.permute.xlu0 %7651
      %7653 = vrot.lane.b32.xlu0 %v7581, 12
      %v7654 = vpop.permute.xlu0 %7653
      %7655 = vrot.lane.b32.xlu0 %v7582, 12
      %v7656 = vpop.permute.xlu0 %7655
      %7657 = vrot.lane.b32.xlu0 %v7583, 12
      %v7658 = vpop.permute.xlu0 %7657
      %7659 = vrot.lane.b32.xlu0 %v7584, 12
      %v7660 = vpop.permute.xlu0 %7659
      %7661 = vrot.lane.b32.xlu0 %v7585, 12
      %v7662 = vpop.permute.xlu0 %7661
      %7663 = vrot.lane.b32.xlu0 %v7586, 12
      %v7664 = vpop.permute.xlu0 %7663
      %7665 = vrot.lane.b32.xlu0 %v7587, 12
      %v7666 = vpop.permute.xlu0 %7665
      %7667 = vrot.lane.b32.xlu0 %v7588, 12
      %v7668 = vpop.permute.xlu0 %7667
      %7669 = vrot.lane.b32.xlu0 %v7589, 12
      %v7670 = vpop.permute.xlu0 %7669
      %7671 = vrot.lane.b32.xlu0 %v7590, 12
      %v7672 = vpop.permute.xlu0 %7671
      %7673 = vrot.lane.b32.xlu0 %v7591, 12
      %v7674 = vpop.permute.xlu0 %7673
      %7675 = vrot.lane.b32.xlu0 %v7592, 12
      %v7676 = vpop.permute.xlu0 %7675
      %7677 = vrot.lane.b32.xlu0 %v7593, 12
      %v7678 = vpop.permute.xlu0 %7677
      %7679 = vrot.lane.b32.xlu0 %v7594, 12
      %v7680 = vpop.permute.xlu0 %7679
      %7681 = vrot.lane.b32.xlu0 %v7595, 12
      %v7682 = vpop.permute.xlu0 %7681
      %7683 = vrot.lane.b32.xlu0 %v7596, 12
      %v7684 = vpop.permute.xlu0 %7683
      %7685 = vrot.lane.b32.xlu0 %v7597, 12
      %v7686 = vpop.permute.xlu0 %7685
      %7687 = vrot.lane.b32.xlu0 %v7598, 12
      %v7688 = vpop.permute.xlu0 %7687
      %7689 = vrot.lane.b32.xlu0 %v7599, 12
      %v7690 = vpop.permute.xlu0 %7689
      %7691 = vrot.lane.b32.xlu0 %v7600, 12
      %v7692 = vpop.permute.xlu0 %7691
      %7693 = vrot.lane.b32.xlu0 %v7601, 12
      %v7694 = vpop.permute.xlu0 %7693
      %7695 = vrot.lane.b32.xlu0 %v7602, 12
      %v7696 = vpop.permute.xlu0 %7695
      %7697 = vrot.lane.b32.xlu0 %v7603, 12
      %v7698 = vpop.permute.xlu0 %7697
      %7699 = vrot.lane.b32.xlu0 %v7604, 12
      %v7700 = vpop.permute.xlu0 %7699
      %7733 = vst.msk [vmem:[#allocation3] sm:$0xff] %vm956, %v7638
      %7734 = vst.msk [vmem:[#allocation3 + $0x8] sm:$0xff] %vm956, %v7640
      %7735 = vst.msk [vmem:[#allocation3 + $0x10] sm:$0xff] %vm956, %v7642
      %7736 = vst.msk [vmem:[#allocation3 + $0x18] sm:$0xff] %vm956, %v7644
      %7737 = vst.msk [vmem:[#allocation3 + $0x20] sm:$0xff] %vm956, %v7646
      %7738 = vst.msk [vmem:[#allocation3 + $0x28] sm:$0xff] %vm956, %v7648
      %7739 = vst.msk [vmem:[#allocation3 + $0x30] sm:$0xff] %vm956, %v7650
      %7740 = vst.msk [vmem:[#allocation3 + $0x38] sm:$0xff] %vm956, %v7652
      %7741 = vst.msk [vmem:[#allocation3 + $0x40] sm:$0xff] %vm956, %v7654
      %7742 = vst.msk [vmem:[#allocation3 + $0x48] sm:$0xff] %vm956, %v7656
      %7743 = vst.msk [vmem:[#allocation3 + $0x50] sm:$0xff] %vm956, %v7658
      %7744 = vst.msk [vmem:[#allocation3 + $0x58] sm:$0xff] %vm956, %v7660
      %7745 = vst.msk [vmem:[#allocation3 + $0x60] sm:$0xff] %vm956, %v7662
      %7746 = vst.msk [vmem:[#allocation3 + $0x68] sm:$0xff] %vm956, %v7664
      %7747 = vst.msk [vmem:[#allocation3 + $0x70] sm:$0xff] %vm956, %v7666
      %7748 = vst.msk [vmem:[#allocation3 + $0x78] sm:$0xff] %vm956, %v7668
      %7749 = vst.msk [vmem:[#allocation3 + $0x80] sm:$0xff] %vm956, %v7670
      %7750 = vst.msk [vmem:[#allocation3 + $0x88] sm:$0xff] %vm956, %v7672
      %7751 = vst.msk [vmem:[#allocation3 + $0x90] sm:$0xff] %vm956, %v7674
      %7752 = vst.msk [vmem:[#allocation3 + $0x98] sm:$0xff] %vm956, %v7676
      %7753 = vst.msk [vmem:[#allocation3 + $0xa0] sm:$0xff] %vm956, %v7678
      %7754 = vst.msk [vmem:[#allocation3 + $0xa8] sm:$0xff] %vm956, %v7680
      %7755 = vst.msk [vmem:[#allocation3 + $0xb0] sm:$0xff] %vm956, %v7682
      %7756 = vst.msk [vmem:[#allocation3 + $0xb8] sm:$0xff] %vm956, %v7684
      %7757 = vst.msk [vmem:[#allocation3 + $0xc0] sm:$0xff] %vm956, %v7686
      %7758 = vst.msk [vmem:[#allocation3 + $0xc8] sm:$0xff] %vm956, %v7688
      %7759 = vst.msk [vmem:[#allocation3 + $0xd0] sm:$0xff] %vm956, %v7690
      %7760 = vst.msk [vmem:[#allocation3 + $0xd8] sm:$0xff] %vm956, %v7692
      %7761 = vst.msk [vmem:[#allocation3 + $0xe0] sm:$0xff] %vm956, %v7694
      %7762 = vst.msk [vmem:[#allocation3 + $0xe8] sm:$0xff] %vm956, %v7696
      %7763 = vst.msk [vmem:[#allocation3 + $0xf0] sm:$0xff] %vm956, %v7698
      %7764 = vst.msk [vmem:[#allocation3 + $0xf8] sm:$0xff] %vm956, %v7700
      %v7765 = vld [vmem:[%s2831 + $0x1] sm:$0xff]
      %v7766 = vld [vmem:[%s2831 + $0x9] sm:$0xff]
      %v7767 = vld [vmem:[%s2831 + $0x19] sm:$0xff]
      %v7768 = vld [vmem:[%s2831 + $0x21] sm:$0xff]
      %v7769 = vld [vmem:[%s2831 + $0x31] sm:$0xff]
      %v7770 = vld [vmem:[%s2831 + $0x39] sm:$0xff]
      %v7771 = vld [vmem:[%s2831 + $0x49] sm:$0xff]
      %v7772 = vld [vmem:[%s2831 + $0x51] sm:$0xff]
      %v7773 = vld [vmem:[%s2831 + $0x61] sm:$0xff]
      %v7774 = vld [vmem:[%s2831 + $0x69] sm:$0xff]
      %v7775 = vld [vmem:[%s2831 + $0x79] sm:$0xff]
      %v7776 = vld [vmem:[%s2831 + $0x81] sm:$0xff]
      %v7777 = vld [vmem:[%s2831 + $0x91] sm:$0xff]
      %v7778 = vld [vmem:[%s2831 + $0x99] sm:$0xff]
      %v7779 = vld [vmem:[%s2831 + $0xa9] sm:$0xff]
      %v7780 = vld [vmem:[%s2831 + $0xb1] sm:$0xff]
      %v7781 = vld [vmem:[%s2831 + $0xc1] sm:$0xff]
      %v7782 = vld [vmem:[%s2831 + $0xc9] sm:$0xff]
      %v7783 = vld [vmem:[%s2831 + $0xd9] sm:$0xff]
      %v7784 = vld [vmem:[%s2831 + $0xe1] sm:$0xff]
      %v7785 = vld [vmem:[%s2831 + $0xf1] sm:$0xff]
      %v7786 = vld [vmem:[%s2831 + $0xf9] sm:$0xff]
      %v7787 = vld [vmem:[%s2831 + $0x109] sm:$0xff]
      %v7788 = vld [vmem:[%s2831 + $0x111] sm:$0xff]
      %v7789 = vld [vmem:[%s2831 + $0x121] sm:$0xff]
      %v7790 = vld [vmem:[%s2831 + $0x129] sm:$0xff]
      %v7791 = vld [vmem:[%s2831 + $0x139] sm:$0xff]
      %v7792 = vld [vmem:[%s2831 + $0x141] sm:$0xff]
      %v7793 = vld [vmem:[%s2831 + $0x151] sm:$0xff]
      %v7794 = vld [vmem:[%s2831 + $0x159] sm:$0xff]
      %v7795 = vld [vmem:[%s2831 + $0x169] sm:$0xff]
      %v7796 = vld [vmem:[%s2831 + $0x171] sm:$0xff]
      %7829 = vrot.lane.b32.xlu0 %v7765, 16
      %v7830 = vpop.permute.xlu0 %7829
      %7831 = vrot.lane.b32.xlu0 %v7766, 16
      %v7832 = vpop.permute.xlu0 %7831
      %7833 = vrot.lane.b32.xlu0 %v7767, 16
      %v7834 = vpop.permute.xlu0 %7833
      %7835 = vrot.lane.b32.xlu0 %v7768, 16
      %v7836 = vpop.permute.xlu0 %7835
      %7837 = vrot.lane.b32.xlu0 %v7769, 16
      %v7838 = vpop.permute.xlu0 %7837
      %7839 = vrot.lane.b32.xlu0 %v7770, 16
      %v7840 = vpop.permute.xlu0 %7839
      %7841 = vrot.lane.b32.xlu0 %v7771, 16
      %v7842 = vpop.permute.xlu0 %7841
      %7843 = vrot.lane.b32.xlu0 %v7772, 16
      %v7844 = vpop.permute.xlu0 %7843
      %7845 = vrot.lane.b32.xlu0 %v7773, 16
      %v7846 = vpop.permute.xlu0 %7845
      %7847 = vrot.lane.b32.xlu0 %v7774, 16
      %v7848 = vpop.permute.xlu0 %7847
      %7849 = vrot.lane.b32.xlu0 %v7775, 16
      %v7850 = vpop.permute.xlu0 %7849
      %7851 = vrot.lane.b32.xlu0 %v7776, 16
      %v7852 = vpop.permute.xlu0 %7851
      %7853 = vrot.lane.b32.xlu0 %v7777, 16
      %v7854 = vpop.permute.xlu0 %7853
      %7855 = vrot.lane.b32.xlu0 %v7778, 16
      %v7856 = vpop.permute.xlu0 %7855
      %7857 = vrot.lane.b32.xlu0 %v7779, 16
      %v7858 = vpop.permute.xlu0 %7857
      %7859 = vrot.lane.b32.xlu0 %v7780, 16
      %v7860 = vpop.permute.xlu0 %7859
      %7861 = vrot.lane.b32.xlu0 %v7781, 16
      %v7862 = vpop.permute.xlu0 %7861
      %7863 = vrot.lane.b32.xlu0 %v7782, 16
      %v7864 = vpop.permute.xlu0 %7863
      %7865 = vrot.lane.b32.xlu0 %v7783, 16
      %v7866 = vpop.permute.xlu0 %7865
      %7867 = vrot.lane.b32.xlu0 %v7784, 16
      %v7868 = vpop.permute.xlu0 %7867
      %7869 = vrot.lane.b32.xlu0 %v7785, 16
      %v7870 = vpop.permute.xlu0 %7869
      %7871 = vrot.lane.b32.xlu0 %v7786, 16
      %v7872 = vpop.permute.xlu0 %7871
      %7873 = vrot.lane.b32.xlu0 %v7787, 16
      %v7874 = vpop.permute.xlu0 %7873
      %7875 = vrot.lane.b32.xlu0 %v7788, 16
      %v7876 = vpop.permute.xlu0 %7875
      %7877 = vrot.lane.b32.xlu0 %v7789, 16
      %v7878 = vpop.permute.xlu0 %7877
      %7879 = vrot.lane.b32.xlu0 %v7790, 16
      %v7880 = vpop.permute.xlu0 %7879
      %7881 = vrot.lane.b32.xlu0 %v7791, 16
      %v7882 = vpop.permute.xlu0 %7881
      %7883 = vrot.lane.b32.xlu0 %v7792, 16
      %v7884 = vpop.permute.xlu0 %7883
      %7885 = vrot.lane.b32.xlu0 %v7793, 16
      %v7886 = vpop.permute.xlu0 %7885
      %7887 = vrot.lane.b32.xlu0 %v7794, 16
      %v7888 = vpop.permute.xlu0 %7887
      %7889 = vrot.lane.b32.xlu0 %v7795, 16
      %v7890 = vpop.permute.xlu0 %7889
      %7891 = vrot.lane.b32.xlu0 %v7796, 16
      %v7892 = vpop.permute.xlu0 %7891
      %7925 = vst.msk [vmem:[#allocation3] sm:$0xff] %vm1149, %v7830
      %7926 = vst.msk [vmem:[#allocation3 + $0x8] sm:$0xff] %vm1149, %v7832
      %7927 = vst.msk [vmem:[#allocation3 + $0x10] sm:$0xff] %vm1149, %v7834
      %7928 = vst.msk [vmem:[#allocation3 + $0x18] sm:$0xff] %vm1149, %v7836
      %7929 = vst.msk [vmem:[#allocation3 + $0x20] sm:$0xff] %vm1149, %v7838
      %7930 = vst.msk [vmem:[#allocation3 + $0x28] sm:$0xff] %vm1149, %v7840
      %7931 = vst.msk [vmem:[#allocation3 + $0x30] sm:$0xff] %vm1149, %v7842
      %7932 = vst.msk [vmem:[#allocation3 + $0x38] sm:$0xff] %vm1149, %v7844
      %7933 = vst.msk [vmem:[#allocation3 + $0x40] sm:$0xff] %vm1149, %v7846
      %7934 = vst.msk [vmem:[#allocation3 + $0x48] sm:$0xff] %vm1149, %v7848
      %7935 = vst.msk [vmem:[#allocation3 + $0x50] sm:$0xff] %vm1149, %v7850
      %7936 = vst.msk [vmem:[#allocation3 + $0x58] sm:$0xff] %vm1149, %v7852
      %7937 = vst.msk [vmem:[#allocation3 + $0x60] sm:$0xff] %vm1149, %v7854
      %7938 = vst.msk [vmem:[#allocation3 + $0x68] sm:$0xff] %vm1149, %v7856
      %7939 = vst.msk [vmem:[#allocation3 + $0x70] sm:$0xff] %vm1149, %v7858
      %7940 = vst.msk [vmem:[#allocation3 + $0x78] sm:$0xff] %vm1149, %v7860
      %7941 = vst.msk [vmem:[#allocation3 + $0x80] sm:$0xff] %vm1149, %v7862
      %7942 = vst.msk [vmem:[#allocation3 + $0x88] sm:$0xff] %vm1149, %v7864
      %7943 = vst.msk [vmem:[#allocation3 + $0x90] sm:$0xff] %vm1149, %v7866
      %7944 = vst.msk [vmem:[#allocation3 + $0x98] sm:$0xff] %vm1149, %v7868
      %7945 = vst.msk [vmem:[#allocation3 + $0xa0] sm:$0xff] %vm1149, %v7870
      %7946 = vst.msk [vmem:[#allocation3 + $0xa8] sm:$0xff] %vm1149, %v7872
      %7947 = vst.msk [vmem:[#allocation3 + $0xb0] sm:$0xff] %vm1149, %v7874
      %7948 = vst.msk [vmem:[#allocation3 + $0xb8] sm:$0xff] %vm1149, %v7876
      %7949 = vst.msk [vmem:[#allocation3 + $0xc0] sm:$0xff] %vm1149, %v7878
      %7950 = vst.msk [vmem:[#allocation3 + $0xc8] sm:$0xff] %vm1149, %v7880
      %7951 = vst.msk [vmem:[#allocation3 + $0xd0] sm:$0xff] %vm1149, %v7882
      %7952 = vst.msk [vmem:[#allocation3 + $0xd8] sm:$0xff] %vm1149, %v7884
      %7953 = vst.msk [vmem:[#allocation3 + $0xe0] sm:$0xff] %vm1149, %v7886
      %7954 = vst.msk [vmem:[#allocation3 + $0xe8] sm:$0xff] %vm1149, %v7888
      %7955 = vst.msk [vmem:[#allocation3 + $0xf0] sm:$0xff] %vm1149, %v7890
      %7956 = vst.msk [vmem:[#allocation3 + $0xf8] sm:$0xff] %vm1149, %v7892
      %v7957 = vld [vmem:[%s2960 + $0x1] sm:$0xff]
      %v7958 = vld [vmem:[%s2960 + $0x9] sm:$0xff]
      %v7959 = vld [vmem:[%s2960 + $0x19] sm:$0xff]
      %v7960 = vld [vmem:[%s2960 + $0x21] sm:$0xff]
      %v7961 = vld [vmem:[%s2960 + $0x31] sm:$0xff]
      %v7962 = vld [vmem:[%s2960 + $0x39] sm:$0xff]
      %v7963 = vld [vmem:[%s2960 + $0x49] sm:$0xff]
      %v7964 = vld [vmem:[%s2960 + $0x51] sm:$0xff]
      %v7965 = vld [vmem:[%s2960 + $0x61] sm:$0xff]
      %v7966 = vld [vmem:[%s2960 + $0x69] sm:$0xff]
      %v7967 = vld [vmem:[%s2960 + $0x79] sm:$0xff]
      %v7968 = vld [vmem:[%s2960 + $0x81] sm:$0xff]
      %v7969 = vld [vmem:[%s2960 + $0x91] sm:$0xff]
      %v7970 = vld [vmem:[%s2960 + $0x99] sm:$0xff]
      %v7971 = vld [vmem:[%s2960 + $0xa9] sm:$0xff]
      %v7972 = vld [vmem:[%s2960 + $0xb1] sm:$0xff]
      %v7973 = vld [vmem:[%s2960 + $0xc1] sm:$0xff]
      %v7974 = vld [vmem:[%s2960 + $0xc9] sm:$0xff]
      %v7975 = vld [vmem:[%s2960 + $0xd9] sm:$0xff]
      %v7976 = vld [vmem:[%s2960 + $0xe1] sm:$0xff]
      %v7977 = vld [vmem:[%s2960 + $0xf1] sm:$0xff]
      %v7978 = vld [vmem:[%s2960 + $0xf9] sm:$0xff]
      %v7979 = vld [vmem:[%s2960 + $0x109] sm:$0xff]
      %v7980 = vld [vmem:[%s2960 + $0x111] sm:$0xff]
      %v7981 = vld [vmem:[%s2960 + $0x121] sm:$0xff]
      %v7982 = vld [vmem:[%s2960 + $0x129] sm:$0xff]
      %v7983 = vld [vmem:[%s2960 + $0x139] sm:$0xff]
      %v7984 = vld [vmem:[%s2960 + $0x141] sm:$0xff]
      %v7985 = vld [vmem:[%s2960 + $0x151] sm:$0xff]
      %v7986 = vld [vmem:[%s2960 + $0x159] sm:$0xff]
      %v7987 = vld [vmem:[%s2960 + $0x169] sm:$0xff]
      %v7988 = vld [vmem:[%s2960 + $0x171] sm:$0xff]
      %8021 = vrot.lane.b32.xlu0 %v7957, 20
      %v8022 = vpop.permute.xlu0 %8021
      %8023 = vrot.lane.b32.xlu0 %v7958, 20
      %v8024 = vpop.permute.xlu0 %8023
      %8025 = vrot.lane.b32.xlu0 %v7959, 20
      %v8026 = vpop.permute.xlu0 %8025
      %8027 = vrot.lane.b32.xlu0 %v7960, 20
      %v8028 = vpop.permute.xlu0 %8027
      %8029 = vrot.lane.b32.xlu0 %v7961, 20
      %v8030 = vpop.permute.xlu0 %8029
      %8031 = vrot.lane.b32.xlu0 %v7962, 20
      %v8032 = vpop.permute.xlu0 %8031
      %8033 = vrot.lane.b32.xlu0 %v7963, 20
      %v8034 = vpop.permute.xlu0 %8033
      %8035 = vrot.lane.b32.xlu0 %v7964, 20
      %v8036 = vpop.permute.xlu0 %8035
      %8037 = vrot.lane.b32.xlu0 %v7965, 20
      %v8038 = vpop.permute.xlu0 %8037
      %8039 = vrot.lane.b32.xlu0 %v7966, 20
      %v8040 = vpop.permute.xlu0 %8039
      %8041 = vrot.lane.b32.xlu0 %v7967, 20
      %v8042 = vpop.permute.xlu0 %8041
      %8043 = vrot.lane.b32.xlu0 %v7968, 20
      %v8044 = vpop.permute.xlu0 %8043
      %8045 = vrot.lane.b32.xlu0 %v7969, 20
      %v8046 = vpop.permute.xlu0 %8045
      %8047 = vrot.lane.b32.xlu0 %v7970, 20
      %v8048 = vpop.permute.xlu0 %8047
      %8049 = vrot.lane.b32.xlu0 %v7971, 20
      %v8050 = vpop.permute.xlu0 %8049
      %8051 = vrot.lane.b32.xlu0 %v7972, 20
      %v8052 = vpop.permute.xlu0 %8051
      %8053 = vrot.lane.b32.xlu0 %v7973, 20
      %v8054 = vpop.permute.xlu0 %8053
      %8055 = vrot.lane.b32.xlu0 %v7974, 20
      %v8056 = vpop.permute.xlu0 %8055
      %8057 = vrot.lane.b32.xlu0 %v7975, 20
      %v8058 = vpop.permute.xlu0 %8057
      %8059 = vrot.lane.b32.xlu0 %v7976, 20
      %v8060 = vpop.permute.xlu0 %8059
      %8061 = vrot.lane.b32.xlu0 %v7977, 20
      %v8062 = vpop.permute.xlu0 %8061
      %8063 = vrot.lane.b32.xlu0 %v7978, 20
      %v8064 = vpop.permute.xlu0 %8063
      %8065 = vrot.lane.b32.xlu0 %v7979, 20
      %v8066 = vpop.permute.xlu0 %8065
      %8067 = vrot.lane.b32.xlu0 %v7980, 20
      %v8068 = vpop.permute.xlu0 %8067
      %8069 = vrot.lane.b32.xlu0 %v7981, 20
      %v8070 = vpop.permute.xlu0 %8069
      %8071 = vrot.lane.b32.xlu0 %v7982, 20
      %v8072 = vpop.permute.xlu0 %8071
      %8073 = vrot.lane.b32.xlu0 %v7983, 20
      %v8074 = vpop.permute.xlu0 %8073
      %8075 = vrot.lane.b32.xlu0 %v7984, 20
      %v8076 = vpop.permute.xlu0 %8075
      %8077 = vrot.lane.b32.xlu0 %v7985, 20
      %v8078 = vpop.permute.xlu0 %8077
      %8079 = vrot.lane.b32.xlu0 %v7986, 20
      %v8080 = vpop.permute.xlu0 %8079
      %8081 = vrot.lane.b32.xlu0 %v7987, 20
      %v8082 = vpop.permute.xlu0 %8081
      %8083 = vrot.lane.b32.xlu0 %v7988, 20
      %v8084 = vpop.permute.xlu0 %8083
      %8117 = vst.msk [vmem:[#allocation3] sm:$0xff] %vm1342, %v8022
      %8118 = vst.msk [vmem:[#allocation3 + $0x8] sm:$0xff] %vm1342, %v8024
      %8119 = vst.msk [vmem:[#allocation3 + $0x10] sm:$0xff] %vm1342, %v8026
      %8120 = vst.msk [vmem:[#allocation3 + $0x18] sm:$0xff] %vm1342, %v8028
      %8121 = vst.msk [vmem:[#allocation3 + $0x20] sm:$0xff] %vm1342, %v8030
      %8122 = vst.msk [vmem:[#allocation3 + $0x28] sm:$0xff] %vm1342, %v8032
      %8123 = vst.msk [vmem:[#allocation3 + $0x30] sm:$0xff] %vm1342, %v8034
      %8124 = vst.msk [vmem:[#allocation3 + $0x38] sm:$0xff] %vm1342, %v8036
      %8125 = vst.msk [vmem:[#allocation3 + $0x40] sm:$0xff] %vm1342, %v8038
      %8126 = vst.msk [vmem:[#allocation3 + $0x48] sm:$0xff] %vm1342, %v8040
      %8127 = vst.msk [vmem:[#allocation3 + $0x50] sm:$0xff] %vm1342, %v8042
      %8128 = vst.msk [vmem:[#allocation3 + $0x58] sm:$0xff] %vm1342, %v8044
      %8129 = vst.msk [vmem:[#allocation3 + $0x60] sm:$0xff] %vm1342, %v8046
      %8130 = vst.msk [vmem:[#allocation3 + $0x68] sm:$0xff] %vm1342, %v8048
      %8131 = vst.msk [vmem:[#allocation3 + $0x70] sm:$0xff] %vm1342, %v8050
      %8132 = vst.msk [vmem:[#allocation3 + $0x78] sm:$0xff] %vm1342, %v8052
      %8133 = vst.msk [vmem:[#allocation3 + $0x80] sm:$0xff] %vm1342, %v8054
      %8134 = vst.msk [vmem:[#allocation3 + $0x88] sm:$0xff] %vm1342, %v8056
      %8135 = vst.msk [vmem:[#allocation3 + $0x90] sm:$0xff] %vm1342, %v8058
      %8136 = vst.msk [vmem:[#allocation3 + $0x98] sm:$0xff] %vm1342, %v8060
      %8137 = vst.msk [vmem:[#allocation3 + $0xa0] sm:$0xff] %vm1342, %v8062
      %8138 = vst.msk [vmem:[#allocation3 + $0xa8] sm:$0xff] %vm1342, %v8064
      %8139 = vst.msk [vmem:[#allocation3 + $0xb0] sm:$0xff] %vm1342, %v8066
      %8140 = vst.msk [vmem:[#allocation3 + $0xb8] sm:$0xff] %vm1342, %v8068
      %8141 = vst.msk [vmem:[#allocation3 + $0xc0] sm:$0xff] %vm1342, %v8070
      %8142 = vst.msk [vmem:[#allocation3 + $0xc8] sm:$0xff] %vm1342, %v8072
      %8143 = vst.msk [vmem:[#allocation3 + $0xd0] sm:$0xff] %vm1342, %v8074
      %8144 = vst.msk [vmem:[#allocation3 + $0xd8] sm:$0xff] %vm1342, %v8076
      %8145 = vst.msk [vmem:[#allocation3 + $0xe0] sm:$0xff] %vm1342, %v8078
      %8146 = vst.msk [vmem:[#allocation3 + $0xe8] sm:$0xff] %vm1342, %v8080
      %8147 = vst.msk [vmem:[#allocation3 + $0xf0] sm:$0xff] %vm1342, %v8082
      %8148 = vst.msk [vmem:[#allocation3 + $0xf8] sm:$0xff] %vm1342, %v8084
      %s8149 = scalar_lea.vmem [#allocation4], 480
      %v8150 = vld [vmem:[%s8149] sm:$0xff]
      %v8151 = vld [vmem:[%s8149 + $0x8] sm:$0xff]
      %v8152 = vld [vmem:[%s8149 + $0x18] sm:$0xff]
      %v8153 = vld [vmem:[%s8149 + $0x20] sm:$0xff]
      %v8154 = vld [vmem:[%s8149 + $0x30] sm:$0xff]
      %v8155 = vld [vmem:[%s8149 + $0x38] sm:$0xff]
      %v8156 = vld [vmem:[%s8149 + $0x48] sm:$0xff]
      %v8157 = vld [vmem:[%s8149 + $0x50] sm:$0xff]
      %v8158 = vld [vmem:[%s8149 + $0x60] sm:$0xff]
      %v8159 = vld [vmem:[%s8149 + $0x68] sm:$0xff]
      %v8160 = vld [vmem:[%s8149 + $0x78] sm:$0xff]
      %v8161 = vld [vmem:[%s8149 + $0x80] sm:$0xff]
      %v8162 = vld [vmem:[%s8149 + $0x90] sm:$0xff]
      %v8163 = vld [vmem:[%s8149 + $0x98] sm:$0xff]
      %v8164 = vld [vmem:[%s8149 + $0xa8] sm:$0xff]
      %v8165 = vld [vmem:[%s8149 + $0xb0] sm:$0xff]
      %v8166 = vld [vmem:[%s8149 + $0xc0] sm:$0xff]
      %v8167 = vld [vmem:[%s8149 + $0xc8] sm:$0xff]
      %v8168 = vld [vmem:[%s8149 + $0xd8] sm:$0xff]
      %v8169 = vld [vmem:[%s8149 + $0xe0] sm:$0xff]
      %v8170 = vld [vmem:[%s8149 + $0xf0] sm:$0xff]
      %v8171 = vld [vmem:[%s8149 + $0xf8] sm:$0xff]
      %v8172 = vld [vmem:[%s8149 + $0x108] sm:$0xff]
      %v8173 = vld [vmem:[%s8149 + $0x110] sm:$0xff]
      %v8174 = vld [vmem:[%s8149 + $0x120] sm:$0xff]
      %v8175 = vld [vmem:[%s8149 + $0x128] sm:$0xff]
      %v8176 = vld [vmem:[%s8149 + $0x138] sm:$0xff]
      %v8177 = vld [vmem:[%s8149 + $0x140] sm:$0xff]
      %v8178 = vld [vmem:[%s8149 + $0x150] sm:$0xff]
      %v8179 = vld [vmem:[%s8149 + $0x158] sm:$0xff]
      %v8180 = vld [vmem:[%s8149 + $0x168] sm:$0xff]
      %v8181 = vld [vmem:[%s8149 + $0x170] sm:$0xff]
      %8214 = vrot.lane.b32.xlu0 %v8150, 24
      %v8215 = vpop.permute.xlu0 %8214
      %8216 = vrot.lane.b32.xlu0 %v8151, 24
      %v8217 = vpop.permute.xlu0 %8216
      %8218 = vrot.lane.b32.xlu0 %v8152, 24
      %v8219 = vpop.permute.xlu0 %8218
      %8220 = vrot.lane.b32.xlu0 %v8153, 24
      %v8221 = vpop.permute.xlu0 %8220
      %8222 = vrot.lane.b32.xlu0 %v8154, 24
      %v8223 = vpop.permute.xlu0 %8222
      %8224 = vrot.lane.b32.xlu0 %v8155, 24
      %v8225 = vpop.permute.xlu0 %8224
      %8226 = vrot.lane.b32.xlu0 %v8156, 24
      %v8227 = vpop.permute.xlu0 %8226
      %8228 = vrot.lane.b32.xlu0 %v8157, 24
      %v8229 = vpop.permute.xlu0 %8228
      %8230 = vrot.lane.b32.xlu0 %v8158, 24
      %v8231 = vpop.permute.xlu0 %8230
      %8232 = vrot.lane.b32.xlu0 %v8159, 24
      %v8233 = vpop.permute.xlu0 %8232
      %8234 = vrot.lane.b32.xlu0 %v8160, 24
      %v8235 = vpop.permute.xlu0 %8234
      %8236 = vrot.lane.b32.xlu0 %v8161, 24
      %v8237 = vpop.permute.xlu0 %8236
      %8238 = vrot.lane.b32.xlu0 %v8162, 24
      %v8239 = vpop.permute.xlu0 %8238
      %8240 = vrot.lane.b32.xlu0 %v8163, 24
      %v8241 = vpop.permute.xlu0 %8240
      %8242 = vrot.lane.b32.xlu0 %v8164, 24
      %v8243 = vpop.permute.xlu0 %8242
      %8244 = vrot.lane.b32.xlu0 %v8165, 24
      %v8245 = vpop.permute.xlu0 %8244
      %8246 = vrot.lane.b32.xlu0 %v8166, 24
      %v8247 = vpop.permute.xlu0 %8246
      %8248 = vrot.lane.b32.xlu0 %v8167, 24
      %v8249 = vpop.permute.xlu0 %8248
      %8250 = vrot.lane.b32.xlu0 %v8168, 24
      %v8251 = vpop.permute.xlu0 %8250
      %8252 = vrot.lane.b32.xlu0 %v8169, 24
      %v8253 = vpop.permute.xlu0 %8252
      %8254 = vrot.lane.b32.xlu0 %v8170, 24
      %v8255 = vpop.permute.xlu0 %8254
      %8256 = vrot.lane.b32.xlu0 %v8171, 24
      %v8257 = vpop.permute.xlu0 %8256
      %8258 = vrot.lane.b32.xlu0 %v8172, 24
      %v8259 = vpop.permute.xlu0 %8258
      %8260 = vrot.lane.b32.xlu0 %v8173, 24
      %v8261 = vpop.permute.xlu0 %8260
      %8262 = vrot.lane.b32.xlu0 %v8174, 24
      %v8263 = vpop.permute.xlu0 %8262
      %8264 = vrot.lane.b32.xlu0 %v8175, 24
      %v8265 = vpop.permute.xlu0 %8264
      %8266 = vrot.lane.b32.xlu0 %v8176, 24
      %v8267 = vpop.permute.xlu0 %8266
      %8268 = vrot.lane.b32.xlu0 %v8177, 24
      %v8269 = vpop.permute.xlu0 %8268
      %8270 = vrot.lane.b32.xlu0 %v8178, 24
      %v8271 = vpop.permute.xlu0 %8270
      %8272 = vrot.lane.b32.xlu0 %v8179, 24
      %v8273 = vpop.permute.xlu0 %8272
      %8274 = vrot.lane.b32.xlu0 %v8180, 24
      %v8275 = vpop.permute.xlu0 %8274
      %8276 = vrot.lane.b32.xlu0 %v8181, 24
      %v8277 = vpop.permute.xlu0 %8276
      %8310 = vst.msk [vmem:[#allocation3] sm:$0xff] %vm1536, %v8215
      %8311 = vst.msk [vmem:[#allocation3 + $0x8] sm:$0xff] %vm1536, %v8217
      %8312 = vst.msk [vmem:[#allocation3 + $0x10] sm:$0xff] %vm1536, %v8219
      %8313 = vst.msk [vmem:[#allocation3 + $0x18] sm:$0xff] %vm1536, %v8221
      %8314 = vst.msk [vmem:[#allocation3 + $0x20] sm:$0xff] %vm1536, %v8223
      %8315 = vst.msk [vmem:[#allocation3 + $0x28] sm:$0xff] %vm1536, %v8225
      %8316 = vst.msk [vmem:[#allocation3 + $0x30] sm:$0xff] %vm1536, %v8227
      %8317 = vst.msk [vmem:[#allocation3 + $0x38] sm:$0xff] %vm1536, %v8229
      %8318 = vst.msk [vmem:[#allocation3 + $0x40] sm:$0xff] %vm1536, %v8231
      %8319 = vst.msk [vmem:[#allocation3 + $0x48] sm:$0xff] %vm1536, %v8233
      %8320 = vst.msk [vmem:[#allocation3 + $0x50] sm:$0xff] %vm1536, %v8235
      %8321 = vst.msk [vmem:[#allocation3 + $0x58] sm:$0xff] %vm1536, %v8237
      %8322 = vst.msk [vmem:[#allocation3 + $0x60] sm:$0xff] %vm1536, %v8239
      %8323 = vst.msk [vmem:[#allocation3 + $0x68] sm:$0xff] %vm1536, %v8241
      %8324 = vst.msk [vmem:[#allocation3 + $0x70] sm:$0xff] %vm1536, %v8243
      %8325 = vst.msk [vmem:[#allocation3 + $0x78] sm:$0xff] %vm1536, %v8245
      %8326 = vst.msk [vmem:[#allocation3 + $0x80] sm:$0xff] %vm1536, %v8247
      %8327 = vst.msk [vmem:[#allocation3 + $0x88] sm:$0xff] %vm1536, %v8249
      %8328 = vst.msk [vmem:[#allocation3 + $0x90] sm:$0xff] %vm1536, %v8251
      %8329 = vst.msk [vmem:[#allocation3 + $0x98] sm:$0xff] %vm1536, %v8253
      %8330 = vst.msk [vmem:[#allocation3 + $0xa0] sm:$0xff] %vm1536, %v8255
      %8331 = vst.msk [vmem:[#allocation3 + $0xa8] sm:$0xff] %vm1536, %v8257
      %8332 = vst.msk [vmem:[#allocation3 + $0xb0] sm:$0xff] %vm1536, %v8259
      %8333 = vst.msk [vmem:[#allocation3 + $0xb8] sm:$0xff] %vm1536, %v8261
      %8334 = vst.msk [vmem:[#allocation3 + $0xc0] sm:$0xff] %vm1536, %v8263
      %8335 = vst.msk [vmem:[#allocation3 + $0xc8] sm:$0xff] %vm1536, %v8265
      %8336 = vst.msk [vmem:[#allocation3 + $0xd0] sm:$0xff] %vm1536, %v8267
      %8337 = vst.msk [vmem:[#allocation3 + $0xd8] sm:$0xff] %vm1536, %v8269
      %8338 = vst.msk [vmem:[#allocation3 + $0xe0] sm:$0xff] %vm1536, %v8271
      %8339 = vst.msk [vmem:[#allocation3 + $0xe8] sm:$0xff] %vm1536, %v8273
      %8340 = vst.msk [vmem:[#allocation3 + $0xf0] sm:$0xff] %vm1536, %v8275
      %8341 = vst.msk [vmem:[#allocation3 + $0xf8] sm:$0xff] %vm1536, %v8277
      %s8342 = scalar_lea.vmem [#allocation4], 48
      %v8343 = vld [vmem:[%s8342 + $0x1] sm:$0xff]
      %v8344 = vld [vmem:[%s8342 + $0x9] sm:$0xff]
      %v8345 = vld [vmem:[%s8342 + $0x19] sm:$0xff]
      %v8346 = vld [vmem:[%s8342 + $0x21] sm:$0xff]
      %v8347 = vld [vmem:[%s8342 + $0x31] sm:$0xff]
      %v8348 = vld [vmem:[%s8342 + $0x39] sm:$0xff]
      %v8349 = vld [vmem:[%s8342 + $0x49] sm:$0xff]
      %v8350 = vld [vmem:[%s8342 + $0x51] sm:$0xff]
      %v8351 = vld [vmem:[%s8342 + $0x61] sm:$0xff]
      %v8352 = vld [vmem:[%s8342 + $0x69] sm:$0xff]
      %v8353 = vld [vmem:[%s8342 + $0x79] sm:$0xff]
      %v8354 = vld [vmem:[%s8342 + $0x81] sm:$0xff]
      %v8355 = vld [vmem:[%s8342 + $0x91] sm:$0xff]
      %v8356 = vld [vmem:[%s8342 + $0x99] sm:$0xff]
      %v8357 = vld [vmem:[%s8342 + $0xa9] sm:$0xff]
      %v8358 = vld [vmem:[%s8342 + $0xb1] sm:$0xff]
      %v8359 = vld [vmem:[%s8342 + $0xc1] sm:$0xff]
      %v8360 = vld [vmem:[%s8342 + $0xc9] sm:$0xff]
      %v8361 = vld [vmem:[%s8342 + $0xd9] sm:$0xff]
      %v8362 = vld [vmem:[%s8342 + $0xe1] sm:$0xff]
      %v8363 = vld [vmem:[%s8342 + $0xf1] sm:$0xff]
      %v8364 = vld [vmem:[%s8342 + $0xf9] sm:$0xff]
      %v8365 = vld [vmem:[%s8342 + $0x109] sm:$0xff]
      %v8366 = vld [vmem:[%s8342 + $0x111] sm:$0xff]
      %v8367 = vld [vmem:[%s8342 + $0x121] sm:$0xff]
      %v8368 = vld [vmem:[%s8342 + $0x129] sm:$0xff]
      %v8369 = vld [vmem:[%s8342 + $0x139] sm:$0xff]
      %v8370 = vld [vmem:[%s8342 + $0x141] sm:$0xff]
      %v8371 = vld [vmem:[%s8342 + $0x151] sm:$0xff]
      %v8372 = vld [vmem:[%s8342 + $0x159] sm:$0xff]
      %v8373 = vld [vmem:[%s8342 + $0x169] sm:$0xff]
      %v8374 = vld [vmem:[%s8342 + $0x171] sm:$0xff]
      %8407 = vrot.lane.b32.xlu0 %v8343, 28
      %v8408 = vpop.permute.xlu0 %8407
      %8409 = vrot.lane.b32.xlu0 %v8344, 28
      %v8410 = vpop.permute.xlu0 %8409
      %8411 = vrot.lane.b32.xlu0 %v8345, 28
      %v8412 = vpop.permute.xlu0 %8411
      %8413 = vrot.lane.b32.xlu0 %v8346, 28
      %v8414 = vpop.permute.xlu0 %8413
      %8415 = vrot.lane.b32.xlu0 %v8347, 28
      %v8416 = vpop.permute.xlu0 %8415
      %8417 = vrot.lane.b32.xlu0 %v8348, 28
      %v8418 = vpop.permute.xlu0 %8417
      %8419 = vrot.lane.b32.xlu0 %v8349, 28
      %v8420 = vpop.permute.xlu0 %8419
      %8421 = vrot.lane.b32.xlu0 %v8350, 28
      %v8422 = vpop.permute.xlu0 %8421
      %8423 = vrot.lane.b32.xlu0 %v8351, 28
      %v8424 = vpop.permute.xlu0 %8423
      %8425 = vrot.lane.b32.xlu0 %v8352, 28
      %v8426 = vpop.permute.xlu0 %8425
      %8427 = vrot.lane.b32.xlu0 %v8353, 28
      %v8428 = vpop.permute.xlu0 %8427
      %8429 = vrot.lane.b32.xlu0 %v8354, 28
      %v8430 = vpop.permute.xlu0 %8429
      %8431 = vrot.lane.b32.xlu0 %v8355, 28
      %v8432 = vpop.permute.xlu0 %8431
      %8433 = vrot.lane.b32.xlu0 %v8356, 28
      %v8434 = vpop.permute.xlu0 %8433
      %8435 = vrot.lane.b32.xlu0 %v8357, 28
      %v8436 = vpop.permute.xlu0 %8435
      %8437 = vrot.lane.b32.xlu0 %v8358, 28
      %v8438 = vpop.permute.xlu0 %8437
      %8439 = vrot.lane.b32.xlu0 %v8359, 28
      %v8440 = vpop.permute.xlu0 %8439
      %8441 = vrot.lane.b32.xlu0 %v8360, 28
      %v8442 = vpop.permute.xlu0 %8441
      %8443 = vrot.lane.b32.xlu0 %v8361, 28
      %v8444 = vpop.permute.xlu0 %8443
      %8445 = vrot.lane.b32.xlu0 %v8362, 28
      %v8446 = vpop.permute.xlu0 %8445
      %8447 = vrot.lane.b32.xlu0 %v8363, 28
      %v8448 = vpop.permute.xlu0 %8447
      %8449 = vrot.lane.b32.xlu0 %v8364, 28
      %v8450 = vpop.permute.xlu0 %8449
      %8451 = vrot.lane.b32.xlu0 %v8365, 28
      %v8452 = vpop.permute.xlu0 %8451
      %8453 = vrot.lane.b32.xlu0 %v8366, 28
      %v8454 = vpop.permute.xlu0 %8453
      %8455 = vrot.lane.b32.xlu0 %v8367, 28
      %v8456 = vpop.permute.xlu0 %8455
      %8457 = vrot.lane.b32.xlu0 %v8368, 28
      %v8458 = vpop.permute.xlu0 %8457
      %8459 = vrot.lane.b32.xlu0 %v8369, 28
      %v8460 = vpop.permute.xlu0 %8459
      %8461 = vrot.lane.b32.xlu0 %v8370, 28
      %v8462 = vpop.permute.xlu0 %8461
      %8463 = vrot.lane.b32.xlu0 %v8371, 28
      %v8464 = vpop.permute.xlu0 %8463
      %8465 = vrot.lane.b32.xlu0 %v8372, 28
      %v8466 = vpop.permute.xlu0 %8465
      %8467 = vrot.lane.b32.xlu0 %v8373, 28
      %v8468 = vpop.permute.xlu0 %8467
      %8469 = vrot.lane.b32.xlu0 %v8374, 28
      %v8470 = vpop.permute.xlu0 %8469
      %8503 = vst.msk [vmem:[#allocation3] sm:$0xff] %vm1729, %v8408
      %8504 = vst.msk [vmem:[#allocation3 + $0x8] sm:$0xff] %vm1729, %v8410
      %8505 = vst.msk [vmem:[#allocation3 + $0x10] sm:$0xff] %vm1729, %v8412
      %8506 = vst.msk [vmem:[#allocation3 + $0x18] sm:$0xff] %vm1729, %v8414
      %8507 = vst.msk [vmem:[#allocation3 + $0x20] sm:$0xff] %vm1729, %v8416
      %8508 = vst.msk [vmem:[#allocation3 + $0x28] sm:$0xff] %vm1729, %v8418
      %8509 = vst.msk [vmem:[#allocation3 + $0x30] sm:$0xff] %vm1729, %v8420
      %8510 = vst.msk [vmem:[#allocation3 + $0x38] sm:$0xff] %vm1729, %v8422
      %8511 = vst.msk [vmem:[#allocation3 + $0x40] sm:$0xff] %vm1729, %v8424
      %8512 = vst.msk [vmem:[#allocation3 + $0x48] sm:$0xff] %vm1729, %v8426
      %8513 = vst.msk [vmem:[#allocation3 + $0x50] sm:$0xff] %vm1729, %v8428
      %8514 = vst.msk [vmem:[#allocation3 + $0x58] sm:$0xff] %vm1729, %v8430
      %8515 = vst.msk [vmem:[#allocation3 + $0x60] sm:$0xff] %vm1729, %v8432
      %8516 = vst.msk [vmem:[#allocation3 + $0x68] sm:$0xff] %vm1729, %v8434
      %8517 = vst.msk [vmem:[#allocation3 + $0x70] sm:$0xff] %vm1729, %v8436
      %8518 = vst.msk [vmem:[#allocation3 + $0x78] sm:$0xff] %vm1729, %v8438
      %8519 = vst.msk [vmem:[#allocation3 + $0x80] sm:$0xff] %vm1729, %v8440
      %8520 = vst.msk [vmem:[#allocation3 + $0x88] sm:$0xff] %vm1729, %v8442
      %8521 = vst.msk [vmem:[#allocation3 + $0x90] sm:$0xff] %vm1729, %v8444
      %8522 = vst.msk [vmem:[#allocation3 + $0x98] sm:$0xff] %vm1729, %v8446
      %8523 = vst.msk [vmem:[#allocation3 + $0xa0] sm:$0xff] %vm1729, %v8448
      %8524 = vst.msk [vmem:[#allocation3 + $0xa8] sm:$0xff] %vm1729, %v8450
      %8525 = vst.msk [vmem:[#allocation3 + $0xb0] sm:$0xff] %vm1729, %v8452
      %8526 = vst.msk [vmem:[#allocation3 + $0xb8] sm:$0xff] %vm1729, %v8454
      %8527 = vst.msk [vmem:[#allocation3 + $0xc0] sm:$0xff] %vm1729, %v8456
      %8528 = vst.msk [vmem:[#allocation3 + $0xc8] sm:$0xff] %vm1729, %v8458
      %8529 = vst.msk [vmem:[#allocation3 + $0xd0] sm:$0xff] %vm1729, %v8460
      %8530 = vst.msk [vmem:[#allocation3 + $0xd8] sm:$0xff] %vm1729, %v8462
      %8531 = vst.msk [vmem:[#allocation3 + $0xe0] sm:$0xff] %vm1729, %v8464
      %8532 = vst.msk [vmem:[#allocation3 + $0xe8] sm:$0xff] %vm1729, %v8466
      %8533 = vst.msk [vmem:[#allocation3 + $0xf0] sm:$0xff] %vm1729, %v8468
      %8534 = vst.msk [vmem:[#allocation3 + $0xf8] sm:$0xff] %vm1729, %v8470
      %v8535 = vld [vmem:[%s8149 + $0x1] sm:$0xff]
      %v8536 = vld [vmem:[%s8149 + $0x9] sm:$0xff]
      %v8537 = vld [vmem:[%s8149 + $0x19] sm:$0xff]
      %v8538 = vld [vmem:[%s8149 + $0x21] sm:$0xff]
      %v8539 = vld [vmem:[%s8149 + $0x31] sm:$0xff]
      %v8540 = vld [vmem:[%s8149 + $0x39] sm:$0xff]
      %v8541 = vld [vmem:[%s8149 + $0x49] sm:$0xff]
      %v8542 = vld [vmem:[%s8149 + $0x51] sm:$0xff]
      %v8543 = vld [vmem:[%s8149 + $0x61] sm:$0xff]
      %v8544 = vld [vmem:[%s8149 + $0x69] sm:$0xff]
      %v8545 = vld [vmem:[%s8149 + $0x79] sm:$0xff]
      %v8546 = vld [vmem:[%s8149 + $0x81] sm:$0xff]
      %v8547 = vld [vmem:[%s8149 + $0x91] sm:$0xff]
      %v8548 = vld [vmem:[%s8149 + $0x99] sm:$0xff]
      %v8549 = vld [vmem:[%s8149 + $0xa9] sm:$0xff]
      %v8550 = vld [vmem:[%s8149 + $0xb1] sm:$0xff]
      %v8551 = vld [vmem:[%s8149 + $0xc1] sm:$0xff]
      %v8552 = vld [vmem:[%s8149 + $0xc9] sm:$0xff]
      %v8553 = vld [vmem:[%s8149 + $0xd9] sm:$0xff]
      %v8554 = vld [vmem:[%s8149 + $0xe1] sm:$0xff]
      %v8555 = vld [vmem:[%s8149 + $0xf1] sm:$0xff]
      %v8556 = vld [vmem:[%s8149 + $0xf9] sm:$0xff]
      %v8557 = vld [vmem:[%s8149 + $0x109] sm:$0xff]
      %v8558 = vld [vmem:[%s8149 + $0x111] sm:$0xff]
      %v8559 = vld [vmem:[%s8149 + $0x121] sm:$0xff]
      %v8560 = vld [vmem:[%s8149 + $0x129] sm:$0xff]
      %v8561 = vld [vmem:[%s8149 + $0x139] sm:$0xff]
      %v8562 = vld [vmem:[%s8149 + $0x141] sm:$0xff]
      %v8563 = vld [vmem:[%s8149 + $0x151] sm:$0xff]
      %v8564 = vld [vmem:[%s8149 + $0x159] sm:$0xff]
      %v8565 = vld [vmem:[%s8149 + $0x169] sm:$0xff]
      %v8566 = vld [vmem:[%s8149 + $0x171] sm:$0xff]
      %8599 = vrot.lane.b32.xlu0 %v8535, 32
      %v8600 = vpop.permute.xlu0 %8599
      %8601 = vrot.lane.b32.xlu0 %v8536, 32
      %v8602 = vpop.permute.xlu0 %8601
      %8603 = vrot.lane.b32.xlu0 %v8537, 32
      %v8604 = vpop.permute.xlu0 %8603
      %8605 = vrot.lane.b32.xlu0 %v8538, 32
      %v8606 = vpop.permute.xlu0 %8605
      %8607 = vrot.lane.b32.xlu0 %v8539, 32
      %v8608 = vpop.permute.xlu0 %8607
      %8609 = vrot.lane.b32.xlu0 %v8540, 32
      %v8610 = vpop.permute.xlu0 %8609
      %8611 = vrot.lane.b32.xlu0 %v8541, 32
      %v8612 = vpop.permute.xlu0 %8611
      %8613 = vrot.lane.b32.xlu0 %v8542, 32
      %v8614 = vpop.permute.xlu0 %8613
      %8615 = vrot.lane.b32.xlu0 %v8543, 32
      %v8616 = vpop.permute.xlu0 %8615
      %8617 = vrot.lane.b32.xlu0 %v8544, 32
      %v8618 = vpop.permute.xlu0 %8617
      %8619 = vrot.lane.b32.xlu0 %v8545, 32
      %v8620 = vpop.permute.xlu0 %8619
      %8621 = vrot.lane.b32.xlu0 %v8546, 32
      %v8622 = vpop.permute.xlu0 %8621
      %8623 = vrot.lane.b32.xlu0 %v8547, 32
      %v8624 = vpop.permute.xlu0 %8623
      %8625 = vrot.lane.b32.xlu0 %v8548, 32
      %v8626 = vpop.permute.xlu0 %8625
      %8627 = vrot.lane.b32.xlu0 %v8549, 32
      %v8628 = vpop.permute.xlu0 %8627
      %8629 = vrot.lane.b32.xlu0 %v8550, 32
      %v8630 = vpop.permute.xlu0 %8629
      %8631 = vrot.lane.b32.xlu0 %v8551, 32
      %v8632 = vpop.permute.xlu0 %8631
      %8633 = vrot.lane.b32.xlu0 %v8552, 32
      %v8634 = vpop.permute.xlu0 %8633
      %8635 = vrot.lane.b32.xlu0 %v8553, 32
      %v8636 = vpop.permute.xlu0 %8635
      %8637 = vrot.lane.b32.xlu0 %v8554, 32
      %v8638 = vpop.permute.xlu0 %8637
      %8639 = vrot.lane.b32.xlu0 %v8555, 32
      %v8640 = vpop.permute.xlu0 %8639
      %8641 = vrot.lane.b32.xlu0 %v8556, 32
      %v8642 = vpop.permute.xlu0 %8641
      %8643 = vrot.lane.b32.xlu0 %v8557, 32
      %v8644 = vpop.permute.xlu0 %8643
      %8645 = vrot.lane.b32.xlu0 %v8558, 32
      %v8646 = vpop.permute.xlu0 %8645
      %8647 = vrot.lane.b32.xlu0 %v8559, 32
      %v8648 = vpop.permute.xlu0 %8647
      %8649 = vrot.lane.b32.xlu0 %v8560, 32
      %v8650 = vpop.permute.xlu0 %8649
      %8651 = vrot.lane.b32.xlu0 %v8561, 32
      %v8652 = vpop.permute.xlu0 %8651
      %8653 = vrot.lane.b32.xlu0 %v8562, 32
      %v8654 = vpop.permute.xlu0 %8653
      %8655 = vrot.lane.b32.xlu0 %v8563, 32
      %v8656 = vpop.permute.xlu0 %8655
      %8657 = vrot.lane.b32.xlu0 %v8564, 32
      %v8658 = vpop.permute.xlu0 %8657
      %8659 = vrot.lane.b32.xlu0 %v8565, 32
      %v8660 = vpop.permute.xlu0 %8659
      %8661 = vrot.lane.b32.xlu0 %v8566, 32
      %v8662 = vpop.permute.xlu0 %8661
      %8695 = vst.msk [vmem:[#allocation3] sm:$0xff] %vm1922, %v8600
      %8696 = vst.msk [vmem:[#allocation3 + $0x8] sm:$0xff] %vm1922, %v8602
      %8697 = vst.msk [vmem:[#allocation3 + $0x10] sm:$0xff] %vm1922, %v8604
      %8698 = vst.msk [vmem:[#allocation3 + $0x18] sm:$0xff] %vm1922, %v8606
      %8699 = vst.msk [vmem:[#allocation3 + $0x20] sm:$0xff] %vm1922, %v8608
      %8700 = vst.msk [vmem:[#allocation3 + $0x28] sm:$0xff] %vm1922, %v8610
      %8701 = vst.msk [vmem:[#allocation3 + $0x30] sm:$0xff] %vm1922, %v8612
      %8702 = vst.msk [vmem:[#allocation3 + $0x38] sm:$0xff] %vm1922, %v8614
      %8703 = vst.msk [vmem:[#allocation3 + $0x40] sm:$0xff] %vm1922, %v8616
      %8704 = vst.msk [vmem:[#allocation3 + $0x48] sm:$0xff] %vm1922, %v8618
      %8705 = vst.msk [vmem:[#allocation3 + $0x50] sm:$0xff] %vm1922, %v8620
      %8706 = vst.msk [vmem:[#allocation3 + $0x58] sm:$0xff] %vm1922, %v8622
      %8707 = vst.msk [vmem:[#allocation3 + $0x60] sm:$0xff] %vm1922, %v8624
      %8708 = vst.msk [vmem:[#allocation3 + $0x68] sm:$0xff] %vm1922, %v8626
      %8709 = vst.msk [vmem:[#allocation3 + $0x70] sm:$0xff] %vm1922, %v8628
      %8710 = vst.msk [vmem:[#allocation3 + $0x78] sm:$0xff] %vm1922, %v8630
      %8711 = vst.msk [vmem:[#allocation3 + $0x80] sm:$0xff] %vm1922, %v8632
      %8712 = vst.msk [vmem:[#allocation3 + $0x88] sm:$0xff] %vm1922, %v8634
      %8713 = vst.msk [vmem:[#allocation3 + $0x90] sm:$0xff] %vm1922, %v8636
      %8714 = vst.msk [vmem:[#allocation3 + $0x98] sm:$0xff] %vm1922, %v8638
      %8715 = vst.msk [vmem:[#allocation3 + $0xa0] sm:$0xff] %vm1922, %v8640
      %8716 = vst.msk [vmem:[#allocation3 + $0xa8] sm:$0xff] %vm1922, %v8642
      %8717 = vst.msk [vmem:[#allocation3 + $0xb0] sm:$0xff] %vm1922, %v8644
      %8718 = vst.msk [vmem:[#allocation3 + $0xb8] sm:$0xff] %vm1922, %v8646
      %8719 = vst.msk [vmem:[#allocation3 + $0xc0] sm:$0xff] %vm1922, %v8648
      %8720 = vst.msk [vmem:[#allocation3 + $0xc8] sm:$0xff] %vm1922, %v8650
      %8721 = vst.msk [vmem:[#allocation3 + $0xd0] sm:$0xff] %vm1922, %v8652
      %8722 = vst.msk [vmem:[#allocation3 + $0xd8] sm:$0xff] %vm1922, %v8654
      %8723 = vst.msk [vmem:[#allocation3 + $0xe0] sm:$0xff] %vm1922, %v8656
      %8724 = vst.msk [vmem:[#allocation3 + $0xe8] sm:$0xff] %vm1922, %v8658
      %8725 = vst.msk [vmem:[#allocation3 + $0xf0] sm:$0xff] %vm1922, %v8660
      %8726 = vst.msk [vmem:[#allocation3 + $0xf8] sm:$0xff] %vm1922, %v8662
      %v8727 = vld [vmem:[#allocation3] sm:$0xff]
      %v8728 = vld [vmem:[#allocation3 + $0x8] sm:$0xff]
      %v8729 = vld [vmem:[#allocation3 + $0x10] sm:$0xff]
      %v8730 = vld [vmem:[#allocation3 + $0x18] sm:$0xff]
      %v8731 = vld [vmem:[#allocation3 + $0x20] sm:$0xff]
      %v8732 = vld [vmem:[#allocation3 + $0x28] sm:$0xff]
      %v8733 = vld [vmem:[#allocation3 + $0x30] sm:$0xff]
      %v8734 = vld [vmem:[#allocation3 + $0x38] sm:$0xff]
      %v8735 = vld [vmem:[#allocation3 + $0x40] sm:$0xff]
      %v8736 = vld [vmem:[#allocation3 + $0x48] sm:$0xff]
      %v8737 = vld [vmem:[#allocation3 + $0x50] sm:$0xff]
      %v8738 = vld [vmem:[#allocation3 + $0x58] sm:$0xff]
      %v8739 = vld [vmem:[#allocation3 + $0x60] sm:$0xff]
      %v8740 = vld [vmem:[#allocation3 + $0x68] sm:$0xff]
      %v8741 = vld [vmem:[#allocation3 + $0x70] sm:$0xff]
      %v8742 = vld [vmem:[#allocation3 + $0x78] sm:$0xff]
      %v8743 = vld [vmem:[#allocation3 + $0x80] sm:$0xff]
      %v8744 = vld [vmem:[#allocation3 + $0x88] sm:$0xff]
      %v8745 = vld [vmem:[#allocation3 + $0x90] sm:$0xff]
      %v8746 = vld [vmem:[#allocation3 + $0x98] sm:$0xff]
      %v8747 = vld [vmem:[#allocation3 + $0xa0] sm:$0xff]
      %v8748 = vld [vmem:[#allocation3 + $0xa8] sm:$0xff]
      %v8749 = vld [vmem:[#allocation3 + $0xb0] sm:$0xff]
      %v8750 = vld [vmem:[#allocation3 + $0xb8] sm:$0xff]
      %v8751 = vld [vmem:[#allocation3 + $0xc0] sm:$0xff]
      %v8752 = vld [vmem:[#allocation3 + $0xc8] sm:$0xff]
      %v8753 = vld [vmem:[#allocation3 + $0xd0] sm:$0xff]
      %v8754 = vld [vmem:[#allocation3 + $0xd8] sm:$0xff]
      %v8755 = vld [vmem:[#allocation3 + $0xe0] sm:$0xff]
      %v8756 = vld [vmem:[#allocation3 + $0xe8] sm:$0xff]
      %v8757 = vld [vmem:[#allocation3 + $0xf0] sm:$0xff]
      %v8758 = vld [vmem:[#allocation3 + $0xf8] sm:$0xff]
      %v8759 = vld [vmem:[%s3] sm:$0xff]
      %v8760 = vld [vmem:[%s3 + $0x8] sm:$0xff]
      %v8761 = vld [vmem:[%s3 + $0x10] sm:$0xff]
      %v8762 = vld [vmem:[%s3 + $0x18] sm:$0xff]
      %v8763 = vld [vmem:[%s3 + $0x20] sm:$0xf]
      %v8764 = vld [vmem:[%s4] sm:$0x1]
      %v8766 = vlaneseq
      %v8767 = vshrl.u32 %v8766, 7
      %v8768 = vsub.s32 0, %v8767
      %v8769 = vrot.slane %v8764, %v8768
      %v8772 = vsel %vm1999, %v8727, 0
      %v8775 = vsel %vm1999, %v8728, 0
      %v8778 = vsel %vm1999, %v8729, 0
      %v8781 = vsel %vm1999, %v8730, 0
      %v8784 = vsel %vm1999, %v8731, 0
      %v8787 = vsel %vm1999, %v8732, 0
      %v8790 = vsel %vm1999, %v8733, 0
      %v8793 = vsel %vm1999, %v8734, 0
      %v8796 = vsel %vm1999, %v8735, 0
      %v8799 = vsel %vm1999, %v8736, 0
      %v8802 = vsel %vm1999, %v8737, 0
      %v8805 = vsel %vm1999, %v8738, 0
      %v8808 = vsel %vm1999, %v8739, 0
      %v8811 = vsel %vm1999, %v8740, 0
      %v8814 = vsel %vm1999, %v8741, 0
      %v8817 = vsel %vm1999, %v8742, 0
      %v8820 = vsel %vm1999, %v8743, 0
      %v8823 = vsel %vm1999, %v8744, 0
      %v8826 = vsel %vm1999, %v8745, 0
      %v8829 = vsel %vm1999, %v8746, 0
      %v8832 = vsel %vm1999, %v8747, 0
      %v8835 = vsel %vm1999, %v8748, 0
      %v8838 = vsel %vm1999, %v8749, 0
      %v8841 = vsel %vm1999, %v8750, 0
      %v8844 = vsel %vm1999, %v8751, 0
      %v8847 = vsel %vm1999, %v8752, 0
      %v8850 = vsel %vm1999, %v8753, 0
      %v8853 = vsel %vm1999, %v8754, 0
      %v8856 = vsel %vm1999, %v8755, 0
      %v8859 = vsel %vm1999, %v8756, 0
      %v8862 = vsel %vm1999, %v8757, 0
      %v8865 = vsel %vm1999, %v8758, 0
      %v8868 = vsel %vm2096, %v8763, 0
      %8870 = vmatprep.subr.mxu0 0.0
      %8871 = vmatpush1.msra.mxu0 %v8759
      %8872 = vmatprep.subr.mxu0 0.0
      %8873 = vmatpush1.msra.mxu0 %v8760
      %8874 = vmatprep.subr.mxu0 0.0
      %8875 = vmatpush1.msra.mxu0 %v8761
      %8876 = vmatprep.subr.mxu0 0.0
      %8877 = vmatpush1.msra.mxu0 %v8762
      %8878 = vmatprep.subr.mxu0 0.0
      %8879 = vmatpush1.msra.mxu0 %v8868
      %8880 = vmatprep.subr.mxu0 0.0
      %8881 = vmatpush1.msra.mxu0 0.0
      %8882 = vmatprep.subr.mxu0 0.0
      %8883 = vmatpush1.msra.mxu0 0.0
      %8884 = vmatprep.subr.mxu0 0.0
      %8885 = vmatpush1.msra.mxu0 0.0
      %8886 = vmatprep.subr.mxu0 0.0
      %8887 = vmatpush1.msra.mxu0 0.0
      %8888 = vmatprep.subr.mxu0 0.0
      %8889 = vmatpush1.msra.mxu0 0.0
      %8890 = vmatprep.subr.mxu0 0.0
      %8891 = vmatpush1.msra.mxu0 0.0
      %8892 = vmatprep.subr.mxu0 0.0
      %8893 = vmatpush1.msra.mxu0 0.0
      %8894 = vmatprep.subr.mxu0 0.0
      %8895 = vmatpush1.msra.mxu0 0.0
      %8896 = vmatprep.subr.mxu0 0.0
      %8897 = vmatpush1.msra.mxu0 0.0
      %8898 = vmatprep.subr.mxu0 0.0
      %8899 = vmatpush1.msra.mxu0 0.0
      %8900 = vmatprep.subr.mxu0 0.0
      %8901 = vmatpush1.msra.mxu0 0.0
      %8902 = vmatprep.subr.mxu0 0.0
      %8903 = vmatpush1.msra.mxu0 0.0
      %8904 = vmatprep.subr.mxu0 0.0
      %8905 = vmatpush1.msra.mxu0 0.0
      %8906 = vmatprep.subr.mxu0 0.0
      %8907 = vmatpush1.msra.mxu0 0.0
      %8908 = vmatprep.subr.mxu0 0.0
      %8909 = vmatpush1.msra.mxu0 0.0
      %8910 = vmatprep.subr.mxu0 0.0
      %8911 = vmatpush1.msra.mxu0 0.0
      %8912 = vmatprep.subr.mxu0 0.0
      %8913 = vmatpush1.msra.mxu0 0.0
      %8914 = vmatprep.subr.mxu0 0.0
      %8915 = vmatpush1.msra.mxu0 0.0
      %8916 = vmatprep.subr.mxu0 0.0
      %8917 = vmatpush1.msra.mxu0 0.0
      %8918 = vmatprep.subr.mxu0 0.0
      %8919 = vmatpush1.msra.mxu0 0.0
      %8920 = vmatprep.subr.mxu0 0.0
      %8921 = vmatpush1.msra.mxu0 0.0
      %8922 = vmatprep.subr.mxu0 0.0
      %8923 = vmatpush1.msra.mxu0 0.0
      %8924 = vmatprep.subr.mxu0 0.0
      %8925 = vmatpush1.msra.mxu0 0.0
      %8926 = vmatprep.subr.mxu0 0.0
      %8927 = vmatpush1.msra.mxu0 0.0
      %8928 = vmatprep.subr.mxu0 0.0
      %8929 = vmatpush1.msra.mxu0 0.0
      %8930 = vmatprep.subr.mxu0 0.0
      %8931 = vmatpush1.msra.mxu0 0.0
      %8932 = vmatprep.subr.mxu0 0.0
      %8933 = vmatpush1.msra.mxu0 0.0
      %8934 = vmatprep.mubr.f32.mxu0 0.0
      %8935 = vmatmul.mubr.f32.gmra.mrb[0].mxu0 %v8772
      %v8936 = vpop.f32.mrb[0].mxu0
      %v8937 = vadd.f32 %v8769, %v8936
      %v8938 = vpop.f32.mrb[0].mxu0
      %8939 = vmatprep.mubr.f32.mxu0 0.0
      %8940 = vmatmul.mubr.f32.gmra.mrb[0].mxu0 %v8775
      %v8941 = vpop.f32.mrb[0].mxu0
      %v8942 = vadd.f32 %v8769, %v8941
      %v8943 = vpop.f32.mrb[0].mxu0
      %8944 = vmatprep.mubr.f32.mxu0 0.0
      %8945 = vmatmul.mubr.f32.gmra.mrb[0].mxu0 %v8778
      %v8946 = vpop.f32.mrb[0].mxu0
      %v8947 = vadd.f32 %v8769, %v8946
      %v8948 = vpop.f32.mrb[0].mxu0
      %8949 = vmatprep.mubr.f32.mxu0 0.0
      %8950 = vmatmul.mubr.f32.gmra.mrb[0].mxu0 %v8781
      %v8951 = vpop.f32.mrb[0].mxu0
      %v8952 = vadd.f32 %v8769, %v8951
      %v8953 = vpop.f32.mrb[0].mxu0
      %8954 = vmatprep.mubr.f32.mxu0 0.0
      %8955 = vmatmul.mubr.f32.gmra.mrb[0].mxu0 %v8784
      %v8956 = vpop.f32.mrb[0].mxu0
      %v8957 = vadd.f32 %v8769, %v8956
      %v8958 = vpop.f32.mrb[0].mxu0
      %8959 = vmatprep.mubr.f32.mxu0 0.0
      %8960 = vmatmul.mubr.f32.gmra.mrb[0].mxu0 %v8787
      %v8961 = vpop.f32.mrb[0].mxu0
      %v8962 = vadd.f32 %v8769, %v8961
      %v8963 = vpop.f32.mrb[0].mxu0
      %8964 = vmatprep.mubr.f32.mxu0 0.0
      %8965 = vmatmul.mubr.f32.gmra.mrb[0].mxu0 %v8790
      %v8966 = vpop.f32.mrb[0].mxu0
      %v8967 = vadd.f32 %v8769, %v8966
      %v8968 = vpop.f32.mrb[0].mxu0
      %8969 = vmatprep.mubr.f32.mxu0 0.0
      %8970 = vmatmul.mubr.f32.gmra.mrb[0].mxu0 %v8793
      %v8971 = vpop.f32.mrb[0].mxu0
      %v8972 = vadd.f32 %v8769, %v8971
      %v8973 = vpop.f32.mrb[0].mxu0
      %8974 = vmatprep.mubr.f32.mxu0 0.0
      %8975 = vmatmul.mubr.f32.gmra.mrb[0].mxu0 %v8796
      %v8976 = vpop.f32.mrb[0].mxu0
      %v8977 = vadd.f32 %v8769, %v8976
      %v8978 = vpop.f32.mrb[0].mxu0
      %8979 = vmatprep.mubr.f32.mxu0 0.0
      %8980 = vmatmul.mubr.f32.gmra.mrb[0].mxu0 %v8799
      %v8981 = vpop.f32.mrb[0].mxu0
      %v8982 = vadd.f32 %v8769, %v8981
      %v8983 = vpop.f32.mrb[0].mxu0
      %8984 = vmatprep.mubr.f32.mxu0 0.0
      %8985 = vmatmul.mubr.f32.gmra.mrb[0].mxu0 %v8802
      %v8986 = vpop.f32.mrb[0].mxu0
      %v8987 = vadd.f32 %v8769, %v8986
      %v8988 = vpop.f32.mrb[0].mxu0
      %8989 = vmatprep.mubr.f32.mxu0 0.0
      %8990 = vmatmul.mubr.f32.gmra.mrb[0].mxu0 %v8805
      %v8991 = vpop.f32.mrb[0].mxu0
      %v8992 = vadd.f32 %v8769, %v8991
      %v8993 = vpop.f32.mrb[0].mxu0
      %8994 = vmatprep.mubr.f32.mxu0 0.0
      %8995 = vmatmul.mubr.f32.gmra.mrb[0].mxu0 %v8808
      %v8996 = vpop.f32.mrb[0].mxu0
      %v8997 = vadd.f32 %v8769, %v8996
      %v8998 = vpop.f32.mrb[0].mxu0
      %8999 = vmatprep.mubr.f32.mxu0 0.0
      %9000 = vmatmul.mubr.f32.gmra.mrb[0].mxu0 %v8811
      %v9001 = vpop.f32.mrb[0].mxu0
      %v9002 = vadd.f32 %v8769, %v9001
      %v9003 = vpop.f32.mrb[0].mxu0
      %9004 = vmatprep.mubr.f32.mxu0 0.0
      %9005 = vmatmul.mubr.f32.gmra.mrb[0].mxu0 %v8814
      %v9006 = vpop.f32.mrb[0].mxu0
      %v9007 = vadd.f32 %v8769, %v9006
      %v9008 = vpop.f32.mrb[0].mxu0
      %9009 = vmatprep.mubr.f32.mxu0 0.0
      %9010 = vmatmul.mubr.f32.gmra.mrb[0].mxu0 %v8817
      %v9011 = vpop.f32.mrb[0].mxu0
      %v9012 = vadd.f32 %v8769, %v9011
      %v9013 = vpop.f32.mrb[0].mxu0
      %9014 = vmatprep.mubr.f32.mxu0 0.0
      %9015 = vmatmul.mubr.f32.gmra.mrb[0].mxu0 %v8820
      %v9016 = vpop.f32.mrb[0].mxu0
      %v9017 = vadd.f32 %v8769, %v9016
      %v9018 = vpop.f32.mrb[0].mxu0
      %9019 = vmatprep.mubr.f32.mxu0 0.0
      %9020 = vmatmul.mubr.f32.gmra.mrb[0].mxu0 %v8823
      %v9021 = vpop.f32.mrb[0].mxu0
      %v9022 = vadd.f32 %v8769, %v9021
      %v9023 = vpop.f32.mrb[0].mxu0
      %9024 = vmatprep.mubr.f32.mxu0 0.0
      %9025 = vmatmul.mubr.f32.gmra.mrb[0].mxu0 %v8826
      %v9026 = vpop.f32.mrb[0].mxu0
      %v9027 = vadd.f32 %v8769, %v9026
      %v9028 = vpop.f32.mrb[0].mxu0
      %9029 = vmatprep.mubr.f32.mxu0 0.0
      %9030 = vmatmul.mubr.f32.gmra.mrb[0].mxu0 %v8829
      %v9031 = vpop.f32.mrb[0].mxu0
      %v9032 = vadd.f32 %v8769, %v9031
      %v9033 = vpop.f32.mrb[0].mxu0
      %9034 = vmatprep.mubr.f32.mxu0 0.0
      %9035 = vmatmul.mubr.f32.gmra.mrb[0].mxu0 %v8832
      %v9036 = vpop.f32.mrb[0].mxu0
      %v9037 = vadd.f32 %v8769, %v9036
      %v9038 = vpop.f32.mrb[0].mxu0
      %9039 = vmatprep.mubr.f32.mxu0 0.0
      %9040 = vmatmul.mubr.f32.gmra.mrb[0].mxu0 %v8835
      %v9041 = vpop.f32.mrb[0].mxu0
      %v9042 = vadd.f32 %v8769, %v9041
      %v9043 = vpop.f32.mrb[0].mxu0
      %9044 = vmatprep.mubr.f32.mxu0 0.0
      %9045 = vmatmul.mubr.f32.gmra.mrb[0].mxu0 %v8838
      %v9046 = vpop.f32.mrb[0].mxu0
      %v9047 = vadd.f32 %v8769, %v9046
      %v9048 = vpop.f32.mrb[0].mxu0
      %9049 = vmatprep.mubr.f32.mxu0 0.0
      %9050 = vmatmul.mubr.f32.gmra.mrb[0].mxu0 %v8841
      %v9051 = vpop.f32.mrb[0].mxu0
      %v9052 = vadd.f32 %v8769, %v9051
      %v9053 = vpop.f32.mrb[0].mxu0
      %9054 = vmatprep.mubr.f32.mxu0 0.0
      %9055 = vmatmul.mubr.f32.gmra.mrb[0].mxu0 %v8844
      %v9056 = vpop.f32.mrb[0].mxu0
      %v9057 = vadd.f32 %v8769, %v9056
      %v9058 = vpop.f32.mrb[0].mxu0
      %9059 = vmatprep.mubr.f32.mxu0 0.0
      %9060 = vmatmul.mubr.f32.gmra.mrb[0].mxu0 %v8847
      %v9061 = vpop.f32.mrb[0].mxu0
      %v9062 = vadd.f32 %v8769, %v9061
      %v9063 = vpop.f32.mrb[0].mxu0
      %9064 = vmatprep.mubr.f32.mxu0 0.0
      %9065 = vmatmul.mubr.f32.gmra.mrb[0].mxu0 %v8850
      %v9066 = vpop.f32.mrb[0].mxu0
      %v9067 = vadd.f32 %v8769, %v9066
      %v9068 = vpop.f32.mrb[0].mxu0
      %9069 = vmatprep.mubr.f32.mxu0 0.0
      %9070 = vmatmul.mubr.f32.gmra.mrb[0].mxu0 %v8853
      %v9071 = vpop.f32.mrb[0].mxu0
      %v9072 = vadd.f32 %v8769, %v9071
      %v9073 = vpop.f32.mrb[0].mxu0
      %9074 = vmatprep.mubr.f32.mxu0 0.0
      %9075 = vmatmul.mubr.f32.gmra.mrb[0].mxu0 %v8856
      %v9076 = vpop.f32.mrb[0].mxu0
      %v9077 = vadd.f32 %v8769, %v9076
      %v9078 = vpop.f32.mrb[0].mxu0
      %9079 = vmatprep.mubr.f32.mxu0 0.0
      %9080 = vmatmul.mubr.f32.gmra.mrb[0].mxu0 %v8859
      %v9081 = vpop.f32.mrb[0].mxu0
      %v9082 = vadd.f32 %v8769, %v9081
      %v9083 = vpop.f32.mrb[0].mxu0
      %9084 = vmatprep.mubr.f32.mxu0 0.0
      %9085 = vmatmul.mubr.f32.gmra.mrb[0].mxu0 %v8862
      %v9086 = vpop.f32.mrb[0].mxu0
      %v9087 = vadd.f32 %v8769, %v9086
      %v9088 = vpop.f32.mrb[0].mxu0
      %9089 = vmatprep.mubr.f32.mxu0 0.0
      %9090 = vmatmul.mubr.f32.gmra.mrb[0].mxu0 %v8865
      %v9091 = vpop.f32.mrb[0].mxu0
      %v9092 = vadd.f32 %v8769, %v9091
      %v9093 = vpop.f32.mrb[0].mxu0
      %9094 = vdwg.mxu0
      %9127 = vrot.lane.b32.xlu0 %v8937, 32
      %v9128 = vpop.permute.xlu0 %9127
      %9129 = vrot.lane.b32.xlu0 %v8942, 32
      %v9130 = vpop.permute.xlu0 %9129
      %9131 = vrot.lane.b32.xlu0 %v8947, 32
      %v9132 = vpop.permute.xlu0 %9131
      %9133 = vrot.lane.b32.xlu0 %v8952, 32
      %v9134 = vpop.permute.xlu0 %9133
      %9135 = vrot.lane.b32.xlu0 %v8957, 32
      %v9136 = vpop.permute.xlu0 %9135
      %9137 = vrot.lane.b32.xlu0 %v8962, 32
      %v9138 = vpop.permute.xlu0 %9137
      %9139 = vrot.lane.b32.xlu0 %v8967, 32
      %v9140 = vpop.permute.xlu0 %9139
      %9141 = vrot.lane.b32.xlu0 %v8972, 32
      %v9142 = vpop.permute.xlu0 %9141
      %9143 = vrot.lane.b32.xlu0 %v8977, 32
      %v9144 = vpop.permute.xlu0 %9143
      %9145 = vrot.lane.b32.xlu0 %v8982, 32
      %v9146 = vpop.permute.xlu0 %9145
      %9147 = vrot.lane.b32.xlu0 %v8987, 32
      %v9148 = vpop.permute.xlu0 %9147
      %9149 = vrot.lane.b32.xlu0 %v8992, 32
      %v9150 = vpop.permute.xlu0 %9149
      %9151 = vrot.lane.b32.xlu0 %v8997, 32
      %v9152 = vpop.permute.xlu0 %9151
      %9153 = vrot.lane.b32.xlu0 %v9002, 32
      %v9154 = vpop.permute.xlu0 %9153
      %9155 = vrot.lane.b32.xlu0 %v9007, 32
      %v9156 = vpop.permute.xlu0 %9155
      %9157 = vrot.lane.b32.xlu0 %v9012, 32
      %v9158 = vpop.permute.xlu0 %9157
      %9159 = vrot.lane.b32.xlu0 %v9017, 32
      %v9160 = vpop.permute.xlu0 %9159
      %9161 = vrot.lane.b32.xlu0 %v9022, 32
      %v9162 = vpop.permute.xlu0 %9161
      %9163 = vrot.lane.b32.xlu0 %v9027, 32
      %v9164 = vpop.permute.xlu0 %9163
      %9165 = vrot.lane.b32.xlu0 %v9032, 32
      %v9166 = vpop.permute.xlu0 %9165
      %9167 = vrot.lane.b32.xlu0 %v9037, 32
      %v9168 = vpop.permute.xlu0 %9167
      %9169 = vrot.lane.b32.xlu0 %v9042, 32
      %v9170 = vpop.permute.xlu0 %9169
      %9171 = vrot.lane.b32.xlu0 %v9047, 32
      %v9172 = vpop.permute.xlu0 %9171
      %9173 = vrot.lane.b32.xlu0 %v9052, 32
      %v9174 = vpop.permute.xlu0 %9173
      %9175 = vrot.lane.b32.xlu0 %v9057, 32
      %v9176 = vpop.permute.xlu0 %9175
      %9177 = vrot.lane.b32.xlu0 %v9062, 32
      %v9178 = vpop.permute.xlu0 %9177
      %9179 = vrot.lane.b32.xlu0 %v9067, 32
      %v9180 = vpop.permute.xlu0 %9179
      %9181 = vrot.lane.b32.xlu0 %v9072, 32
      %v9182 = vpop.permute.xlu0 %9181
      %9183 = vrot.lane.b32.xlu0 %v9077, 32
      %v9184 = vpop.permute.xlu0 %9183
      %9185 = vrot.lane.b32.xlu0 %v9082, 32
      %v9186 = vpop.permute.xlu0 %9185
      %9187 = vrot.lane.b32.xlu0 %v9087, 32
      %v9188 = vpop.permute.xlu0 %9187
      %9189 = vrot.lane.b32.xlu0 %v9092, 32
      %v9190 = vpop.permute.xlu0 %9189
      %vm9223 = vcmask 392448
      %9224 = vst.msk [vmem:[%s224] sm:$0xff] %vm9223, %v9128
      %9225 = vst.msk [vmem:[%s224 + $0x8] sm:$0xff] %vm9223, %v9130
      %9226 = vst.msk [vmem:[%s224 + $0x10] sm:$0xff] %vm9223, %v9132
      %9227 = vst.msk [vmem:[%s224 + $0x18] sm:$0xff] %vm9223, %v9134
      %9228 = vst.msk [vmem:[%s224 + $0x20] sm:$0xff] %vm9223, %v9136
      %9229 = vst.msk [vmem:[%s224 + $0x28] sm:$0xff] %vm9223, %v9138
      %9230 = vst.msk [vmem:[%s224 + $0x30] sm:$0xff] %vm9223, %v9140
      %9231 = vst.msk [vmem:[%s224 + $0x38] sm:$0xff] %vm9223, %v9142
      %9232 = vst.msk [vmem:[%s224 + $0x40] sm:$0xff] %vm9223, %v9144
      %9233 = vst.msk [vmem:[%s224 + $0x48] sm:$0xff] %vm9223, %v9146
      %9234 = vst.msk [vmem:[%s224 + $0x50] sm:$0xff] %vm9223, %v9148
      %9235 = vst.msk [vmem:[%s224 + $0x58] sm:$0xff] %vm9223, %v9150
      %9236 = vst.msk [vmem:[%s224 + $0x60] sm:$0xff] %vm9223, %v9152
      %9237 = vst.msk [vmem:[%s224 + $0x68] sm:$0xff] %vm9223, %v9154
      %9238 = vst.msk [vmem:[%s224 + $0x70] sm:$0xff] %vm9223, %v9156
      %9239 = vst.msk [vmem:[%s224 + $0x78] sm:$0xff] %vm9223, %v9158
      %9240 = vst.msk [vmem:[%s224 + $0x80] sm:$0xff] %vm9223, %v9160
      %9241 = vst.msk [vmem:[%s224 + $0x88] sm:$0xff] %vm9223, %v9162
      %9242 = vst.msk [vmem:[%s224 + $0x90] sm:$0xff] %vm9223, %v9164
      %9243 = vst.msk [vmem:[%s224 + $0x98] sm:$0xff] %vm9223, %v9166
      %9244 = vst.msk [vmem:[%s224 + $0xa0] sm:$0xff] %vm9223, %v9168
      %9245 = vst.msk [vmem:[%s224 + $0xa8] sm:$0xff] %vm9223, %v9170
      %9246 = vst.msk [vmem:[%s224 + $0xb0] sm:$0xff] %vm9223, %v9172
      %9247 = vst.msk [vmem:[%s224 + $0xb8] sm:$0xff] %vm9223, %v9174
      %9248 = vst.msk [vmem:[%s224 + $0xc0] sm:$0xff] %vm9223, %v9176
      %9249 = vst.msk [vmem:[%s224 + $0xc8] sm:$0xff] %vm9223, %v9178
      %9250 = vst.msk [vmem:[%s224 + $0xd0] sm:$0xff] %vm9223, %v9180
      %9251 = vst.msk [vmem:[%s224 + $0xd8] sm:$0xff] %vm9223, %v9182
      %9252 = vst.msk [vmem:[%s224 + $0xe0] sm:$0xff] %vm9223, %v9184
      %9253 = vst.msk [vmem:[%s224 + $0xe8] sm:$0xff] %vm9223, %v9186
      %9254 = vst.msk [vmem:[%s224 + $0xf0] sm:$0xff] %vm9223, %v9188
      %9255 = vst.msk [vmem:[%s224 + $0xf8] sm:$0xff] %vm9223, %v9190
      %v9256 = vld [vmem:[%s2541 + $0x1] sm:$0xff]
      %v9257 = vld [vmem:[%s2541 + $0x9] sm:$0xff]
      %v9258 = vld [vmem:[%s2541 + $0x19] sm:$0xff]
      %v9259 = vld [vmem:[%s2541 + $0x21] sm:$0xff]
      %v9260 = vld [vmem:[%s2541 + $0x31] sm:$0xff]
      %v9261 = vld [vmem:[%s2541 + $0x39] sm:$0xff]
      %v9262 = vld [vmem:[%s2541 + $0x49] sm:$0xff]
      %v9263 = vld [vmem:[%s2541 + $0x51] sm:$0xff]
      %v9264 = vld [vmem:[%s2541 + $0x61] sm:$0xff]
      %v9265 = vld [vmem:[%s2541 + $0x69] sm:$0xff]
      %v9266 = vld [vmem:[%s2541 + $0x79] sm:$0xff]
      %v9267 = vld [vmem:[%s2541 + $0x81] sm:$0xff]
      %v9268 = vld [vmem:[%s2541 + $0x91] sm:$0xff]
      %v9269 = vld [vmem:[%s2541 + $0x99] sm:$0xff]
      %v9270 = vld [vmem:[%s2541 + $0xa9] sm:$0xff]
      %v9271 = vld [vmem:[%s2541 + $0xb1] sm:$0xff]
      %v9272 = vld [vmem:[%s2541 + $0xc1] sm:$0xff]
      %v9273 = vld [vmem:[%s2541 + $0xc9] sm:$0xff]
      %v9274 = vld [vmem:[%s2541 + $0xd9] sm:$0xff]
      %v9275 = vld [vmem:[%s2541 + $0xe1] sm:$0xff]
      %v9276 = vld [vmem:[%s2541 + $0xf1] sm:$0xff]
      %v9277 = vld [vmem:[%s2541 + $0xf9] sm:$0xff]
      %v9278 = vld [vmem:[%s2541 + $0x109] sm:$0xff]
      %v9279 = vld [vmem:[%s2541 + $0x111] sm:$0xff]
      %v9280 = vld [vmem:[%s2541 + $0x121] sm:$0xff]
      %v9281 = vld [vmem:[%s2541 + $0x129] sm:$0xff]
      %v9282 = vld [vmem:[%s2541 + $0x139] sm:$0xff]
      %v9283 = vld [vmem:[%s2541 + $0x141] sm:$0xff]
      %v9284 = vld [vmem:[%s2541 + $0x151] sm:$0xff]
      %v9285 = vld [vmem:[%s2541 + $0x159] sm:$0xff]
      %v9286 = vld [vmem:[%s2541 + $0x169] sm:$0xff]
      %v9287 = vld [vmem:[%s2541 + $0x171] sm:$0xff]
      %9288 = vst.msk [vmem:[#allocation3] sm:$0xff] %vm225, %v9256
      %9289 = vst.msk [vmem:[#allocation3 + $0x8] sm:$0xff] %vm225, %v9257
      %9290 = vst.msk [vmem:[#allocation3 + $0x10] sm:$0xff] %vm225, %v9258
      %9291 = vst.msk [vmem:[#allocation3 + $0x18] sm:$0xff] %vm225, %v9259
      %9292 = vst.msk [vmem:[#allocation3 + $0x20] sm:$0xff] %vm225, %v9260
      %9293 = vst.msk [vmem:[#allocation3 + $0x28] sm:$0xff] %vm225, %v9261
      %9294 = vst.msk [vmem:[#allocation3 + $0x30] sm:$0xff] %vm225, %v9262
      %9295 = vst.msk [vmem:[#allocation3 + $0x38] sm:$0xff] %vm225, %v9263
      %9296 = vst.msk [vmem:[#allocation3 + $0x40] sm:$0xff] %vm225, %v9264
      %9297 = vst.msk [vmem:[#allocation3 + $0x48] sm:$0xff] %vm225, %v9265
      %9298 = vst.msk [vmem:[#allocation3 + $0x50] sm:$0xff] %vm225, %v9266
      %9299 = vst.msk [vmem:[#allocation3 + $0x58] sm:$0xff] %vm225, %v9267
      %9300 = vst.msk [vmem:[#allocation3 + $0x60] sm:$0xff] %vm225, %v9268
      %9301 = vst.msk [vmem:[#allocation3 + $0x68] sm:$0xff] %vm225, %v9269
      %9302 = vst.msk [vmem:[#allocation3 + $0x70] sm:$0xff] %vm225, %v9270
      %9303 = vst.msk [vmem:[#allocation3 + $0x78] sm:$0xff] %vm225, %v9271
      %9304 = vst.msk [vmem:[#allocation3 + $0x80] sm:$0xff] %vm225, %v9272
      %9305 = vst.msk [vmem:[#allocation3 + $0x88] sm:$0xff] %vm225, %v9273
      %9306 = vst.msk [vmem:[#allocation3 + $0x90] sm:$0xff] %vm225, %v9274
      %9307 = vst.msk [vmem:[#allocation3 + $0x98] sm:$0xff] %vm225, %v9275
      %9308 = vst.msk [vmem:[#allocation3 + $0xa0] sm:$0xff] %vm225, %v9276
      %9309 = vst.msk [vmem:[#allocation3 + $0xa8] sm:$0xff] %vm225, %v9277
      %9310 = vst.msk [vmem:[#allocation3 + $0xb0] sm:$0xff] %vm225, %v9278
      %9311 = vst.msk [vmem:[#allocation3 + $0xb8] sm:$0xff] %vm225, %v9279
      %9312 = vst.msk [vmem:[#allocation3 + $0xc0] sm:$0xff] %vm225, %v9280
      %9313 = vst.msk [vmem:[#allocation3 + $0xc8] sm:$0xff] %vm225, %v9281
      %9314 = vst.msk [vmem:[#allocation3 + $0xd0] sm:$0xff] %vm225, %v9282
      %9315 = vst.msk [vmem:[#allocation3 + $0xd8] sm:$0xff] %vm225, %v9283
      %9316 = vst.msk [vmem:[#allocation3 + $0xe0] sm:$0xff] %vm225, %v9284
      %9317 = vst.msk [vmem:[#allocation3 + $0xe8] sm:$0xff] %vm225, %v9285
      %9318 = vst.msk [vmem:[#allocation3 + $0xf0] sm:$0xff] %vm225, %v9286
      %9319 = vst.msk [vmem:[#allocation3 + $0xf8] sm:$0xff] %vm225, %v9287
      %v9320 = vld [vmem:[%s2702 + $0x1] sm:$0xff]
      %v9321 = vld [vmem:[%s2702 + $0x9] sm:$0xff]
      %v9322 = vld [vmem:[%s2702 + $0x19] sm:$0xff]
      %v9323 = vld [vmem:[%s2702 + $0x21] sm:$0xff]
      %v9324 = vld [vmem:[%s2702 + $0x31] sm:$0xff]
      %v9325 = vld [vmem:[%s2702 + $0x39] sm:$0xff]
      %v9326 = vld [vmem:[%s2702 + $0x49] sm:$0xff]
      %v9327 = vld [vmem:[%s2702 + $0x51] sm:$0xff]
      %v9328 = vld [vmem:[%s2702 + $0x61] sm:$0xff]
      %v9329 = vld [vmem:[%s2702 + $0x69] sm:$0xff]
      %v9330 = vld [vmem:[%s2702 + $0x79] sm:$0xff]
      %v9331 = vld [vmem:[%s2702 + $0x81] sm:$0xff]
      %v9332 = vld [vmem:[%s2702 + $0x91] sm:$0xff]
      %v9333 = vld [vmem:[%s2702 + $0x99] sm:$0xff]
      %v9334 = vld [vmem:[%s2702 + $0xa9] sm:$0xff]
      %v9335 = vld [vmem:[%s2702 + $0xb1] sm:$0xff]
      %v9336 = vld [vmem:[%s2702 + $0xc1] sm:$0xff]
      %v9337 = vld [vmem:[%s2702 + $0xc9] sm:$0xff]
      %v9338 = vld [vmem:[%s2702 + $0xd9] sm:$0xff]
      %v9339 = vld [vmem:[%s2702 + $0xe1] sm:$0xff]
      %v9340 = vld [vmem:[%s2702 + $0xf1] sm:$0xff]
      %v9341 = vld [vmem:[%s2702 + $0xf9] sm:$0xff]
      %v9342 = vld [vmem:[%s2702 + $0x109] sm:$0xff]
      %v9343 = vld [vmem:[%s2702 + $0x111] sm:$0xff]
      %v9344 = vld [vmem:[%s2702 + $0x121] sm:$0xff]
      %v9345 = vld [vmem:[%s2702 + $0x129] sm:$0xff]
      %v9346 = vld [vmem:[%s2702 + $0x139] sm:$0xff]
      %v9347 = vld [vmem:[%s2702 + $0x141] sm:$0xff]
      %v9348 = vld [vmem:[%s2702 + $0x151] sm:$0xff]
      %v9349 = vld [vmem:[%s2702 + $0x159] sm:$0xff]
      %v9350 = vld [vmem:[%s2702 + $0x169] sm:$0xff]
      %v9351 = vld [vmem:[%s2702 + $0x171] sm:$0xff]
      %9384 = vrot.lane.b32.xlu0 %v9320, 4
      %v9385 = vpop.permute.xlu0 %9384
      %9386 = vrot.lane.b32.xlu0 %v9321, 4
      %v9387 = vpop.permute.xlu0 %9386
      %9388 = vrot.lane.b32.xlu0 %v9322, 4
      %v9389 = vpop.permute.xlu0 %9388
      %9390 = vrot.lane.b32.xlu0 %v9323, 4
      %v9391 = vpop.permute.xlu0 %9390
      %9392 = vrot.lane.b32.xlu0 %v9324, 4
      %v9393 = vpop.permute.xlu0 %9392
      %9394 = vrot.lane.b32.xlu0 %v9325, 4
      %v9395 = vpop.permute.xlu0 %9394
      %9396 = vrot.lane.b32.xlu0 %v9326, 4
      %v9397 = vpop.permute.xlu0 %9396
      %9398 = vrot.lane.b32.xlu0 %v9327, 4
      %v9399 = vpop.permute.xlu0 %9398
      %9400 = vrot.lane.b32.xlu0 %v9328, 4
      %v9401 = vpop.permute.xlu0 %9400
      %9402 = vrot.lane.b32.xlu0 %v9329, 4
      %v9403 = vpop.permute.xlu0 %9402
      %9404 = vrot.lane.b32.xlu0 %v9330, 4
      %v9405 = vpop.permute.xlu0 %9404
      %9406 = vrot.lane.b32.xlu0 %v9331, 4
      %v9407 = vpop.permute.xlu0 %9406
      %9408 = vrot.lane.b32.xlu0 %v9332, 4
      %v9409 = vpop.permute.xlu0 %9408
      %9410 = vrot.lane.b32.xlu0 %v9333, 4
      %v9411 = vpop.permute.xlu0 %9410
      %9412 = vrot.lane.b32.xlu0 %v9334, 4
      %v9413 = vpop.permute.xlu0 %9412
      %9414 = vrot.lane.b32.xlu0 %v9335, 4
      %v9415 = vpop.permute.xlu0 %9414
      %9416 = vrot.lane.b32.xlu0 %v9336, 4
      %v9417 = vpop.permute.xlu0 %9416
      %9418 = vrot.lane.b32.xlu0 %v9337, 4
      %v9419 = vpop.permute.xlu0 %9418
      %9420 = vrot.lane.b32.xlu0 %v9338, 4
      %v9421 = vpop.permute.xlu0 %9420
      %9422 = vrot.lane.b32.xlu0 %v9339, 4
      %v9423 = vpop.permute.xlu0 %9422
      %9424 = vrot.lane.b32.xlu0 %v9340, 4
      %v9425 = vpop.permute.xlu0 %9424
      %9426 = vrot.lane.b32.xlu0 %v9341, 4
      %v9427 = vpop.permute.xlu0 %9426
      %9428 = vrot.lane.b32.xlu0 %v9342, 4
      %v9429 = vpop.permute.xlu0 %9428
      %9430 = vrot.lane.b32.xlu0 %v9343, 4
      %v9431 = vpop.permute.xlu0 %9430
      %9432 = vrot.lane.b32.xlu0 %v9344, 4
      %v9433 = vpop.permute.xlu0 %9432
      %9434 = vrot.lane.b32.xlu0 %v9345, 4
      %v9435 = vpop.permute.xlu0 %9434
      %9436 = vrot.lane.b32.xlu0 %v9346, 4
      %v9437 = vpop.permute.xlu0 %9436
      %9438 = vrot.lane.b32.xlu0 %v9347, 4
      %v9439 = vpop.permute.xlu0 %9438
      %9440 = vrot.lane.b32.xlu0 %v9348, 4
      %v9441 = vpop.permute.xlu0 %9440
      %9442 = vrot.lane.b32.xlu0 %v9349, 4
      %v9443 = vpop.permute.xlu0 %9442
      %9444 = vrot.lane.b32.xlu0 %v9350, 4
      %v9445 = vpop.permute.xlu0 %9444
      %9446 = vrot.lane.b32.xlu0 %v9351, 4
      %v9447 = vpop.permute.xlu0 %9446
      %9480 = vst.msk [vmem:[#allocation3] sm:$0xff] %vm570, %v9385
      %9481 = vst.msk [vmem:[#allocation3 + $0x8] sm:$0xff] %vm570, %v9387
      %9482 = vst.msk [vmem:[#allocation3 + $0x10] sm:$0xff] %vm570, %v9389
      %9483 = vst.msk [vmem:[#allocation3 + $0x18] sm:$0xff] %vm570, %v9391
      %9484 = vst.msk [vmem:[#allocation3 + $0x20] sm:$0xff] %vm570, %v9393
      %9485 = vst.msk [vmem:[#allocation3 + $0x28] sm:$0xff] %vm570, %v9395
      %9486 = vst.msk [vmem:[#allocation3 + $0x30] sm:$0xff] %vm570, %v9397
      %9487 = vst.msk [vmem:[#allocation3 + $0x38] sm:$0xff] %vm570, %v9399
      %9488 = vst.msk [vmem:[#allocation3 + $0x40] sm:$0xff] %vm570, %v9401
      %9489 = vst.msk [vmem:[#allocation3 + $0x48] sm:$0xff] %vm570, %v9403
      %9490 = vst.msk [vmem:[#allocation3 + $0x50] sm:$0xff] %vm570, %v9405
      %9491 = vst.msk [vmem:[#allocation3 + $0x58] sm:$0xff] %vm570, %v9407
      %9492 = vst.msk [vmem:[#allocation3 + $0x60] sm:$0xff] %vm570, %v9409
      %9493 = vst.msk [vmem:[#allocation3 + $0x68] sm:$0xff] %vm570, %v9411
      %9494 = vst.msk [vmem:[#allocation3 + $0x70] sm:$0xff] %vm570, %v9413
      %9495 = vst.msk [vmem:[#allocation3 + $0x78] sm:$0xff] %vm570, %v9415
      %9496 = vst.msk [vmem:[#allocation3 + $0x80] sm:$0xff] %vm570, %v9417
      %9497 = vst.msk [vmem:[#allocation3 + $0x88] sm:$0xff] %vm570, %v9419
      %9498 = vst.msk [vmem:[#allocation3 + $0x90] sm:$0xff] %vm570, %v9421
      %9499 = vst.msk [vmem:[#allocation3 + $0x98] sm:$0xff] %vm570, %v9423
      %9500 = vst.msk [vmem:[#allocation3 + $0xa0] sm:$0xff] %vm570, %v9425
      %9501 = vst.msk [vmem:[#allocation3 + $0xa8] sm:$0xff] %vm570, %v9427
      %9502 = vst.msk [vmem:[#allocation3 + $0xb0] sm:$0xff] %vm570, %v9429
      %9503 = vst.msk [vmem:[#allocation3 + $0xb8] sm:$0xff] %vm570, %v9431
      %9504 = vst.msk [vmem:[#allocation3 + $0xc0] sm:$0xff] %vm570, %v9433
      %9505 = vst.msk [vmem:[#allocation3 + $0xc8] sm:$0xff] %vm570, %v9435
      %9506 = vst.msk [vmem:[#allocation3 + $0xd0] sm:$0xff] %vm570, %v9437
      %9507 = vst.msk [vmem:[#allocation3 + $0xd8] sm:$0xff] %vm570, %v9439
      %9508 = vst.msk [vmem:[#allocation3 + $0xe0] sm:$0xff] %vm570, %v9441
      %9509 = vst.msk [vmem:[#allocation3 + $0xe8] sm:$0xff] %vm570, %v9443
      %9510 = vst.msk [vmem:[#allocation3 + $0xf0] sm:$0xff] %vm570, %v9445
      %9511 = vst.msk [vmem:[#allocation3 + $0xf8] sm:$0xff] %vm570, %v9447
      %v9512 = vld [vmem:[%s2541 + $0x2] sm:$0xff]
      %v9513 = vld [vmem:[%s2541 + $0xa] sm:$0xff]
      %v9514 = vld [vmem:[%s2541 + $0x1a] sm:$0xff]
      %v9515 = vld [vmem:[%s2541 + $0x22] sm:$0xff]
      %v9516 = vld [vmem:[%s2541 + $0x32] sm:$0xff]
      %v9517 = vld [vmem:[%s2541 + $0x3a] sm:$0xff]
      %v9518 = vld [vmem:[%s2541 + $0x4a] sm:$0xff]
      %v9519 = vld [vmem:[%s2541 + $0x52] sm:$0xff]
      %v9520 = vld [vmem:[%s2541 + $0x62] sm:$0xff]
      %v9521 = vld [vmem:[%s2541 + $0x6a] sm:$0xff]
      %v9522 = vld [vmem:[%s2541 + $0x7a] sm:$0xff]
      %v9523 = vld [vmem:[%s2541 + $0x82] sm:$0xff]
      %v9524 = vld [vmem:[%s2541 + $0x92] sm:$0xff]
      %v9525 = vld [vmem:[%s2541 + $0x9a] sm:$0xff]
      %v9526 = vld [vmem:[%s2541 + $0xaa] sm:$0xff]
      %v9527 = vld [vmem:[%s2541 + $0xb2] sm:$0xff]
      %v9528 = vld [vmem:[%s2541 + $0xc2] sm:$0xff]
      %v9529 = vld [vmem:[%s2541 + $0xca] sm:$0xff]
      %v9530 = vld [vmem:[%s2541 + $0xda] sm:$0xff]
      %v9531 = vld [vmem:[%s2541 + $0xe2] sm:$0xff]
      %v9532 = vld [vmem:[%s2541 + $0xf2] sm:$0xff]
      %v9533 = vld [vmem:[%s2541 + $0xfa] sm:$0xff]
      %v9534 = vld [vmem:[%s2541 + $0x10a] sm:$0xff]
      %v9535 = vld [vmem:[%s2541 + $0x112] sm:$0xff]
      %v9536 = vld [vmem:[%s2541 + $0x122] sm:$0xff]
      %v9537 = vld [vmem:[%s2541 + $0x12a] sm:$0xff]
      %v9538 = vld [vmem:[%s2541 + $0x13a] sm:$0xff]
      %v9539 = vld [vmem:[%s2541 + $0x142] sm:$0xff]
      %v9540 = vld [vmem:[%s2541 + $0x152] sm:$0xff]
      %v9541 = vld [vmem:[%s2541 + $0x15a] sm:$0xff]
      %v9542 = vld [vmem:[%s2541 + $0x16a] sm:$0xff]
      %v9543 = vld [vmem:[%s2541 + $0x172] sm:$0xff]
      %9576 = vrot.lane.b32.xlu0 %v9512, 8
      %v9577 = vpop.permute.xlu0 %9576
      %9578 = vrot.lane.b32.xlu0 %v9513, 8
      %v9579 = vpop.permute.xlu0 %9578
      %9580 = vrot.lane.b32.xlu0 %v9514, 8
      %v9581 = vpop.permute.xlu0 %9580
      %9582 = vrot.lane.b32.xlu0 %v9515, 8
      %v9583 = vpop.permute.xlu0 %9582
      %9584 = vrot.lane.b32.xlu0 %v9516, 8
      %v9585 = vpop.permute.xlu0 %9584
      %9586 = vrot.lane.b32.xlu0 %v9517, 8
      %v9587 = vpop.permute.xlu0 %9586
      %9588 = vrot.lane.b32.xlu0 %v9518, 8
      %v9589 = vpop.permute.xlu0 %9588
      %9590 = vrot.lane.b32.xlu0 %v9519, 8
      %v9591 = vpop.permute.xlu0 %9590
      %9592 = vrot.lane.b32.xlu0 %v9520, 8
      %v9593 = vpop.permute.xlu0 %9592
      %9594 = vrot.lane.b32.xlu0 %v9521, 8
      %v9595 = vpop.permute.xlu0 %9594
      %9596 = vrot.lane.b32.xlu0 %v9522, 8
      %v9597 = vpop.permute.xlu0 %9596
      %9598 = vrot.lane.b32.xlu0 %v9523, 8
      %v9599 = vpop.permute.xlu0 %9598
      %9600 = vrot.lane.b32.xlu0 %v9524, 8
      %v9601 = vpop.permute.xlu0 %9600
      %9602 = vrot.lane.b32.xlu0 %v9525, 8
      %v9603 = vpop.permute.xlu0 %9602
      %9604 = vrot.lane.b32.xlu0 %v9526, 8
      %v9605 = vpop.permute.xlu0 %9604
      %9606 = vrot.lane.b32.xlu0 %v9527, 8
      %v9607 = vpop.permute.xlu0 %9606
      %9608 = vrot.lane.b32.xlu0 %v9528, 8
      %v9609 = vpop.permute.xlu0 %9608
      %9610 = vrot.lane.b32.xlu0 %v9529, 8
      %v9611 = vpop.permute.xlu0 %9610
      %9612 = vrot.lane.b32.xlu0 %v9530, 8
      %v9613 = vpop.permute.xlu0 %9612
      %9614 = vrot.lane.b32.xlu0 %v9531, 8
      %v9615 = vpop.permute.xlu0 %9614
      %9616 = vrot.lane.b32.xlu0 %v9532, 8
      %v9617 = vpop.permute.xlu0 %9616
      %9618 = vrot.lane.b32.xlu0 %v9533, 8
      %v9619 = vpop.permute.xlu0 %9618
      %9620 = vrot.lane.b32.xlu0 %v9534, 8
      %v9621 = vpop.permute.xlu0 %9620
      %9622 = vrot.lane.b32.xlu0 %v9535, 8
      %v9623 = vpop.permute.xlu0 %9622
      %9624 = vrot.lane.b32.xlu0 %v9536, 8
      %v9625 = vpop.permute.xlu0 %9624
      %9626 = vrot.lane.b32.xlu0 %v9537, 8
      %v9627 = vpop.permute.xlu0 %9626
      %9628 = vrot.lane.b32.xlu0 %v9538, 8
      %v9629 = vpop.permute.xlu0 %9628
      %9630 = vrot.lane.b32.xlu0 %v9539, 8
      %v9631 = vpop.permute.xlu0 %9630
      %9632 = vrot.lane.b32.xlu0 %v9540, 8
      %v9633 = vpop.permute.xlu0 %9632
      %9634 = vrot.lane.b32.xlu0 %v9541, 8
      %v9635 = vpop.permute.xlu0 %9634
      %9636 = vrot.lane.b32.xlu0 %v9542, 8
      %v9637 = vpop.permute.xlu0 %9636
      %9638 = vrot.lane.b32.xlu0 %v9543, 8
      %v9639 = vpop.permute.xlu0 %9638
      %9672 = vst.msk [vmem:[#allocation3] sm:$0xff] %vm763, %v9577
      %9673 = vst.msk [vmem:[#allocation3 + $0x8] sm:$0xff] %vm763, %v9579
      %9674 = vst.msk [vmem:[#allocation3 + $0x10] sm:$0xff] %vm763, %v9581
      %9675 = vst.msk [vmem:[#allocation3 + $0x18] sm:$0xff] %vm763, %v9583
      %9676 = vst.msk [vmem:[#allocation3 + $0x20] sm:$0xff] %vm763, %v9585
      %9677 = vst.msk [vmem:[#allocation3 + $0x28] sm:$0xff] %vm763, %v9587
      %9678 = vst.msk [vmem:[#allocation3 + $0x30] sm:$0xff] %vm763, %v9589
      %9679 = vst.msk [vmem:[#allocation3 + $0x38] sm:$0xff] %vm763, %v9591
      %9680 = vst.msk [vmem:[#allocation3 + $0x40] sm:$0xff] %vm763, %v9593
      %9681 = vst.msk [vmem:[#allocation3 + $0x48] sm:$0xff] %vm763, %v9595
      %9682 = vst.msk [vmem:[#allocation3 + $0x50] sm:$0xff] %vm763, %v9597
      %9683 = vst.msk [vmem:[#allocation3 + $0x58] sm:$0xff] %vm763, %v9599
      %9684 = vst.msk [vmem:[#allocation3 + $0x60] sm:$0xff] %vm763, %v9601
      %9685 = vst.msk [vmem:[#allocation3 + $0x68] sm:$0xff] %vm763, %v9603
      %9686 = vst.msk [vmem:[#allocation3 + $0x70] sm:$0xff] %vm763, %v9605
      %9687 = vst.msk [vmem:[#allocation3 + $0x78] sm:$0xff] %vm763, %v9607
      %9688 = vst.msk [vmem:[#allocation3 + $0x80] sm:$0xff] %vm763, %v9609
      %9689 = vst.msk [vmem:[#allocation3 + $0x88] sm:$0xff] %vm763, %v9611
      %9690 = vst.msk [vmem:[#allocation3 + $0x90] sm:$0xff] %vm763, %v9613
      %9691 = vst.msk [vmem:[#allocation3 + $0x98] sm:$0xff] %vm763, %v9615
      %9692 = vst.msk [vmem:[#allocation3 + $0xa0] sm:$0xff] %vm763, %v9617
      %9693 = vst.msk [vmem:[#allocation3 + $0xa8] sm:$0xff] %vm763, %v9619
      %9694 = vst.msk [vmem:[#allocation3 + $0xb0] sm:$0xff] %vm763, %v9621
      %9695 = vst.msk [vmem:[#allocation3 + $0xb8] sm:$0xff] %vm763, %v9623
      %9696 = vst.msk [vmem:[#allocation3 + $0xc0] sm:$0xff] %vm763, %v9625
      %9697 = vst.msk [vmem:[#allocation3 + $0xc8] sm:$0xff] %vm763, %v9627
      %9698 = vst.msk [vmem:[#allocation3 + $0xd0] sm:$0xff] %vm763, %v9629
      %9699 = vst.msk [vmem:[#allocation3 + $0xd8] sm:$0xff] %vm763, %v9631
      %9700 = vst.msk [vmem:[#allocation3 + $0xe0] sm:$0xff] %vm763, %v9633
      %9701 = vst.msk [vmem:[#allocation3 + $0xe8] sm:$0xff] %vm763, %v9635
      %9702 = vst.msk [vmem:[#allocation3 + $0xf0] sm:$0xff] %vm763, %v9637
      %9703 = vst.msk [vmem:[#allocation3 + $0xf8] sm:$0xff] %vm763, %v9639
      %v9704 = vld [vmem:[%s2831 + $0x1] sm:$0xff]
      %v9705 = vld [vmem:[%s2831 + $0x9] sm:$0xff]
      %v9706 = vld [vmem:[%s2831 + $0x19] sm:$0xff]
      %v9707 = vld [vmem:[%s2831 + $0x21] sm:$0xff]
      %v9708 = vld [vmem:[%s2831 + $0x31] sm:$0xff]
      %v9709 = vld [vmem:[%s2831 + $0x39] sm:$0xff]
      %v9710 = vld [vmem:[%s2831 + $0x49] sm:$0xff]
      %v9711 = vld [vmem:[%s2831 + $0x51] sm:$0xff]
      %v9712 = vld [vmem:[%s2831 + $0x61] sm:$0xff]
      %v9713 = vld [vmem:[%s2831 + $0x69] sm:$0xff]
      %v9714 = vld [vmem:[%s2831 + $0x79] sm:$0xff]
      %v9715 = vld [vmem:[%s2831 + $0x81] sm:$0xff]
      %v9716 = vld [vmem:[%s2831 + $0x91] sm:$0xff]
      %v9717 = vld [vmem:[%s2831 + $0x99] sm:$0xff]
      %v9718 = vld [vmem:[%s2831 + $0xa9] sm:$0xff]
      %v9719 = vld [vmem:[%s2831 + $0xb1] sm:$0xff]
      %v9720 = vld [vmem:[%s2831 + $0xc1] sm:$0xff]
      %v9721 = vld [vmem:[%s2831 + $0xc9] sm:$0xff]
      %v9722 = vld [vmem:[%s2831 + $0xd9] sm:$0xff]
      %v9723 = vld [vmem:[%s2831 + $0xe1] sm:$0xff]
      %v9724 = vld [vmem:[%s2831 + $0xf1] sm:$0xff]
      %v9725 = vld [vmem:[%s2831 + $0xf9] sm:$0xff]
      %v9726 = vld [vmem:[%s2831 + $0x109] sm:$0xff]
      %v9727 = vld [vmem:[%s2831 + $0x111] sm:$0xff]
      %v9728 = vld [vmem:[%s2831 + $0x121] sm:$0xff]
      %v9729 = vld [vmem:[%s2831 + $0x129] sm:$0xff]
      %v9730 = vld [vmem:[%s2831 + $0x139] sm:$0xff]
      %v9731 = vld [vmem:[%s2831 + $0x141] sm:$0xff]
      %v9732 = vld [vmem:[%s2831 + $0x151] sm:$0xff]
      %v9733 = vld [vmem:[%s2831 + $0x159] sm:$0xff]
      %v9734 = vld [vmem:[%s2831 + $0x169] sm:$0xff]
      %v9735 = vld [vmem:[%s2831 + $0x171] sm:$0xff]
      %9768 = vrot.lane.b32.xlu0 %v9704, 12
      %v9769 = vpop.permute.xlu0 %9768
      %9770 = vrot.lane.b32.xlu0 %v9705, 12
      %v9771 = vpop.permute.xlu0 %9770
      %9772 = vrot.lane.b32.xlu0 %v9706, 12
      %v9773 = vpop.permute.xlu0 %9772
      %9774 = vrot.lane.b32.xlu0 %v9707, 12
      %v9775 = vpop.permute.xlu0 %9774
      %9776 = vrot.lane.b32.xlu0 %v9708, 12
      %v9777 = vpop.permute.xlu0 %9776
      %9778 = vrot.lane.b32.xlu0 %v9709, 12
      %v9779 = vpop.permute.xlu0 %9778
      %9780 = vrot.lane.b32.xlu0 %v9710, 12
      %v9781 = vpop.permute.xlu0 %9780
      %9782 = vrot.lane.b32.xlu0 %v9711, 12
      %v9783 = vpop.permute.xlu0 %9782
      %9784 = vrot.lane.b32.xlu0 %v9712, 12
      %v9785 = vpop.permute.xlu0 %9784
      %9786 = vrot.lane.b32.xlu0 %v9713, 12
      %v9787 = vpop.permute.xlu0 %9786
      %9788 = vrot.lane.b32.xlu0 %v9714, 12
      %v9789 = vpop.permute.xlu0 %9788
      %9790 = vrot.lane.b32.xlu0 %v9715, 12
      %v9791 = vpop.permute.xlu0 %9790
      %9792 = vrot.lane.b32.xlu0 %v9716, 12
      %v9793 = vpop.permute.xlu0 %9792
      %9794 = vrot.lane.b32.xlu0 %v9717, 12
      %v9795 = vpop.permute.xlu0 %9794
      %9796 = vrot.lane.b32.xlu0 %v9718, 12
      %v9797 = vpop.permute.xlu0 %9796
      %9798 = vrot.lane.b32.xlu0 %v9719, 12
      %v9799 = vpop.permute.xlu0 %9798
      %9800 = vrot.lane.b32.xlu0 %v9720, 12
      %v9801 = vpop.permute.xlu0 %9800
      %9802 = vrot.lane.b32.xlu0 %v9721, 12
      %v9803 = vpop.permute.xlu0 %9802
      %9804 = vrot.lane.b32.xlu0 %v9722, 12
      %v9805 = vpop.permute.xlu0 %9804
      %9806 = vrot.lane.b32.xlu0 %v9723, 12
      %v9807 = vpop.permute.xlu0 %9806
      %9808 = vrot.lane.b32.xlu0 %v9724, 12
      %v9809 = vpop.permute.xlu0 %9808
      %9810 = vrot.lane.b32.xlu0 %v9725, 12
      %v9811 = vpop.permute.xlu0 %9810
      %9812 = vrot.lane.b32.xlu0 %v9726, 12
      %v9813 = vpop.permute.xlu0 %9812
      %9814 = vrot.lane.b32.xlu0 %v9727, 12
      %v9815 = vpop.permute.xlu0 %9814
      %9816 = vrot.lane.b32.xlu0 %v9728, 12
      %v9817 = vpop.permute.xlu0 %9816
      %9818 = vrot.lane.b32.xlu0 %v9729, 12
      %v9819 = vpop.permute.xlu0 %9818
      %9820 = vrot.lane.b32.xlu0 %v9730, 12
      %v9821 = vpop.permute.xlu0 %9820
      %9822 = vrot.lane.b32.xlu0 %v9731, 12
      %v9823 = vpop.permute.xlu0 %9822
      %9824 = vrot.lane.b32.xlu0 %v9732, 12
      %v9825 = vpop.permute.xlu0 %9824
      %9826 = vrot.lane.b32.xlu0 %v9733, 12
      %v9827 = vpop.permute.xlu0 %9826
      %9828 = vrot.lane.b32.xlu0 %v9734, 12
      %v9829 = vpop.permute.xlu0 %9828
      %9830 = vrot.lane.b32.xlu0 %v9735, 12
      %v9831 = vpop.permute.xlu0 %9830
      %9864 = vst.msk [vmem:[#allocation3] sm:$0xff] %vm956, %v9769
      %9865 = vst.msk [vmem:[#allocation3 + $0x8] sm:$0xff] %vm956, %v9771
      %9866 = vst.msk [vmem:[#allocation3 + $0x10] sm:$0xff] %vm956, %v9773
      %9867 = vst.msk [vmem:[#allocation3 + $0x18] sm:$0xff] %vm956, %v9775
      %9868 = vst.msk [vmem:[#allocation3 + $0x20] sm:$0xff] %vm956, %v9777
      %9869 = vst.msk [vmem:[#allocation3 + $0x28] sm:$0xff] %vm956, %v9779
      %9870 = vst.msk [vmem:[#allocation3 + $0x30] sm:$0xff] %vm956, %v9781
      %9871 = vst.msk [vmem:[#allocation3 + $0x38] sm:$0xff] %vm956, %v9783
      %9872 = vst.msk [vmem:[#allocation3 + $0x40] sm:$0xff] %vm956, %v9785
      %9873 = vst.msk [vmem:[#allocation3 + $0x48] sm:$0xff] %vm956, %v9787
      %9874 = vst.msk [vmem:[#allocation3 + $0x50] sm:$0xff] %vm956, %v9789
      %9875 = vst.msk [vmem:[#allocation3 + $0x58] sm:$0xff] %vm956, %v9791
      %9876 = vst.msk [vmem:[#allocation3 + $0x60] sm:$0xff] %vm956, %v9793
      %9877 = vst.msk [vmem:[#allocation3 + $0x68] sm:$0xff] %vm956, %v9795
      %9878 = vst.msk [vmem:[#allocation3 + $0x70] sm:$0xff] %vm956, %v9797
      %9879 = vst.msk [vmem:[#allocation3 + $0x78] sm:$0xff] %vm956, %v9799
      %9880 = vst.msk [vmem:[#allocation3 + $0x80] sm:$0xff] %vm956, %v9801
      %9881 = vst.msk [vmem:[#allocation3 + $0x88] sm:$0xff] %vm956, %v9803
      %9882 = vst.msk [vmem:[#allocation3 + $0x90] sm:$0xff] %vm956, %v9805
      %9883 = vst.msk [vmem:[#allocation3 + $0x98] sm:$0xff] %vm956, %v9807
      %9884 = vst.msk [vmem:[#allocation3 + $0xa0] sm:$0xff] %vm956, %v9809
      %9885 = vst.msk [vmem:[#allocation3 + $0xa8] sm:$0xff] %vm956, %v9811
      %9886 = vst.msk [vmem:[#allocation3 + $0xb0] sm:$0xff] %vm956, %v9813
      %9887 = vst.msk [vmem:[#allocation3 + $0xb8] sm:$0xff] %vm956, %v9815
      %9888 = vst.msk [vmem:[#allocation3 + $0xc0] sm:$0xff] %vm956, %v9817
      %9889 = vst.msk [vmem:[#allocation3 + $0xc8] sm:$0xff] %vm956, %v9819
      %9890 = vst.msk [vmem:[#allocation3 + $0xd0] sm:$0xff] %vm956, %v9821
      %9891 = vst.msk [vmem:[#allocation3 + $0xd8] sm:$0xff] %vm956, %v9823
      %9892 = vst.msk [vmem:[#allocation3 + $0xe0] sm:$0xff] %vm956, %v9825
      %9893 = vst.msk [vmem:[#allocation3 + $0xe8] sm:$0xff] %vm956, %v9827
      %9894 = vst.msk [vmem:[#allocation3 + $0xf0] sm:$0xff] %vm956, %v9829
      %9895 = vst.msk [vmem:[#allocation3 + $0xf8] sm:$0xff] %vm956, %v9831
      %v9896 = vld [vmem:[%s2960 + $0x1] sm:$0xff]
      %v9897 = vld [vmem:[%s2960 + $0x9] sm:$0xff]
      %v9898 = vld [vmem:[%s2960 + $0x19] sm:$0xff]
      %v9899 = vld [vmem:[%s2960 + $0x21] sm:$0xff]
      %v9900 = vld [vmem:[%s2960 + $0x31] sm:$0xff]
      %v9901 = vld [vmem:[%s2960 + $0x39] sm:$0xff]
      %v9902 = vld [vmem:[%s2960 + $0x49] sm:$0xff]
      %v9903 = vld [vmem:[%s2960 + $0x51] sm:$0xff]
      %v9904 = vld [vmem:[%s2960 + $0x61] sm:$0xff]
      %v9905 = vld [vmem:[%s2960 + $0x69] sm:$0xff]
      %v9906 = vld [vmem:[%s2960 + $0x79] sm:$0xff]
      %v9907 = vld [vmem:[%s2960 + $0x81] sm:$0xff]
      %v9908 = vld [vmem:[%s2960 + $0x91] sm:$0xff]
      %v9909 = vld [vmem:[%s2960 + $0x99] sm:$0xff]
      %v9910 = vld [vmem:[%s2960 + $0xa9] sm:$0xff]
      %v9911 = vld [vmem:[%s2960 + $0xb1] sm:$0xff]
      %v9912 = vld [vmem:[%s2960 + $0xc1] sm:$0xff]
      %v9913 = vld [vmem:[%s2960 + $0xc9] sm:$0xff]
      %v9914 = vld [vmem:[%s2960 + $0xd9] sm:$0xff]
      %v9915 = vld [vmem:[%s2960 + $0xe1] sm:$0xff]
      %v9916 = vld [vmem:[%s2960 + $0xf1] sm:$0xff]
      %v9917 = vld [vmem:[%s2960 + $0xf9] sm:$0xff]
      %v9918 = vld [vmem:[%s2960 + $0x109] sm:$0xff]
      %v9919 = vld [vmem:[%s2960 + $0x111] sm:$0xff]
      %v9920 = vld [vmem:[%s2960 + $0x121] sm:$0xff]
      %v9921 = vld [vmem:[%s2960 + $0x129] sm:$0xff]
      %v9922 = vld [vmem:[%s2960 + $0x139] sm:$0xff]
      %v9923 = vld [vmem:[%s2960 + $0x141] sm:$0xff]
      %v9924 = vld [vmem:[%s2960 + $0x151] sm:$0xff]
      %v9925 = vld [vmem:[%s2960 + $0x159] sm:$0xff]
      %v9926 = vld [vmem:[%s2960 + $0x169] sm:$0xff]
      %v9927 = vld [vmem:[%s2960 + $0x171] sm:$0xff]
      %9960 = vrot.lane.b32.xlu0 %v9896, 16
      %v9961 = vpop.permute.xlu0 %9960
      %9962 = vrot.lane.b32.xlu0 %v9897, 16
      %v9963 = vpop.permute.xlu0 %9962
      %9964 = vrot.lane.b32.xlu0 %v9898, 16
      %v9965 = vpop.permute.xlu0 %9964
      %9966 = vrot.lane.b32.xlu0 %v9899, 16
      %v9967 = vpop.permute.xlu0 %9966
      %9968 = vrot.lane.b32.xlu0 %v9900, 16
      %v9969 = vpop.permute.xlu0 %9968
      %9970 = vrot.lane.b32.xlu0 %v9901, 16
      %v9971 = vpop.permute.xlu0 %9970
      %9972 = vrot.lane.b32.xlu0 %v9902, 16
      %v9973 = vpop.permute.xlu0 %9972
      %9974 = vrot.lane.b32.xlu0 %v9903, 16
      %v9975 = vpop.permute.xlu0 %9974
      %9976 = vrot.lane.b32.xlu0 %v9904, 16
      %v9977 = vpop.permute.xlu0 %9976
      %9978 = vrot.lane.b32.xlu0 %v9905, 16
      %v9979 = vpop.permute.xlu0 %9978
      %9980 = vrot.lane.b32.xlu0 %v9906, 16
      %v9981 = vpop.permute.xlu0 %9980
      %9982 = vrot.lane.b32.xlu0 %v9907, 16
      %v9983 = vpop.permute.xlu0 %9982
      %9984 = vrot.lane.b32.xlu0 %v9908, 16
      %v9985 = vpop.permute.xlu0 %9984
      %9986 = vrot.lane.b32.xlu0 %v9909, 16
      %v9987 = vpop.permute.xlu0 %9986
      %9988 = vrot.lane.b32.xlu0 %v9910, 16
      %v9989 = vpop.permute.xlu0 %9988
      %9990 = vrot.lane.b32.xlu0 %v9911, 16
      %v9991 = vpop.permute.xlu0 %9990
      %9992 = vrot.lane.b32.xlu0 %v9912, 16
      %v9993 = vpop.permute.xlu0 %9992
      %9994 = vrot.lane.b32.xlu0 %v9913, 16
      %v9995 = vpop.permute.xlu0 %9994
      %9996 = vrot.lane.b32.xlu0 %v9914, 16
      %v9997 = vpop.permute.xlu0 %9996
      %9998 = vrot.lane.b32.xlu0 %v9915, 16
      %v9999 = vpop.permute.xlu0 %9998
      %10000 = vrot.lane.b32.xlu0 %v9916, 16
      %v10001 = vpop.permute.xlu0 %10000
      %10002 = vrot.lane.b32.xlu0 %v9917, 16
      %v10003 = vpop.permute.xlu0 %10002
      %10004 = vrot.lane.b32.xlu0 %v9918, 16
      %v10005 = vpop.permute.xlu0 %10004
      %10006 = vrot.lane.b32.xlu0 %v9919, 16
      %v10007 = vpop.permute.xlu0 %10006
      %10008 = vrot.lane.b32.xlu0 %v9920, 16
      %v10009 = vpop.permute.xlu0 %10008
      %10010 = vrot.lane.b32.xlu0 %v9921, 16
      %v10011 = vpop.permute.xlu0 %10010
      %10012 = vrot.lane.b32.xlu0 %v9922, 16
      %v10013 = vpop.permute.xlu0 %10012
      %10014 = vrot.lane.b32.xlu0 %v9923, 16
      %v10015 = vpop.permute.xlu0 %10014
      %10016 = vrot.lane.b32.xlu0 %v9924, 16
      %v10017 = vpop.permute.xlu0 %10016
      %10018 = vrot.lane.b32.xlu0 %v9925, 16
      %v10019 = vpop.permute.xlu0 %10018
      %10020 = vrot.lane.b32.xlu0 %v9926, 16
      %v10021 = vpop.permute.xlu0 %10020
      %10022 = vrot.lane.b32.xlu0 %v9927, 16
      %v10023 = vpop.permute.xlu0 %10022
      %10056 = vst.msk [vmem:[#allocation3] sm:$0xff] %vm1149, %v9961
      %10057 = vst.msk [vmem:[#allocation3 + $0x8] sm:$0xff] %vm1149, %v9963
      %10058 = vst.msk [vmem:[#allocation3 + $0x10] sm:$0xff] %vm1149, %v9965
      %10059 = vst.msk [vmem:[#allocation3 + $0x18] sm:$0xff] %vm1149, %v9967
      %10060 = vst.msk [vmem:[#allocation3 + $0x20] sm:$0xff] %vm1149, %v9969
      %10061 = vst.msk [vmem:[#allocation3 + $0x28] sm:$0xff] %vm1149, %v9971
      %10062 = vst.msk [vmem:[#allocation3 + $0x30] sm:$0xff] %vm1149, %v9973
      %10063 = vst.msk [vmem:[#allocation3 + $0x38] sm:$0xff] %vm1149, %v9975
      %10064 = vst.msk [vmem:[#allocation3 + $0x40] sm:$0xff] %vm1149, %v9977
      %10065 = vst.msk [vmem:[#allocation3 + $0x48] sm:$0xff] %vm1149, %v9979
      %10066 = vst.msk [vmem:[#allocation3 + $0x50] sm:$0xff] %vm1149, %v9981
      %10067 = vst.msk [vmem:[#allocation3 + $0x58] sm:$0xff] %vm1149, %v9983
      %10068 = vst.msk [vmem:[#allocation3 + $0x60] sm:$0xff] %vm1149, %v9985
      %10069 = vst.msk [vmem:[#allocation3 + $0x68] sm:$0xff] %vm1149, %v9987
      %10070 = vst.msk [vmem:[#allocation3 + $0x70] sm:$0xff] %vm1149, %v9989
      %10071 = vst.msk [vmem:[#allocation3 + $0x78] sm:$0xff] %vm1149, %v9991
      %10072 = vst.msk [vmem:[#allocation3 + $0x80] sm:$0xff] %vm1149, %v9993
      %10073 = vst.msk [vmem:[#allocation3 + $0x88] sm:$0xff] %vm1149, %v9995
      %10074 = vst.msk [vmem:[#allocation3 + $0x90] sm:$0xff] %vm1149, %v9997
      %10075 = vst.msk [vmem:[#allocation3 + $0x98] sm:$0xff] %vm1149, %v9999
      %10076 = vst.msk [vmem:[#allocation3 + $0xa0] sm:$0xff] %vm1149, %v10001
      %10077 = vst.msk [vmem:[#allocation3 + $0xa8] sm:$0xff] %vm1149, %v10003
      %10078 = vst.msk [vmem:[#allocation3 + $0xb0] sm:$0xff] %vm1149, %v10005
      %10079 = vst.msk [vmem:[#allocation3 + $0xb8] sm:$0xff] %vm1149, %v10007
      %10080 = vst.msk [vmem:[#allocation3 + $0xc0] sm:$0xff] %vm1149, %v10009
      %10081 = vst.msk [vmem:[#allocation3 + $0xc8] sm:$0xff] %vm1149, %v10011
      %10082 = vst.msk [vmem:[#allocation3 + $0xd0] sm:$0xff] %vm1149, %v10013
      %10083 = vst.msk [vmem:[#allocation3 + $0xd8] sm:$0xff] %vm1149, %v10015
      %10084 = vst.msk [vmem:[#allocation3 + $0xe0] sm:$0xff] %vm1149, %v10017
      %10085 = vst.msk [vmem:[#allocation3 + $0xe8] sm:$0xff] %vm1149, %v10019
      %10086 = vst.msk [vmem:[#allocation3 + $0xf0] sm:$0xff] %vm1149, %v10021
      %10087 = vst.msk [vmem:[#allocation3 + $0xf8] sm:$0xff] %vm1149, %v10023
      %v10088 = vld [vmem:[%s2831 + $0x2] sm:$0xff]
      %v10089 = vld [vmem:[%s2831 + $0xa] sm:$0xff]
      %v10090 = vld [vmem:[%s2831 + $0x1a] sm:$0xff]
      %v10091 = vld [vmem:[%s2831 + $0x22] sm:$0xff]
      %v10092 = vld [vmem:[%s2831 + $0x32] sm:$0xff]
      %v10093 = vld [vmem:[%s2831 + $0x3a] sm:$0xff]
      %v10094 = vld [vmem:[%s2831 + $0x4a] sm:$0xff]
      %v10095 = vld [vmem:[%s2831 + $0x52] sm:$0xff]
      %v10096 = vld [vmem:[%s2831 + $0x62] sm:$0xff]
      %v10097 = vld [vmem:[%s2831 + $0x6a] sm:$0xff]
      %v10098 = vld [vmem:[%s2831 + $0x7a] sm:$0xff]
      %v10099 = vld [vmem:[%s2831 + $0x82] sm:$0xff]
      %v10100 = vld [vmem:[%s2831 + $0x92] sm:$0xff]
      %v10101 = vld [vmem:[%s2831 + $0x9a] sm:$0xff]
      %v10102 = vld [vmem:[%s2831 + $0xaa] sm:$0xff]
      %v10103 = vld [vmem:[%s2831 + $0xb2] sm:$0xff]
      %v10104 = vld [vmem:[%s2831 + $0xc2] sm:$0xff]
      %v10105 = vld [vmem:[%s2831 + $0xca] sm:$0xff]
      %v10106 = vld [vmem:[%s2831 + $0xda] sm:$0xff]
      %v10107 = vld [vmem:[%s2831 + $0xe2] sm:$0xff]
      %v10108 = vld [vmem:[%s2831 + $0xf2] sm:$0xff]
      %v10109 = vld [vmem:[%s2831 + $0xfa] sm:$0xff]
      %v10110 = vld [vmem:[%s2831 + $0x10a] sm:$0xff]
      %v10111 = vld [vmem:[%s2831 + $0x112] sm:$0xff]
      %v10112 = vld [vmem:[%s2831 + $0x122] sm:$0xff]
      %v10113 = vld [vmem:[%s2831 + $0x12a] sm:$0xff]
      %v10114 = vld [vmem:[%s2831 + $0x13a] sm:$0xff]
      %v10115 = vld [vmem:[%s2831 + $0x142] sm:$0xff]
      %v10116 = vld [vmem:[%s2831 + $0x152] sm:$0xff]
      %v10117 = vld [vmem:[%s2831 + $0x15a] sm:$0xff]
      %v10118 = vld [vmem:[%s2831 + $0x16a] sm:$0xff]
      %v10119 = vld [vmem:[%s2831 + $0x172] sm:$0xff]
      %10152 = vrot.lane.b32.xlu0 %v10088, 20
      %v10153 = vpop.permute.xlu0 %10152
      %10154 = vrot.lane.b32.xlu0 %v10089, 20
      %v10155 = vpop.permute.xlu0 %10154
      %10156 = vrot.lane.b32.xlu0 %v10090, 20
      %v10157 = vpop.permute.xlu0 %10156
      %10158 = vrot.lane.b32.xlu0 %v10091, 20
      %v10159 = vpop.permute.xlu0 %10158
      %10160 = vrot.lane.b32.xlu0 %v10092, 20
      %v10161 = vpop.permute.xlu0 %10160
      %10162 = vrot.lane.b32.xlu0 %v10093, 20
      %v10163 = vpop.permute.xlu0 %10162
      %10164 = vrot.lane.b32.xlu0 %v10094, 20
      %v10165 = vpop.permute.xlu0 %10164
      %10166 = vrot.lane.b32.xlu0 %v10095, 20
      %v10167 = vpop.permute.xlu0 %10166
      %10168 = vrot.lane.b32.xlu0 %v10096, 20
      %v10169 = vpop.permute.xlu0 %10168
      %10170 = vrot.lane.b32.xlu0 %v10097, 20
      %v10171 = vpop.permute.xlu0 %10170
      %10172 = vrot.lane.b32.xlu0 %v10098, 20
      %v10173 = vpop.permute.xlu0 %10172
      %10174 = vrot.lane.b32.xlu0 %v10099, 20
      %v10175 = vpop.permute.xlu0 %10174
      %10176 = vrot.lane.b32.xlu0 %v10100, 20
      %v10177 = vpop.permute.xlu0 %10176
      %10178 = vrot.lane.b32.xlu0 %v10101, 20
      %v10179 = vpop.permute.xlu0 %10178
      %10180 = vrot.lane.b32.xlu0 %v10102, 20
      %v10181 = vpop.permute.xlu0 %10180
      %10182 = vrot.lane.b32.xlu0 %v10103, 20
      %v10183 = vpop.permute.xlu0 %10182
      %10184 = vrot.lane.b32.xlu0 %v10104, 20
      %v10185 = vpop.permute.xlu0 %10184
      %10186 = vrot.lane.b32.xlu0 %v10105, 20
      %v10187 = vpop.permute.xlu0 %10186
      %10188 = vrot.lane.b32.xlu0 %v10106, 20
      %v10189 = vpop.permute.xlu0 %10188
      %10190 = vrot.lane.b32.xlu0 %v10107, 20
      %v10191 = vpop.permute.xlu0 %10190
      %10192 = vrot.lane.b32.xlu0 %v10108, 20
      %v10193 = vpop.permute.xlu0 %10192
      %10194 = vrot.lane.b32.xlu0 %v10109, 20
      %v10195 = vpop.permute.xlu0 %10194
      %10196 = vrot.lane.b32.xlu0 %v10110, 20
      %v10197 = vpop.permute.xlu0 %10196
      %10198 = vrot.lane.b32.xlu0 %v10111, 20
      %v10199 = vpop.permute.xlu0 %10198
      %10200 = vrot.lane.b32.xlu0 %v10112, 20
      %v10201 = vpop.permute.xlu0 %10200
      %10202 = vrot.lane.b32.xlu0 %v10113, 20
      %v10203 = vpop.permute.xlu0 %10202
      %10204 = vrot.lane.b32.xlu0 %v10114, 20
      %v10205 = vpop.permute.xlu0 %10204
      %10206 = vrot.lane.b32.xlu0 %v10115, 20
      %v10207 = vpop.permute.xlu0 %10206
      %10208 = vrot.lane.b32.xlu0 %v10116, 20
      %v10209 = vpop.permute.xlu0 %10208
      %10210 = vrot.lane.b32.xlu0 %v10117, 20
      %v10211 = vpop.permute.xlu0 %10210
      %10212 = vrot.lane.b32.xlu0 %v10118, 20
      %v10213 = vpop.permute.xlu0 %10212
      %10214 = vrot.lane.b32.xlu0 %v10119, 20
      %v10215 = vpop.permute.xlu0 %10214
      %10248 = vst.msk [vmem:[#allocation3] sm:$0xff] %vm1342, %v10153
      %10249 = vst.msk [vmem:[#allocation3 + $0x8] sm:$0xff] %vm1342, %v10155
      %10250 = vst.msk [vmem:[#allocation3 + $0x10] sm:$0xff] %vm1342, %v10157
      %10251 = vst.msk [vmem:[#allocation3 + $0x18] sm:$0xff] %vm1342, %v10159
      %10252 = vst.msk [vmem:[#allocation3 + $0x20] sm:$0xff] %vm1342, %v10161
      %10253 = vst.msk [vmem:[#allocation3 + $0x28] sm:$0xff] %vm1342, %v10163
      %10254 = vst.msk [vmem:[#allocation3 + $0x30] sm:$0xff] %vm1342, %v10165
      %10255 = vst.msk [vmem:[#allocation3 + $0x38] sm:$0xff] %vm1342, %v10167
      %10256 = vst.msk [vmem:[#allocation3 + $0x40] sm:$0xff] %vm1342, %v10169
      %10257 = vst.msk [vmem:[#allocation3 + $0x48] sm:$0xff] %vm1342, %v10171
      %10258 = vst.msk [vmem:[#allocation3 + $0x50] sm:$0xff] %vm1342, %v10173
      %10259 = vst.msk [vmem:[#allocation3 + $0x58] sm:$0xff] %vm1342, %v10175
      %10260 = vst.msk [vmem:[#allocation3 + $0x60] sm:$0xff] %vm1342, %v10177
      %10261 = vst.msk [vmem:[#allocation3 + $0x68] sm:$0xff] %vm1342, %v10179
      %10262 = vst.msk [vmem:[#allocation3 + $0x70] sm:$0xff] %vm1342, %v10181
      %10263 = vst.msk [vmem:[#allocation3 + $0x78] sm:$0xff] %vm1342, %v10183
      %10264 = vst.msk [vmem:[#allocation3 + $0x80] sm:$0xff] %vm1342, %v10185
      %10265 = vst.msk [vmem:[#allocation3 + $0x88] sm:$0xff] %vm1342, %v10187
      %10266 = vst.msk [vmem:[#allocation3 + $0x90] sm:$0xff] %vm1342, %v10189
      %10267 = vst.msk [vmem:[#allocation3 + $0x98] sm:$0xff] %vm1342, %v10191
      %10268 = vst.msk [vmem:[#allocation3 + $0xa0] sm:$0xff] %vm1342, %v10193
      %10269 = vst.msk [vmem:[#allocation3 + $0xa8] sm:$0xff] %vm1342, %v10195
      %10270 = vst.msk [vmem:[#allocation3 + $0xb0] sm:$0xff] %vm1342, %v10197
      %10271 = vst.msk [vmem:[#allocation3 + $0xb8] sm:$0xff] %vm1342, %v10199
      %10272 = vst.msk [vmem:[#allocation3 + $0xc0] sm:$0xff] %vm1342, %v10201
      %10273 = vst.msk [vmem:[#allocation3 + $0xc8] sm:$0xff] %vm1342, %v10203
      %10274 = vst.msk [vmem:[#allocation3 + $0xd0] sm:$0xff] %vm1342, %v10205
      %10275 = vst.msk [vmem:[#allocation3 + $0xd8] sm:$0xff] %vm1342, %v10207
      %10276 = vst.msk [vmem:[#allocation3 + $0xe0] sm:$0xff] %vm1342, %v10209
      %10277 = vst.msk [vmem:[#allocation3 + $0xe8] sm:$0xff] %vm1342, %v10211
      %10278 = vst.msk [vmem:[#allocation3 + $0xf0] sm:$0xff] %vm1342, %v10213
      %10279 = vst.msk [vmem:[#allocation3 + $0xf8] sm:$0xff] %vm1342, %v10215
      %v10280 = vld [vmem:[%s8342 + $0x1] sm:$0xff]
      %v10281 = vld [vmem:[%s8342 + $0x9] sm:$0xff]
      %v10282 = vld [vmem:[%s8342 + $0x19] sm:$0xff]
      %v10283 = vld [vmem:[%s8342 + $0x21] sm:$0xff]
      %v10284 = vld [vmem:[%s8342 + $0x31] sm:$0xff]
      %v10285 = vld [vmem:[%s8342 + $0x39] sm:$0xff]
      %v10286 = vld [vmem:[%s8342 + $0x49] sm:$0xff]
      %v10287 = vld [vmem:[%s8342 + $0x51] sm:$0xff]
      %v10288 = vld [vmem:[%s8342 + $0x61] sm:$0xff]
      %v10289 = vld [vmem:[%s8342 + $0x69] sm:$0xff]
      %v10290 = vld [vmem:[%s8342 + $0x79] sm:$0xff]
      %v10291 = vld [vmem:[%s8342 + $0x81] sm:$0xff]
      %v10292 = vld [vmem:[%s8342 + $0x91] sm:$0xff]
      %v10293 = vld [vmem:[%s8342 + $0x99] sm:$0xff]
      %v10294 = vld [vmem:[%s8342 + $0xa9] sm:$0xff]
      %v10295 = vld [vmem:[%s8342 + $0xb1] sm:$0xff]
      %v10296 = vld [vmem:[%s8342 + $0xc1] sm:$0xff]
      %v10297 = vld [vmem:[%s8342 + $0xc9] sm:$0xff]
      %v10298 = vld [vmem:[%s8342 + $0xd9] sm:$0xff]
      %v10299 = vld [vmem:[%s8342 + $0xe1] sm:$0xff]
      %v10300 = vld [vmem:[%s8342 + $0xf1] sm:$0xff]
      %v10301 = vld [vmem:[%s8342 + $0xf9] sm:$0xff]
      %v10302 = vld [vmem:[%s8342 + $0x109] sm:$0xff]
      %v10303 = vld [vmem:[%s8342 + $0x111] sm:$0xff]
      %v10304 = vld [vmem:[%s8342 + $0x121] sm:$0xff]
      %v10305 = vld [vmem:[%s8342 + $0x129] sm:$0xff]
      %v10306 = vld [vmem:[%s8342 + $0x139] sm:$0xff]
      %v10307 = vld [vmem:[%s8342 + $0x141] sm:$0xff]
      %v10308 = vld [vmem:[%s8342 + $0x151] sm:$0xff]
      %v10309 = vld [vmem:[%s8342 + $0x159] sm:$0xff]
      %v10310 = vld [vmem:[%s8342 + $0x169] sm:$0xff]
      %v10311 = vld [vmem:[%s8342 + $0x171] sm:$0xff]
      %10344 = vrot.lane.b32.xlu0 %v10280, 24
      %v10345 = vpop.permute.xlu0 %10344
      %10346 = vrot.lane.b32.xlu0 %v10281, 24
      %v10347 = vpop.permute.xlu0 %10346
      %10348 = vrot.lane.b32.xlu0 %v10282, 24
      %v10349 = vpop.permute.xlu0 %10348
      %10350 = vrot.lane.b32.xlu0 %v10283, 24
      %v10351 = vpop.permute.xlu0 %10350
      %10352 = vrot.lane.b32.xlu0 %v10284, 24
      %v10353 = vpop.permute.xlu0 %10352
      %10354 = vrot.lane.b32.xlu0 %v10285, 24
      %v10355 = vpop.permute.xlu0 %10354
      %10356 = vrot.lane.b32.xlu0 %v10286, 24
      %v10357 = vpop.permute.xlu0 %10356
      %10358 = vrot.lane.b32.xlu0 %v10287, 24
      %v10359 = vpop.permute.xlu0 %10358
      %10360 = vrot.lane.b32.xlu0 %v10288, 24
      %v10361 = vpop.permute.xlu0 %10360
      %10362 = vrot.lane.b32.xlu0 %v10289, 24
      %v10363 = vpop.permute.xlu0 %10362
      %10364 = vrot.lane.b32.xlu0 %v10290, 24
      %v10365 = vpop.permute.xlu0 %10364
      %10366 = vrot.lane.b32.xlu0 %v10291, 24
      %v10367 = vpop.permute.xlu0 %10366
      %10368 = vrot.lane.b32.xlu0 %v10292, 24
      %v10369 = vpop.permute.xlu0 %10368
      %10370 = vrot.lane.b32.xlu0 %v10293, 24
      %v10371 = vpop.permute.xlu0 %10370
      %10372 = vrot.lane.b32.xlu0 %v10294, 24
      %v10373 = vpop.permute.xlu0 %10372
      %10374 = vrot.lane.b32.xlu0 %v10295, 24
      %v10375 = vpop.permute.xlu0 %10374
      %10376 = vrot.lane.b32.xlu0 %v10296, 24
      %v10377 = vpop.permute.xlu0 %10376
      %10378 = vrot.lane.b32.xlu0 %v10297, 24
      %v10379 = vpop.permute.xlu0 %10378
      %10380 = vrot.lane.b32.xlu0 %v10298, 24
      %v10381 = vpop.permute.xlu0 %10380
      %10382 = vrot.lane.b32.xlu0 %v10299, 24
      %v10383 = vpop.permute.xlu0 %10382
      %10384 = vrot.lane.b32.xlu0 %v10300, 24
      %v10385 = vpop.permute.xlu0 %10384
      %10386 = vrot.lane.b32.xlu0 %v10301, 24
      %v10387 = vpop.permute.xlu0 %10386
      %10388 = vrot.lane.b32.xlu0 %v10302, 24
      %v10389 = vpop.permute.xlu0 %10388
      %10390 = vrot.lane.b32.xlu0 %v10303, 24
      %v10391 = vpop.permute.xlu0 %10390
      %10392 = vrot.lane.b32.xlu0 %v10304, 24
      %v10393 = vpop.permute.xlu0 %10392
      %10394 = vrot.lane.b32.xlu0 %v10305, 24
      %v10395 = vpop.permute.xlu0 %10394
      %10396 = vrot.lane.b32.xlu0 %v10306, 24
      %v10397 = vpop.permute.xlu0 %10396
      %10398 = vrot.lane.b32.xlu0 %v10307, 24
      %v10399 = vpop.permute.xlu0 %10398
      %10400 = vrot.lane.b32.xlu0 %v10308, 24
      %v10401 = vpop.permute.xlu0 %10400
      %10402 = vrot.lane.b32.xlu0 %v10309, 24
      %v10403 = vpop.permute.xlu0 %10402
      %10404 = vrot.lane.b32.xlu0 %v10310, 24
      %v10405 = vpop.permute.xlu0 %10404
      %10406 = vrot.lane.b32.xlu0 %v10311, 24
      %v10407 = vpop.permute.xlu0 %10406
      %10440 = vst.msk [vmem:[#allocation3] sm:$0xff] %vm1536, %v10345
      %10441 = vst.msk [vmem:[#allocation3 + $0x8] sm:$0xff] %vm1536, %v10347
      %10442 = vst.msk [vmem:[#allocation3 + $0x10] sm:$0xff] %vm1536, %v10349
      %10443 = vst.msk [vmem:[#allocation3 + $0x18] sm:$0xff] %vm1536, %v10351
      %10444 = vst.msk [vmem:[#allocation3 + $0x20] sm:$0xff] %vm1536, %v10353
      %10445 = vst.msk [vmem:[#allocation3 + $0x28] sm:$0xff] %vm1536, %v10355
      %10446 = vst.msk [vmem:[#allocation3 + $0x30] sm:$0xff] %vm1536, %v10357
      %10447 = vst.msk [vmem:[#allocation3 + $0x38] sm:$0xff] %vm1536, %v10359
      %10448 = vst.msk [vmem:[#allocation3 + $0x40] sm:$0xff] %vm1536, %v10361
      %10449 = vst.msk [vmem:[#allocation3 + $0x48] sm:$0xff] %vm1536, %v10363
      %10450 = vst.msk [vmem:[#allocation3 + $0x50] sm:$0xff] %vm1536, %v10365
      %10451 = vst.msk [vmem:[#allocation3 + $0x58] sm:$0xff] %vm1536, %v10367
      %10452 = vst.msk [vmem:[#allocation3 + $0x60] sm:$0xff] %vm1536, %v10369
      %10453 = vst.msk [vmem:[#allocation3 + $0x68] sm:$0xff] %vm1536, %v10371
      %10454 = vst.msk [vmem:[#allocation3 + $0x70] sm:$0xff] %vm1536, %v10373
      %10455 = vst.msk [vmem:[#allocation3 + $0x78] sm:$0xff] %vm1536, %v10375
      %10456 = vst.msk [vmem:[#allocation3 + $0x80] sm:$0xff] %vm1536, %v10377
      %10457 = vst.msk [vmem:[#allocation3 + $0x88] sm:$0xff] %vm1536, %v10379
      %10458 = vst.msk [vmem:[#allocation3 + $0x90] sm:$0xff] %vm1536, %v10381
      %10459 = vst.msk [vmem:[#allocation3 + $0x98] sm:$0xff] %vm1536, %v10383
      %10460 = vst.msk [vmem:[#allocation3 + $0xa0] sm:$0xff] %vm1536, %v10385
      %10461 = vst.msk [vmem:[#allocation3 + $0xa8] sm:$0xff] %vm1536, %v10387
      %10462 = vst.msk [vmem:[#allocation3 + $0xb0] sm:$0xff] %vm1536, %v10389
      %10463 = vst.msk [vmem:[#allocation3 + $0xb8] sm:$0xff] %vm1536, %v10391
      %10464 = vst.msk [vmem:[#allocation3 + $0xc0] sm:$0xff] %vm1536, %v10393
      %10465 = vst.msk [vmem:[#allocation3 + $0xc8] sm:$0xff] %vm1536, %v10395
      %10466 = vst.msk [vmem:[#allocation3 + $0xd0] sm:$0xff] %vm1536, %v10397
      %10467 = vst.msk [vmem:[#allocation3 + $0xd8] sm:$0xff] %vm1536, %v10399
      %10468 = vst.msk [vmem:[#allocation3 + $0xe0] sm:$0xff] %vm1536, %v10401
      %10469 = vst.msk [vmem:[#allocation3 + $0xe8] sm:$0xff] %vm1536, %v10403
      %10470 = vst.msk [vmem:[#allocation3 + $0xf0] sm:$0xff] %vm1536, %v10405
      %10471 = vst.msk [vmem:[#allocation3 + $0xf8] sm:$0xff] %vm1536, %v10407
      %v10472 = vld [vmem:[%s8149 + $0x1] sm:$0xff]
      %v10473 = vld [vmem:[%s8149 + $0x9] sm:$0xff]
      %v10474 = vld [vmem:[%s8149 + $0x19] sm:$0xff]
      %v10475 = vld [vmem:[%s8149 + $0x21] sm:$0xff]
      %v10476 = vld [vmem:[%s8149 + $0x31] sm:$0xff]
      %v10477 = vld [vmem:[%s8149 + $0x39] sm:$0xff]
      %v10478 = vld [vmem:[%s8149 + $0x49] sm:$0xff]
      %v10479 = vld [vmem:[%s8149 + $0x51] sm:$0xff]
      %v10480 = vld [vmem:[%s8149 + $0x61] sm:$0xff]
      %v10481 = vld [vmem:[%s8149 + $0x69] sm:$0xff]
      %v10482 = vld [vmem:[%s8149 + $0x79] sm:$0xff]
      %v10483 = vld [vmem:[%s8149 + $0x81] sm:$0xff]
      %v10484 = vld [vmem:[%s8149 + $0x91] sm:$0xff]
      %v10485 = vld [vmem:[%s8149 + $0x99] sm:$0xff]
      %v10486 = vld [vmem:[%s8149 + $0xa9] sm:$0xff]
      %v10487 = vld [vmem:[%s8149 + $0xb1] sm:$0xff]
      %v10488 = vld [vmem:[%s8149 + $0xc1] sm:$0xff]
      %v10489 = vld [vmem:[%s8149 + $0xc9] sm:$0xff]
      %v10490 = vld [vmem:[%s8149 + $0xd9] sm:$0xff]
      %v10491 = vld [vmem:[%s8149 + $0xe1] sm:$0xff]
      %v10492 = vld [vmem:[%s8149 + $0xf1] sm:$0xff]
      %v10493 = vld [vmem:[%s8149 + $0xf9] sm:$0xff]
      %v10494 = vld [vmem:[%s8149 + $0x109] sm:$0xff]
      %v10495 = vld [vmem:[%s8149 + $0x111] sm:$0xff]
      %v10496 = vld [vmem:[%s8149 + $0x121] sm:$0xff]
      %v10497 = vld [vmem:[%s8149 + $0x129] sm:$0xff]
      %v10498 = vld [vmem:[%s8149 + $0x139] sm:$0xff]
      %v10499 = vld [vmem:[%s8149 + $0x141] sm:$0xff]
      %v10500 = vld [vmem:[%s8149 + $0x151] sm:$0xff]
      %v10501 = vld [vmem:[%s8149 + $0x159] sm:$0xff]
      %v10502 = vld [vmem:[%s8149 + $0x169] sm:$0xff]
      %v10503 = vld [vmem:[%s8149 + $0x171] sm:$0xff]
      %10536 = vrot.lane.b32.xlu0 %v10472, 28
      %v10537 = vpop.permute.xlu0 %10536
      %10538 = vrot.lane.b32.xlu0 %v10473, 28
      %v10539 = vpop.permute.xlu0 %10538
      %10540 = vrot.lane.b32.xlu0 %v10474, 28
      %v10541 = vpop.permute.xlu0 %10540
      %10542 = vrot.lane.b32.xlu0 %v10475, 28
      %v10543 = vpop.permute.xlu0 %10542
      %10544 = vrot.lane.b32.xlu0 %v10476, 28
      %v10545 = vpop.permute.xlu0 %10544
      %10546 = vrot.lane.b32.xlu0 %v10477, 28
      %v10547 = vpop.permute.xlu0 %10546
      %10548 = vrot.lane.b32.xlu0 %v10478, 28
      %v10549 = vpop.permute.xlu0 %10548
      %10550 = vrot.lane.b32.xlu0 %v10479, 28
      %v10551 = vpop.permute.xlu0 %10550
      %10552 = vrot.lane.b32.xlu0 %v10480, 28
      %v10553 = vpop.permute.xlu0 %10552
      %10554 = vrot.lane.b32.xlu0 %v10481, 28
      %v10555 = vpop.permute.xlu0 %10554
      %10556 = vrot.lane.b32.xlu0 %v10482, 28
      %v10557 = vpop.permute.xlu0 %10556
      %10558 = vrot.lane.b32.xlu0 %v10483, 28
      %v10559 = vpop.permute.xlu0 %10558
      %10560 = vrot.lane.b32.xlu0 %v10484, 28
      %v10561 = vpop.permute.xlu0 %10560
      %10562 = vrot.lane.b32.xlu0 %v10485, 28
      %v10563 = vpop.permute.xlu0 %10562
      %10564 = vrot.lane.b32.xlu0 %v10486, 28
      %v10565 = vpop.permute.xlu0 %10564
      %10566 = vrot.lane.b32.xlu0 %v10487, 28
      %v10567 = vpop.permute.xlu0 %10566
      %10568 = vrot.lane.b32.xlu0 %v10488, 28
      %v10569 = vpop.permute.xlu0 %10568
      %10570 = vrot.lane.b32.xlu0 %v10489, 28
      %v10571 = vpop.permute.xlu0 %10570
      %10572 = vrot.lane.b32.xlu0 %v10490, 28
      %v10573 = vpop.permute.xlu0 %10572
      %10574 = vrot.lane.b32.xlu0 %v10491, 28
      %v10575 = vpop.permute.xlu0 %10574
      %10576 = vrot.lane.b32.xlu0 %v10492, 28
      %v10577 = vpop.permute.xlu0 %10576
      %10578 = vrot.lane.b32.xlu0 %v10493, 28
      %v10579 = vpop.permute.xlu0 %10578
      %10580 = vrot.lane.b32.xlu0 %v10494, 28
      %v10581 = vpop.permute.xlu0 %10580
      %10582 = vrot.lane.b32.xlu0 %v10495, 28
      %v10583 = vpop.permute.xlu0 %10582
      %10584 = vrot.lane.b32.xlu0 %v10496, 28
      %v10585 = vpop.permute.xlu0 %10584
      %10586 = vrot.lane.b32.xlu0 %v10497, 28
      %v10587 = vpop.permute.xlu0 %10586
      %10588 = vrot.lane.b32.xlu0 %v10498, 28
      %v10589 = vpop.permute.xlu0 %10588
      %10590 = vrot.lane.b32.xlu0 %v10499, 28
      %v10591 = vpop.permute.xlu0 %10590
      %10592 = vrot.lane.b32.xlu0 %v10500, 28
      %v10593 = vpop.permute.xlu0 %10592
      %10594 = vrot.lane.b32.xlu0 %v10501, 28
      %v10595 = vpop.permute.xlu0 %10594
      %10596 = vrot.lane.b32.xlu0 %v10502, 28
      %v10597 = vpop.permute.xlu0 %10596
      %10598 = vrot.lane.b32.xlu0 %v10503, 28
      %v10599 = vpop.permute.xlu0 %10598
      %10632 = vst.msk [vmem:[#allocation3] sm:$0xff] %vm1729, %v10537
      %10633 = vst.msk [vmem:[#allocation3 + $0x8] sm:$0xff] %vm1729, %v10539
      %10634 = vst.msk [vmem:[#allocation3 + $0x10] sm:$0xff] %vm1729, %v10541
      %10635 = vst.msk [vmem:[#allocation3 + $0x18] sm:$0xff] %vm1729, %v10543
      %10636 = vst.msk [vmem:[#allocation3 + $0x20] sm:$0xff] %vm1729, %v10545
      %10637 = vst.msk [vmem:[#allocation3 + $0x28] sm:$0xff] %vm1729, %v10547
      %10638 = vst.msk [vmem:[#allocation3 + $0x30] sm:$0xff] %vm1729, %v10549
      %10639 = vst.msk [vmem:[#allocation3 + $0x38] sm:$0xff] %vm1729, %v10551
      %10640 = vst.msk [vmem:[#allocation3 + $0x40] sm:$0xff] %vm1729, %v10553
      %10641 = vst.msk [vmem:[#allocation3 + $0x48] sm:$0xff] %vm1729, %v10555
      %10642 = vst.msk [vmem:[#allocation3 + $0x50] sm:$0xff] %vm1729, %v10557
      %10643 = vst.msk [vmem:[#allocation3 + $0x58] sm:$0xff] %vm1729, %v10559
      %10644 = vst.msk [vmem:[#allocation3 + $0x60] sm:$0xff] %vm1729, %v10561
      %10645 = vst.msk [vmem:[#allocation3 + $0x68] sm:$0xff] %vm1729, %v10563
      %10646 = vst.msk [vmem:[#allocation3 + $0x70] sm:$0xff] %vm1729, %v10565
      %10647 = vst.msk [vmem:[#allocation3 + $0x78] sm:$0xff] %vm1729, %v10567
      %10648 = vst.msk [vmem:[#allocation3 + $0x80] sm:$0xff] %vm1729, %v10569
      %10649 = vst.msk [vmem:[#allocation3 + $0x88] sm:$0xff] %vm1729, %v10571
      %10650 = vst.msk [vmem:[#allocation3 + $0x90] sm:$0xff] %vm1729, %v10573
      %10651 = vst.msk [vmem:[#allocation3 + $0x98] sm:$0xff] %vm1729, %v10575
      %10652 = vst.msk [vmem:[#allocation3 + $0xa0] sm:$0xff] %vm1729, %v10577
      %10653 = vst.msk [vmem:[#allocation3 + $0xa8] sm:$0xff] %vm1729, %v10579
      %10654 = vst.msk [vmem:[#allocation3 + $0xb0] sm:$0xff] %vm1729, %v10581
      %10655 = vst.msk [vmem:[#allocation3 + $0xb8] sm:$0xff] %vm1729, %v10583
      %10656 = vst.msk [vmem:[#allocation3 + $0xc0] sm:$0xff] %vm1729, %v10585
      %10657 = vst.msk [vmem:[#allocation3 + $0xc8] sm:$0xff] %vm1729, %v10587
      %10658 = vst.msk [vmem:[#allocation3 + $0xd0] sm:$0xff] %vm1729, %v10589
      %10659 = vst.msk [vmem:[#allocation3 + $0xd8] sm:$0xff] %vm1729, %v10591
      %10660 = vst.msk [vmem:[#allocation3 + $0xe0] sm:$0xff] %vm1729, %v10593
      %10661 = vst.msk [vmem:[#allocation3 + $0xe8] sm:$0xff] %vm1729, %v10595
      %10662 = vst.msk [vmem:[#allocation3 + $0xf0] sm:$0xff] %vm1729, %v10597
      %10663 = vst.msk [vmem:[#allocation3 + $0xf8] sm:$0xff] %vm1729, %v10599
      %v10664 = vld [vmem:[%s8342 + $0x2] sm:$0xff]
      %v10665 = vld [vmem:[%s8342 + $0xa] sm:$0xff]
      %v10666 = vld [vmem:[%s8342 + $0x1a] sm:$0xff]
      %v10667 = vld [vmem:[%s8342 + $0x22] sm:$0xff]
      %v10668 = vld [vmem:[%s8342 + $0x32] sm:$0xff]
      %v10669 = vld [vmem:[%s8342 + $0x3a] sm:$0xff]
      %v10670 = vld [vmem:[%s8342 + $0x4a] sm:$0xff]
      %v10671 = vld [vmem:[%s8342 + $0x52] sm:$0xff]
      %v10672 = vld [vmem:[%s8342 + $0x62] sm:$0xff]
      %v10673 = vld [vmem:[%s8342 + $0x6a] sm:$0xff]
      %v10674 = vld [vmem:[%s8342 + $0x7a] sm:$0xff]
      %v10675 = vld [vmem:[%s8342 + $0x82] sm:$0xff]
      %v10676 = vld [vmem:[%s8342 + $0x92] sm:$0xff]
      %v10677 = vld [vmem:[%s8342 + $0x9a] sm:$0xff]
      %v10678 = vld [vmem:[%s8342 + $0xaa] sm:$0xff]
      %v10679 = vld [vmem:[%s8342 + $0xb2] sm:$0xff]
      %v10680 = vld [vmem:[%s8342 + $0xc2] sm:$0xff]
      %v10681 = vld [vmem:[%s8342 + $0xca] sm:$0xff]
      %v10682 = vld [vmem:[%s8342 + $0xda] sm:$0xff]
      %v10683 = vld [vmem:[%s8342 + $0xe2] sm:$0xff]
      %v10684 = vld [vmem:[%s8342 + $0xf2] sm:$0xff]
      %v10685 = vld [vmem:[%s8342 + $0xfa] sm:$0xff]
      %v10686 = vld [vmem:[%s8342 + $0x10a] sm:$0xff]
      %v10687 = vld [vmem:[%s8342 + $0x112] sm:$0xff]
      %v10688 = vld [vmem:[%s8342 + $0x122] sm:$0xff]
      %v10689 = vld [vmem:[%s8342 + $0x12a] sm:$0xff]
      %v10690 = vld [vmem:[%s8342 + $0x13a] sm:$0xff]
      %v10691 = vld [vmem:[%s8342 + $0x142] sm:$0xff]
      %v10692 = vld [vmem:[%s8342 + $0x152] sm:$0xff]
      %v10693 = vld [vmem:[%s8342 + $0x15a] sm:$0xff]
      %v10694 = vld [vmem:[%s8342 + $0x16a] sm:$0xff]
      %v10695 = vld [vmem:[%s8342 + $0x172] sm:$0xff]
      %10728 = vrot.lane.b32.xlu0 %v10664, 32
      %v10729 = vpop.permute.xlu0 %10728
      %10730 = vrot.lane.b32.xlu0 %v10665, 32
      %v10731 = vpop.permute.xlu0 %10730
      %10732 = vrot.lane.b32.xlu0 %v10666, 32
      %v10733 = vpop.permute.xlu0 %10732
      %10734 = vrot.lane.b32.xlu0 %v10667, 32
      %v10735 = vpop.permute.xlu0 %10734
      %10736 = vrot.lane.b32.xlu0 %v10668, 32
      %v10737 = vpop.permute.xlu0 %10736
      %10738 = vrot.lane.b32.xlu0 %v10669, 32
      %v10739 = vpop.permute.xlu0 %10738
      %10740 = vrot.lane.b32.xlu0 %v10670, 32
      %v10741 = vpop.permute.xlu0 %10740
      %10742 = vrot.lane.b32.xlu0 %v10671, 32
      %v10743 = vpop.permute.xlu0 %10742
      %10744 = vrot.lane.b32.xlu0 %v10672, 32
      %v10745 = vpop.permute.xlu0 %10744
      %10746 = vrot.lane.b32.xlu0 %v10673, 32
      %v10747 = vpop.permute.xlu0 %10746
      %10748 = vrot.lane.b32.xlu0 %v10674, 32
      %v10749 = vpop.permute.xlu0 %10748
      %10750 = vrot.lane.b32.xlu0 %v10675, 32
      %v10751 = vpop.permute.xlu0 %10750
      %10752 = vrot.lane.b32.xlu0 %v10676, 32
      %v10753 = vpop.permute.xlu0 %10752
      %10754 = vrot.lane.b32.xlu0 %v10677, 32
      %v10755 = vpop.permute.xlu0 %10754
      %10756 = vrot.lane.b32.xlu0 %v10678, 32
      %v10757 = vpop.permute.xlu0 %10756
      %10758 = vrot.lane.b32.xlu0 %v10679, 32
      %v10759 = vpop.permute.xlu0 %10758
      %10760 = vrot.lane.b32.xlu0 %v10680, 32
      %v10761 = vpop.permute.xlu0 %10760
      %10762 = vrot.lane.b32.xlu0 %v10681, 32
      %v10763 = vpop.permute.xlu0 %10762
      %10764 = vrot.lane.b32.xlu0 %v10682, 32
      %v10765 = vpop.permute.xlu0 %10764
      %10766 = vrot.lane.b32.xlu0 %v10683, 32
      %v10767 = vpop.permute.xlu0 %10766
      %10768 = vrot.lane.b32.xlu0 %v10684, 32
      %v10769 = vpop.permute.xlu0 %10768
      %10770 = vrot.lane.b32.xlu0 %v10685, 32
      %v10771 = vpop.permute.xlu0 %10770
      %10772 = vrot.lane.b32.xlu0 %v10686, 32
      %v10773 = vpop.permute.xlu0 %10772
      %10774 = vrot.lane.b32.xlu0 %v10687, 32
      %v10775 = vpop.permute.xlu0 %10774
      %10776 = vrot.lane.b32.xlu0 %v10688, 32
      %v10777 = vpop.permute.xlu0 %10776
      %10778 = vrot.lane.b32.xlu0 %v10689, 32
      %v10779 = vpop.permute.xlu0 %10778
      %10780 = vrot.lane.b32.xlu0 %v10690, 32
      %v10781 = vpop.permute.xlu0 %10780
      %10782 = vrot.lane.b32.xlu0 %v10691, 32
      %v10783 = vpop.permute.xlu0 %10782
      %10784 = vrot.lane.b32.xlu0 %v10692, 32
      %v10785 = vpop.permute.xlu0 %10784
      %10786 = vrot.lane.b32.xlu0 %v10693, 32
      %v10787 = vpop.permute.xlu0 %10786
      %10788 = vrot.lane.b32.xlu0 %v10694, 32
      %v10789 = vpop.permute.xlu0 %10788
      %10790 = vrot.lane.b32.xlu0 %v10695, 32
      %v10791 = vpop.permute.xlu0 %10790
      %10824 = vst.msk [vmem:[#allocation3] sm:$0xff] %vm1922, %v10729
      %10825 = vst.msk [vmem:[#allocation3 + $0x8] sm:$0xff] %vm1922, %v10731
      %10826 = vst.msk [vmem:[#allocation3 + $0x10] sm:$0xff] %vm1922, %v10733
      %10827 = vst.msk [vmem:[#allocation3 + $0x18] sm:$0xff] %vm1922, %v10735
      %10828 = vst.msk [vmem:[#allocation3 + $0x20] sm:$0xff] %vm1922, %v10737
      %10829 = vst.msk [vmem:[#allocation3 + $0x28] sm:$0xff] %vm1922, %v10739
      %10830 = vst.msk [vmem:[#allocation3 + $0x30] sm:$0xff] %vm1922, %v10741
      %10831 = vst.msk [vmem:[#allocation3 + $0x38] sm:$0xff] %vm1922, %v10743
      %10832 = vst.msk [vmem:[#allocation3 + $0x40] sm:$0xff] %vm1922, %v10745
      %10833 = vst.msk [vmem:[#allocation3 + $0x48] sm:$0xff] %vm1922, %v10747
      %10834 = vst.msk [vmem:[#allocation3 + $0x50] sm:$0xff] %vm1922, %v10749
      %10835 = vst.msk [vmem:[#allocation3 + $0x58] sm:$0xff] %vm1922, %v10751
      %10836 = vst.msk [vmem:[#allocation3 + $0x60] sm:$0xff] %vm1922, %v10753
      %10837 = vst.msk [vmem:[#allocation3 + $0x68] sm:$0xff] %vm1922, %v10755
      %10838 = vst.msk [vmem:[#allocation3 + $0x70] sm:$0xff] %vm1922, %v10757
      %10839 = vst.msk [vmem:[#allocation3 + $0x78] sm:$0xff] %vm1922, %v10759
      %10840 = vst.msk [vmem:[#allocation3 + $0x80] sm:$0xff] %vm1922, %v10761
      %10841 = vst.msk [vmem:[#allocation3 + $0x88] sm:$0xff] %vm1922, %v10763
      %10842 = vst.msk [vmem:[#allocation3 + $0x90] sm:$0xff] %vm1922, %v10765
      %10843 = vst.msk [vmem:[#allocation3 + $0x98] sm:$0xff] %vm1922, %v10767
      %10844 = vst.msk [vmem:[#allocation3 + $0xa0] sm:$0xff] %vm1922, %v10769
      %10845 = vst.msk [vmem:[#allocation3 + $0xa8] sm:$0xff] %vm1922, %v10771
      %10846 = vst.msk [vmem:[#allocation3 + $0xb0] sm:$0xff] %vm1922, %v10773
      %10847 = vst.msk [vmem:[#allocation3 + $0xb8] sm:$0xff] %vm1922, %v10775
      %10848 = vst.msk [vmem:[#allocation3 + $0xc0] sm:$0xff] %vm1922, %v10777
      %10849 = vst.msk [vmem:[#allocation3 + $0xc8] sm:$0xff] %vm1922, %v10779
      %10850 = vst.msk [vmem:[#allocation3 + $0xd0] sm:$0xff] %vm1922, %v10781
      %10851 = vst.msk [vmem:[#allocation3 + $0xd8] sm:$0xff] %vm1922, %v10783
      %10852 = vst.msk [vmem:[#allocation3 + $0xe0] sm:$0xff] %vm1922, %v10785
      %10853 = vst.msk [vmem:[#allocation3 + $0xe8] sm:$0xff] %vm1922, %v10787
      %10854 = vst.msk [vmem:[#allocation3 + $0xf0] sm:$0xff] %vm1922, %v10789
      %10855 = vst.msk [vmem:[#allocation3 + $0xf8] sm:$0xff] %vm1922, %v10791
      %v10856 = vld [vmem:[#allocation3] sm:$0xff]
      %v10857 = vld [vmem:[#allocation3 + $0x8] sm:$0xff]
      %v10858 = vld [vmem:[#allocation3 + $0x10] sm:$0xff]
      %v10859 = vld [vmem:[#allocation3 + $0x18] sm:$0xff]
      %v10860 = vld [vmem:[#allocation3 + $0x20] sm:$0xff]
      %v10861 = vld [vmem:[#allocation3 + $0x28] sm:$0xff]
      %v10862 = vld [vmem:[#allocation3 + $0x30] sm:$0xff]
      %v10863 = vld [vmem:[#allocation3 + $0x38] sm:$0xff]
      %v10864 = vld [vmem:[#allocation3 + $0x40] sm:$0xff]
      %v10865 = vld [vmem:[#allocation3 + $0x48] sm:$0xff]
      %v10866 = vld [vmem:[#allocation3 + $0x50] sm:$0xff]
      %v10867 = vld [vmem:[#allocation3 + $0x58] sm:$0xff]
      %v10868 = vld [vmem:[#allocation3 + $0x60] sm:$0xff]
      %v10869 = vld [vmem:[#allocation3 + $0x68] sm:$0xff]
      %v10870 = vld [vmem:[#allocation3 + $0x70] sm:$0xff]
      %v10871 = vld [vmem:[#allocation3 + $0x78] sm:$0xff]
      %v10872 = vld [vmem:[#allocation3 + $0x80] sm:$0xff]
      %v10873 = vld [vmem:[#allocation3 + $0x88] sm:$0xff]
      %v10874 = vld [vmem:[#allocation3 + $0x90] sm:$0xff]
      %v10875 = vld [vmem:[#allocation3 + $0x98] sm:$0xff]
      %v10876 = vld [vmem:[#allocation3 + $0xa0] sm:$0xff]
      %v10877 = vld [vmem:[#allocation3 + $0xa8] sm:$0xff]
      %v10878 = vld [vmem:[#allocation3 + $0xb0] sm:$0xff]
      %v10879 = vld [vmem:[#allocation3 + $0xb8] sm:$0xff]
      %v10880 = vld [vmem:[#allocation3 + $0xc0] sm:$0xff]
      %v10881 = vld [vmem:[#allocation3 + $0xc8] sm:$0xff]
      %v10882 = vld [vmem:[#allocation3 + $0xd0] sm:$0xff]
      %v10883 = vld [vmem:[#allocation3 + $0xd8] sm:$0xff]
      %v10884 = vld [vmem:[#allocation3 + $0xe0] sm:$0xff]
      %v10885 = vld [vmem:[#allocation3 + $0xe8] sm:$0xff]
      %v10886 = vld [vmem:[#allocation3 + $0xf0] sm:$0xff]
      %v10887 = vld [vmem:[#allocation3 + $0xf8] sm:$0xff]
      %v10888 = vld [vmem:[%s3] sm:$0xff]
      %v10889 = vld [vmem:[%s3 + $0x8] sm:$0xff]
      %v10890 = vld [vmem:[%s3 + $0x10] sm:$0xff]
      %v10891 = vld [vmem:[%s3 + $0x18] sm:$0xff]
      %v10892 = vld [vmem:[%s3 + $0x20] sm:$0xf]
      %v10893 = vld [vmem:[%s4] sm:$0x1]
      %v10895 = vlaneseq
      %v10896 = vshrl.u32 %v10895, 7
      %v10897 = vsub.s32 0, %v10896
      %v10898 = vrot.slane %v10893, %v10897
      %v10901 = vsel %vm1999, %v10856, 0
      %v10904 = vsel %vm1999, %v10857, 0
      %v10907 = vsel %vm1999, %v10858, 0
      %v10910 = vsel %vm1999, %v10859, 0
      %v10913 = vsel %vm1999, %v10860, 0
      %v10916 = vsel %vm1999, %v10861, 0
      %v10919 = vsel %vm1999, %v10862, 0
      %v10922 = vsel %vm1999, %v10863, 0
      %v10925 = vsel %vm1999, %v10864, 0
      %v10928 = vsel %vm1999, %v10865, 0
      %v10931 = vsel %vm1999, %v10866, 0
      %v10934 = vsel %vm1999, %v10867, 0
      %v10937 = vsel %vm1999, %v10868, 0
      %v10940 = vsel %vm1999, %v10869, 0
      %v10943 = vsel %vm1999, %v10870, 0
      %v10946 = vsel %vm1999, %v10871, 0
      %v10949 = vsel %vm1999, %v10872, 0
      %v10952 = vsel %vm1999, %v10873, 0
      %v10955 = vsel %vm1999, %v10874, 0
      %v10958 = vsel %vm1999, %v10875, 0
      %v10961 = vsel %vm1999, %v10876, 0
      %v10964 = vsel %vm1999, %v10877, 0
      %v10967 = vsel %vm1999, %v10878, 0
      %v10970 = vsel %vm1999, %v10879, 0
      %v10973 = vsel %vm1999, %v10880, 0
      %v10976 = vsel %vm1999, %v10881, 0
      %v10979 = vsel %vm1999, %v10882, 0
      %v10982 = vsel %vm1999, %v10883, 0
      %v10985 = vsel %vm1999, %v10884, 0
      %v10988 = vsel %vm1999, %v10885, 0
      %v10991 = vsel %vm1999, %v10886, 0
      %v10994 = vsel %vm1999, %v10887, 0
      %v10997 = vsel %vm2096, %v10892, 0
      %10999 = vmatprep.subr.mxu0 0.0
      %11000 = vmatpush1.msra.mxu0 %v10888
      %11001 = vmatprep.subr.mxu0 0.0
      %11002 = vmatpush1.msra.mxu0 %v10889
      %11003 = vmatprep.subr.mxu0 0.0
      %11004 = vmatpush1.msra.mxu0 %v10890
      %11005 = vmatprep.subr.mxu0 0.0
      %11006 = vmatpush1.msra.mxu0 %v10891
      %11007 = vmatprep.subr.mxu0 0.0
      %11008 = vmatpush1.msra.mxu0 %v10997
      %11009 = vmatprep.subr.mxu0 0.0
      %11010 = vmatpush1.msra.mxu0 0.0
      %11011 = vmatprep.subr.mxu0 0.0
      %11012 = vmatpush1.msra.mxu0 0.0
      %11013 = vmatprep.subr.mxu0 0.0
      %11014 = vmatpush1.msra.mxu0 0.0
      %11015 = vmatprep.subr.mxu0 0.0
      %11016 = vmatpush1.msra.mxu0 0.0
      %11017 = vmatprep.subr.mxu0 0.0
      %11018 = vmatpush1.msra.mxu0 0.0
      %11019 = vmatprep.subr.mxu0 0.0
      %11020 = vmatpush1.msra.mxu0 0.0
      %11021 = vmatprep.subr.mxu0 0.0
      %11022 = vmatpush1.msra.mxu0 0.0
      %11023 = vmatprep.subr.mxu0 0.0
      %11024 = vmatpush1.msra.mxu0 0.0
      %11025 = vmatprep.subr.mxu0 0.0
      %11026 = vmatpush1.msra.mxu0 0.0
      %11027 = vmatprep.subr.mxu0 0.0
      %11028 = vmatpush1.msra.mxu0 0.0
      %11029 = vmatprep.subr.mxu0 0.0
      %11030 = vmatpush1.msra.mxu0 0.0
      %11031 = vmatprep.subr.mxu0 0.0
      %11032 = vmatpush1.msra.mxu0 0.0
      %11033 = vmatprep.subr.mxu0 0.0
      %11034 = vmatpush1.msra.mxu0 0.0
      %11035 = vmatprep.subr.mxu0 0.0
      %11036 = vmatpush1.msra.mxu0 0.0
      %11037 = vmatprep.subr.mxu0 0.0
      %11038 = vmatpush1.msra.mxu0 0.0
      %11039 = vmatprep.subr.mxu0 0.0
      %11040 = vmatpush1.msra.mxu0 0.0
      %11041 = vmatprep.subr.mxu0 0.0
      %11042 = vmatpush1.msra.mxu0 0.0
      %11043 = vmatprep.subr.mxu0 0.0
      %11044 = vmatpush1.msra.mxu0 0.0
      %11045 = vmatprep.subr.mxu0 0.0
      %11046 = vmatpush1.msra.mxu0 0.0
      %11047 = vmatprep.subr.mxu0 0.0
      %11048 = vmatpush1.msra.mxu0 0.0
      %11049 = vmatprep.subr.mxu0 0.0
      %11050 = vmatpush1.msra.mxu0 0.0
      %11051 = vmatprep.subr.mxu0 0.0
      %11052 = vmatpush1.msra.mxu0 0.0
      %11053 = vmatprep.subr.mxu0 0.0
      %11054 = vmatpush1.msra.mxu0 0.0
      %11055 = vmatprep.subr.mxu0 0.0
      %11056 = vmatpush1.msra.mxu0 0.0
      %11057 = vmatprep.subr.mxu0 0.0
      %11058 = vmatpush1.msra.mxu0 0.0
      %11059 = vmatprep.subr.mxu0 0.0
      %11060 = vmatpush1.msra.mxu0 0.0
      %11061 = vmatprep.subr.mxu0 0.0
      %11062 = vmatpush1.msra.mxu0 0.0
      %11063 = vmatprep.mubr.f32.mxu0 0.0
      %11064 = vmatmul.mubr.f32.gmra.mrb[0].mxu0 %v10901
      %v11065 = vpop.f32.mrb[0].mxu0
      %v11066 = vadd.f32 %v10898, %v11065
      %v11067 = vpop.f32.mrb[0].mxu0
      %11068 = vmatprep.mubr.f32.mxu0 0.0
      %11069 = vmatmul.mubr.f32.gmra.mrb[0].mxu0 %v10904
      %v11070 = vpop.f32.mrb[0].mxu0
      %v11071 = vadd.f32 %v10898, %v11070
      %v11072 = vpop.f32.mrb[0].mxu0
      %11073 = vmatprep.mubr.f32.mxu0 0.0
      %11074 = vmatmul.mubr.f32.gmra.mrb[0].mxu0 %v10907
      %v11075 = vpop.f32.mrb[0].mxu0
      %v11076 = vadd.f32 %v10898, %v11075
      %v11077 = vpop.f32.mrb[0].mxu0
      %11078 = vmatprep.mubr.f32.mxu0 0.0
      %11079 = vmatmul.mubr.f32.gmra.mrb[0].mxu0 %v10910
      %v11080 = vpop.f32.mrb[0].mxu0
      %v11081 = vadd.f32 %v10898, %v11080
      %v11082 = vpop.f32.mrb[0].mxu0
      %11083 = vmatprep.mubr.f32.mxu0 0.0
      %11084 = vmatmul.mubr.f32.gmra.mrb[0].mxu0 %v10913
      %v11085 = vpop.f32.mrb[0].mxu0
      %v11086 = vadd.f32 %v10898, %v11085
      %v11087 = vpop.f32.mrb[0].mxu0
      %11088 = vmatprep.mubr.f32.mxu0 0.0
      %11089 = vmatmul.mubr.f32.gmra.mrb[0].mxu0 %v10916
      %v11090 = vpop.f32.mrb[0].mxu0
      %v11091 = vadd.f32 %v10898, %v11090
      %v11092 = vpop.f32.mrb[0].mxu0
      %11093 = vmatprep.mubr.f32.mxu0 0.0
      %11094 = vmatmul.mubr.f32.gmra.mrb[0].mxu0 %v10919
      %v11095 = vpop.f32.mrb[0].mxu0
      %v11096 = vadd.f32 %v10898, %v11095
      %v11097 = vpop.f32.mrb[0].mxu0
      %11098 = vmatprep.mubr.f32.mxu0 0.0
      %11099 = vmatmul.mubr.f32.gmra.mrb[0].mxu0 %v10922
      %v11100 = vpop.f32.mrb[0].mxu0
      %v11101 = vadd.f32 %v10898, %v11100
      %v11102 = vpop.f32.mrb[0].mxu0
      %11103 = vmatprep.mubr.f32.mxu0 0.0
      %11104 = vmatmul.mubr.f32.gmra.mrb[0].mxu0 %v10925
      %v11105 = vpop.f32.mrb[0].mxu0
      %v11106 = vadd.f32 %v10898, %v11105
      %v11107 = vpop.f32.mrb[0].mxu0
      %11108 = vmatprep.mubr.f32.mxu0 0.0
      %11109 = vmatmul.mubr.f32.gmra.mrb[0].mxu0 %v10928
      %v11110 = vpop.f32.mrb[0].mxu0
      %v11111 = vadd.f32 %v10898, %v11110
      %v11112 = vpop.f32.mrb[0].mxu0
      %11113 = vmatprep.mubr.f32.mxu0 0.0
      %11114 = vmatmul.mubr.f32.gmra.mrb[0].mxu0 %v10931
      %v11115 = vpop.f32.mrb[0].mxu0
      %v11116 = vadd.f32 %v10898, %v11115
      %v11117 = vpop.f32.mrb[0].mxu0
      %11118 = vmatprep.mubr.f32.mxu0 0.0
      %11119 = vmatmul.mubr.f32.gmra.mrb[0].mxu0 %v10934
      %v11120 = vpop.f32.mrb[0].mxu0
      %v11121 = vadd.f32 %v10898, %v11120
      %v11122 = vpop.f32.mrb[0].mxu0
      %11123 = vmatprep.mubr.f32.mxu0 0.0
      %11124 = vmatmul.mubr.f32.gmra.mrb[0].mxu0 %v10937
      %v11125 = vpop.f32.mrb[0].mxu0
      %v11126 = vadd.f32 %v10898, %v11125
      %v11127 = vpop.f32.mrb[0].mxu0
      %11128 = vmatprep.mubr.f32.mxu0 0.0
      %11129 = vmatmul.mubr.f32.gmra.mrb[0].mxu0 %v10940
      %v11130 = vpop.f32.mrb[0].mxu0
      %v11131 = vadd.f32 %v10898, %v11130
      %v11132 = vpop.f32.mrb[0].mxu0
      %11133 = vmatprep.mubr.f32.mxu0 0.0
      %11134 = vmatmul.mubr.f32.gmra.mrb[0].mxu0 %v10943
      %v11135 = vpop.f32.mrb[0].mxu0
      %v11136 = vadd.f32 %v10898, %v11135
      %v11137 = vpop.f32.mrb[0].mxu0
      %11138 = vmatprep.mubr.f32.mxu0 0.0
      %11139 = vmatmul.mubr.f32.gmra.mrb[0].mxu0 %v10946
      %v11140 = vpop.f32.mrb[0].mxu0
      %v11141 = vadd.f32 %v10898, %v11140
      %v11142 = vpop.f32.mrb[0].mxu0
      %11143 = vmatprep.mubr.f32.mxu0 0.0
      %11144 = vmatmul.mubr.f32.gmra.mrb[0].mxu0 %v10949
      %v11145 = vpop.f32.mrb[0].mxu0
      %v11146 = vadd.f32 %v10898, %v11145
      %v11147 = vpop.f32.mrb[0].mxu0
      %11148 = vmatprep.mubr.f32.mxu0 0.0
      %11149 = vmatmul.mubr.f32.gmra.mrb[0].mxu0 %v10952
      %v11150 = vpop.f32.mrb[0].mxu0
      %v11151 = vadd.f32 %v10898, %v11150
      %v11152 = vpop.f32.mrb[0].mxu0
      %11153 = vmatprep.mubr.f32.mxu0 0.0
      %11154 = vmatmul.mubr.f32.gmra.mrb[0].mxu0 %v10955
      %v11155 = vpop.f32.mrb[0].mxu0
      %v11156 = vadd.f32 %v10898, %v11155
      %v11157 = vpop.f32.mrb[0].mxu0
      %11158 = vmatprep.mubr.f32.mxu0 0.0
      %11159 = vmatmul.mubr.f32.gmra.mrb[0].mxu0 %v10958
      %v11160 = vpop.f32.mrb[0].mxu0
      %v11161 = vadd.f32 %v10898, %v11160
      %v11162 = vpop.f32.mrb[0].mxu0
      %11163 = vmatprep.mubr.f32.mxu0 0.0
      %11164 = vmatmul.mubr.f32.gmra.mrb[0].mxu0 %v10961
      %v11165 = vpop.f32.mrb[0].mxu0
      %v11166 = vadd.f32 %v10898, %v11165
      %v11167 = vpop.f32.mrb[0].mxu0
      %11168 = vmatprep.mubr.f32.mxu0 0.0
      %11169 = vmatmul.mubr.f32.gmra.mrb[0].mxu0 %v10964
      %v11170 = vpop.f32.mrb[0].mxu0
      %v11171 = vadd.f32 %v10898, %v11170
      %v11172 = vpop.f32.mrb[0].mxu0
      %11173 = vmatprep.mubr.f32.mxu0 0.0
      %11174 = vmatmul.mubr.f32.gmra.mrb[0].mxu0 %v10967
      %v11175 = vpop.f32.mrb[0].mxu0
      %v11176 = vadd.f32 %v10898, %v11175
      %v11177 = vpop.f32.mrb[0].mxu0
      %11178 = vmatprep.mubr.f32.mxu0 0.0
      %11179 = vmatmul.mubr.f32.gmra.mrb[0].mxu0 %v10970
      %v11180 = vpop.f32.mrb[0].mxu0
      %v11181 = vadd.f32 %v10898, %v11180
      %v11182 = vpop.f32.mrb[0].mxu0
      %11183 = vmatprep.mubr.f32.mxu0 0.0
      %11184 = vmatmul.mubr.f32.gmra.mrb[0].mxu0 %v10973
      %v11185 = vpop.f32.mrb[0].mxu0
      %v11186 = vadd.f32 %v10898, %v11185
      %v11187 = vpop.f32.mrb[0].mxu0
      %11188 = vmatprep.mubr.f32.mxu0 0.0
      %11189 = vmatmul.mubr.f32.gmra.mrb[0].mxu0 %v10976
      %v11190 = vpop.f32.mrb[0].mxu0
      %v11191 = vadd.f32 %v10898, %v11190
      %v11192 = vpop.f32.mrb[0].mxu0
      %11193 = vmatprep.mubr.f32.mxu0 0.0
      %11194 = vmatmul.mubr.f32.gmra.mrb[0].mxu0 %v10979
      %v11195 = vpop.f32.mrb[0].mxu0
      %v11196 = vadd.f32 %v10898, %v11195
      %v11197 = vpop.f32.mrb[0].mxu0
      %11198 = vmatprep.mubr.f32.mxu0 0.0
      %11199 = vmatmul.mubr.f32.gmra.mrb[0].mxu0 %v10982
      %v11200 = vpop.f32.mrb[0].mxu0
      %v11201 = vadd.f32 %v10898, %v11200
      %v11202 = vpop.f32.mrb[0].mxu0
      %11203 = vmatprep.mubr.f32.mxu0 0.0
      %11204 = vmatmul.mubr.f32.gmra.mrb[0].mxu0 %v10985
      %v11205 = vpop.f32.mrb[0].mxu0
      %v11206 = vadd.f32 %v10898, %v11205
      %v11207 = vpop.f32.mrb[0].mxu0
      %11208 = vmatprep.mubr.f32.mxu0 0.0
      %11209 = vmatmul.mubr.f32.gmra.mrb[0].mxu0 %v10988
      %v11210 = vpop.f32.mrb[0].mxu0
      %v11211 = vadd.f32 %v10898, %v11210
      %v11212 = vpop.f32.mrb[0].mxu0
      %11213 = vmatprep.mubr.f32.mxu0 0.0
      %11214 = vmatmul.mubr.f32.gmra.mrb[0].mxu0 %v10991
      %v11215 = vpop.f32.mrb[0].mxu0
      %v11216 = vadd.f32 %v10898, %v11215
      %v11217 = vpop.f32.mrb[0].mxu0
      %11218 = vmatprep.mubr.f32.mxu0 0.0
      %11219 = vmatmul.mubr.f32.gmra.mrb[0].mxu0 %v10994
      %v11220 = vpop.f32.mrb[0].mxu0
      %v11221 = vadd.f32 %v10898, %v11220
      %v11222 = vpop.f32.mrb[0].mxu0
      %11223 = vdwg.mxu0
      %11256 = vrot.lane.b32.xlu0 %v11066, 48
      %v11257 = vpop.permute.xlu0 %11256
      %11258 = vrot.lane.b32.xlu0 %v11071, 48
      %v11259 = vpop.permute.xlu0 %11258
      %11260 = vrot.lane.b32.xlu0 %v11076, 48
      %v11261 = vpop.permute.xlu0 %11260
      %11262 = vrot.lane.b32.xlu0 %v11081, 48
      %v11263 = vpop.permute.xlu0 %11262
      %11264 = vrot.lane.b32.xlu0 %v11086, 48
      %v11265 = vpop.permute.xlu0 %11264
      %11266 = vrot.lane.b32.xlu0 %v11091, 48
      %v11267 = vpop.permute.xlu0 %11266
      %11268 = vrot.lane.b32.xlu0 %v11096, 48
      %v11269 = vpop.permute.xlu0 %11268
      %11270 = vrot.lane.b32.xlu0 %v11101, 48
      %v11271 = vpop.permute.xlu0 %11270
      %11272 = vrot.lane.b32.xlu0 %v11106, 48
      %v11273 = vpop.permute.xlu0 %11272
      %11274 = vrot.lane.b32.xlu0 %v11111, 48
      %v11275 = vpop.permute.xlu0 %11274
      %11276 = vrot.lane.b32.xlu0 %v11116, 48
      %v11277 = vpop.permute.xlu0 %11276
      %11278 = vrot.lane.b32.xlu0 %v11121, 48
      %v11279 = vpop.permute.xlu0 %11278
      %11280 = vrot.lane.b32.xlu0 %v11126, 48
      %v11281 = vpop.permute.xlu0 %11280
      %11282 = vrot.lane.b32.xlu0 %v11131, 48
      %v11283 = vpop.permute.xlu0 %11282
      %11284 = vrot.lane.b32.xlu0 %v11136, 48
      %v11285 = vpop.permute.xlu0 %11284
      %11286 = vrot.lane.b32.xlu0 %v11141, 48
      %v11287 = vpop.permute.xlu0 %11286
      %11288 = vrot.lane.b32.xlu0 %v11146, 48
      %v11289 = vpop.permute.xlu0 %11288
      %11290 = vrot.lane.b32.xlu0 %v11151, 48
      %v11291 = vpop.permute.xlu0 %11290
      %11292 = vrot.lane.b32.xlu0 %v11156, 48
      %v11293 = vpop.permute.xlu0 %11292
      %11294 = vrot.lane.b32.xlu0 %v11161, 48
      %v11295 = vpop.permute.xlu0 %11294
      %11296 = vrot.lane.b32.xlu0 %v11166, 48
      %v11297 = vpop.permute.xlu0 %11296
      %11298 = vrot.lane.b32.xlu0 %v11171, 48
      %v11299 = vpop.permute.xlu0 %11298
      %11300 = vrot.lane.b32.xlu0 %v11176, 48
      %v11301 = vpop.permute.xlu0 %11300
      %11302 = vrot.lane.b32.xlu0 %v11181, 48
      %v11303 = vpop.permute.xlu0 %11302
      %11304 = vrot.lane.b32.xlu0 %v11186, 48
      %v11305 = vpop.permute.xlu0 %11304
      %11306 = vrot.lane.b32.xlu0 %v11191, 48
      %v11307 = vpop.permute.xlu0 %11306
      %11308 = vrot.lane.b32.xlu0 %v11196, 48
      %v11309 = vpop.permute.xlu0 %11308
      %11310 = vrot.lane.b32.xlu0 %v11201, 48
      %v11311 = vpop.permute.xlu0 %11310
      %11312 = vrot.lane.b32.xlu0 %v11206, 48
      %v11313 = vpop.permute.xlu0 %11312
      %11314 = vrot.lane.b32.xlu0 %v11211, 48
      %v11315 = vpop.permute.xlu0 %11314
      %11316 = vrot.lane.b32.xlu0 %v11216, 48
      %v11317 = vpop.permute.xlu0 %11316
      %11318 = vrot.lane.b32.xlu0 %v11221, 48
      %v11319 = vpop.permute.xlu0 %11318
      %vm11352 = vcmask 523648
      %11353 = vst.msk [vmem:[%s224] sm:$0xff] %vm11352, %v11257
      %11354 = vst.msk [vmem:[%s224 + $0x8] sm:$0xff] %vm11352, %v11259
      %11355 = vst.msk [vmem:[%s224 + $0x10] sm:$0xff] %vm11352, %v11261
      %11356 = vst.msk [vmem:[%s224 + $0x18] sm:$0xff] %vm11352, %v11263
      %11357 = vst.msk [vmem:[%s224 + $0x20] sm:$0xff] %vm11352, %v11265
      %11358 = vst.msk [vmem:[%s224 + $0x28] sm:$0xff] %vm11352, %v11267
      %11359 = vst.msk [vmem:[%s224 + $0x30] sm:$0xff] %vm11352, %v11269
      %11360 = vst.msk [vmem:[%s224 + $0x38] sm:$0xff] %vm11352, %v11271
      %11361 = vst.msk [vmem:[%s224 + $0x40] sm:$0xff] %vm11352, %v11273
      %11362 = vst.msk [vmem:[%s224 + $0x48] sm:$0xff] %vm11352, %v11275
      %11363 = vst.msk [vmem:[%s224 + $0x50] sm:$0xff] %vm11352, %v11277
      %11364 = vst.msk [vmem:[%s224 + $0x58] sm:$0xff] %vm11352, %v11279
      %11365 = vst.msk [vmem:[%s224 + $0x60] sm:$0xff] %vm11352, %v11281
      %11366 = vst.msk [vmem:[%s224 + $0x68] sm:$0xff] %vm11352, %v11283
      %11367 = vst.msk [vmem:[%s224 + $0x70] sm:$0xff] %vm11352, %v11285
      %11368 = vst.msk [vmem:[%s224 + $0x78] sm:$0xff] %vm11352, %v11287
      %11369 = vst.msk [vmem:[%s224 + $0x80] sm:$0xff] %vm11352, %v11289
      %11370 = vst.msk [vmem:[%s224 + $0x88] sm:$0xff] %vm11352, %v11291
      %11371 = vst.msk [vmem:[%s224 + $0x90] sm:$0xff] %vm11352, %v11293
      %11372 = vst.msk [vmem:[%s224 + $0x98] sm:$0xff] %vm11352, %v11295
      %11373 = vst.msk [vmem:[%s224 + $0xa0] sm:$0xff] %vm11352, %v11297
      %11374 = vst.msk [vmem:[%s224 + $0xa8] sm:$0xff] %vm11352, %v11299
      %11375 = vst.msk [vmem:[%s224 + $0xb0] sm:$0xff] %vm11352, %v11301
      %11376 = vst.msk [vmem:[%s224 + $0xb8] sm:$0xff] %vm11352, %v11303
      %11377 = vst.msk [vmem:[%s224 + $0xc0] sm:$0xff] %vm11352, %v11305
      %11378 = vst.msk [vmem:[%s224 + $0xc8] sm:$0xff] %vm11352, %v11307
      %11379 = vst.msk [vmem:[%s224 + $0xd0] sm:$0xff] %vm11352, %v11309
      %11380 = vst.msk [vmem:[%s224 + $0xd8] sm:$0xff] %vm11352, %v11311
      %11381 = vst.msk [vmem:[%s224 + $0xe0] sm:$0xff] %vm11352, %v11313
      %11382 = vst.msk [vmem:[%s224 + $0xe8] sm:$0xff] %vm11352, %v11315
      %11383 = vst.msk [vmem:[%s224 + $0xf0] sm:$0xff] %vm11352, %v11317
      %11384 = vst.msk [vmem:[%s224 + $0xf8] sm:$0xff] %vm11352, %v11319
      %p11385 = scmp.lt.s32.totalorder %s16, 1
      %s11386 = scalar_select %p11385, %s16, 1
      %s11387 = smul.addr %s11386, 32
      %s11388 = smul.addr %s11387, 8
      %s11389 = scalar_lea.vmem %s5, %s11388
      // Predicated region
      $region41: #{upsample_block_forward.1} parent=39 // pred_check
        %p11390 = pneg %p144
      $region42: #{upsample_block_forward.1} parent=39 // pred_check_branch
        %11392 = sbr.rel (%p11390) target = $region44
      $region43: #{upsample_block_forward.1} parent=39 // pred_region
        _
      $region44: #{upsample_block_forward.1} parent=39 // pred_fallthru
        _
    $region40: #{upsample_block_forward.1} parent=5 // pred_fallthru
      _
    %p11393 = scmp.le.s32.totalorder 2, %s11
    // Predicated region
    $region45: #{upsample_block_forward.1} parent=5 // pred_check
      %p11394 = pneg %p11393
    $region46: #{upsample_block_forward.1} parent=5 // pred_check_branch
      %11396 = sbr.rel (%p11394) target = $region48
    $region47: #{upsample_block_forward.1} parent=5 // pred_region
      %s11397 = ssub.s32 %s11, 2
      // Predicated region
      $region49: #{upsample_block_forward.1} parent=47 // pred_check
        %p11398 = pneg %p150
      $region50: #{upsample_block_forward.1} parent=47 // pred_check_branch
        %11400 = sbr.rel (%p11398) target = $region52
      $region51: #{upsample_block_forward.1} parent=47 // pred_region
        %p11401 = scmp.lt.s32.totalorder %s17, 1
        %s11402 = scalar_select %p11401, %s17, 1
        %s11403 = smul.addr %s11402, 32
        %s11404 = smul.addr %s11403, 8
        %s11405 = scalar_lea.vmem %s5, %s11404
      $region52: #{upsample_block_forward.1} parent=47 // pred_fallthru
        _
    $region48: #{upsample_block_forward.1} parent=5 // pred_fallthru
      _
  $region6: #{upsample_block_forward.1} parent=0 // loop_footer
    %s15 = sadd.s32 1, %s11
  $region7: #{upsample_block_forward.1} parent=0 // loop_footer_branch
    %10 = sbr.rel target = $region3
  $region8: #{upsample_block_forward.1} parent=0 // loop_exit
    _

</llo_original>
